<compile_context>
chip_gen: v6e
topology: v6e:2x2x1
jax: 0.10.0
libtpu: 0.0.40
codegen_flags: <defaults>
</compile_context>

<pallas_src>
import jax
import jax.numpy as jnp
from jax import lax
from jax.experimental import pallas as pl
from jax.experimental.pallas import tpu as pltpu

NEG_SLOPE = 0.01   # PyTorch LeakyReLU default negative_slope
K = 5              # conv kernel size
POOL = 3           # max-pool window == stride


def _leaky(v):
    return jnp.where(v > 0, v, NEG_SLOPE * v)


def _pool3_from_3d(h):
    # h: (L, C, TB) -> (n_out*C, TB), rows ordered position-major (row = p*C + c).
    l = h.shape[0]
    n_out = (l - POOL) // POOL + 1
    outs = []
    for p in range(n_out):
        m = jnp.maximum(jnp.maximum(h[POOL * p], h[POOL * p + 1]), h[POOL * p + 2])
        outs.append(m)                                    # (C, TB)
    return jnp.concatenate(outs, axis=0)


def _pool3_rows(h, c):
    # h: (L*c, TB) position-major rows -> (n_out*c, TB).  c is a multiple of 8,
    # so every slice is sublane-tile aligned.
    l = h.shape[0] // c
    n_out = (l - POOL) // POOL + 1
    outs = []
    for p in range(n_out):
        r = POOL * p * c
        m = jnp.maximum(jnp.maximum(h[r:r + c, :], h[r + c:r + 2 * c, :]),
                        h[r + 2 * c:r + 3 * c, :])
        outs.append(m)                                    # (c, TB)
    return jnp.concatenate(outs, axis=0)


def _conv_mix(h, w_ref, b_ref, c_in):
    # Channel-mixing conv on the MXU with batch on lanes.
    # h: (L_in*c_in, TB) position-major; w_ref: (c_out, K*c_in) with column index
    # k*c_in + ci; b_ref: (c_out, 1).  Returns (L_out*c_out, TB).
    l_in = h.shape[0] // c_in
    l_out = l_in - K + 1
    a = w_ref[...]
    b = b_ref[...]
    outs = []
    for l in range(l_out):
        win = h[l * c_in:(l + K) * c_in, :]               # (K*c_in, TB), aligned
        outs.append(jnp.dot(a, win, preferred_element_type=jnp.float32) + b)
    return jnp.concatenate(outs, axis=0)


def _cnn1d_kernel(x_ref, w1_ref, b1_ref, w2_ref, b2_ref, w3_ref, b3_ref,
                  wfc_ref, bfc_ref, o_ref):
    x = x_ref[...]                                        # (L, TB), batch on lanes
    l_in = x.shape[0]
    l1 = l_in - K + 1                                     # 124

    # conv1 (Cin=1): tap-wise broadcast FMAs, all 8 output channels at once.
    h3 = x[0:l1, :][:, None, :] * w1_ref[0][None, :, :]   # (124, 8, TB)
    for k in range(1, K):
        h3 = h3 + x[k:k + l1, :][:, None, :] * w1_ref[k][None, :, :]
    h3 = _leaky(h3 + b1_ref[...][None, :, :])
    h = _pool3_from_3d(h3)                                # (41*8, TB)

    # conv2 / conv3: per-position MXU matmuls, batch on lanes.
    h = _leaky(_conv_mix(h, w2_ref, b2_ref, c_in=8))      # (37*16, TB)
    h = _pool3_rows(h, c=16)                              # (12*16, TB)
    h = _leaky(_conv_mix(h, w3_ref, b3_ref, c_in=16))     # (8*32, TB)
    h = _pool3_rows(h, c=32)                              # (2*32, TB) = (64, TB)

    # Flatten + Linear(64, 1): rows are l*32 + c and wfc is pre-permuted to match,
    # so this is one (1, 64) @ (64, TB) matmul.  Output is lane-dense (1, TB).
    out = jnp.dot(wfc_ref[...], h, preferred_element_type=jnp.float32)
    o_ref[...] = out + bfc_ref[...]


def cnn1d_machine_forward(x_ncl, pt_params, block_batch=128):
    """x_ncl: (B, 1, L) float32 in PyTorch NCL layout.  pt_params in PyTorch
    layouts: (w1 (8,1,5), b1 (8,), w2 (16,8,5), b2 (16,), w3 (32,16,5), b3 (32,),
    wfc (1,64), bfc (1,)).  Returns (B, 1)."""
    w1, b1, w2, b2, w3, b3, wfc, bfc = pt_params
    B, c_in, L = x_ncl.shape
    assert c_in == 1
    assert block_batch % 128 == 0

    # Static length chain; Linear(64, 1) forces L == 128.
    l1c = L - K + 1;   l1p = (l1c - POOL) // POOL + 1
    l2c = l1p - K + 1; l2p = (l2c - POOL) // POOL + 1
    l3c = l2p - K + 1; l3p = (l3c - POOL) // POOL + 1
    assert 32 * l3p == wfc.shape[1] == 64, "input length must be 128"

    f32 = jnp.float32
    # Kernel-layout parameters.
    w1k = jnp.transpose(w1, (2, 0, 1)).astype(f32)                     # (5, 8, 1)
    b1k = b1.reshape(8, 1).astype(f32)
    a2 = jnp.transpose(w2, (0, 2, 1)).reshape(16, K * 8).astype(f32)   # col = k*8+ci
    b2k = b2.reshape(16, 1).astype(f32)
    a3 = jnp.transpose(w3, (0, 2, 1)).reshape(32, K * 16).astype(f32)  # col = k*16+ci
    b3k = b3.reshape(32, 1).astype(f32)
    wfck = wfc.reshape(32, l3p).T.reshape(1, 32 * l3p).astype(f32)     # col = l*32+c
    bfck = bfc.reshape(1, 1).astype(f32)

    # Batch on the lane axis, padded to a multiple of the batch tile.
    tb = block_batch
    nb = pl.cdiv(B, tb)
    bp = nb * tb
    x_lb = jnp.transpose(x_ncl[:, 0, :].astype(f32), (1, 0))           # (L, B)
    if bp > B:
        x_lb = jnp.pad(x_lb, ((0, 0), (0, bp - B)))

    def full(a):
        return pl.BlockSpec(a.shape, lambda i, nd=a.ndim: (0,) * nd)

    out = pl.pallas_call(
        _cnn1d_kernel,
        out_shape=jax.ShapeDtypeStruct((1, bp), f32),
        grid_spec=pltpu.PrefetchScalarGridSpec(
            num_scalar_prefetch=0,
            grid=(nb,),
            in_specs=[
                pl.BlockSpec((L, tb), lambda i: (0, i)),               # x batch tile
                full(w1k), full(b1k),
                full(a2), full(b2k),
                full(a3), full(b3k),
                full(wfck), full(bfck),
            ],
            out_specs=pl.BlockSpec((1, tb), lambda i: (0, i)),         # lane-dense
        ),
        compiler_params=pltpu.CompilerParams(
            dimension_semantics=("parallel",)),
    )(x_lb, w1k, b1k, a2, b2k, a3, b3k, wfck, bfck)
    return out[0, :B].reshape(B, 1)


def _reference_forward(x_ncl, pt_params):
    """Pure-JAX reference in PyTorch layouts (for correctness checking)."""
    w1, b1, w2, b2, w3, b3, wfc, bfc = pt_params

    def conv(v, w, b):
        out = lax.conv_general_dilated(v, w, window_strides=(1,), padding='VALID',
                                       dimension_numbers=('NCH', 'OIH', 'NCH'))
        return out + b[None, :, None]

    def pool(v):
        return lax.reduce_window(v, -jnp.inf, lax.max,
                                 (1, 1, POOL), (1, 1, POOL), 'VALID')

    h = pool(_leaky(conv(x_ncl, w1, b1)))
    h = pool(_leaky(conv(h, w2, b2)))
    h = pool(_leaky(conv(h, w3, b3)))
    flat = h.reshape(h.shape[0], -1)          # channel-major flatten, like nn.Flatten
    return flat @ wfc.T + bfc[None, :]


if __name__ == "__main__":
    key = jax.random.PRNGKey(0)
    ks = jax.random.split(key, 9)

    def uinit(k, shape, fan_in):
        bound = 1.0 / (fan_in ** 0.5)
        return jax.random.uniform(k, shape, jnp.float32, -bound, bound)

    # Deterministic parameters in PyTorch layouts (Conv1d: (Cout,Cin,K); Linear: (out,in)).
    w1 = uinit(ks[0], (8, 1, 5), 1 * 5);    b1 = uinit(ks[1], (8,), 1 * 5)
    w2 = uinit(ks[2], (16, 8, 5), 8 * 5);   b2 = uinit(ks[3], (16,), 8 * 5)
    w3 = uinit(ks[4], (32, 16, 5), 16 * 5); b3 = uinit(ks[5], (32,), 16 * 5)
    wfc = uinit(ks[6], (1, 64), 64);        bfc = uinit(ks[7], (1,), 64)
    params = (w1, b1, w2, b2, w3, b3, wfc, bfc)

    # Input in PyTorch NCL layout: batch=2, channels=1, length=128 (forced by Linear(64,1)).
    x = jax.random.normal(ks[8], (2, 1, 128), jnp.float32)

    out = jax.block_until_ready(cnn1d_machine_forward(x, params))
    ref = _reference_forward(x, params)

    assert out.shape == (2, 1), out.shape
    assert jnp.allclose(out, ref, atol=5e-4, rtol=5e-4), (out, ref)
    print("KERNEL_OK")
</pallas_src>

<mosaic_0001>
module attributes {stable_mosaic.version = 11 : i64} {
  func.func @_cnn1d_kernel(%arg0: i32, %arg1: memref<128x128xf32, #tpu.memory_space<vmem>>, %arg2: memref<5x8x1xf32, #tpu.memory_space<vmem>>, %arg3: memref<8x1xf32, #tpu.memory_space<vmem>>, %arg4: memref<16x40xf32, #tpu.memory_space<vmem>>, %arg5: memref<16x1xf32, #tpu.memory_space<vmem>>, %arg6: memref<32x80xf32, #tpu.memory_space<vmem>>, %arg7: memref<32x1xf32, #tpu.memory_space<vmem>>, %arg8: memref<1x64xf32, #tpu.memory_space<vmem>>, %arg9: memref<1x1xf32, #tpu.memory_space<vmem>>, %arg10: memref<1x128xf32, #tpu.memory_space<vmem>>) attributes {dimension_semantics = [#tpu.dimension_semantics<parallel>], iteration_bounds = array<i64: 1>, scalar_prefetch = 0 : i64, scratch_operands = 0 : i64, tpu.core_type = #tpu.core_type<tc>, window_params = [{transform_indices = @transform_0, window_bounds = array<i64: 128, 128>}, {pipeline_mode = #tpu.pipeline_mode<synchronous>, transform_indices = @transform_1, window_bounds = array<i64: 5, 8, 1>}, {pipeline_mode = #tpu.pipeline_mode<synchronous>, transform_indices = @transform_2, window_bounds = array<i64: 8, 1>}, {pipeline_mode = #tpu.pipeline_mode<synchronous>, transform_indices = @transform_3, window_bounds = array<i64: 16, 40>}, {pipeline_mode = #tpu.pipeline_mode<synchronous>, transform_indices = @transform_4, window_bounds = array<i64: 16, 1>}, {pipeline_mode = #tpu.pipeline_mode<synchronous>, transform_indices = @transform_5, window_bounds = array<i64: 32, 80>}, {pipeline_mode = #tpu.pipeline_mode<synchronous>, transform_indices = @transform_6, window_bounds = array<i64: 32, 1>}, {pipeline_mode = #tpu.pipeline_mode<synchronous>, transform_indices = @transform_7, window_bounds = array<i64: 1, 64>}, {pipeline_mode = #tpu.pipeline_mode<synchronous>, transform_indices = @transform_8, window_bounds = array<i64: 1, 1>}, {transform_indices = @transform_9, window_bounds = array<i64: 1, 128>}]} {
    %c0 = arith.constant 0 : index
    %c0_0 = arith.constant 0 : index
    %0 = vector.load %arg1[%c0, %c0_0] : memref<128x128xf32, #tpu.memory_space<vmem>>, vector<128x128xf32>
    %1 = vector.extract_strided_slice %0 {offsets = [0, 0], sizes = [124, 128], strides = [1, 1]} : vector<128x128xf32> to vector<124x128xf32>
    %2 = vector.shape_cast %1 : vector<124x128xf32> to vector<124x1x128xf32>
    %c0_1 = arith.constant 0 : index
    %c0_2 = arith.constant 0 : index
    %c0_3 = arith.constant 0 : index
    %3 = vector.load %arg2[%c0_1, %c0_2, %c0_3] : memref<5x8x1xf32, #tpu.memory_space<vmem>>, vector<1x8x1xf32>
    %4 = vector.shape_cast %3 : vector<1x8x1xf32> to vector<8x1xf32>
    %5 = vector.shape_cast %4 : vector<8x1xf32> to vector<1x8x1xf32>
    %6 = vector.broadcast %2 : vector<124x1x128xf32> to vector<124x8x128xf32>
    %7 = vector.broadcast %5 : vector<1x8x1xf32> to vector<124x8x128xf32>
    %8 = arith.mulf %6, %7 : vector<124x8x128xf32>
    %9 = vector.extract_strided_slice %0 {offsets = [1, 0], sizes = [124, 128], strides = [1, 1]} : vector<128x128xf32> to vector<124x128xf32>
    %10 = vector.shape_cast %9 : vector<124x128xf32> to vector<124x1x128xf32>
    %c1 = arith.constant 1 : index
    %c0_4 = arith.constant 0 : index
    %c0_5 = arith.constant 0 : index
    %11 = vector.load %arg2[%c1, %c0_4, %c0_5] : memref<5x8x1xf32, #tpu.memory_space<vmem>>, vector<1x8x1xf32>
    %12 = vector.shape_cast %11 : vector<1x8x1xf32> to vector<8x1xf32>
    %13 = vector.shape_cast %12 : vector<8x1xf32> to vector<1x8x1xf32>
    %14 = vector.broadcast %10 : vector<124x1x128xf32> to vector<124x8x128xf32>
    %15 = vector.broadcast %13 : vector<1x8x1xf32> to vector<124x8x128xf32>
    %16 = arith.mulf %14, %15 : vector<124x8x128xf32>
    %17 = arith.addf %8, %16 : vector<124x8x128xf32>
    %18 = vector.extract_strided_slice %0 {offsets = [2, 0], sizes = [124, 128], strides = [1, 1]} : vector<128x128xf32> to vector<124x128xf32>
    %19 = vector.shape_cast %18 : vector<124x128xf32> to vector<124x1x128xf32>
    %c2 = arith.constant 2 : index
    %c0_6 = arith.constant 0 : index
    %c0_7 = arith.constant 0 : index
    %20 = vector.load %arg2[%c2, %c0_6, %c0_7] : memref<5x8x1xf32, #tpu.memory_space<vmem>>, vector<1x8x1xf32>
    %21 = vector.shape_cast %20 : vector<1x8x1xf32> to vector<8x1xf32>
    %22 = vector.shape_cast %21 : vector<8x1xf32> to vector<1x8x1xf32>
    %23 = vector.broadcast %19 : vector<124x1x128xf32> to vector<124x8x128xf32>
    %24 = vector.broadcast %22 : vector<1x8x1xf32> to vector<124x8x128xf32>
    %25 = arith.mulf %23, %24 : vector<124x8x128xf32>
    %26 = arith.addf %17, %25 : vector<124x8x128xf32>
    %27 = vector.extract_strided_slice %0 {offsets = [3, 0], sizes = [124, 128], strides = [1, 1]} : vector<128x128xf32> to vector<124x128xf32>
    %28 = vector.shape_cast %27 : vector<124x128xf32> to vector<124x1x128xf32>
    %c3 = arith.constant 3 : index
    %c0_8 = arith.constant 0 : index
    %c0_9 = arith.constant 0 : index
    %29 = vector.load %arg2[%c3, %c0_8, %c0_9] : memref<5x8x1xf32, #tpu.memory_space<vmem>>, vector<1x8x1xf32>
    %30 = vector.shape_cast %29 : vector<1x8x1xf32> to vector<8x1xf32>
    %31 = vector.shape_cast %30 : vector<8x1xf32> to vector<1x8x1xf32>
    %32 = vector.broadcast %28 : vector<124x1x128xf32> to vector<124x8x128xf32>
    %33 = vector.broadcast %31 : vector<1x8x1xf32> to vector<124x8x128xf32>
    %34 = arith.mulf %32, %33 : vector<124x8x128xf32>
    %35 = arith.addf %26, %34 : vector<124x8x128xf32>
    %36 = vector.extract_strided_slice %0 {offsets = [4, 0], sizes = [124, 128], strides = [1, 1]} : vector<128x128xf32> to vector<124x128xf32>
    %37 = vector.shape_cast %36 : vector<124x128xf32> to vector<124x1x128xf32>
    %c4 = arith.constant 4 : index
    %c0_10 = arith.constant 0 : index
    %c0_11 = arith.constant 0 : index
    %38 = vector.load %arg2[%c4, %c0_10, %c0_11] : memref<5x8x1xf32, #tpu.memory_space<vmem>>, vector<1x8x1xf32>
    %39 = vector.shape_cast %38 : vector<1x8x1xf32> to vector<8x1xf32>
    %40 = vector.shape_cast %39 : vector<8x1xf32> to vector<1x8x1xf32>
    %41 = vector.broadcast %37 : vector<124x1x128xf32> to vector<124x8x128xf32>
    %42 = vector.broadcast %40 : vector<1x8x1xf32> to vector<124x8x128xf32>
    %43 = arith.mulf %41, %42 : vector<124x8x128xf32>
    %44 = arith.addf %35, %43 : vector<124x8x128xf32>
    %c0_12 = arith.constant 0 : index
    %c0_13 = arith.constant 0 : index
    %45 = vector.load %arg3[%c0_12, %c0_13] : memref<8x1xf32, #tpu.memory_space<vmem>>, vector<8x1xf32>
    %46 = vector.shape_cast %45 : vector<8x1xf32> to vector<1x8x1xf32>
    %47 = vector.broadcast %46 : vector<1x8x1xf32> to vector<124x8x128xf32>
    %48 = arith.addf %44, %47 : vector<124x8x128xf32>
    %cst = arith.constant 0.000000e+00 : f32
    %49 = vector.broadcast %cst : f32 to vector<124x8x128xf32>
    %50 = arith.cmpf ogt, %48, %49 : vector<124x8x128xf32>
    %cst_14 = arith.constant 0.00999999977 : f32
    %51 = vector.broadcast %cst_14 : f32 to vector<124x8x128xf32>
    %52 = arith.mulf %51, %48 : vector<124x8x128xf32>
    %53 = arith.select %50, %48, %52 : vector<124x8x128xi1>, vector<124x8x128xf32>
    %54 = vector.extract_strided_slice %53 {offsets = [0, 0, 0], sizes = [1, 8, 128], strides = [1, 1, 1]} : vector<124x8x128xf32> to vector<1x8x128xf32>
    %55 = vector.shape_cast %54 : vector<1x8x128xf32> to vector<8x128xf32>
    %56 = vector.extract_strided_slice %53 {offsets = [1, 0, 0], sizes = [1, 8, 128], strides = [1, 1, 1]} : vector<124x8x128xf32> to vector<1x8x128xf32>
    %57 = vector.shape_cast %56 : vector<1x8x128xf32> to vector<8x128xf32>
    %58 = arith.maximumf %55, %57 : vector<8x128xf32>
    %59 = vector.extract_strided_slice %53 {offsets = [2, 0, 0], sizes = [1, 8, 128], strides = [1, 1, 1]} : vector<124x8x128xf32> to vector<1x8x128xf32>
    %60 = vector.shape_cast %59 : vector<1x8x128xf32> to vector<8x128xf32>
    %61 = arith.maximumf %58, %60 : vector<8x128xf32>
    %62 = vector.extract_strided_slice %53 {offsets = [3, 0, 0], sizes = [1, 8, 128], strides = [1, 1, 1]} : vector<124x8x128xf32> to vector<1x8x128xf32>
    %63 = vector.shape_cast %62 : vector<1x8x128xf32> to vector<8x128xf32>
    %64 = vector.extract_strided_slice %53 {offsets = [4, 0, 0], sizes = [1, 8, 128], strides = [1, 1, 1]} : vector<124x8x128xf32> to vector<1x8x128xf32>
    %65 = vector.shape_cast %64 : vector<1x8x128xf32> to vector<8x128xf32>
    %66 = arith.maximumf %63, %65 : vector<8x128xf32>
    %67 = vector.extract_strided_slice %53 {offsets = [5, 0, 0], sizes = [1, 8, 128], strides = [1, 1, 1]} : vector<124x8x128xf32> to vector<1x8x128xf32>
    %68 = vector.shape_cast %67 : vector<1x8x128xf32> to vector<8x128xf32>
    %69 = arith.maximumf %66, %68 : vector<8x128xf32>
    %70 = vector.extract_strided_slice %53 {offsets = [6, 0, 0], sizes = [1, 8, 128], strides = [1, 1, 1]} : vector<124x8x128xf32> to vector<1x8x128xf32>
    %71 = vector.shape_cast %70 : vector<1x8x128xf32> to vector<8x128xf32>
    %72 = vector.extract_strided_slice %53 {offsets = [7, 0, 0], sizes = [1, 8, 128], strides = [1, 1, 1]} : vector<124x8x128xf32> to vector<1x8x128xf32>
    %73 = vector.shape_cast %72 : vector<1x8x128xf32> to vector<8x128xf32>
    %74 = arith.maximumf %71, %73 : vector<8x128xf32>
    %75 = vector.extract_strided_slice %53 {offsets = [8, 0, 0], sizes = [1, 8, 128], strides = [1, 1, 1]} : vector<124x8x128xf32> to vector<1x8x128xf32>
    %76 = vector.shape_cast %75 : vector<1x8x128xf32> to vector<8x128xf32>
    %77 = arith.maximumf %74, %76 : vector<8x128xf32>
    %78 = vector.extract_strided_slice %53 {offsets = [9, 0, 0], sizes = [1, 8, 128], strides = [1, 1, 1]} : vector<124x8x128xf32> to vector<1x8x128xf32>
    %79 = vector.shape_cast %78 : vector<1x8x128xf32> to vector<8x128xf32>
    %80 = vector.extract_strided_slice %53 {offsets = [10, 0, 0], sizes = [1, 8, 128], strides = [1, 1, 1]} : vector<124x8x128xf32> to vector<1x8x128xf32>
    %81 = vector.shape_cast %80 : vector<1x8x128xf32> to vector<8x128xf32>
    %82 = arith.maximumf %79, %81 : vector<8x128xf32>
    %83 = vector.extract_strided_slice %53 {offsets = [11, 0, 0], sizes = [1, 8, 128], strides = [1, 1, 1]} : vector<124x8x128xf32> to vector<1x8x128xf32>
    %84 = vector.shape_cast %83 : vector<1x8x128xf32> to vector<8x128xf32>
    %85 = arith.maximumf %82, %84 : vector<8x128xf32>
    %86 = vector.extract_strided_slice %53 {offsets = [12, 0, 0], sizes = [1, 8, 128], strides = [1, 1, 1]} : vector<124x8x128xf32> to vector<1x8x128xf32>
    %87 = vector.shape_cast %86 : vector<1x8x128xf32> to vector<8x128xf32>
    %88 = vector.extract_strided_slice %53 {offsets = [13, 0, 0], sizes = [1, 8, 128], strides = [1, 1, 1]} : vector<124x8x128xf32> to vector<1x8x128xf32>
    %89 = vector.shape_cast %88 : vector<1x8x128xf32> to vector<8x128xf32>
    %90 = arith.maximumf %87, %89 : vector<8x128xf32>
    %91 = vector.extract_strided_slice %53 {offsets = [14, 0, 0], sizes = [1, 8, 128], strides = [1, 1, 1]} : vector<124x8x128xf32> to vector<1x8x128xf32>
    %92 = vector.shape_cast %91 : vector<1x8x128xf32> to vector<8x128xf32>
    %93 = arith.maximumf %90, %92 : vector<8x128xf32>
    %94 = vector.extract_strided_slice %53 {offsets = [15, 0, 0], sizes = [1, 8, 128], strides = [1, 1, 1]} : vector<124x8x128xf32> to vector<1x8x128xf32>
    %95 = vector.shape_cast %94 : vector<1x8x128xf32> to vector<8x128xf32>
    %96 = vector.extract_strided_slice %53 {offsets = [16, 0, 0], sizes = [1, 8, 128], strides = [1, 1, 1]} : vector<124x8x128xf32> to vector<1x8x128xf32>
    %97 = vector.shape_cast %96 : vector<1x8x128xf32> to vector<8x128xf32>
    %98 = arith.maximumf %95, %97 : vector<8x128xf32>
    %99 = vector.extract_strided_slice %53 {offsets = [17, 0, 0], sizes = [1, 8, 128], strides = [1, 1, 1]} : vector<124x8x128xf32> to vector<1x8x128xf32>
    %100 = vector.shape_cast %99 : vector<1x8x128xf32> to vector<8x128xf32>
    %101 = arith.maximumf %98, %100 : vector<8x128xf32>
    %102 = vector.extract_strided_slice %53 {offsets = [18, 0, 0], sizes = [1, 8, 128], strides = [1, 1, 1]} : vector<124x8x128xf32> to vector<1x8x128xf32>
    %103 = vector.shape_cast %102 : vector<1x8x128xf32> to vector<8x128xf32>
    %104 = vector.extract_strided_slice %53 {offsets = [19, 0, 0], sizes = [1, 8, 128], strides = [1, 1, 1]} : vector<124x8x128xf32> to vector<1x8x128xf32>
    %105 = vector.shape_cast %104 : vector<1x8x128xf32> to vector<8x128xf32>
    %106 = arith.maximumf %103, %105 : vector<8x128xf32>
    %107 = vector.extract_strided_slice %53 {offsets = [20, 0, 0], sizes = [1, 8, 128], strides = [1, 1, 1]} : vector<124x8x128xf32> to vector<1x8x128xf32>
    %108 = vector.shape_cast %107 : vector<1x8x128xf32> to vector<8x128xf32>
    %109 = arith.maximumf %106, %108 : vector<8x128xf32>
    %110 = vector.extract_strided_slice %53 {offsets = [21, 0, 0], sizes = [1, 8, 128], strides = [1, 1, 1]} : vector<124x8x128xf32> to vector<1x8x128xf32>
    %111 = vector.shape_cast %110 : vector<1x8x128xf32> to vector<8x128xf32>
    %112 = vector.extract_strided_slice %53 {offsets = [22, 0, 0], sizes = [1, 8, 128], strides = [1, 1, 1]} : vector<124x8x128xf32> to vector<1x8x128xf32>
    %113 = vector.shape_cast %112 : vector<1x8x128xf32> to vector<8x128xf32>
    %114 = arith.maximumf %111, %113 : vector<8x128xf32>
    %115 = vector.extract_strided_slice %53 {offsets = [23, 0, 0], sizes = [1, 8, 128], strides = [1, 1, 1]} : vector<124x8x128xf32> to vector<1x8x128xf32>
    %116 = vector.shape_cast %115 : vector<1x8x128xf32> to vector<8x128xf32>
    %117 = arith.maximumf %114, %116 : vector<8x128xf32>
    %118 = vector.extract_strided_slice %53 {offsets = [24, 0, 0], sizes = [1, 8, 128], strides = [1, 1, 1]} : vector<124x8x128xf32> to vector<1x8x128xf32>
    %119 = vector.shape_cast %118 : vector<1x8x128xf32> to vector<8x128xf32>
    %120 = vector.extract_strided_slice %53 {offsets = [25, 0, 0], sizes = [1, 8, 128], strides = [1, 1, 1]} : vector<124x8x128xf32> to vector<1x8x128xf32>
    %121 = vector.shape_cast %120 : vector<1x8x128xf32> to vector<8x128xf32>
    %122 = arith.maximumf %119, %121 : vector<8x128xf32>
    %123 = vector.extract_strided_slice %53 {offsets = [26, 0, 0], sizes = [1, 8, 128], strides = [1, 1, 1]} : vector<124x8x128xf32> to vector<1x8x128xf32>
    %124 = vector.shape_cast %123 : vector<1x8x128xf32> to vector<8x128xf32>
    %125 = arith.maximumf %122, %124 : vector<8x128xf32>
    %126 = vector.extract_strided_slice %53 {offsets = [27, 0, 0], sizes = [1, 8, 128], strides = [1, 1, 1]} : vector<124x8x128xf32> to vector<1x8x128xf32>
    %127 = vector.shape_cast %126 : vector<1x8x128xf32> to vector<8x128xf32>
    %128 = vector.extract_strided_slice %53 {offsets = [28, 0, 0], sizes = [1, 8, 128], strides = [1, 1, 1]} : vector<124x8x128xf32> to vector<1x8x128xf32>
    %129 = vector.shape_cast %128 : vector<1x8x128xf32> to vector<8x128xf32>
    %130 = arith.maximumf %127, %129 : vector<8x128xf32>
    %131 = vector.extract_strided_slice %53 {offsets = [29, 0, 0], sizes = [1, 8, 128], strides = [1, 1, 1]} : vector<124x8x128xf32> to vector<1x8x128xf32>
    %132 = vector.shape_cast %131 : vector<1x8x128xf32> to vector<8x128xf32>
    %133 = arith.maximumf %130, %132 : vector<8x128xf32>
    %134 = vector.extract_strided_slice %53 {offsets = [30, 0, 0], sizes = [1, 8, 128], strides = [1, 1, 1]} : vector<124x8x128xf32> to vector<1x8x128xf32>
    %135 = vector.shape_cast %134 : vector<1x8x128xf32> to vector<8x128xf32>
    %136 = vector.extract_strided_slice %53 {offsets = [31, 0, 0], sizes = [1, 8, 128], strides = [1, 1, 1]} : vector<124x8x128xf32> to vector<1x8x128xf32>
    %137 = vector.shape_cast %136 : vector<1x8x128xf32> to vector<8x128xf32>
    %138 = arith.maximumf %135, %137 : vector<8x128xf32>
    %139 = vector.extract_strided_slice %53 {offsets = [32, 0, 0], sizes = [1, 8, 128], strides = [1, 1, 1]} : vector<124x8x128xf32> to vector<1x8x128xf32>
    %140 = vector.shape_cast %139 : vector<1x8x128xf32> to vector<8x128xf32>
    %141 = arith.maximumf %138, %140 : vector<8x128xf32>
    %142 = vector.extract_strided_slice %53 {offsets = [33, 0, 0], sizes = [1, 8, 128], strides = [1, 1, 1]} : vector<124x8x128xf32> to vector<1x8x128xf32>
    %143 = vector.shape_cast %142 : vector<1x8x128xf32> to vector<8x128xf32>
    %144 = vector.extract_strided_slice %53 {offsets = [34, 0, 0], sizes = [1, 8, 128], strides = [1, 1, 1]} : vector<124x8x128xf32> to vector<1x8x128xf32>
    %145 = vector.shape_cast %144 : vector<1x8x128xf32> to vector<8x128xf32>
    %146 = arith.maximumf %143, %145 : vector<8x128xf32>
    %147 = vector.extract_strided_slice %53 {offsets = [35, 0, 0], sizes = [1, 8, 128], strides = [1, 1, 1]} : vector<124x8x128xf32> to vector<1x8x128xf32>
    %148 = vector.shape_cast %147 : vector<1x8x128xf32> to vector<8x128xf32>
    %149 = arith.maximumf %146, %148 : vector<8x128xf32>
    %150 = vector.extract_strided_slice %53 {offsets = [36, 0, 0], sizes = [1, 8, 128], strides = [1, 1, 1]} : vector<124x8x128xf32> to vector<1x8x128xf32>
    %151 = vector.shape_cast %150 : vector<1x8x128xf32> to vector<8x128xf32>
    %152 = vector.extract_strided_slice %53 {offsets = [37, 0, 0], sizes = [1, 8, 128], strides = [1, 1, 1]} : vector<124x8x128xf32> to vector<1x8x128xf32>
    %153 = vector.shape_cast %152 : vector<1x8x128xf32> to vector<8x128xf32>
    %154 = arith.maximumf %151, %153 : vector<8x128xf32>
    %155 = vector.extract_strided_slice %53 {offsets = [38, 0, 0], sizes = [1, 8, 128], strides = [1, 1, 1]} : vector<124x8x128xf32> to vector<1x8x128xf32>
    %156 = vector.shape_cast %155 : vector<1x8x128xf32> to vector<8x128xf32>
    %157 = arith.maximumf %154, %156 : vector<8x128xf32>
    %158 = vector.extract_strided_slice %53 {offsets = [39, 0, 0], sizes = [1, 8, 128], strides = [1, 1, 1]} : vector<124x8x128xf32> to vector<1x8x128xf32>
    %159 = vector.shape_cast %158 : vector<1x8x128xf32> to vector<8x128xf32>
    %160 = vector.extract_strided_slice %53 {offsets = [40, 0, 0], sizes = [1, 8, 128], strides = [1, 1, 1]} : vector<124x8x128xf32> to vector<1x8x128xf32>
    %161 = vector.shape_cast %160 : vector<1x8x128xf32> to vector<8x128xf32>
    %162 = arith.maximumf %159, %161 : vector<8x128xf32>
    %163 = vector.extract_strided_slice %53 {offsets = [41, 0, 0], sizes = [1, 8, 128], strides = [1, 1, 1]} : vector<124x8x128xf32> to vector<1x8x128xf32>
    %164 = vector.shape_cast %163 : vector<1x8x128xf32> to vector<8x128xf32>
    %165 = arith.maximumf %162, %164 : vector<8x128xf32>
    %166 = vector.extract_strided_slice %53 {offsets = [42, 0, 0], sizes = [1, 8, 128], strides = [1, 1, 1]} : vector<124x8x128xf32> to vector<1x8x128xf32>
    %167 = vector.shape_cast %166 : vector<1x8x128xf32> to vector<8x128xf32>
    %168 = vector.extract_strided_slice %53 {offsets = [43, 0, 0], sizes = [1, 8, 128], strides = [1, 1, 1]} : vector<124x8x128xf32> to vector<1x8x128xf32>
    %169 = vector.shape_cast %168 : vector<1x8x128xf32> to vector<8x128xf32>
    %170 = arith.maximumf %167, %169 : vector<8x128xf32>
    %171 = vector.extract_strided_slice %53 {offsets = [44, 0, 0], sizes = [1, 8, 128], strides = [1, 1, 1]} : vector<124x8x128xf32> to vector<1x8x128xf32>
    %172 = vector.shape_cast %171 : vector<1x8x128xf32> to vector<8x128xf32>
    %173 = arith.maximumf %170, %172 : vector<8x128xf32>
    %174 = vector.extract_strided_slice %53 {offsets = [45, 0, 0], sizes = [1, 8, 128], strides = [1, 1, 1]} : vector<124x8x128xf32> to vector<1x8x128xf32>
    %175 = vector.shape_cast %174 : vector<1x8x128xf32> to vector<8x128xf32>
    %176 = vector.extract_strided_slice %53 {offsets = [46, 0, 0], sizes = [1, 8, 128], strides = [1, 1, 1]} : vector<124x8x128xf32> to vector<1x8x128xf32>
    %177 = vector.shape_cast %176 : vector<1x8x128xf32> to vector<8x128xf32>
    %178 = arith.maximumf %175, %177 : vector<8x128xf32>
    %179 = vector.extract_strided_slice %53 {offsets = [47, 0, 0], sizes = [1, 8, 128], strides = [1, 1, 1]} : vector<124x8x128xf32> to vector<1x8x128xf32>
    %180 = vector.shape_cast %179 : vector<1x8x128xf32> to vector<8x128xf32>
    %181 = arith.maximumf %178, %180 : vector<8x128xf32>
    %182 = vector.extract_strided_slice %53 {offsets = [48, 0, 0], sizes = [1, 8, 128], strides = [1, 1, 1]} : vector<124x8x128xf32> to vector<1x8x128xf32>
    %183 = vector.shape_cast %182 : vector<1x8x128xf32> to vector<8x128xf32>
    %184 = vector.extract_strided_slice %53 {offsets = [49, 0, 0], sizes = [1, 8, 128], strides = [1, 1, 1]} : vector<124x8x128xf32> to vector<1x8x128xf32>
    %185 = vector.shape_cast %184 : vector<1x8x128xf32> to vector<8x128xf32>
    %186 = arith.maximumf %183, %185 : vector<8x128xf32>
    %187 = vector.extract_strided_slice %53 {offsets = [50, 0, 0], sizes = [1, 8, 128], strides = [1, 1, 1]} : vector<124x8x128xf32> to vector<1x8x128xf32>
    %188 = vector.shape_cast %187 : vector<1x8x128xf32> to vector<8x128xf32>
    %189 = arith.maximumf %186, %188 : vector<8x128xf32>
    %190 = vector.extract_strided_slice %53 {offsets = [51, 0, 0], sizes = [1, 8, 128], strides = [1, 1, 1]} : vector<124x8x128xf32> to vector<1x8x128xf32>
    %191 = vector.shape_cast %190 : vector<1x8x128xf32> to vector<8x128xf32>
    %192 = vector.extract_strided_slice %53 {offsets = [52, 0, 0], sizes = [1, 8, 128], strides = [1, 1, 1]} : vector<124x8x128xf32> to vector<1x8x128xf32>
    %193 = vector.shape_cast %192 : vector<1x8x128xf32> to vector<8x128xf32>
    %194 = arith.maximumf %191, %193 : vector<8x128xf32>
    %195 = vector.extract_strided_slice %53 {offsets = [53, 0, 0], sizes = [1, 8, 128], strides = [1, 1, 1]} : vector<124x8x128xf32> to vector<1x8x128xf32>
    %196 = vector.shape_cast %195 : vector<1x8x128xf32> to vector<8x128xf32>
    %197 = arith.maximumf %194, %196 : vector<8x128xf32>
    %198 = vector.extract_strided_slice %53 {offsets = [54, 0, 0], sizes = [1, 8, 128], strides = [1, 1, 1]} : vector<124x8x128xf32> to vector<1x8x128xf32>
    %199 = vector.shape_cast %198 : vector<1x8x128xf32> to vector<8x128xf32>
    %200 = vector.extract_strided_slice %53 {offsets = [55, 0, 0], sizes = [1, 8, 128], strides = [1, 1, 1]} : vector<124x8x128xf32> to vector<1x8x128xf32>
    %201 = vector.shape_cast %200 : vector<1x8x128xf32> to vector<8x128xf32>
    %202 = arith.maximumf %199, %201 : vector<8x128xf32>
    %203 = vector.extract_strided_slice %53 {offsets = [56, 0, 0], sizes = [1, 8, 128], strides = [1, 1, 1]} : vector<124x8x128xf32> to vector<1x8x128xf32>
    %204 = vector.shape_cast %203 : vector<1x8x128xf32> to vector<8x128xf32>
    %205 = arith.maximumf %202, %204 : vector<8x128xf32>
    %206 = vector.extract_strided_slice %53 {offsets = [57, 0, 0], sizes = [1, 8, 128], strides = [1, 1, 1]} : vector<124x8x128xf32> to vector<1x8x128xf32>
    %207 = vector.shape_cast %206 : vector<1x8x128xf32> to vector<8x128xf32>
    %208 = vector.extract_strided_slice %53 {offsets = [58, 0, 0], sizes = [1, 8, 128], strides = [1, 1, 1]} : vector<124x8x128xf32> to vector<1x8x128xf32>
    %209 = vector.shape_cast %208 : vector<1x8x128xf32> to vector<8x128xf32>
    %210 = arith.maximumf %207, %209 : vector<8x128xf32>
    %211 = vector.extract_strided_slice %53 {offsets = [59, 0, 0], sizes = [1, 8, 128], strides = [1, 1, 1]} : vector<124x8x128xf32> to vector<1x8x128xf32>
    %212 = vector.shape_cast %211 : vector<1x8x128xf32> to vector<8x128xf32>
    %213 = arith.maximumf %210, %212 : vector<8x128xf32>
    %214 = vector.extract_strided_slice %53 {offsets = [60, 0, 0], sizes = [1, 8, 128], strides = [1, 1, 1]} : vector<124x8x128xf32> to vector<1x8x128xf32>
    %215 = vector.shape_cast %214 : vector<1x8x128xf32> to vector<8x128xf32>
    %216 = vector.extract_strided_slice %53 {offsets = [61, 0, 0], sizes = [1, 8, 128], strides = [1, 1, 1]} : vector<124x8x128xf32> to vector<1x8x128xf32>
    %217 = vector.shape_cast %216 : vector<1x8x128xf32> to vector<8x128xf32>
    %218 = arith.maximumf %215, %217 : vector<8x128xf32>
    %219 = vector.extract_strided_slice %53 {offsets = [62, 0, 0], sizes = [1, 8, 128], strides = [1, 1, 1]} : vector<124x8x128xf32> to vector<1x8x128xf32>
    %220 = vector.shape_cast %219 : vector<1x8x128xf32> to vector<8x128xf32>
    %221 = arith.maximumf %218, %220 : vector<8x128xf32>
    %222 = vector.extract_strided_slice %53 {offsets = [63, 0, 0], sizes = [1, 8, 128], strides = [1, 1, 1]} : vector<124x8x128xf32> to vector<1x8x128xf32>
    %223 = vector.shape_cast %222 : vector<1x8x128xf32> to vector<8x128xf32>
    %224 = vector.extract_strided_slice %53 {offsets = [64, 0, 0], sizes = [1, 8, 128], strides = [1, 1, 1]} : vector<124x8x128xf32> to vector<1x8x128xf32>
    %225 = vector.shape_cast %224 : vector<1x8x128xf32> to vector<8x128xf32>
    %226 = arith.maximumf %223, %225 : vector<8x128xf32>
    %227 = vector.extract_strided_slice %53 {offsets = [65, 0, 0], sizes = [1, 8, 128], strides = [1, 1, 1]} : vector<124x8x128xf32> to vector<1x8x128xf32>
    %228 = vector.shape_cast %227 : vector<1x8x128xf32> to vector<8x128xf32>
    %229 = arith.maximumf %226, %228 : vector<8x128xf32>
    %230 = vector.extract_strided_slice %53 {offsets = [66, 0, 0], sizes = [1, 8, 128], strides = [1, 1, 1]} : vector<124x8x128xf32> to vector<1x8x128xf32>
    %231 = vector.shape_cast %230 : vector<1x8x128xf32> to vector<8x128xf32>
    %232 = vector.extract_strided_slice %53 {offsets = [67, 0, 0], sizes = [1, 8, 128], strides = [1, 1, 1]} : vector<124x8x128xf32> to vector<1x8x128xf32>
    %233 = vector.shape_cast %232 : vector<1x8x128xf32> to vector<8x128xf32>
    %234 = arith.maximumf %231, %233 : vector<8x128xf32>
    %235 = vector.extract_strided_slice %53 {offsets = [68, 0, 0], sizes = [1, 8, 128], strides = [1, 1, 1]} : vector<124x8x128xf32> to vector<1x8x128xf32>
    %236 = vector.shape_cast %235 : vector<1x8x128xf32> to vector<8x128xf32>
    %237 = arith.maximumf %234, %236 : vector<8x128xf32>
    %238 = vector.extract_strided_slice %53 {offsets = [69, 0, 0], sizes = [1, 8, 128], strides = [1, 1, 1]} : vector<124x8x128xf32> to vector<1x8x128xf32>
    %239 = vector.shape_cast %238 : vector<1x8x128xf32> to vector<8x128xf32>
    %240 = vector.extract_strided_slice %53 {offsets = [70, 0, 0], sizes = [1, 8, 128], strides = [1, 1, 1]} : vector<124x8x128xf32> to vector<1x8x128xf32>
    %241 = vector.shape_cast %240 : vector<1x8x128xf32> to vector<8x128xf32>
    %242 = arith.maximumf %239, %241 : vector<8x128xf32>
    %243 = vector.extract_strided_slice %53 {offsets = [71, 0, 0], sizes = [1, 8, 128], strides = [1, 1, 1]} : vector<124x8x128xf32> to vector<1x8x128xf32>
    %244 = vector.shape_cast %243 : vector<1x8x128xf32> to vector<8x128xf32>
    %245 = arith.maximumf %242, %244 : vector<8x128xf32>
    %246 = vector.extract_strided_slice %53 {offsets = [72, 0, 0], sizes = [1, 8, 128], strides = [1, 1, 1]} : vector<124x8x128xf32> to vector<1x8x128xf32>
    %247 = vector.shape_cast %246 : vector<1x8x128xf32> to vector<8x128xf32>
    %248 = vector.extract_strided_slice %53 {offsets = [73, 0, 0], sizes = [1, 8, 128], strides = [1, 1, 1]} : vector<124x8x128xf32> to vector<1x8x128xf32>
    %249 = vector.shape_cast %248 : vector<1x8x128xf32> to vector<8x128xf32>
    %250 = arith.maximumf %247, %249 : vector<8x128xf32>
    %251 = vector.extract_strided_slice %53 {offsets = [74, 0, 0], sizes = [1, 8, 128], strides = [1, 1, 1]} : vector<124x8x128xf32> to vector<1x8x128xf32>
    %252 = vector.shape_cast %251 : vector<1x8x128xf32> to vector<8x128xf32>
    %253 = arith.maximumf %250, %252 : vector<8x128xf32>
    %254 = vector.extract_strided_slice %53 {offsets = [75, 0, 0], sizes = [1, 8, 128], strides = [1, 1, 1]} : vector<124x8x128xf32> to vector<1x8x128xf32>
    %255 = vector.shape_cast %254 : vector<1x8x128xf32> to vector<8x128xf32>
    %256 = vector.extract_strided_slice %53 {offsets = [76, 0, 0], sizes = [1, 8, 128], strides = [1, 1, 1]} : vector<124x8x128xf32> to vector<1x8x128xf32>
    %257 = vector.shape_cast %256 : vector<1x8x128xf32> to vector<8x128xf32>
    %258 = arith.maximumf %255, %257 : vector<8x128xf32>
    %259 = vector.extract_strided_slice %53 {offsets = [77, 0, 0], sizes = [1, 8, 128], strides = [1, 1, 1]} : vector<124x8x128xf32> to vector<1x8x128xf32>
    %260 = vector.shape_cast %259 : vector<1x8x128xf32> to vector<8x128xf32>
    %261 = arith.maximumf %258, %260 : vector<8x128xf32>
    %262 = vector.extract_strided_slice %53 {offsets = [78, 0, 0], sizes = [1, 8, 128], strides = [1, 1, 1]} : vector<124x8x128xf32> to vector<1x8x128xf32>
    %263 = vector.shape_cast %262 : vector<1x8x128xf32> to vector<8x128xf32>
    %264 = vector.extract_strided_slice %53 {offsets = [79, 0, 0], sizes = [1, 8, 128], strides = [1, 1, 1]} : vector<124x8x128xf32> to vector<1x8x128xf32>
    %265 = vector.shape_cast %264 : vector<1x8x128xf32> to vector<8x128xf32>
    %266 = arith.maximumf %263, %265 : vector<8x128xf32>
    %267 = vector.extract_strided_slice %53 {offsets = [80, 0, 0], sizes = [1, 8, 128], strides = [1, 1, 1]} : vector<124x8x128xf32> to vector<1x8x128xf32>
    %268 = vector.shape_cast %267 : vector<1x8x128xf32> to vector<8x128xf32>
    %269 = arith.maximumf %266, %268 : vector<8x128xf32>
    %270 = vector.extract_strided_slice %53 {offsets = [81, 0, 0], sizes = [1, 8, 128], strides = [1, 1, 1]} : vector<124x8x128xf32> to vector<1x8x128xf32>
    %271 = vector.shape_cast %270 : vector<1x8x128xf32> to vector<8x128xf32>
    %272 = vector.extract_strided_slice %53 {offsets = [82, 0, 0], sizes = [1, 8, 128], strides = [1, 1, 1]} : vector<124x8x128xf32> to vector<1x8x128xf32>
    %273 = vector.shape_cast %272 : vector<1x8x128xf32> to vector<8x128xf32>
    %274 = arith.maximumf %271, %273 : vector<8x128xf32>
    %275 = vector.extract_strided_slice %53 {offsets = [83, 0, 0], sizes = [1, 8, 128], strides = [1, 1, 1]} : vector<124x8x128xf32> to vector<1x8x128xf32>
    %276 = vector.shape_cast %275 : vector<1x8x128xf32> to vector<8x128xf32>
    %277 = arith.maximumf %274, %276 : vector<8x128xf32>
    %278 = vector.extract_strided_slice %53 {offsets = [84, 0, 0], sizes = [1, 8, 128], strides = [1, 1, 1]} : vector<124x8x128xf32> to vector<1x8x128xf32>
    %279 = vector.shape_cast %278 : vector<1x8x128xf32> to vector<8x128xf32>
    %280 = vector.extract_strided_slice %53 {offsets = [85, 0, 0], sizes = [1, 8, 128], strides = [1, 1, 1]} : vector<124x8x128xf32> to vector<1x8x128xf32>
    %281 = vector.shape_cast %280 : vector<1x8x128xf32> to vector<8x128xf32>
    %282 = arith.maximumf %279, %281 : vector<8x128xf32>
    %283 = vector.extract_strided_slice %53 {offsets = [86, 0, 0], sizes = [1, 8, 128], strides = [1, 1, 1]} : vector<124x8x128xf32> to vector<1x8x128xf32>
    %284 = vector.shape_cast %283 : vector<1x8x128xf32> to vector<8x128xf32>
    %285 = arith.maximumf %282, %284 : vector<8x128xf32>
    %286 = vector.extract_strided_slice %53 {offsets = [87, 0, 0], sizes = [1, 8, 128], strides = [1, 1, 1]} : vector<124x8x128xf32> to vector<1x8x128xf32>
    %287 = vector.shape_cast %286 : vector<1x8x128xf32> to vector<8x128xf32>
    %288 = vector.extract_strided_slice %53 {offsets = [88, 0, 0], sizes = [1, 8, 128], strides = [1, 1, 1]} : vector<124x8x128xf32> to vector<1x8x128xf32>
    %289 = vector.shape_cast %288 : vector<1x8x128xf32> to vector<8x128xf32>
    %290 = arith.maximumf %287, %289 : vector<8x128xf32>
    %291 = vector.extract_strided_slice %53 {offsets = [89, 0, 0], sizes = [1, 8, 128], strides = [1, 1, 1]} : vector<124x8x128xf32> to vector<1x8x128xf32>
    %292 = vector.shape_cast %291 : vector<1x8x128xf32> to vector<8x128xf32>
    %293 = arith.maximumf %290, %292 : vector<8x128xf32>
    %294 = vector.extract_strided_slice %53 {offsets = [90, 0, 0], sizes = [1, 8, 128], strides = [1, 1, 1]} : vector<124x8x128xf32> to vector<1x8x128xf32>
    %295 = vector.shape_cast %294 : vector<1x8x128xf32> to vector<8x128xf32>
    %296 = vector.extract_strided_slice %53 {offsets = [91, 0, 0], sizes = [1, 8, 128], strides = [1, 1, 1]} : vector<124x8x128xf32> to vector<1x8x128xf32>
    %297 = vector.shape_cast %296 : vector<1x8x128xf32> to vector<8x128xf32>
    %298 = arith.maximumf %295, %297 : vector<8x128xf32>
    %299 = vector.extract_strided_slice %53 {offsets = [92, 0, 0], sizes = [1, 8, 128], strides = [1, 1, 1]} : vector<124x8x128xf32> to vector<1x8x128xf32>
    %300 = vector.shape_cast %299 : vector<1x8x128xf32> to vector<8x128xf32>
    %301 = arith.maximumf %298, %300 : vector<8x128xf32>
    %302 = vector.extract_strided_slice %53 {offsets = [93, 0, 0], sizes = [1, 8, 128], strides = [1, 1, 1]} : vector<124x8x128xf32> to vector<1x8x128xf32>
    %303 = vector.shape_cast %302 : vector<1x8x128xf32> to vector<8x128xf32>
    %304 = vector.extract_strided_slice %53 {offsets = [94, 0, 0], sizes = [1, 8, 128], strides = [1, 1, 1]} : vector<124x8x128xf32> to vector<1x8x128xf32>
    %305 = vector.shape_cast %304 : vector<1x8x128xf32> to vector<8x128xf32>
    %306 = arith.maximumf %303, %305 : vector<8x128xf32>
    %307 = vector.extract_strided_slice %53 {offsets = [95, 0, 0], sizes = [1, 8, 128], strides = [1, 1, 1]} : vector<124x8x128xf32> to vector<1x8x128xf32>
    %308 = vector.shape_cast %307 : vector<1x8x128xf32> to vector<8x128xf32>
    %309 = arith.maximumf %306, %308 : vector<8x128xf32>
    %310 = vector.extract_strided_slice %53 {offsets = [96, 0, 0], sizes = [1, 8, 128], strides = [1, 1, 1]} : vector<124x8x128xf32> to vector<1x8x128xf32>
    %311 = vector.shape_cast %310 : vector<1x8x128xf32> to vector<8x128xf32>
    %312 = vector.extract_strided_slice %53 {offsets = [97, 0, 0], sizes = [1, 8, 128], strides = [1, 1, 1]} : vector<124x8x128xf32> to vector<1x8x128xf32>
    %313 = vector.shape_cast %312 : vector<1x8x128xf32> to vector<8x128xf32>
    %314 = arith.maximumf %311, %313 : vector<8x128xf32>
    %315 = vector.extract_strided_slice %53 {offsets = [98, 0, 0], sizes = [1, 8, 128], strides = [1, 1, 1]} : vector<124x8x128xf32> to vector<1x8x128xf32>
    %316 = vector.shape_cast %315 : vector<1x8x128xf32> to vector<8x128xf32>
    %317 = arith.maximumf %314, %316 : vector<8x128xf32>
    %318 = vector.extract_strided_slice %53 {offsets = [99, 0, 0], sizes = [1, 8, 128], strides = [1, 1, 1]} : vector<124x8x128xf32> to vector<1x8x128xf32>
    %319 = vector.shape_cast %318 : vector<1x8x128xf32> to vector<8x128xf32>
    %320 = vector.extract_strided_slice %53 {offsets = [100, 0, 0], sizes = [1, 8, 128], strides = [1, 1, 1]} : vector<124x8x128xf32> to vector<1x8x128xf32>
    %321 = vector.shape_cast %320 : vector<1x8x128xf32> to vector<8x128xf32>
    %322 = arith.maximumf %319, %321 : vector<8x128xf32>
    %323 = vector.extract_strided_slice %53 {offsets = [101, 0, 0], sizes = [1, 8, 128], strides = [1, 1, 1]} : vector<124x8x128xf32> to vector<1x8x128xf32>
    %324 = vector.shape_cast %323 : vector<1x8x128xf32> to vector<8x128xf32>
    %325 = arith.maximumf %322, %324 : vector<8x128xf32>
    %326 = vector.extract_strided_slice %53 {offsets = [102, 0, 0], sizes = [1, 8, 128], strides = [1, 1, 1]} : vector<124x8x128xf32> to vector<1x8x128xf32>
    %327 = vector.shape_cast %326 : vector<1x8x128xf32> to vector<8x128xf32>
    %328 = vector.extract_strided_slice %53 {offsets = [103, 0, 0], sizes = [1, 8, 128], strides = [1, 1, 1]} : vector<124x8x128xf32> to vector<1x8x128xf32>
    %329 = vector.shape_cast %328 : vector<1x8x128xf32> to vector<8x128xf32>
    %330 = arith.maximumf %327, %329 : vector<8x128xf32>
    %331 = vector.extract_strided_slice %53 {offsets = [104, 0, 0], sizes = [1, 8, 128], strides = [1, 1, 1]} : vector<124x8x128xf32> to vector<1x8x128xf32>
    %332 = vector.shape_cast %331 : vector<1x8x128xf32> to vector<8x128xf32>
    %333 = arith.maximumf %330, %332 : vector<8x128xf32>
    %334 = vector.extract_strided_slice %53 {offsets = [105, 0, 0], sizes = [1, 8, 128], strides = [1, 1, 1]} : vector<124x8x128xf32> to vector<1x8x128xf32>
    %335 = vector.shape_cast %334 : vector<1x8x128xf32> to vector<8x128xf32>
    %336 = vector.extract_strided_slice %53 {offsets = [106, 0, 0], sizes = [1, 8, 128], strides = [1, 1, 1]} : vector<124x8x128xf32> to vector<1x8x128xf32>
    %337 = vector.shape_cast %336 : vector<1x8x128xf32> to vector<8x128xf32>
    %338 = arith.maximumf %335, %337 : vector<8x128xf32>
    %339 = vector.extract_strided_slice %53 {offsets = [107, 0, 0], sizes = [1, 8, 128], strides = [1, 1, 1]} : vector<124x8x128xf32> to vector<1x8x128xf32>
    %340 = vector.shape_cast %339 : vector<1x8x128xf32> to vector<8x128xf32>
    %341 = arith.maximumf %338, %340 : vector<8x128xf32>
    %342 = vector.extract_strided_slice %53 {offsets = [108, 0, 0], sizes = [1, 8, 128], strides = [1, 1, 1]} : vector<124x8x128xf32> to vector<1x8x128xf32>
    %343 = vector.shape_cast %342 : vector<1x8x128xf32> to vector<8x128xf32>
    %344 = vector.extract_strided_slice %53 {offsets = [109, 0, 0], sizes = [1, 8, 128], strides = [1, 1, 1]} : vector<124x8x128xf32> to vector<1x8x128xf32>
    %345 = vector.shape_cast %344 : vector<1x8x128xf32> to vector<8x128xf32>
    %346 = arith.maximumf %343, %345 : vector<8x128xf32>
    %347 = vector.extract_strided_slice %53 {offsets = [110, 0, 0], sizes = [1, 8, 128], strides = [1, 1, 1]} : vector<124x8x128xf32> to vector<1x8x128xf32>
    %348 = vector.shape_cast %347 : vector<1x8x128xf32> to vector<8x128xf32>
    %349 = arith.maximumf %346, %348 : vector<8x128xf32>
    %350 = vector.extract_strided_slice %53 {offsets = [111, 0, 0], sizes = [1, 8, 128], strides = [1, 1, 1]} : vector<124x8x128xf32> to vector<1x8x128xf32>
    %351 = vector.shape_cast %350 : vector<1x8x128xf32> to vector<8x128xf32>
    %352 = vector.extract_strided_slice %53 {offsets = [112, 0, 0], sizes = [1, 8, 128], strides = [1, 1, 1]} : vector<124x8x128xf32> to vector<1x8x128xf32>
    %353 = vector.shape_cast %352 : vector<1x8x128xf32> to vector<8x128xf32>
    %354 = arith.maximumf %351, %353 : vector<8x128xf32>
    %355 = vector.extract_strided_slice %53 {offsets = [113, 0, 0], sizes = [1, 8, 128], strides = [1, 1, 1]} : vector<124x8x128xf32> to vector<1x8x128xf32>
    %356 = vector.shape_cast %355 : vector<1x8x128xf32> to vector<8x128xf32>
    %357 = arith.maximumf %354, %356 : vector<8x128xf32>
    %358 = vector.extract_strided_slice %53 {offsets = [114, 0, 0], sizes = [1, 8, 128], strides = [1, 1, 1]} : vector<124x8x128xf32> to vector<1x8x128xf32>
    %359 = vector.shape_cast %358 : vector<1x8x128xf32> to vector<8x128xf32>
    %360 = vector.extract_strided_slice %53 {offsets = [115, 0, 0], sizes = [1, 8, 128], strides = [1, 1, 1]} : vector<124x8x128xf32> to vector<1x8x128xf32>
    %361 = vector.shape_cast %360 : vector<1x8x128xf32> to vector<8x128xf32>
    %362 = arith.maximumf %359, %361 : vector<8x128xf32>
    %363 = vector.extract_strided_slice %53 {offsets = [116, 0, 0], sizes = [1, 8, 128], strides = [1, 1, 1]} : vector<124x8x128xf32> to vector<1x8x128xf32>
    %364 = vector.shape_cast %363 : vector<1x8x128xf32> to vector<8x128xf32>
    %365 = arith.maximumf %362, %364 : vector<8x128xf32>
    %366 = vector.extract_strided_slice %53 {offsets = [117, 0, 0], sizes = [1, 8, 128], strides = [1, 1, 1]} : vector<124x8x128xf32> to vector<1x8x128xf32>
    %367 = vector.shape_cast %366 : vector<1x8x128xf32> to vector<8x128xf32>
    %368 = vector.extract_strided_slice %53 {offsets = [118, 0, 0], sizes = [1, 8, 128], strides = [1, 1, 1]} : vector<124x8x128xf32> to vector<1x8x128xf32>
    %369 = vector.shape_cast %368 : vector<1x8x128xf32> to vector<8x128xf32>
    %370 = arith.maximumf %367, %369 : vector<8x128xf32>
    %371 = vector.extract_strided_slice %53 {offsets = [119, 0, 0], sizes = [1, 8, 128], strides = [1, 1, 1]} : vector<124x8x128xf32> to vector<1x8x128xf32>
    %372 = vector.shape_cast %371 : vector<1x8x128xf32> to vector<8x128xf32>
    %373 = arith.maximumf %370, %372 : vector<8x128xf32>
    %374 = vector.extract_strided_slice %53 {offsets = [120, 0, 0], sizes = [1, 8, 128], strides = [1, 1, 1]} : vector<124x8x128xf32> to vector<1x8x128xf32>
    %375 = vector.shape_cast %374 : vector<1x8x128xf32> to vector<8x128xf32>
    %376 = vector.extract_strided_slice %53 {offsets = [121, 0, 0], sizes = [1, 8, 128], strides = [1, 1, 1]} : vector<124x8x128xf32> to vector<1x8x128xf32>
    %377 = vector.shape_cast %376 : vector<1x8x128xf32> to vector<8x128xf32>
    %378 = arith.maximumf %375, %377 : vector<8x128xf32>
    %379 = vector.extract_strided_slice %53 {offsets = [122, 0, 0], sizes = [1, 8, 128], strides = [1, 1, 1]} : vector<124x8x128xf32> to vector<1x8x128xf32>
    %380 = vector.shape_cast %379 : vector<1x8x128xf32> to vector<8x128xf32>
    %381 = arith.maximumf %378, %380 : vector<8x128xf32>
    %382 = tpu.concatenate %61, %69, %77, %85, %93, %101, %109, %117, %125, %133, %141, %149, %157, %165, %173, %181 in 0 : vector<8x128xf32>, vector<8x128xf32>, vector<8x128xf32>, vector<8x128xf32>, vector<8x128xf32>, vector<8x128xf32>, vector<8x128xf32>, vector<8x128xf32>, vector<8x128xf32>, vector<8x128xf32>, vector<8x128xf32>, vector<8x128xf32>, vector<8x128xf32>, vector<8x128xf32>, vector<8x128xf32>, vector<8x128xf32> -> vector<128x128xf32>
    %383 = tpu.concatenate %189, %197, %205, %213, %221, %229, %237, %245, %253, %261, %269, %277, %285, %293, %301, %309 in 0 : vector<8x128xf32>, vector<8x128xf32>, vector<8x128xf32>, vector<8x128xf32>, vector<8x128xf32>, vector<8x128xf32>, vector<8x128xf32>, vector<8x128xf32>, vector<8x128xf32>, vector<8x128xf32>, vector<8x128xf32>, vector<8x128xf32>, vector<8x128xf32>, vector<8x128xf32>, vector<8x128xf32>, vector<8x128xf32> -> vector<128x128xf32>
    %384 = tpu.concatenate %317, %325, %333, %341, %349, %357, %365, %373, %381 in 0 : vector<8x128xf32>, vector<8x128xf32>, vector<8x128xf32>, vector<8x128xf32>, vector<8x128xf32>, vector<8x128xf32>, vector<8x128xf32>, vector<8x128xf32>, vector<8x128xf32> -> vector<72x128xf32>
    %385 = tpu.concatenate %382, %383, %384 in 0 : vector<128x128xf32>, vector<128x128xf32>, vector<72x128xf32> -> vector<328x128xf32>
    %c0_15 = arith.constant 0 : index
    %c0_16 = arith.constant 0 : index
    %386 = vector.load %arg4[%c0_15, %c0_16] : memref<16x40xf32, #tpu.memory_space<vmem>>, vector<16x40xf32>
    %c0_17 = arith.constant 0 : index
    %c0_18 = arith.constant 0 : index
    %387 = vector.load %arg5[%c0_17, %c0_18] : memref<16x1xf32, #tpu.memory_space<vmem>>, vector<16x1xf32>
    %388 = vector.extract_strided_slice %385 {offsets = [0, 0], sizes = [40, 128], strides = [1, 1]} : vector<328x128xf32> to vector<40x128xf32>
    %cst_19 = arith.constant dense<0.000000e+00> : vector<16x128xf32>
    %389 = tpu.matmul %386, %388, %cst_19 {dimension_numbers = #tpu.dot_dimension_numbers<[1], [0], [0], [1], [0, 0, 1, 1], [], []>} : vector<16x40xf32>, vector<40x128xf32>, vector<16x128xf32> -> vector<16x128xf32>
    %390 = vector.broadcast %387 : vector<16x1xf32> to vector<16x128xf32>
    %391 = arith.addf %389, %390 : vector<16x128xf32>
    %392 = vector.extract_strided_slice %385 {offsets = [8, 0], sizes = [40, 128], strides = [1, 1]} : vector<328x128xf32> to vector<40x128xf32>
    %cst_20 = arith.constant dense<0.000000e+00> : vector<16x128xf32>
    %393 = tpu.matmul %386, %392, %cst_20 {dimension_numbers = #tpu.dot_dimension_numbers<[1], [0], [0], [1], [0, 0, 1, 1], [], []>} : vector<16x40xf32>, vector<40x128xf32>, vector<16x128xf32> -> vector<16x128xf32>
    %394 = vector.broadcast %387 : vector<16x1xf32> to vector<16x128xf32>
    %395 = arith.addf %393, %394 : vector<16x128xf32>
    %396 = vector.extract_strided_slice %385 {offsets = [16, 0], sizes = [40, 128], strides = [1, 1]} : vector<328x128xf32> to vector<40x128xf32>
    %cst_21 = arith.constant dense<0.000000e+00> : vector<16x128xf32>
    %397 = tpu.matmul %386, %396, %cst_21 {dimension_numbers = #tpu.dot_dimension_numbers<[1], [0], [0], [1], [0, 0, 1, 1], [], []>} : vector<16x40xf32>, vector<40x128xf32>, vector<16x128xf32> -> vector<16x128xf32>
    %398 = vector.broadcast %387 : vector<16x1xf32> to vector<16x128xf32>
    %399 = arith.addf %397, %398 : vector<16x128xf32>
    %400 = vector.extract_strided_slice %385 {offsets = [24, 0], sizes = [40, 128], strides = [1, 1]} : vector<328x128xf32> to vector<40x128xf32>
    %cst_22 = arith.constant dense<0.000000e+00> : vector<16x128xf32>
    %401 = tpu.matmul %386, %400, %cst_22 {dimension_numbers = #tpu.dot_dimension_numbers<[1], [0], [0], [1], [0, 0, 1, 1], [], []>} : vector<16x40xf32>, vector<40x128xf32>, vector<16x128xf32> -> vector<16x128xf32>
    %402 = vector.broadcast %387 : vector<16x1xf32> to vector<16x128xf32>
    %403 = arith.addf %401, %402 : vector<16x128xf32>
    %404 = vector.extract_strided_slice %385 {offsets = [32, 0], sizes = [40, 128], strides = [1, 1]} : vector<328x128xf32> to vector<40x128xf32>
    %cst_23 = arith.constant dense<0.000000e+00> : vector<16x128xf32>
    %405 = tpu.matmul %386, %404, %cst_23 {dimension_numbers = #tpu.dot_dimension_numbers<[1], [0], [0], [1], [0, 0, 1, 1], [], []>} : vector<16x40xf32>, vector<40x128xf32>, vector<16x128xf32> -> vector<16x128xf32>
    %406 = vector.broadcast %387 : vector<16x1xf32> to vector<16x128xf32>
    %407 = arith.addf %405, %406 : vector<16x128xf32>
    %408 = vector.extract_strided_slice %385 {offsets = [40, 0], sizes = [40, 128], strides = [1, 1]} : vector<328x128xf32> to vector<40x128xf32>
    %cst_24 = arith.constant dense<0.000000e+00> : vector<16x128xf32>
    %409 = tpu.matmul %386, %408, %cst_24 {dimension_numbers = #tpu.dot_dimension_numbers<[1], [0], [0], [1], [0, 0, 1, 1], [], []>} : vector<16x40xf32>, vector<40x128xf32>, vector<16x128xf32> -> vector<16x128xf32>
    %410 = vector.broadcast %387 : vector<16x1xf32> to vector<16x128xf32>
    %411 = arith.addf %409, %410 : vector<16x128xf32>
    %412 = vector.extract_strided_slice %385 {offsets = [48, 0], sizes = [40, 128], strides = [1, 1]} : vector<328x128xf32> to vector<40x128xf32>
    %cst_25 = arith.constant dense<0.000000e+00> : vector<16x128xf32>
    %413 = tpu.matmul %386, %412, %cst_25 {dimension_numbers = #tpu.dot_dimension_numbers<[1], [0], [0], [1], [0, 0, 1, 1], [], []>} : vector<16x40xf32>, vector<40x128xf32>, vector<16x128xf32> -> vector<16x128xf32>
    %414 = vector.broadcast %387 : vector<16x1xf32> to vector<16x128xf32>
    %415 = arith.addf %413, %414 : vector<16x128xf32>
    %416 = vector.extract_strided_slice %385 {offsets = [56, 0], sizes = [40, 128], strides = [1, 1]} : vector<328x128xf32> to vector<40x128xf32>
    %cst_26 = arith.constant dense<0.000000e+00> : vector<16x128xf32>
    %417 = tpu.matmul %386, %416, %cst_26 {dimension_numbers = #tpu.dot_dimension_numbers<[1], [0], [0], [1], [0, 0, 1, 1], [], []>} : vector<16x40xf32>, vector<40x128xf32>, vector<16x128xf32> -> vector<16x128xf32>
    %418 = vector.broadcast %387 : vector<16x1xf32> to vector<16x128xf32>
    %419 = arith.addf %417, %418 : vector<16x128xf32>
    %420 = vector.extract_strided_slice %385 {offsets = [64, 0], sizes = [40, 128], strides = [1, 1]} : vector<328x128xf32> to vector<40x128xf32>
    %cst_27 = arith.constant dense<0.000000e+00> : vector<16x128xf32>
    %421 = tpu.matmul %386, %420, %cst_27 {dimension_numbers = #tpu.dot_dimension_numbers<[1], [0], [0], [1], [0, 0, 1, 1], [], []>} : vector<16x40xf32>, vector<40x128xf32>, vector<16x128xf32> -> vector<16x128xf32>
    %422 = vector.broadcast %387 : vector<16x1xf32> to vector<16x128xf32>
    %423 = arith.addf %421, %422 : vector<16x128xf32>
    %424 = vector.extract_strided_slice %385 {offsets = [72, 0], sizes = [40, 128], strides = [1, 1]} : vector<328x128xf32> to vector<40x128xf32>
    %cst_28 = arith.constant dense<0.000000e+00> : vector<16x128xf32>
    %425 = tpu.matmul %386, %424, %cst_28 {dimension_numbers = #tpu.dot_dimension_numbers<[1], [0], [0], [1], [0, 0, 1, 1], [], []>} : vector<16x40xf32>, vector<40x128xf32>, vector<16x128xf32> -> vector<16x128xf32>
    %426 = vector.broadcast %387 : vector<16x1xf32> to vector<16x128xf32>
    %427 = arith.addf %425, %426 : vector<16x128xf32>
    %428 = vector.extract_strided_slice %385 {offsets = [80, 0], sizes = [40, 128], strides = [1, 1]} : vector<328x128xf32> to vector<40x128xf32>
    %cst_29 = arith.constant dense<0.000000e+00> : vector<16x128xf32>
    %429 = tpu.matmul %386, %428, %cst_29 {dimension_numbers = #tpu.dot_dimension_numbers<[1], [0], [0], [1], [0, 0, 1, 1], [], []>} : vector<16x40xf32>, vector<40x128xf32>, vector<16x128xf32> -> vector<16x128xf32>
    %430 = vector.broadcast %387 : vector<16x1xf32> to vector<16x128xf32>
    %431 = arith.addf %429, %430 : vector<16x128xf32>
    %432 = vector.extract_strided_slice %385 {offsets = [88, 0], sizes = [40, 128], strides = [1, 1]} : vector<328x128xf32> to vector<40x128xf32>
    %cst_30 = arith.constant dense<0.000000e+00> : vector<16x128xf32>
    %433 = tpu.matmul %386, %432, %cst_30 {dimension_numbers = #tpu.dot_dimension_numbers<[1], [0], [0], [1], [0, 0, 1, 1], [], []>} : vector<16x40xf32>, vector<40x128xf32>, vector<16x128xf32> -> vector<16x128xf32>
    %434 = vector.broadcast %387 : vector<16x1xf32> to vector<16x128xf32>
    %435 = arith.addf %433, %434 : vector<16x128xf32>
    %436 = vector.extract_strided_slice %385 {offsets = [96, 0], sizes = [40, 128], strides = [1, 1]} : vector<328x128xf32> to vector<40x128xf32>
    %cst_31 = arith.constant dense<0.000000e+00> : vector<16x128xf32>
    %437 = tpu.matmul %386, %436, %cst_31 {dimension_numbers = #tpu.dot_dimension_numbers<[1], [0], [0], [1], [0, 0, 1, 1], [], []>} : vector<16x40xf32>, vector<40x128xf32>, vector<16x128xf32> -> vector<16x128xf32>
    %438 = vector.broadcast %387 : vector<16x1xf32> to vector<16x128xf32>
    %439 = arith.addf %437, %438 : vector<16x128xf32>
    %440 = vector.extract_strided_slice %385 {offsets = [104, 0], sizes = [40, 128], strides = [1, 1]} : vector<328x128xf32> to vector<40x128xf32>
    %cst_32 = arith.constant dense<0.000000e+00> : vector<16x128xf32>
    %441 = tpu.matmul %386, %440, %cst_32 {dimension_numbers = #tpu.dot_dimension_numbers<[1], [0], [0], [1], [0, 0, 1, 1], [], []>} : vector<16x40xf32>, vector<40x128xf32>, vector<16x128xf32> -> vector<16x128xf32>
    %442 = vector.broadcast %387 : vector<16x1xf32> to vector<16x128xf32>
    %443 = arith.addf %441, %442 : vector<16x128xf32>
    %444 = vector.extract_strided_slice %385 {offsets = [112, 0], sizes = [40, 128], strides = [1, 1]} : vector<328x128xf32> to vector<40x128xf32>
    %cst_33 = arith.constant dense<0.000000e+00> : vector<16x128xf32>
    %445 = tpu.matmul %386, %444, %cst_33 {dimension_numbers = #tpu.dot_dimension_numbers<[1], [0], [0], [1], [0, 0, 1, 1], [], []>} : vector<16x40xf32>, vector<40x128xf32>, vector<16x128xf32> -> vector<16x128xf32>
    %446 = vector.broadcast %387 : vector<16x1xf32> to vector<16x128xf32>
    %447 = arith.addf %445, %446 : vector<16x128xf32>
    %448 = vector.extract_strided_slice %385 {offsets = [120, 0], sizes = [40, 128], strides = [1, 1]} : vector<328x128xf32> to vector<40x128xf32>
    %cst_34 = arith.constant dense<0.000000e+00> : vector<16x128xf32>
    %449 = tpu.matmul %386, %448, %cst_34 {dimension_numbers = #tpu.dot_dimension_numbers<[1], [0], [0], [1], [0, 0, 1, 1], [], []>} : vector<16x40xf32>, vector<40x128xf32>, vector<16x128xf32> -> vector<16x128xf32>
    %450 = vector.broadcast %387 : vector<16x1xf32> to vector<16x128xf32>
    %451 = arith.addf %449, %450 : vector<16x128xf32>
    %452 = vector.extract_strided_slice %385 {offsets = [128, 0], sizes = [40, 128], strides = [1, 1]} : vector<328x128xf32> to vector<40x128xf32>
    %cst_35 = arith.constant dense<0.000000e+00> : vector<16x128xf32>
    %453 = tpu.matmul %386, %452, %cst_35 {dimension_numbers = #tpu.dot_dimension_numbers<[1], [0], [0], [1], [0, 0, 1, 1], [], []>} : vector<16x40xf32>, vector<40x128xf32>, vector<16x128xf32> -> vector<16x128xf32>
    %454 = vector.broadcast %387 : vector<16x1xf32> to vector<16x128xf32>
    %455 = arith.addf %453, %454 : vector<16x128xf32>
    %456 = vector.extract_strided_slice %385 {offsets = [136, 0], sizes = [40, 128], strides = [1, 1]} : vector<328x128xf32> to vector<40x128xf32>
    %cst_36 = arith.constant dense<0.000000e+00> : vector<16x128xf32>
    %457 = tpu.matmul %386, %456, %cst_36 {dimension_numbers = #tpu.dot_dimension_numbers<[1], [0], [0], [1], [0, 0, 1, 1], [], []>} : vector<16x40xf32>, vector<40x128xf32>, vector<16x128xf32> -> vector<16x128xf32>
    %458 = vector.broadcast %387 : vector<16x1xf32> to vector<16x128xf32>
    %459 = arith.addf %457, %458 : vector<16x128xf32>
    %460 = vector.extract_strided_slice %385 {offsets = [144, 0], sizes = [40, 128], strides = [1, 1]} : vector<328x128xf32> to vector<40x128xf32>
    %cst_37 = arith.constant dense<0.000000e+00> : vector<16x128xf32>
    %461 = tpu.matmul %386, %460, %cst_37 {dimension_numbers = #tpu.dot_dimension_numbers<[1], [0], [0], [1], [0, 0, 1, 1], [], []>} : vector<16x40xf32>, vector<40x128xf32>, vector<16x128xf32> -> vector<16x128xf32>
    %462 = vector.broadcast %387 : vector<16x1xf32> to vector<16x128xf32>
    %463 = arith.addf %461, %462 : vector<16x128xf32>
    %464 = vector.extract_strided_slice %385 {offsets = [152, 0], sizes = [40, 128], strides = [1, 1]} : vector<328x128xf32> to vector<40x128xf32>
    %cst_38 = arith.constant dense<0.000000e+00> : vector<16x128xf32>
    %465 = tpu.matmul %386, %464, %cst_38 {dimension_numbers = #tpu.dot_dimension_numbers<[1], [0], [0], [1], [0, 0, 1, 1], [], []>} : vector<16x40xf32>, vector<40x128xf32>, vector<16x128xf32> -> vector<16x128xf32>
    %466 = vector.broadcast %387 : vector<16x1xf32> to vector<16x128xf32>
    %467 = arith.addf %465, %466 : vector<16x128xf32>
    %468 = vector.extract_strided_slice %385 {offsets = [160, 0], sizes = [40, 128], strides = [1, 1]} : vector<328x128xf32> to vector<40x128xf32>
    %cst_39 = arith.constant dense<0.000000e+00> : vector<16x128xf32>
    %469 = tpu.matmul %386, %468, %cst_39 {dimension_numbers = #tpu.dot_dimension_numbers<[1], [0], [0], [1], [0, 0, 1, 1], [], []>} : vector<16x40xf32>, vector<40x128xf32>, vector<16x128xf32> -> vector<16x128xf32>
    %470 = vector.broadcast %387 : vector<16x1xf32> to vector<16x128xf32>
    %471 = arith.addf %469, %470 : vector<16x128xf32>
    %472 = vector.extract_strided_slice %385 {offsets = [168, 0], sizes = [40, 128], strides = [1, 1]} : vector<328x128xf32> to vector<40x128xf32>
    %cst_40 = arith.constant dense<0.000000e+00> : vector<16x128xf32>
    %473 = tpu.matmul %386, %472, %cst_40 {dimension_numbers = #tpu.dot_dimension_numbers<[1], [0], [0], [1], [0, 0, 1, 1], [], []>} : vector<16x40xf32>, vector<40x128xf32>, vector<16x128xf32> -> vector<16x128xf32>
    %474 = vector.broadcast %387 : vector<16x1xf32> to vector<16x128xf32>
    %475 = arith.addf %473, %474 : vector<16x128xf32>
    %476 = vector.extract_strided_slice %385 {offsets = [176, 0], sizes = [40, 128], strides = [1, 1]} : vector<328x128xf32> to vector<40x128xf32>
    %cst_41 = arith.constant dense<0.000000e+00> : vector<16x128xf32>
    %477 = tpu.matmul %386, %476, %cst_41 {dimension_numbers = #tpu.dot_dimension_numbers<[1], [0], [0], [1], [0, 0, 1, 1], [], []>} : vector<16x40xf32>, vector<40x128xf32>, vector<16x128xf32> -> vector<16x128xf32>
    %478 = vector.broadcast %387 : vector<16x1xf32> to vector<16x128xf32>
    %479 = arith.addf %477, %478 : vector<16x128xf32>
    %480 = vector.extract_strided_slice %385 {offsets = [184, 0], sizes = [40, 128], strides = [1, 1]} : vector<328x128xf32> to vector<40x128xf32>
    %cst_42 = arith.constant dense<0.000000e+00> : vector<16x128xf32>
    %481 = tpu.matmul %386, %480, %cst_42 {dimension_numbers = #tpu.dot_dimension_numbers<[1], [0], [0], [1], [0, 0, 1, 1], [], []>} : vector<16x40xf32>, vector<40x128xf32>, vector<16x128xf32> -> vector<16x128xf32>
    %482 = vector.broadcast %387 : vector<16x1xf32> to vector<16x128xf32>
    %483 = arith.addf %481, %482 : vector<16x128xf32>
    %484 = vector.extract_strided_slice %385 {offsets = [192, 0], sizes = [40, 128], strides = [1, 1]} : vector<328x128xf32> to vector<40x128xf32>
    %cst_43 = arith.constant dense<0.000000e+00> : vector<16x128xf32>
    %485 = tpu.matmul %386, %484, %cst_43 {dimension_numbers = #tpu.dot_dimension_numbers<[1], [0], [0], [1], [0, 0, 1, 1], [], []>} : vector<16x40xf32>, vector<40x128xf32>, vector<16x128xf32> -> vector<16x128xf32>
    %486 = vector.broadcast %387 : vector<16x1xf32> to vector<16x128xf32>
    %487 = arith.addf %485, %486 : vector<16x128xf32>
    %488 = vector.extract_strided_slice %385 {offsets = [200, 0], sizes = [40, 128], strides = [1, 1]} : vector<328x128xf32> to vector<40x128xf32>
    %cst_44 = arith.constant dense<0.000000e+00> : vector<16x128xf32>
    %489 = tpu.matmul %386, %488, %cst_44 {dimension_numbers = #tpu.dot_dimension_numbers<[1], [0], [0], [1], [0, 0, 1, 1], [], []>} : vector<16x40xf32>, vector<40x128xf32>, vector<16x128xf32> -> vector<16x128xf32>
    %490 = vector.broadcast %387 : vector<16x1xf32> to vector<16x128xf32>
    %491 = arith.addf %489, %490 : vector<16x128xf32>
    %492 = vector.extract_strided_slice %385 {offsets = [208, 0], sizes = [40, 128], strides = [1, 1]} : vector<328x128xf32> to vector<40x128xf32>
    %cst_45 = arith.constant dense<0.000000e+00> : vector<16x128xf32>
    %493 = tpu.matmul %386, %492, %cst_45 {dimension_numbers = #tpu.dot_dimension_numbers<[1], [0], [0], [1], [0, 0, 1, 1], [], []>} : vector<16x40xf32>, vector<40x128xf32>, vector<16x128xf32> -> vector<16x128xf32>
    %494 = vector.broadcast %387 : vector<16x1xf32> to vector<16x128xf32>
    %495 = arith.addf %493, %494 : vector<16x128xf32>
    %496 = vector.extract_strided_slice %385 {offsets = [216, 0], sizes = [40, 128], strides = [1, 1]} : vector<328x128xf32> to vector<40x128xf32>
    %cst_46 = arith.constant dense<0.000000e+00> : vector<16x128xf32>
    %497 = tpu.matmul %386, %496, %cst_46 {dimension_numbers = #tpu.dot_dimension_numbers<[1], [0], [0], [1], [0, 0, 1, 1], [], []>} : vector<16x40xf32>, vector<40x128xf32>, vector<16x128xf32> -> vector<16x128xf32>
    %498 = vector.broadcast %387 : vector<16x1xf32> to vector<16x128xf32>
    %499 = arith.addf %497, %498 : vector<16x128xf32>
    %500 = vector.extract_strided_slice %385 {offsets = [224, 0], sizes = [40, 128], strides = [1, 1]} : vector<328x128xf32> to vector<40x128xf32>
    %cst_47 = arith.constant dense<0.000000e+00> : vector<16x128xf32>
    %501 = tpu.matmul %386, %500, %cst_47 {dimension_numbers = #tpu.dot_dimension_numbers<[1], [0], [0], [1], [0, 0, 1, 1], [], []>} : vector<16x40xf32>, vector<40x128xf32>, vector<16x128xf32> -> vector<16x128xf32>
    %502 = vector.broadcast %387 : vector<16x1xf32> to vector<16x128xf32>
    %503 = arith.addf %501, %502 : vector<16x128xf32>
    %504 = vector.extract_strided_slice %385 {offsets = [232, 0], sizes = [40, 128], strides = [1, 1]} : vector<328x128xf32> to vector<40x128xf32>
    %cst_48 = arith.constant dense<0.000000e+00> : vector<16x128xf32>
    %505 = tpu.matmul %386, %504, %cst_48 {dimension_numbers = #tpu.dot_dimension_numbers<[1], [0], [0], [1], [0, 0, 1, 1], [], []>} : vector<16x40xf32>, vector<40x128xf32>, vector<16x128xf32> -> vector<16x128xf32>
    %506 = vector.broadcast %387 : vector<16x1xf32> to vector<16x128xf32>
    %507 = arith.addf %505, %506 : vector<16x128xf32>
    %508 = vector.extract_strided_slice %385 {offsets = [240, 0], sizes = [40, 128], strides = [1, 1]} : vector<328x128xf32> to vector<40x128xf32>
    %cst_49 = arith.constant dense<0.000000e+00> : vector<16x128xf32>
    %509 = tpu.matmul %386, %508, %cst_49 {dimension_numbers = #tpu.dot_dimension_numbers<[1], [0], [0], [1], [0, 0, 1, 1], [], []>} : vector<16x40xf32>, vector<40x128xf32>, vector<16x128xf32> -> vector<16x128xf32>
    %510 = vector.broadcast %387 : vector<16x1xf32> to vector<16x128xf32>
    %511 = arith.addf %509, %510 : vector<16x128xf32>
    %512 = vector.extract_strided_slice %385 {offsets = [248, 0], sizes = [40, 128], strides = [1, 1]} : vector<328x128xf32> to vector<40x128xf32>
    %cst_50 = arith.constant dense<0.000000e+00> : vector<16x128xf32>
    %513 = tpu.matmul %386, %512, %cst_50 {dimension_numbers = #tpu.dot_dimension_numbers<[1], [0], [0], [1], [0, 0, 1, 1], [], []>} : vector<16x40xf32>, vector<40x128xf32>, vector<16x128xf32> -> vector<16x128xf32>
    %514 = vector.broadcast %387 : vector<16x1xf32> to vector<16x128xf32>
    %515 = arith.addf %513, %514 : vector<16x128xf32>
    %516 = vector.extract_strided_slice %385 {offsets = [256, 0], sizes = [40, 128], strides = [1, 1]} : vector<328x128xf32> to vector<40x128xf32>
    %cst_51 = arith.constant dense<0.000000e+00> : vector<16x128xf32>
    %517 = tpu.matmul %386, %516, %cst_51 {dimension_numbers = #tpu.dot_dimension_numbers<[1], [0], [0], [1], [0, 0, 1, 1], [], []>} : vector<16x40xf32>, vector<40x128xf32>, vector<16x128xf32> -> vector<16x128xf32>
    %518 = vector.broadcast %387 : vector<16x1xf32> to vector<16x128xf32>
    %519 = arith.addf %517, %518 : vector<16x128xf32>
    %520 = vector.extract_strided_slice %385 {offsets = [264, 0], sizes = [40, 128], strides = [1, 1]} : vector<328x128xf32> to vector<40x128xf32>
    %cst_52 = arith.constant dense<0.000000e+00> : vector<16x128xf32>
    %521 = tpu.matmul %386, %520, %cst_52 {dimension_numbers = #tpu.dot_dimension_numbers<[1], [0], [0], [1], [0, 0, 1, 1], [], []>} : vector<16x40xf32>, vector<40x128xf32>, vector<16x128xf32> -> vector<16x128xf32>
    %522 = vector.broadcast %387 : vector<16x1xf32> to vector<16x128xf32>
    %523 = arith.addf %521, %522 : vector<16x128xf32>
    %524 = vector.extract_strided_slice %385 {offsets = [272, 0], sizes = [40, 128], strides = [1, 1]} : vector<328x128xf32> to vector<40x128xf32>
    %cst_53 = arith.constant dense<0.000000e+00> : vector<16x128xf32>
    %525 = tpu.matmul %386, %524, %cst_53 {dimension_numbers = #tpu.dot_dimension_numbers<[1], [0], [0], [1], [0, 0, 1, 1], [], []>} : vector<16x40xf32>, vector<40x128xf32>, vector<16x128xf32> -> vector<16x128xf32>
    %526 = vector.broadcast %387 : vector<16x1xf32> to vector<16x128xf32>
    %527 = arith.addf %525, %526 : vector<16x128xf32>
    %528 = vector.extract_strided_slice %385 {offsets = [280, 0], sizes = [40, 128], strides = [1, 1]} : vector<328x128xf32> to vector<40x128xf32>
    %cst_54 = arith.constant dense<0.000000e+00> : vector<16x128xf32>
    %529 = tpu.matmul %386, %528, %cst_54 {dimension_numbers = #tpu.dot_dimension_numbers<[1], [0], [0], [1], [0, 0, 1, 1], [], []>} : vector<16x40xf32>, vector<40x128xf32>, vector<16x128xf32> -> vector<16x128xf32>
    %530 = vector.broadcast %387 : vector<16x1xf32> to vector<16x128xf32>
    %531 = arith.addf %529, %530 : vector<16x128xf32>
    %532 = vector.extract_strided_slice %385 {offsets = [288, 0], sizes = [40, 128], strides = [1, 1]} : vector<328x128xf32> to vector<40x128xf32>
    %cst_55 = arith.constant dense<0.000000e+00> : vector<16x128xf32>
    %533 = tpu.matmul %386, %532, %cst_55 {dimension_numbers = #tpu.dot_dimension_numbers<[1], [0], [0], [1], [0, 0, 1, 1], [], []>} : vector<16x40xf32>, vector<40x128xf32>, vector<16x128xf32> -> vector<16x128xf32>
    %534 = vector.broadcast %387 : vector<16x1xf32> to vector<16x128xf32>
    %535 = arith.addf %533, %534 : vector<16x128xf32>
    %536 = tpu.concatenate %391, %395, %399, %403, %407, %411, %415, %419, %423, %427, %431, %435, %439, %443, %447, %451 in 0 : vector<16x128xf32>, vector<16x128xf32>, vector<16x128xf32>, vector<16x128xf32>, vector<16x128xf32>, vector<16x128xf32>, vector<16x128xf32>, vector<16x128xf32>, vector<16x128xf32>, vector<16x128xf32>, vector<16x128xf32>, vector<16x128xf32>, vector<16x128xf32>, vector<16x128xf32>, vector<16x128xf32>, vector<16x128xf32> -> vector<256x128xf32>
    %537 = tpu.concatenate %455, %459, %463, %467, %471, %475, %479, %483, %487, %491, %495, %499, %503, %507, %511, %515 in 0 : vector<16x128xf32>, vector<16x128xf32>, vector<16x128xf32>, vector<16x128xf32>, vector<16x128xf32>, vector<16x128xf32>, vector<16x128xf32>, vector<16x128xf32>, vector<16x128xf32>, vector<16x128xf32>, vector<16x128xf32>, vector<16x128xf32>, vector<16x128xf32>, vector<16x128xf32>, vector<16x128xf32>, vector<16x128xf32> -> vector<256x128xf32>
    %538 = tpu.concatenate %519, %523, %527, %531, %535 in 0 : vector<16x128xf32>, vector<16x128xf32>, vector<16x128xf32>, vector<16x128xf32>, vector<16x128xf32> -> vector<80x128xf32>
    %539 = tpu.concatenate %536, %537, %538 in 0 : vector<256x128xf32>, vector<256x128xf32>, vector<80x128xf32> -> vector<592x128xf32>
    %cst_56 = arith.constant 0.000000e+00 : f32
    %540 = vector.broadcast %cst_56 : f32 to vector<592x128xf32>
    %541 = arith.cmpf ogt, %539, %540 : vector<592x128xf32>
    %cst_57 = arith.constant 0.00999999977 : f32
    %542 = vector.broadcast %cst_57 : f32 to vector<592x128xf32>
    %543 = arith.mulf %542, %539 : vector<592x128xf32>
    %544 = arith.select %541, %539, %543 : vector<592x128xi1>, vector<592x128xf32>
    %545 = vector.extract_strided_slice %544 {offsets = [0, 0], sizes = [16, 128], strides = [1, 1]} : vector<592x128xf32> to vector<16x128xf32>
    %546 = vector.extract_strided_slice %544 {offsets = [16, 0], sizes = [16, 128], strides = [1, 1]} : vector<592x128xf32> to vector<16x128xf32>
    %547 = arith.maximumf %545, %546 : vector<16x128xf32>
    %548 = vector.extract_strided_slice %544 {offsets = [32, 0], sizes = [16, 128], strides = [1, 1]} : vector<592x128xf32> to vector<16x128xf32>
    %549 = arith.maximumf %547, %548 : vector<16x128xf32>
    %550 = vector.extract_strided_slice %544 {offsets = [48, 0], sizes = [16, 128], strides = [1, 1]} : vector<592x128xf32> to vector<16x128xf32>
    %551 = vector.extract_strided_slice %544 {offsets = [64, 0], sizes = [16, 128], strides = [1, 1]} : vector<592x128xf32> to vector<16x128xf32>
    %552 = arith.maximumf %550, %551 : vector<16x128xf32>
    %553 = vector.extract_strided_slice %544 {offsets = [80, 0], sizes = [16, 128], strides = [1, 1]} : vector<592x128xf32> to vector<16x128xf32>
    %554 = arith.maximumf %552, %553 : vector<16x128xf32>
    %555 = vector.extract_strided_slice %544 {offsets = [96, 0], sizes = [16, 128], strides = [1, 1]} : vector<592x128xf32> to vector<16x128xf32>
    %556 = vector.extract_strided_slice %544 {offsets = [112, 0], sizes = [16, 128], strides = [1, 1]} : vector<592x128xf32> to vector<16x128xf32>
    %557 = arith.maximumf %555, %556 : vector<16x128xf32>
    %558 = vector.extract_strided_slice %544 {offsets = [128, 0], sizes = [16, 128], strides = [1, 1]} : vector<592x128xf32> to vector<16x128xf32>
    %559 = arith.maximumf %557, %558 : vector<16x128xf32>
    %560 = vector.extract_strided_slice %544 {offsets = [144, 0], sizes = [16, 128], strides = [1, 1]} : vector<592x128xf32> to vector<16x128xf32>
    %561 = vector.extract_strided_slice %544 {offsets = [160, 0], sizes = [16, 128], strides = [1, 1]} : vector<592x128xf32> to vector<16x128xf32>
    %562 = arith.maximumf %560, %561 : vector<16x128xf32>
    %563 = vector.extract_strided_slice %544 {offsets = [176, 0], sizes = [16, 128], strides = [1, 1]} : vector<592x128xf32> to vector<16x128xf32>
    %564 = arith.maximumf %562, %563 : vector<16x128xf32>
    %565 = vector.extract_strided_slice %544 {offsets = [192, 0], sizes = [16, 128], strides = [1, 1]} : vector<592x128xf32> to vector<16x128xf32>
    %566 = vector.extract_strided_slice %544 {offsets = [208, 0], sizes = [16, 128], strides = [1, 1]} : vector<592x128xf32> to vector<16x128xf32>
    %567 = arith.maximumf %565, %566 : vector<16x128xf32>
    %568 = vector.extract_strided_slice %544 {offsets = [224, 0], sizes = [16, 128], strides = [1, 1]} : vector<592x128xf32> to vector<16x128xf32>
    %569 = arith.maximumf %567, %568 : vector<16x128xf32>
    %570 = vector.extract_strided_slice %544 {offsets = [240, 0], sizes = [16, 128], strides = [1, 1]} : vector<592x128xf32> to vector<16x128xf32>
    %571 = vector.extract_strided_slice %544 {offsets = [256, 0], sizes = [16, 128], strides = [1, 1]} : vector<592x128xf32> to vector<16x128xf32>
    %572 = arith.maximumf %570, %571 : vector<16x128xf32>
    %573 = vector.extract_strided_slice %544 {offsets = [272, 0], sizes = [16, 128], strides = [1, 1]} : vector<592x128xf32> to vector<16x128xf32>
    %574 = arith.maximumf %572, %573 : vector<16x128xf32>
    %575 = vector.extract_strided_slice %544 {offsets = [288, 0], sizes = [16, 128], strides = [1, 1]} : vector<592x128xf32> to vector<16x128xf32>
    %576 = vector.extract_strided_slice %544 {offsets = [304, 0], sizes = [16, 128], strides = [1, 1]} : vector<592x128xf32> to vector<16x128xf32>
    %577 = arith.maximumf %575, %576 : vector<16x128xf32>
    %578 = vector.extract_strided_slice %544 {offsets = [320, 0], sizes = [16, 128], strides = [1, 1]} : vector<592x128xf32> to vector<16x128xf32>
    %579 = arith.maximumf %577, %578 : vector<16x128xf32>
    %580 = vector.extract_strided_slice %544 {offsets = [336, 0], sizes = [16, 128], strides = [1, 1]} : vector<592x128xf32> to vector<16x128xf32>
    %581 = vector.extract_strided_slice %544 {offsets = [352, 0], sizes = [16, 128], strides = [1, 1]} : vector<592x128xf32> to vector<16x128xf32>
    %582 = arith.maximumf %580, %581 : vector<16x128xf32>
    %583 = vector.extract_strided_slice %544 {offsets = [368, 0], sizes = [16, 128], strides = [1, 1]} : vector<592x128xf32> to vector<16x128xf32>
    %584 = arith.maximumf %582, %583 : vector<16x128xf32>
    %585 = vector.extract_strided_slice %544 {offsets = [384, 0], sizes = [16, 128], strides = [1, 1]} : vector<592x128xf32> to vector<16x128xf32>
    %586 = vector.extract_strided_slice %544 {offsets = [400, 0], sizes = [16, 128], strides = [1, 1]} : vector<592x128xf32> to vector<16x128xf32>
    %587 = arith.maximumf %585, %586 : vector<16x128xf32>
    %588 = vector.extract_strided_slice %544 {offsets = [416, 0], sizes = [16, 128], strides = [1, 1]} : vector<592x128xf32> to vector<16x128xf32>
    %589 = arith.maximumf %587, %588 : vector<16x128xf32>
    %590 = vector.extract_strided_slice %544 {offsets = [432, 0], sizes = [16, 128], strides = [1, 1]} : vector<592x128xf32> to vector<16x128xf32>
    %591 = vector.extract_strided_slice %544 {offsets = [448, 0], sizes = [16, 128], strides = [1, 1]} : vector<592x128xf32> to vector<16x128xf32>
    %592 = arith.maximumf %590, %591 : vector<16x128xf32>
    %593 = vector.extract_strided_slice %544 {offsets = [464, 0], sizes = [16, 128], strides = [1, 1]} : vector<592x128xf32> to vector<16x128xf32>
    %594 = arith.maximumf %592, %593 : vector<16x128xf32>
    %595 = vector.extract_strided_slice %544 {offsets = [480, 0], sizes = [16, 128], strides = [1, 1]} : vector<592x128xf32> to vector<16x128xf32>
    %596 = vector.extract_strided_slice %544 {offsets = [496, 0], sizes = [16, 128], strides = [1, 1]} : vector<592x128xf32> to vector<16x128xf32>
    %597 = arith.maximumf %595, %596 : vector<16x128xf32>
    %598 = vector.extract_strided_slice %544 {offsets = [512, 0], sizes = [16, 128], strides = [1, 1]} : vector<592x128xf32> to vector<16x128xf32>
    %599 = arith.maximumf %597, %598 : vector<16x128xf32>
    %600 = vector.extract_strided_slice %544 {offsets = [528, 0], sizes = [16, 128], strides = [1, 1]} : vector<592x128xf32> to vector<16x128xf32>
    %601 = vector.extract_strided_slice %544 {offsets = [544, 0], sizes = [16, 128], strides = [1, 1]} : vector<592x128xf32> to vector<16x128xf32>
    %602 = arith.maximumf %600, %601 : vector<16x128xf32>
    %603 = vector.extract_strided_slice %544 {offsets = [560, 0], sizes = [16, 128], strides = [1, 1]} : vector<592x128xf32> to vector<16x128xf32>
    %604 = arith.maximumf %602, %603 : vector<16x128xf32>
    %605 = tpu.concatenate %549, %554, %559, %564, %569, %574, %579, %584, %589, %594, %599, %604 in 0 : vector<16x128xf32>, vector<16x128xf32>, vector<16x128xf32>, vector<16x128xf32>, vector<16x128xf32>, vector<16x128xf32>, vector<16x128xf32>, vector<16x128xf32>, vector<16x128xf32>, vector<16x128xf32>, vector<16x128xf32>, vector<16x128xf32> -> vector<192x128xf32>
    %c0_58 = arith.constant 0 : index
    %c0_59 = arith.constant 0 : index
    %606 = vector.load %arg6[%c0_58, %c0_59] : memref<32x80xf32, #tpu.memory_space<vmem>>, vector<32x80xf32>
    %c0_60 = arith.constant 0 : index
    %c0_61 = arith.constant 0 : index
    %607 = vector.load %arg7[%c0_60, %c0_61] : memref<32x1xf32, #tpu.memory_space<vmem>>, vector<32x1xf32>
    %608 = vector.extract_strided_slice %605 {offsets = [0, 0], sizes = [80, 128], strides = [1, 1]} : vector<192x128xf32> to vector<80x128xf32>
    %cst_62 = arith.constant dense<0.000000e+00> : vector<32x128xf32>
    %609 = tpu.matmul %606, %608, %cst_62 {dimension_numbers = #tpu.dot_dimension_numbers<[1], [0], [0], [1], [0, 0, 1, 1], [], []>} : vector<32x80xf32>, vector<80x128xf32>, vector<32x128xf32> -> vector<32x128xf32>
    %610 = vector.broadcast %607 : vector<32x1xf32> to vector<32x128xf32>
    %611 = arith.addf %609, %610 : vector<32x128xf32>
    %612 = vector.extract_strided_slice %605 {offsets = [16, 0], sizes = [80, 128], strides = [1, 1]} : vector<192x128xf32> to vector<80x128xf32>
    %cst_63 = arith.constant dense<0.000000e+00> : vector<32x128xf32>
    %613 = tpu.matmul %606, %612, %cst_63 {dimension_numbers = #tpu.dot_dimension_numbers<[1], [0], [0], [1], [0, 0, 1, 1], [], []>} : vector<32x80xf32>, vector<80x128xf32>, vector<32x128xf32> -> vector<32x128xf32>
    %614 = vector.broadcast %607 : vector<32x1xf32> to vector<32x128xf32>
    %615 = arith.addf %613, %614 : vector<32x128xf32>
    %616 = vector.extract_strided_slice %605 {offsets = [32, 0], sizes = [80, 128], strides = [1, 1]} : vector<192x128xf32> to vector<80x128xf32>
    %cst_64 = arith.constant dense<0.000000e+00> : vector<32x128xf32>
    %617 = tpu.matmul %606, %616, %cst_64 {dimension_numbers = #tpu.dot_dimension_numbers<[1], [0], [0], [1], [0, 0, 1, 1], [], []>} : vector<32x80xf32>, vector<80x128xf32>, vector<32x128xf32> -> vector<32x128xf32>
    %618 = vector.broadcast %607 : vector<32x1xf32> to vector<32x128xf32>
    %619 = arith.addf %617, %618 : vector<32x128xf32>
    %620 = vector.extract_strided_slice %605 {offsets = [48, 0], sizes = [80, 128], strides = [1, 1]} : vector<192x128xf32> to vector<80x128xf32>
    %cst_65 = arith.constant dense<0.000000e+00> : vector<32x128xf32>
    %621 = tpu.matmul %606, %620, %cst_65 {dimension_numbers = #tpu.dot_dimension_numbers<[1], [0], [0], [1], [0, 0, 1, 1], [], []>} : vector<32x80xf32>, vector<80x128xf32>, vector<32x128xf32> -> vector<32x128xf32>
    %622 = vector.broadcast %607 : vector<32x1xf32> to vector<32x128xf32>
    %623 = arith.addf %621, %622 : vector<32x128xf32>
    %624 = vector.extract_strided_slice %605 {offsets = [64, 0], sizes = [80, 128], strides = [1, 1]} : vector<192x128xf32> to vector<80x128xf32>
    %cst_66 = arith.constant dense<0.000000e+00> : vector<32x128xf32>
    %625 = tpu.matmul %606, %624, %cst_66 {dimension_numbers = #tpu.dot_dimension_numbers<[1], [0], [0], [1], [0, 0, 1, 1], [], []>} : vector<32x80xf32>, vector<80x128xf32>, vector<32x128xf32> -> vector<32x128xf32>
    %626 = vector.broadcast %607 : vector<32x1xf32> to vector<32x128xf32>
    %627 = arith.addf %625, %626 : vector<32x128xf32>
    %628 = vector.extract_strided_slice %605 {offsets = [80, 0], sizes = [80, 128], strides = [1, 1]} : vector<192x128xf32> to vector<80x128xf32>
    %cst_67 = arith.constant dense<0.000000e+00> : vector<32x128xf32>
    %629 = tpu.matmul %606, %628, %cst_67 {dimension_numbers = #tpu.dot_dimension_numbers<[1], [0], [0], [1], [0, 0, 1, 1], [], []>} : vector<32x80xf32>, vector<80x128xf32>, vector<32x128xf32> -> vector<32x128xf32>
    %630 = vector.broadcast %607 : vector<32x1xf32> to vector<32x128xf32>
    %631 = arith.addf %629, %630 : vector<32x128xf32>
    %632 = vector.extract_strided_slice %605 {offsets = [96, 0], sizes = [80, 128], strides = [1, 1]} : vector<192x128xf32> to vector<80x128xf32>
    %cst_68 = arith.constant dense<0.000000e+00> : vector<32x128xf32>
    %633 = tpu.matmul %606, %632, %cst_68 {dimension_numbers = #tpu.dot_dimension_numbers<[1], [0], [0], [1], [0, 0, 1, 1], [], []>} : vector<32x80xf32>, vector<80x128xf32>, vector<32x128xf32> -> vector<32x128xf32>
    %634 = vector.broadcast %607 : vector<32x1xf32> to vector<32x128xf32>
    %635 = arith.addf %633, %634 : vector<32x128xf32>
    %636 = vector.extract_strided_slice %605 {offsets = [112, 0], sizes = [80, 128], strides = [1, 1]} : vector<192x128xf32> to vector<80x128xf32>
    %cst_69 = arith.constant dense<0.000000e+00> : vector<32x128xf32>
    %637 = tpu.matmul %606, %636, %cst_69 {dimension_numbers = #tpu.dot_dimension_numbers<[1], [0], [0], [1], [0, 0, 1, 1], [], []>} : vector<32x80xf32>, vector<80x128xf32>, vector<32x128xf32> -> vector<32x128xf32>
    %638 = vector.broadcast %607 : vector<32x1xf32> to vector<32x128xf32>
    %639 = arith.addf %637, %638 : vector<32x128xf32>
    %640 = tpu.concatenate %611, %615, %619, %623, %627, %631, %635, %639 in 0 : vector<32x128xf32>, vector<32x128xf32>, vector<32x128xf32>, vector<32x128xf32>, vector<32x128xf32>, vector<32x128xf32>, vector<32x128xf32>, vector<32x128xf32> -> vector<256x128xf32>
    %cst_70 = arith.constant 0.000000e+00 : f32
    %641 = vector.broadcast %cst_70 : f32 to vector<256x128xf32>
    %642 = arith.cmpf ogt, %640, %641 : vector<256x128xf32>
    %cst_71 = arith.constant 0.00999999977 : f32
    %643 = vector.broadcast %cst_71 : f32 to vector<256x128xf32>
    %644 = arith.mulf %643, %640 : vector<256x128xf32>
    %645 = arith.select %642, %640, %644 : vector<256x128xi1>, vector<256x128xf32>
    %646 = vector.extract_strided_slice %645 {offsets = [0, 0], sizes = [32, 128], strides = [1, 1]} : vector<256x128xf32> to vector<32x128xf32>
    %647 = vector.extract_strided_slice %645 {offsets = [32, 0], sizes = [32, 128], strides = [1, 1]} : vector<256x128xf32> to vector<32x128xf32>
    %648 = arith.maximumf %646, %647 : vector<32x128xf32>
    %649 = vector.extract_strided_slice %645 {offsets = [64, 0], sizes = [32, 128], strides = [1, 1]} : vector<256x128xf32> to vector<32x128xf32>
    %650 = arith.maximumf %648, %649 : vector<32x128xf32>
    %651 = vector.extract_strided_slice %645 {offsets = [96, 0], sizes = [32, 128], strides = [1, 1]} : vector<256x128xf32> to vector<32x128xf32>
    %652 = vector.extract_strided_slice %645 {offsets = [128, 0], sizes = [32, 128], strides = [1, 1]} : vector<256x128xf32> to vector<32x128xf32>
    %653 = arith.maximumf %651, %652 : vector<32x128xf32>
    %654 = vector.extract_strided_slice %645 {offsets = [160, 0], sizes = [32, 128], strides = [1, 1]} : vector<256x128xf32> to vector<32x128xf32>
    %655 = arith.maximumf %653, %654 : vector<32x128xf32>
    %656 = tpu.concatenate %650, %655 in 0 : vector<32x128xf32>, vector<32x128xf32> -> vector<64x128xf32>
    %c0_72 = arith.constant 0 : index
    %c0_73 = arith.constant 0 : index
    %657 = vector.load %arg8[%c0_72, %c0_73] : memref<1x64xf32, #tpu.memory_space<vmem>>, vector<1x64xf32>
    %cst_74 = arith.constant dense<0.000000e+00> : vector<1x128xf32>
    %658 = tpu.matmul %657, %656, %cst_74 {dimension_numbers = #tpu.dot_dimension_numbers<[1], [0], [0], [1], [0, 0, 1, 1], [], []>} : vector<1x64xf32>, vector<64x128xf32>, vector<1x128xf32> -> vector<1x128xf32>
    %c0_75 = arith.constant 0 : index
    %c0_76 = arith.constant 0 : index
    %659 = vector.load %arg9[%c0_75, %c0_76] : memref<1x1xf32, #tpu.memory_space<vmem>>, vector<1x1xf32>
    %660 = vector.broadcast %659 : vector<1x1xf32> to vector<1x128xf32>
    %661 = arith.addf %658, %660 : vector<1x128xf32>
    %c0_77 = arith.constant 0 : index
    %c0_78 = arith.constant 0 : index
    %662 = vector.load %arg10[%c0_77, %c0_78] : memref<1x128xf32, #tpu.memory_space<vmem>>, vector<1x128xf32>
    tpu.vector_store %arg10[%c0_77, %c0_78], %661 {strides = array<i32>} : memref<1x128xf32, #tpu.memory_space<vmem>>, vector<1x128xf32>,
    return
  }
  func.func @transform_0(%arg0: i32) -> (i32, i32) {
    %c0_i32 = arith.constant 0 : i32
    %c0_i32_0 = arith.constant 0 : i32
    return %c0_i32, %arg0 : i32, i32
  }
  func.func @transform_1(%arg0: i32) -> (i32, i32, i32) {
    %c0_i32 = arith.constant 0 : i32
    %c0_i32_0 = arith.constant 0 : i32
    %c0_i32_1 = arith.constant 0 : i32
    %c0_i32_2 = arith.constant 0 : i32
    return %c0_i32, %c0_i32_0, %c0_i32_1 : i32, i32, i32
  }
  func.func @transform_2(%arg0: i32) -> (i32, i32) {
    %c0_i32 = arith.constant 0 : i32
    %c0_i32_0 = arith.constant 0 : i32
    %c0_i32_1 = arith.constant 0 : i32
    return %c0_i32, %c0_i32_0 : i32, i32
  }
  func.func @transform_3(%arg0: i32) -> (i32, i32) {
    %c0_i32 = arith.constant 0 : i32
    %c0_i32_0 = arith.constant 0 : i32
    %c0_i32_1 = arith.constant 0 : i32
    return %c0_i32, %c0_i32_0 : i32, i32
  }
  func.func @transform_4(%arg0: i32) -> (i32, i32) {
    %c0_i32 = arith.constant 0 : i32
    %c0_i32_0 = arith.constant 0 : i32
    %c0_i32_1 = arith.constant 0 : i32
    return %c0_i32, %c0_i32_0 : i32, i32
  }
  func.func @transform_5(%arg0: i32) -> (i32, i32) {
    %c0_i32 = arith.constant 0 : i32
    %c0_i32_0 = arith.constant 0 : i32
    %c0_i32_1 = arith.constant 0 : i32
    return %c0_i32, %c0_i32_0 : i32, i32
  }
  func.func @transform_6(%arg0: i32) -> (i32, i32) {
    %c0_i32 = arith.constant 0 : i32
    %c0_i32_0 = arith.constant 0 : i32
    %c0_i32_1 = arith.constant 0 : i32
    return %c0_i32, %c0_i32_0 : i32, i32
  }
  func.func @transform_7(%arg0: i32) -> (i32, i32) {
    %c0_i32 = arith.constant 0 : i32
    %c0_i32_0 = arith.constant 0 : i32
    %c0_i32_1 = arith.constant 0 : i32
    return %c0_i32, %c0_i32_0 : i32, i32
  }
  func.func @transform_8(%arg0: i32) -> (i32, i32) {
    %c0_i32 = arith.constant 0 : i32
    %c0_i32_0 = arith.constant 0 : i32
    %c0_i32_1 = arith.constant 0 : i32
    return %c0_i32, %c0_i32_0 : i32, i32
  }
  func.func @transform_9(%arg0: i32) -> (i32, i32) {
    %c0_i32 = arith.constant 0 : i32
    %c0_i32_0 = arith.constant 0 : i32
    return %c0_i32, %arg0 : i32, i32
  }
}

</mosaic_0001>

<llo_original>
// kernel: tpu_custom_call.1
$region0: #{tpu_custom_call.1}
  #allocation0 [shape = 'u32[]', space=smem, size = 0x4, offset = 0x4, fixed_abs, tag = 'smem constant byte address 0x4 - core index']
  #allocation1 [shape = 'u32[144,128]{1,0:T(1,128)}', space=vmem, size = 0x12000, scoped, tag = 'internal scratch']
  #allocation2 [shape = 'f32[1,1]{1,0:T(1,128)S(1)}', space=vmem, size = 0x200, scoped, tag = 'scoped memory for tpu_custom_call.1']
  %s0 = inlined_call_operand.hbm [shape: f32[128,128], index: 0, kind: input, shape index: {}]
  %s1 = inlined_call_operand.vmem [shape: f32[5,8,1], index: 1, kind: input, shape index: {}]
  %s2 = inlined_call_operand.vmem [shape: f32[8,1], index: 2, kind: input, shape index: {}]
  %s3 = inlined_call_operand.vmem [shape: f32[16,40], index: 3, kind: input, shape index: {}]
  %s4 = inlined_call_operand.vmem [shape: f32[16,1], index: 4, kind: input, shape index: {}]
  %s5 = inlined_call_operand.vmem [shape: f32[32,80], index: 5, kind: input, shape index: {}]
  %s6 = inlined_call_operand.vmem [shape: f32[32,1], index: 6, kind: input, shape index: {}]
  %s7 = inlined_call_operand.vmem [shape: f32[1,64], index: 7, kind: input, shape index: {}]
  %s8 = inlined_call_operand.<no memory space> [shape: f32[1,1], index: 8, kind: input, shape index: {}]
  %s9 = inlined_call_operand.hbm [shape: f32[1,128], index: 9, kind: output, shape index: {}]
  %s10 = sld [smem:[#allocation0]]
  $region50: #{tpu_custom_call.1} parent=0
    _
  %s12 = ssub.s32 1, %s10
  %s13 = scalar_select 0, %s12, %s10
  %v14 = vstv %s8
  %15 = vst [vmem:[#allocation2] sm:$0x1] %v14
  $region1: #{tpu_custom_call.1} parent=0
    #allocation3 [shape = 'u8[65536]{0}', space=vmem, size = 0x10000, scoped, tag = 'input window, operand 0, single buffered']
    #allocation4 [shape = 's32[1]{0}', space=sflag, size = 0x4, scoped, tag = 'scoped memory for tpu_custom_call.1']
    #allocation5 [shape = 's32[1]{0}', space=sflag, size = 0x4, scoped, tag = 'scoped memory for tpu_custom_call.1']
    #allocation6 [shape = 'u8[512]{0}', space=vmem, size = 0x400, scoped, tag = 'output window, operand 0, single buffered']
    %16 = vsyncpa [#allocation4], 0
    %17 = vsyncpa [#allocation5], 0
    // Predicated region
    $region2: #{tpu_custom_call.1} parent=1 // pred_check
      _
    $region3: #{tpu_custom_call.1} parent=1 // pred_check_branch
      %19 = sbr.rel (0) target = $region5
    $region4: #{tpu_custom_call.1} parent=1 // pred_region
      %s21 = ssub.s32 2048, 2048
      %22 = vsyncadd [#allocation4], %s21
      %s23 = sshll.u32 [#allocation3], 4
      %s24 = int_to_ptr.vmem [resolvable:$true] %s23
      %29 = dma.hbm_to_vmem [thread:$0]  %s0, 2048, %s24, [#allocation4], 128, 128, 8
    $region5: #{tpu_custom_call.1} parent=1 // pred_fallthru
      _
    // Predicated region
    $region6: #{tpu_custom_call.1} parent=1 // pred_check
      _
    $region7: #{tpu_custom_call.1} parent=1 // pred_check_branch
      %31 = sbr.rel (0) target = $region9
    $region8: #{tpu_custom_call.1} parent=1 // pred_region
      _
    $region9: #{tpu_custom_call.1} parent=1 // pred_fallthru
      _
    // Predicated region
    $region10: #{tpu_custom_call.1} parent=1 // pred_check
      _
    $region11: #{tpu_custom_call.1} parent=1 // pred_check_branch
      %33 = sbr.rel (0) target = $region13
    $region12: #{tpu_custom_call.1} parent=1 // pred_region
      _
    $region13: #{tpu_custom_call.1} parent=1 // pred_fallthru
      _
    // Predicated region
    $region14: #{tpu_custom_call.1} parent=1 // pred_check
      _
    $region15: #{tpu_custom_call.1} parent=1 // pred_check_branch
      %35 = sbr.rel (0) target = $region17
    $region16: #{tpu_custom_call.1} parent=1 // pred_region
      _
    $region17: #{tpu_custom_call.1} parent=1 // pred_fallthru
      _
    // Predicated region
    $region18: #{tpu_custom_call.1} parent=1 // pred_check
      _
    $region19: #{tpu_custom_call.1} parent=1 // pred_check_branch
      %37 = sbr.rel (0) target = $region21
    $region20: #{tpu_custom_call.1} parent=1 // pred_region
      _
    $region21: #{tpu_custom_call.1} parent=1 // pred_fallthru
      _
    // Predicated region
    $region22: #{tpu_custom_call.1} parent=1 // pred_check
      _
    $region23: #{tpu_custom_call.1} parent=1 // pred_check_branch
      %39 = sbr.rel (0) target = $region25
    $region24: #{tpu_custom_call.1} parent=1 // pred_region
      _
    $region25: #{tpu_custom_call.1} parent=1 // pred_fallthru
      _
    // Predicated region
    $region26: #{tpu_custom_call.1} parent=1 // pred_check
      _
    $region27: #{tpu_custom_call.1} parent=1 // pred_check_branch
      %41 = sbr.rel (0) target = $region29
    $region28: #{tpu_custom_call.1} parent=1 // pred_region
      _
    $region29: #{tpu_custom_call.1} parent=1 // pred_fallthru
      _
    // Predicated region
    $region30: #{tpu_custom_call.1} parent=1 // pred_check
      _
    $region31: #{tpu_custom_call.1} parent=1 // pred_check_branch
      %43 = sbr.rel (0) target = $region33
    $region32: #{tpu_custom_call.1} parent=1 // pred_region
      _
    $region33: #{tpu_custom_call.1} parent=1 // pred_fallthru
      _
    // Predicated region
    $region34: #{tpu_custom_call.1} parent=1 // pred_check
      _
    $region35: #{tpu_custom_call.1} parent=1 // pred_check_branch
      %45 = sbr.rel (0) target = $region37
    $region36: #{tpu_custom_call.1} parent=1 // pred_region
      _
    $region37: #{tpu_custom_call.1} parent=1 // pred_fallthru
      _
    // Predicated region
    $region38: #{tpu_custom_call.1} parent=1 // pred_check
      _
    $region39: #{tpu_custom_call.1} parent=1 // pred_check_branch
      %47 = sbr.rel (0) target = $region41
    $region40: #{tpu_custom_call.1} parent=1 // pred_region
      %48 = dma.done [#allocation4], 2048
    $region41: #{tpu_custom_call.1} parent=1 // pred_fallthru
      _
    %v49 = vld [vmem:[#allocation3] sm:$0xff]
    %v50 = vld [vmem:[#allocation3 + $0x8] sm:$0xff]
    %v51 = vld [vmem:[#allocation3 + $0x10] sm:$0xff]
    %v52 = vld [vmem:[#allocation3 + $0x18] sm:$0xff]
    %v53 = vld [vmem:[#allocation3 + $0x20] sm:$0xff]
    %v54 = vld [vmem:[#allocation3 + $0x28] sm:$0xff]
    %v55 = vld [vmem:[#allocation3 + $0x30] sm:$0xff]
    %v56 = vld [vmem:[#allocation3 + $0x38] sm:$0xff]
    %v57 = vld [vmem:[#allocation3 + $0x40] sm:$0xff]
    %v58 = vld [vmem:[#allocation3 + $0x48] sm:$0xff]
    %v59 = vld [vmem:[#allocation3 + $0x50] sm:$0xff]
    %v60 = vld [vmem:[#allocation3 + $0x58] sm:$0xff]
    %v61 = vld [vmem:[#allocation3 + $0x60] sm:$0xff]
    %v62 = vld [vmem:[#allocation3 + $0x68] sm:$0xff]
    %v77 = vcombine.high %v49, %v49
    %v79 = vunpack.c.l.s4 1966171168
    %v80 = vunpack.c.0.s8 %v79
    %v81 = vlaneseq
    %v82 = vshrl.u32 %v81, 7
    %v83 = vsub.s32 %v80, %v82
    %v84 = vrot.slane %v49, %v83
    %v86 = vunpack.c.l.s4 1966171168
    %v87 = vunpack.c.0.s8 %v86
    %v88 = vlaneseq
    %v89 = vshrl.u32 %v88, 7
    %v90 = vsub.s32 %v87, %v89
    %v91 = vrot.slane %v77, %v90
    %v92 = vcombine.high %v84, %v84
    %v93 = vcombine.high %v91, %v91
    %v95 = vunpack.c.l.s4 1966171168
    %v96 = vunpack.c.0.s8 %v95
    %v97 = vlaneseq
    %v98 = vshrl.u32 %v97, 7
    %v99 = vsub.s32 %v96, %v98
    %v100 = vrot.slane %v84, %v99
    %v102 = vunpack.c.l.s4 1966171168
    %v103 = vunpack.c.0.s8 %v102
    %v104 = vlaneseq
    %v105 = vshrl.u32 %v104, 7
    %v106 = vsub.s32 %v103, %v105
    %v107 = vrot.slane %v91, %v106
    %v109 = vunpack.c.l.s4 1966171168
    %v110 = vunpack.c.0.s8 %v109
    %v111 = vlaneseq
    %v112 = vshrl.u32 %v111, 7
    %v113 = vsub.s32 %v110, %v112
    %v114 = vrot.slane %v92, %v113
    %v116 = vunpack.c.l.s4 1966171168
    %v117 = vunpack.c.0.s8 %v116
    %v118 = vlaneseq
    %v119 = vshrl.u32 %v118, 7
    %v120 = vsub.s32 %v117, %v119
    %v121 = vrot.slane %v93, %v120
    %v122 = vcombine.high %v100, %v100
    %v123 = vcombine.high %v107, %v107
    %v124 = vcombine.high %v114, %v114
    %v125 = vcombine.high %v121, %v121
    %v126 = vcombine.high %v50, %v50
    %v128 = vunpack.c.l.s4 1966171168
    %v129 = vunpack.c.0.s8 %v128
    %v130 = vlaneseq
    %v131 = vshrl.u32 %v130, 7
    %v132 = vsub.s32 %v129, %v131
    %v133 = vrot.slane %v50, %v132
    %v135 = vunpack.c.l.s4 1966171168
    %v136 = vunpack.c.0.s8 %v135
    %v137 = vlaneseq
    %v138 = vshrl.u32 %v137, 7
    %v139 = vsub.s32 %v136, %v138
    %v140 = vrot.slane %v126, %v139
    %v141 = vcombine.high %v133, %v133
    %v142 = vcombine.high %v140, %v140
    %v144 = vunpack.c.l.s4 1966171168
    %v145 = vunpack.c.0.s8 %v144
    %v146 = vlaneseq
    %v147 = vshrl.u32 %v146, 7
    %v148 = vsub.s32 %v145, %v147
    %v149 = vrot.slane %v133, %v148
    %v151 = vunpack.c.l.s4 1966171168
    %v152 = vunpack.c.0.s8 %v151
    %v153 = vlaneseq
    %v154 = vshrl.u32 %v153, 7
    %v155 = vsub.s32 %v152, %v154
    %v156 = vrot.slane %v140, %v155
    %v158 = vunpack.c.l.s4 1966171168
    %v159 = vunpack.c.0.s8 %v158
    %v160 = vlaneseq
    %v161 = vshrl.u32 %v160, 7
    %v162 = vsub.s32 %v159, %v161
    %v163 = vrot.slane %v141, %v162
    %v165 = vunpack.c.l.s4 1966171168
    %v166 = vunpack.c.0.s8 %v165
    %v167 = vlaneseq
    %v168 = vshrl.u32 %v167, 7
    %v169 = vsub.s32 %v166, %v168
    %v170 = vrot.slane %v142, %v169
    %v171 = vcombine.high %v149, %v149
    %v172 = vcombine.high %v156, %v156
    %v173 = vcombine.high %v163, %v163
    %v174 = vcombine.high %v170, %v170
    %v175 = vcombine.high %v51, %v51
    %v177 = vunpack.c.l.s4 1966171168
    %v178 = vunpack.c.0.s8 %v177
    %v179 = vlaneseq
    %v180 = vshrl.u32 %v179, 7
    %v181 = vsub.s32 %v178, %v180
    %v182 = vrot.slane %v51, %v181
    %v184 = vunpack.c.l.s4 1966171168
    %v185 = vunpack.c.0.s8 %v184
    %v186 = vlaneseq
    %v187 = vshrl.u32 %v186, 7
    %v188 = vsub.s32 %v185, %v187
    %v189 = vrot.slane %v175, %v188
    %v190 = vcombine.high %v182, %v182
    %v191 = vcombine.high %v189, %v189
    %v193 = vunpack.c.l.s4 1966171168
    %v194 = vunpack.c.0.s8 %v193
    %v195 = vlaneseq
    %v196 = vshrl.u32 %v195, 7
    %v197 = vsub.s32 %v194, %v196
    %v198 = vrot.slane %v182, %v197
    %v200 = vunpack.c.l.s4 1966171168
    %v201 = vunpack.c.0.s8 %v200
    %v202 = vlaneseq
    %v203 = vshrl.u32 %v202, 7
    %v204 = vsub.s32 %v201, %v203
    %v205 = vrot.slane %v189, %v204
    %v207 = vunpack.c.l.s4 1966171168
    %v208 = vunpack.c.0.s8 %v207
    %v209 = vlaneseq
    %v210 = vshrl.u32 %v209, 7
    %v211 = vsub.s32 %v208, %v210
    %v212 = vrot.slane %v190, %v211
    %v214 = vunpack.c.l.s4 1966171168
    %v215 = vunpack.c.0.s8 %v214
    %v216 = vlaneseq
    %v217 = vshrl.u32 %v216, 7
    %v218 = vsub.s32 %v215, %v217
    %v219 = vrot.slane %v191, %v218
    %v220 = vcombine.high %v198, %v198
    %v221 = vcombine.high %v205, %v205
    %v222 = vcombine.high %v212, %v212
    %v223 = vcombine.high %v219, %v219
    %v224 = vcombine.high %v52, %v52
    %v226 = vunpack.c.l.s4 1966171168
    %v227 = vunpack.c.0.s8 %v226
    %v228 = vlaneseq
    %v229 = vshrl.u32 %v228, 7
    %v230 = vsub.s32 %v227, %v229
    %v231 = vrot.slane %v52, %v230
    %v233 = vunpack.c.l.s4 1966171168
    %v234 = vunpack.c.0.s8 %v233
    %v235 = vlaneseq
    %v236 = vshrl.u32 %v235, 7
    %v237 = vsub.s32 %v234, %v236
    %v238 = vrot.slane %v224, %v237
    %v239 = vcombine.high %v231, %v231
    %v240 = vcombine.high %v238, %v238
    %v242 = vunpack.c.l.s4 1966171168
    %v243 = vunpack.c.0.s8 %v242
    %v244 = vlaneseq
    %v245 = vshrl.u32 %v244, 7
    %v246 = vsub.s32 %v243, %v245
    %v247 = vrot.slane %v231, %v246
    %v249 = vunpack.c.l.s4 1966171168
    %v250 = vunpack.c.0.s8 %v249
    %v251 = vlaneseq
    %v252 = vshrl.u32 %v251, 7
    %v253 = vsub.s32 %v250, %v252
    %v254 = vrot.slane %v238, %v253
    %v256 = vunpack.c.l.s4 1966171168
    %v257 = vunpack.c.0.s8 %v256
    %v258 = vlaneseq
    %v259 = vshrl.u32 %v258, 7
    %v260 = vsub.s32 %v257, %v259
    %v261 = vrot.slane %v239, %v260
    %v263 = vunpack.c.l.s4 1966171168
    %v264 = vunpack.c.0.s8 %v263
    %v265 = vlaneseq
    %v266 = vshrl.u32 %v265, 7
    %v267 = vsub.s32 %v264, %v266
    %v268 = vrot.slane %v240, %v267
    %v269 = vcombine.high %v247, %v247
    %v270 = vcombine.high %v254, %v254
    %v271 = vcombine.high %v261, %v261
    %v272 = vcombine.high %v268, %v268
    %v273 = vcombine.high %v53, %v53
    %v275 = vunpack.c.l.s4 1966171168
    %v276 = vunpack.c.0.s8 %v275
    %v277 = vlaneseq
    %v278 = vshrl.u32 %v277, 7
    %v279 = vsub.s32 %v276, %v278
    %v280 = vrot.slane %v53, %v279
    %v282 = vunpack.c.l.s4 1966171168
    %v283 = vunpack.c.0.s8 %v282
    %v284 = vlaneseq
    %v285 = vshrl.u32 %v284, 7
    %v286 = vsub.s32 %v283, %v285
    %v287 = vrot.slane %v273, %v286
    %v288 = vcombine.high %v280, %v280
    %v289 = vcombine.high %v287, %v287
    %v291 = vunpack.c.l.s4 1966171168
    %v292 = vunpack.c.0.s8 %v291
    %v293 = vlaneseq
    %v294 = vshrl.u32 %v293, 7
    %v295 = vsub.s32 %v292, %v294
    %v296 = vrot.slane %v280, %v295
    %v298 = vunpack.c.l.s4 1966171168
    %v299 = vunpack.c.0.s8 %v298
    %v300 = vlaneseq
    %v301 = vshrl.u32 %v300, 7
    %v302 = vsub.s32 %v299, %v301
    %v303 = vrot.slane %v287, %v302
    %v305 = vunpack.c.l.s4 1966171168
    %v306 = vunpack.c.0.s8 %v305
    %v307 = vlaneseq
    %v308 = vshrl.u32 %v307, 7
    %v309 = vsub.s32 %v306, %v308
    %v310 = vrot.slane %v288, %v309
    %v312 = vunpack.c.l.s4 1966171168
    %v313 = vunpack.c.0.s8 %v312
    %v314 = vlaneseq
    %v315 = vshrl.u32 %v314, 7
    %v316 = vsub.s32 %v313, %v315
    %v317 = vrot.slane %v289, %v316
    %v318 = vcombine.high %v296, %v296
    %v319 = vcombine.high %v303, %v303
    %v320 = vcombine.high %v310, %v310
    %v321 = vcombine.high %v317, %v317
    %v322 = vcombine.high %v54, %v54
    %v324 = vunpack.c.l.s4 1966171168
    %v325 = vunpack.c.0.s8 %v324
    %v326 = vlaneseq
    %v327 = vshrl.u32 %v326, 7
    %v328 = vsub.s32 %v325, %v327
    %v329 = vrot.slane %v54, %v328
    %v331 = vunpack.c.l.s4 1966171168
    %v332 = vunpack.c.0.s8 %v331
    %v333 = vlaneseq
    %v334 = vshrl.u32 %v333, 7
    %v335 = vsub.s32 %v332, %v334
    %v336 = vrot.slane %v322, %v335
    %v337 = vcombine.high %v329, %v329
    %v338 = vcombine.high %v336, %v336
    %v340 = vunpack.c.l.s4 1966171168
    %v341 = vunpack.c.0.s8 %v340
    %v342 = vlaneseq
    %v343 = vshrl.u32 %v342, 7
    %v344 = vsub.s32 %v341, %v343
    %v345 = vrot.slane %v329, %v344
    %v347 = vunpack.c.l.s4 1966171168
    %v348 = vunpack.c.0.s8 %v347
    %v349 = vlaneseq
    %v350 = vshrl.u32 %v349, 7
    %v351 = vsub.s32 %v348, %v350
    %v352 = vrot.slane %v336, %v351
    %v354 = vunpack.c.l.s4 1966171168
    %v355 = vunpack.c.0.s8 %v354
    %v356 = vlaneseq
    %v357 = vshrl.u32 %v356, 7
    %v358 = vsub.s32 %v355, %v357
    %v359 = vrot.slane %v337, %v358
    %v361 = vunpack.c.l.s4 1966171168
    %v362 = vunpack.c.0.s8 %v361
    %v363 = vlaneseq
    %v364 = vshrl.u32 %v363, 7
    %v365 = vsub.s32 %v362, %v364
    %v366 = vrot.slane %v338, %v365
    %v367 = vcombine.high %v345, %v345
    %v368 = vcombine.high %v352, %v352
    %v369 = vcombine.high %v359, %v359
    %v370 = vcombine.high %v366, %v366
    %v371 = vcombine.high %v55, %v55
    %v373 = vunpack.c.l.s4 1966171168
    %v374 = vunpack.c.0.s8 %v373
    %v375 = vlaneseq
    %v376 = vshrl.u32 %v375, 7
    %v377 = vsub.s32 %v374, %v376
    %v378 = vrot.slane %v55, %v377
    %v380 = vunpack.c.l.s4 1966171168
    %v381 = vunpack.c.0.s8 %v380
    %v382 = vlaneseq
    %v383 = vshrl.u32 %v382, 7
    %v384 = vsub.s32 %v381, %v383
    %v385 = vrot.slane %v371, %v384
    %v386 = vcombine.high %v378, %v378
    %v387 = vcombine.high %v385, %v385
    %v389 = vunpack.c.l.s4 1966171168
    %v390 = vunpack.c.0.s8 %v389
    %v391 = vlaneseq
    %v392 = vshrl.u32 %v391, 7
    %v393 = vsub.s32 %v390, %v392
    %v394 = vrot.slane %v378, %v393
    %v396 = vunpack.c.l.s4 1966171168
    %v397 = vunpack.c.0.s8 %v396
    %v398 = vlaneseq
    %v399 = vshrl.u32 %v398, 7
    %v400 = vsub.s32 %v397, %v399
    %v401 = vrot.slane %v385, %v400
    %v403 = vunpack.c.l.s4 1966171168
    %v404 = vunpack.c.0.s8 %v403
    %v405 = vlaneseq
    %v406 = vshrl.u32 %v405, 7
    %v407 = vsub.s32 %v404, %v406
    %v408 = vrot.slane %v386, %v407
    %v410 = vunpack.c.l.s4 1966171168
    %v411 = vunpack.c.0.s8 %v410
    %v412 = vlaneseq
    %v413 = vshrl.u32 %v412, 7
    %v414 = vsub.s32 %v411, %v413
    %v415 = vrot.slane %v387, %v414
    %v416 = vcombine.high %v394, %v394
    %v417 = vcombine.high %v401, %v401
    %v418 = vcombine.high %v408, %v408
    %v419 = vcombine.high %v415, %v415
    %v420 = vcombine.high %v56, %v56
    %v422 = vunpack.c.l.s4 1966171168
    %v423 = vunpack.c.0.s8 %v422
    %v424 = vlaneseq
    %v425 = vshrl.u32 %v424, 7
    %v426 = vsub.s32 %v423, %v425
    %v427 = vrot.slane %v56, %v426
    %v429 = vunpack.c.l.s4 1966171168
    %v430 = vunpack.c.0.s8 %v429
    %v431 = vlaneseq
    %v432 = vshrl.u32 %v431, 7
    %v433 = vsub.s32 %v430, %v432
    %v434 = vrot.slane %v420, %v433
    %v435 = vcombine.high %v427, %v427
    %v436 = vcombine.high %v434, %v434
    %v438 = vunpack.c.l.s4 1966171168
    %v439 = vunpack.c.0.s8 %v438
    %v440 = vlaneseq
    %v441 = vshrl.u32 %v440, 7
    %v442 = vsub.s32 %v439, %v441
    %v443 = vrot.slane %v427, %v442
    %v445 = vunpack.c.l.s4 1966171168
    %v446 = vunpack.c.0.s8 %v445
    %v447 = vlaneseq
    %v448 = vshrl.u32 %v447, 7
    %v449 = vsub.s32 %v446, %v448
    %v450 = vrot.slane %v434, %v449
    %v452 = vunpack.c.l.s4 1966171168
    %v453 = vunpack.c.0.s8 %v452
    %v454 = vlaneseq
    %v455 = vshrl.u32 %v454, 7
    %v456 = vsub.s32 %v453, %v455
    %v457 = vrot.slane %v435, %v456
    %v459 = vunpack.c.l.s4 1966171168
    %v460 = vunpack.c.0.s8 %v459
    %v461 = vlaneseq
    %v462 = vshrl.u32 %v461, 7
    %v463 = vsub.s32 %v460, %v462
    %v464 = vrot.slane %v436, %v463
    %v465 = vcombine.high %v443, %v443
    %v466 = vcombine.high %v450, %v450
    %v467 = vcombine.high %v457, %v457
    %v468 = vcombine.high %v464, %v464
    %v469 = vcombine.high %v57, %v57
    %v471 = vunpack.c.l.s4 1966171168
    %v472 = vunpack.c.0.s8 %v471
    %v473 = vlaneseq
    %v474 = vshrl.u32 %v473, 7
    %v475 = vsub.s32 %v472, %v474
    %v476 = vrot.slane %v57, %v475
    %v478 = vunpack.c.l.s4 1966171168
    %v479 = vunpack.c.0.s8 %v478
    %v480 = vlaneseq
    %v481 = vshrl.u32 %v480, 7
    %v482 = vsub.s32 %v479, %v481
    %v483 = vrot.slane %v469, %v482
    %v484 = vcombine.high %v476, %v476
    %v485 = vcombine.high %v483, %v483
    %v487 = vunpack.c.l.s4 1966171168
    %v488 = vunpack.c.0.s8 %v487
    %v489 = vlaneseq
    %v490 = vshrl.u32 %v489, 7
    %v491 = vsub.s32 %v488, %v490
    %v492 = vrot.slane %v476, %v491
    %v494 = vunpack.c.l.s4 1966171168
    %v495 = vunpack.c.0.s8 %v494
    %v496 = vlaneseq
    %v497 = vshrl.u32 %v496, 7
    %v498 = vsub.s32 %v495, %v497
    %v499 = vrot.slane %v483, %v498
    %v501 = vunpack.c.l.s4 1966171168
    %v502 = vunpack.c.0.s8 %v501
    %v503 = vlaneseq
    %v504 = vshrl.u32 %v503, 7
    %v505 = vsub.s32 %v502, %v504
    %v506 = vrot.slane %v484, %v505
    %v508 = vunpack.c.l.s4 1966171168
    %v509 = vunpack.c.0.s8 %v508
    %v510 = vlaneseq
    %v511 = vshrl.u32 %v510, 7
    %v512 = vsub.s32 %v509, %v511
    %v513 = vrot.slane %v485, %v512
    %v514 = vcombine.high %v492, %v492
    %v515 = vcombine.high %v499, %v499
    %v516 = vcombine.high %v506, %v506
    %v517 = vcombine.high %v513, %v513
    %v518 = vcombine.high %v58, %v58
    %v520 = vunpack.c.l.s4 1966171168
    %v521 = vunpack.c.0.s8 %v520
    %v522 = vlaneseq
    %v523 = vshrl.u32 %v522, 7
    %v524 = vsub.s32 %v521, %v523
    %v525 = vrot.slane %v58, %v524
    %v527 = vunpack.c.l.s4 1966171168
    %v528 = vunpack.c.0.s8 %v527
    %v529 = vlaneseq
    %v530 = vshrl.u32 %v529, 7
    %v531 = vsub.s32 %v528, %v530
    %v532 = vrot.slane %v518, %v531
    %v533 = vcombine.high %v525, %v525
    %v534 = vcombine.high %v532, %v532
    %v536 = vunpack.c.l.s4 1966171168
    %v537 = vunpack.c.0.s8 %v536
    %v538 = vlaneseq
    %v539 = vshrl.u32 %v538, 7
    %v540 = vsub.s32 %v537, %v539
    %v541 = vrot.slane %v525, %v540
    %v543 = vunpack.c.l.s4 1966171168
    %v544 = vunpack.c.0.s8 %v543
    %v545 = vlaneseq
    %v546 = vshrl.u32 %v545, 7
    %v547 = vsub.s32 %v544, %v546
    %v548 = vrot.slane %v532, %v547
    %v550 = vunpack.c.l.s4 1966171168
    %v551 = vunpack.c.0.s8 %v550
    %v552 = vlaneseq
    %v553 = vshrl.u32 %v552, 7
    %v554 = vsub.s32 %v551, %v553
    %v555 = vrot.slane %v533, %v554
    %v557 = vunpack.c.l.s4 1966171168
    %v558 = vunpack.c.0.s8 %v557
    %v559 = vlaneseq
    %v560 = vshrl.u32 %v559, 7
    %v561 = vsub.s32 %v558, %v560
    %v562 = vrot.slane %v534, %v561
    %v563 = vcombine.high %v541, %v541
    %v564 = vcombine.high %v548, %v548
    %v565 = vcombine.high %v555, %v555
    %v566 = vcombine.high %v562, %v562
    %v567 = vcombine.high %v59, %v59
    %v569 = vunpack.c.l.s4 1966171168
    %v570 = vunpack.c.0.s8 %v569
    %v571 = vlaneseq
    %v572 = vshrl.u32 %v571, 7
    %v573 = vsub.s32 %v570, %v572
    %v574 = vrot.slane %v59, %v573
    %v576 = vunpack.c.l.s4 1966171168
    %v577 = vunpack.c.0.s8 %v576
    %v578 = vlaneseq
    %v579 = vshrl.u32 %v578, 7
    %v580 = vsub.s32 %v577, %v579
    %v581 = vrot.slane %v567, %v580
    %v582 = vcombine.high %v574, %v574
    %v583 = vcombine.high %v581, %v581
    %v585 = vunpack.c.l.s4 1966171168
    %v586 = vunpack.c.0.s8 %v585
    %v587 = vlaneseq
    %v588 = vshrl.u32 %v587, 7
    %v589 = vsub.s32 %v586, %v588
    %v590 = vrot.slane %v574, %v589
    %v592 = vunpack.c.l.s4 1966171168
    %v593 = vunpack.c.0.s8 %v592
    %v594 = vlaneseq
    %v595 = vshrl.u32 %v594, 7
    %v596 = vsub.s32 %v593, %v595
    %v597 = vrot.slane %v581, %v596
    %v599 = vunpack.c.l.s4 1966171168
    %v600 = vunpack.c.0.s8 %v599
    %v601 = vlaneseq
    %v602 = vshrl.u32 %v601, 7
    %v603 = vsub.s32 %v600, %v602
    %v604 = vrot.slane %v582, %v603
    %v606 = vunpack.c.l.s4 1966171168
    %v607 = vunpack.c.0.s8 %v606
    %v608 = vlaneseq
    %v609 = vshrl.u32 %v608, 7
    %v610 = vsub.s32 %v607, %v609
    %v611 = vrot.slane %v583, %v610
    %v612 = vcombine.high %v590, %v590
    %v613 = vcombine.high %v597, %v597
    %v614 = vcombine.high %v604, %v604
    %v615 = vcombine.high %v611, %v611
    %v616 = vcombine.high %v60, %v60
    %v618 = vunpack.c.l.s4 1966171168
    %v619 = vunpack.c.0.s8 %v618
    %v620 = vlaneseq
    %v621 = vshrl.u32 %v620, 7
    %v622 = vsub.s32 %v619, %v621
    %v623 = vrot.slane %v60, %v622
    %v625 = vunpack.c.l.s4 1966171168
    %v626 = vunpack.c.0.s8 %v625
    %v627 = vlaneseq
    %v628 = vshrl.u32 %v627, 7
    %v629 = vsub.s32 %v626, %v628
    %v630 = vrot.slane %v616, %v629
    %v631 = vcombine.high %v623, %v623
    %v632 = vcombine.high %v630, %v630
    %v634 = vunpack.c.l.s4 1966171168
    %v635 = vunpack.c.0.s8 %v634
    %v636 = vlaneseq
    %v637 = vshrl.u32 %v636, 7
    %v638 = vsub.s32 %v635, %v637
    %v639 = vrot.slane %v623, %v638
    %v641 = vunpack.c.l.s4 1966171168
    %v642 = vunpack.c.0.s8 %v641
    %v643 = vlaneseq
    %v644 = vshrl.u32 %v643, 7
    %v645 = vsub.s32 %v642, %v644
    %v646 = vrot.slane %v630, %v645
    %v648 = vunpack.c.l.s4 1966171168
    %v649 = vunpack.c.0.s8 %v648
    %v650 = vlaneseq
    %v651 = vshrl.u32 %v650, 7
    %v652 = vsub.s32 %v649, %v651
    %v653 = vrot.slane %v631, %v652
    %v655 = vunpack.c.l.s4 1966171168
    %v656 = vunpack.c.0.s8 %v655
    %v657 = vlaneseq
    %v658 = vshrl.u32 %v657, 7
    %v659 = vsub.s32 %v656, %v658
    %v660 = vrot.slane %v632, %v659
    %v661 = vcombine.high %v639, %v639
    %v662 = vcombine.high %v646, %v646
    %v663 = vcombine.high %v653, %v653
    %v664 = vcombine.high %v660, %v660
    %v665 = vcombine.high %v61, %v61
    %v667 = vunpack.c.l.s4 1966171168
    %v668 = vunpack.c.0.s8 %v667
    %v669 = vlaneseq
    %v670 = vshrl.u32 %v669, 7
    %v671 = vsub.s32 %v668, %v670
    %v672 = vrot.slane %v61, %v671
    %v674 = vunpack.c.l.s4 1966171168
    %v675 = vunpack.c.0.s8 %v674
    %v676 = vlaneseq
    %v677 = vshrl.u32 %v676, 7
    %v678 = vsub.s32 %v675, %v677
    %v679 = vrot.slane %v665, %v678
    %v680 = vcombine.high %v672, %v672
    %v681 = vcombine.high %v679, %v679
    %v683 = vunpack.c.l.s4 1966171168
    %v684 = vunpack.c.0.s8 %v683
    %v685 = vlaneseq
    %v686 = vshrl.u32 %v685, 7
    %v687 = vsub.s32 %v684, %v686
    %v688 = vrot.slane %v672, %v687
    %v690 = vunpack.c.l.s4 1966171168
    %v691 = vunpack.c.0.s8 %v690
    %v692 = vlaneseq
    %v693 = vshrl.u32 %v692, 7
    %v694 = vsub.s32 %v691, %v693
    %v695 = vrot.slane %v679, %v694
    %v697 = vunpack.c.l.s4 1966171168
    %v698 = vunpack.c.0.s8 %v697
    %v699 = vlaneseq
    %v700 = vshrl.u32 %v699, 7
    %v701 = vsub.s32 %v698, %v700
    %v702 = vrot.slane %v680, %v701
    %v704 = vunpack.c.l.s4 1966171168
    %v705 = vunpack.c.0.s8 %v704
    %v706 = vlaneseq
    %v707 = vshrl.u32 %v706, 7
    %v708 = vsub.s32 %v705, %v707
    %v709 = vrot.slane %v681, %v708
    %v710 = vcombine.high %v688, %v688
    %v711 = vcombine.high %v702, %v702
    %v713 = vunpack.c.l.s4 1966171168
    %v714 = vunpack.c.0.s8 %v713
    %v715 = vlaneseq
    %v716 = vshrl.u32 %v715, 7
    %v717 = vsub.s32 %v714, %v716
    %v718 = vrot.slane %v62, %v717
    %v720 = vunpack.c.l.s4 1966171168
    %v721 = vunpack.c.0.s8 %v720
    %v722 = vlaneseq
    %v723 = vshrl.u32 %v722, 7
    %v724 = vsub.s32 %v721, %v723
    %v725 = vrot.slane %v718, %v724
    %v726 = vld [vmem:[%s1] sm:$0xff]
    %v727 = vlaneseq
    %v728 = vshrl.u32 %v727, 7
    %v729 = vsub.s32 0, %v728
    %v730 = vrot.slane %v100, %v729
    %v731 = vlaneseq
    %v732 = vshrl.u32 %v731, 7
    %v733 = vsub.s32 0, %v732
    %v734 = vrot.slane %v114, %v733
    %v735 = vlaneseq
    %v736 = vshrl.u32 %v735, 7
    %v737 = vsub.s32 0, %v736
    %v738 = vrot.slane %v122, %v737
    %v739 = vlaneseq
    %v740 = vshrl.u32 %v739, 7
    %v741 = vsub.s32 0, %v740
    %v742 = vrot.slane %v124, %v741
    %v743 = vlaneseq
    %v744 = vshrl.u32 %v743, 7
    %v745 = vsub.s32 0, %v744
    %v746 = vrot.slane %v107, %v745
    %v747 = vlaneseq
    %v748 = vshrl.u32 %v747, 7
    %v749 = vsub.s32 0, %v748
    %v750 = vrot.slane %v121, %v749
    %v751 = vlaneseq
    %v752 = vshrl.u32 %v751, 7
    %v753 = vsub.s32 0, %v752
    %v754 = vrot.slane %v123, %v753
    %v755 = vlaneseq
    %v756 = vshrl.u32 %v755, 7
    %v757 = vsub.s32 0, %v756
    %v758 = vrot.slane %v125, %v757
    %v759 = vlaneseq
    %v760 = vshrl.u32 %v759, 7
    %v761 = vsub.s32 0, %v760
    %v762 = vrot.slane %v149, %v761
    %v763 = vlaneseq
    %v764 = vshrl.u32 %v763, 7
    %v765 = vsub.s32 0, %v764
    %v766 = vrot.slane %v163, %v765
    %v767 = vlaneseq
    %v768 = vshrl.u32 %v767, 7
    %v769 = vsub.s32 0, %v768
    %v770 = vrot.slane %v171, %v769
    %v771 = vlaneseq
    %v772 = vshrl.u32 %v771, 7
    %v773 = vsub.s32 0, %v772
    %v774 = vrot.slane %v173, %v773
    %v775 = vlaneseq
    %v776 = vshrl.u32 %v775, 7
    %v777 = vsub.s32 0, %v776
    %v778 = vrot.slane %v156, %v777
    %v779 = vlaneseq
    %v780 = vshrl.u32 %v779, 7
    %v781 = vsub.s32 0, %v780
    %v782 = vrot.slane %v170, %v781
    %v783 = vlaneseq
    %v784 = vshrl.u32 %v783, 7
    %v785 = vsub.s32 0, %v784
    %v786 = vrot.slane %v172, %v785
    %v787 = vlaneseq
    %v788 = vshrl.u32 %v787, 7
    %v789 = vsub.s32 0, %v788
    %v790 = vrot.slane %v174, %v789
    %v791 = vlaneseq
    %v792 = vshrl.u32 %v791, 7
    %v793 = vsub.s32 0, %v792
    %v794 = vrot.slane %v198, %v793
    %v795 = vlaneseq
    %v796 = vshrl.u32 %v795, 7
    %v797 = vsub.s32 0, %v796
    %v798 = vrot.slane %v212, %v797
    %v799 = vlaneseq
    %v800 = vshrl.u32 %v799, 7
    %v801 = vsub.s32 0, %v800
    %v802 = vrot.slane %v220, %v801
    %v803 = vlaneseq
    %v804 = vshrl.u32 %v803, 7
    %v805 = vsub.s32 0, %v804
    %v806 = vrot.slane %v222, %v805
    %v807 = vlaneseq
    %v808 = vshrl.u32 %v807, 7
    %v809 = vsub.s32 0, %v808
    %v810 = vrot.slane %v205, %v809
    %v811 = vlaneseq
    %v812 = vshrl.u32 %v811, 7
    %v813 = vsub.s32 0, %v812
    %v814 = vrot.slane %v219, %v813
    %v815 = vlaneseq
    %v816 = vshrl.u32 %v815, 7
    %v817 = vsub.s32 0, %v816
    %v818 = vrot.slane %v221, %v817
    %v819 = vlaneseq
    %v820 = vshrl.u32 %v819, 7
    %v821 = vsub.s32 0, %v820
    %v822 = vrot.slane %v223, %v821
    %v823 = vlaneseq
    %v824 = vshrl.u32 %v823, 7
    %v825 = vsub.s32 0, %v824
    %v826 = vrot.slane %v247, %v825
    %v827 = vlaneseq
    %v828 = vshrl.u32 %v827, 7
    %v829 = vsub.s32 0, %v828
    %v830 = vrot.slane %v261, %v829
    %v831 = vlaneseq
    %v832 = vshrl.u32 %v831, 7
    %v833 = vsub.s32 0, %v832
    %v834 = vrot.slane %v269, %v833
    %v835 = vlaneseq
    %v836 = vshrl.u32 %v835, 7
    %v837 = vsub.s32 0, %v836
    %v838 = vrot.slane %v271, %v837
    %v839 = vlaneseq
    %v840 = vshrl.u32 %v839, 7
    %v841 = vsub.s32 0, %v840
    %v842 = vrot.slane %v254, %v841
    %v843 = vlaneseq
    %v844 = vshrl.u32 %v843, 7
    %v845 = vsub.s32 0, %v844
    %v846 = vrot.slane %v268, %v845
    %v847 = vlaneseq
    %v848 = vshrl.u32 %v847, 7
    %v849 = vsub.s32 0, %v848
    %v850 = vrot.slane %v270, %v849
    %v851 = vlaneseq
    %v852 = vshrl.u32 %v851, 7
    %v853 = vsub.s32 0, %v852
    %v854 = vrot.slane %v272, %v853
    %v855 = vlaneseq
    %v856 = vshrl.u32 %v855, 7
    %v857 = vsub.s32 0, %v856
    %v858 = vrot.slane %v296, %v857
    %v859 = vlaneseq
    %v860 = vshrl.u32 %v859, 7
    %v861 = vsub.s32 0, %v860
    %v862 = vrot.slane %v310, %v861
    %v863 = vlaneseq
    %v864 = vshrl.u32 %v863, 7
    %v865 = vsub.s32 0, %v864
    %v866 = vrot.slane %v318, %v865
    %v867 = vlaneseq
    %v868 = vshrl.u32 %v867, 7
    %v869 = vsub.s32 0, %v868
    %v870 = vrot.slane %v320, %v869
    %v871 = vlaneseq
    %v872 = vshrl.u32 %v871, 7
    %v873 = vsub.s32 0, %v872
    %v874 = vrot.slane %v303, %v873
    %v875 = vlaneseq
    %v876 = vshrl.u32 %v875, 7
    %v877 = vsub.s32 0, %v876
    %v878 = vrot.slane %v317, %v877
    %v879 = vlaneseq
    %v880 = vshrl.u32 %v879, 7
    %v881 = vsub.s32 0, %v880
    %v882 = vrot.slane %v319, %v881
    %v883 = vlaneseq
    %v884 = vshrl.u32 %v883, 7
    %v885 = vsub.s32 0, %v884
    %v886 = vrot.slane %v321, %v885
    %v887 = vlaneseq
    %v888 = vshrl.u32 %v887, 7
    %v889 = vsub.s32 0, %v888
    %v890 = vrot.slane %v345, %v889
    %v891 = vlaneseq
    %v892 = vshrl.u32 %v891, 7
    %v893 = vsub.s32 0, %v892
    %v894 = vrot.slane %v359, %v893
    %v895 = vlaneseq
    %v896 = vshrl.u32 %v895, 7
    %v897 = vsub.s32 0, %v896
    %v898 = vrot.slane %v367, %v897
    %v899 = vlaneseq
    %v900 = vshrl.u32 %v899, 7
    %v901 = vsub.s32 0, %v900
    %v902 = vrot.slane %v369, %v901
    %v903 = vlaneseq
    %v904 = vshrl.u32 %v903, 7
    %v905 = vsub.s32 0, %v904
    %v906 = vrot.slane %v352, %v905
    %v907 = vlaneseq
    %v908 = vshrl.u32 %v907, 7
    %v909 = vsub.s32 0, %v908
    %v910 = vrot.slane %v366, %v909
    %v911 = vlaneseq
    %v912 = vshrl.u32 %v911, 7
    %v913 = vsub.s32 0, %v912
    %v914 = vrot.slane %v368, %v913
    %v915 = vlaneseq
    %v916 = vshrl.u32 %v915, 7
    %v917 = vsub.s32 0, %v916
    %v918 = vrot.slane %v370, %v917
    %v919 = vlaneseq
    %v920 = vshrl.u32 %v919, 7
    %v921 = vsub.s32 0, %v920
    %v922 = vrot.slane %v394, %v921
    %v923 = vlaneseq
    %v924 = vshrl.u32 %v923, 7
    %v925 = vsub.s32 0, %v924
    %v926 = vrot.slane %v408, %v925
    %v927 = vlaneseq
    %v928 = vshrl.u32 %v927, 7
    %v929 = vsub.s32 0, %v928
    %v930 = vrot.slane %v416, %v929
    %v931 = vlaneseq
    %v932 = vshrl.u32 %v931, 7
    %v933 = vsub.s32 0, %v932
    %v934 = vrot.slane %v418, %v933
    %v935 = vlaneseq
    %v936 = vshrl.u32 %v935, 7
    %v937 = vsub.s32 0, %v936
    %v938 = vrot.slane %v401, %v937
    %v939 = vlaneseq
    %v940 = vshrl.u32 %v939, 7
    %v941 = vsub.s32 0, %v940
    %v942 = vrot.slane %v415, %v941
    %v943 = vlaneseq
    %v944 = vshrl.u32 %v943, 7
    %v945 = vsub.s32 0, %v944
    %v946 = vrot.slane %v417, %v945
    %v947 = vlaneseq
    %v948 = vshrl.u32 %v947, 7
    %v949 = vsub.s32 0, %v948
    %v950 = vrot.slane %v419, %v949
    %v951 = vlaneseq
    %v952 = vshrl.u32 %v951, 7
    %v953 = vsub.s32 0, %v952
    %v954 = vrot.slane %v443, %v953
    %v955 = vlaneseq
    %v956 = vshrl.u32 %v955, 7
    %v957 = vsub.s32 0, %v956
    %v958 = vrot.slane %v457, %v957
    %v959 = vlaneseq
    %v960 = vshrl.u32 %v959, 7
    %v961 = vsub.s32 0, %v960
    %v962 = vrot.slane %v465, %v961
    %v963 = vlaneseq
    %v964 = vshrl.u32 %v963, 7
    %v965 = vsub.s32 0, %v964
    %v966 = vrot.slane %v467, %v965
    %v967 = vlaneseq
    %v968 = vshrl.u32 %v967, 7
    %v969 = vsub.s32 0, %v968
    %v970 = vrot.slane %v450, %v969
    %v971 = vlaneseq
    %v972 = vshrl.u32 %v971, 7
    %v973 = vsub.s32 0, %v972
    %v974 = vrot.slane %v464, %v973
    %v975 = vlaneseq
    %v976 = vshrl.u32 %v975, 7
    %v977 = vsub.s32 0, %v976
    %v978 = vrot.slane %v466, %v977
    %v979 = vlaneseq
    %v980 = vshrl.u32 %v979, 7
    %v981 = vsub.s32 0, %v980
    %v982 = vrot.slane %v468, %v981
    %v983 = vlaneseq
    %v984 = vshrl.u32 %v983, 7
    %v985 = vsub.s32 0, %v984
    %v986 = vrot.slane %v492, %v985
    %v987 = vlaneseq
    %v988 = vshrl.u32 %v987, 7
    %v989 = vsub.s32 0, %v988
    %v990 = vrot.slane %v506, %v989
    %v991 = vlaneseq
    %v992 = vshrl.u32 %v991, 7
    %v993 = vsub.s32 0, %v992
    %v994 = vrot.slane %v514, %v993
    %v995 = vlaneseq
    %v996 = vshrl.u32 %v995, 7
    %v997 = vsub.s32 0, %v996
    %v998 = vrot.slane %v516, %v997
    %v999 = vlaneseq
    %v1000 = vshrl.u32 %v999, 7
    %v1001 = vsub.s32 0, %v1000
    %v1002 = vrot.slane %v499, %v1001
    %v1003 = vlaneseq
    %v1004 = vshrl.u32 %v1003, 7
    %v1005 = vsub.s32 0, %v1004
    %v1006 = vrot.slane %v513, %v1005
    %v1007 = vlaneseq
    %v1008 = vshrl.u32 %v1007, 7
    %v1009 = vsub.s32 0, %v1008
    %v1010 = vrot.slane %v515, %v1009
    %v1011 = vlaneseq
    %v1012 = vshrl.u32 %v1011, 7
    %v1013 = vsub.s32 0, %v1012
    %v1014 = vrot.slane %v517, %v1013
    %v1015 = vlaneseq
    %v1016 = vshrl.u32 %v1015, 7
    %v1017 = vsub.s32 0, %v1016
    %v1018 = vrot.slane %v541, %v1017
    %v1019 = vlaneseq
    %v1020 = vshrl.u32 %v1019, 7
    %v1021 = vsub.s32 0, %v1020
    %v1022 = vrot.slane %v555, %v1021
    %v1023 = vlaneseq
    %v1024 = vshrl.u32 %v1023, 7
    %v1025 = vsub.s32 0, %v1024
    %v1026 = vrot.slane %v563, %v1025
    %v1027 = vlaneseq
    %v1028 = vshrl.u32 %v1027, 7
    %v1029 = vsub.s32 0, %v1028
    %v1030 = vrot.slane %v565, %v1029
    %v1031 = vlaneseq
    %v1032 = vshrl.u32 %v1031, 7
    %v1033 = vsub.s32 0, %v1032
    %v1034 = vrot.slane %v548, %v1033
    %v1035 = vlaneseq
    %v1036 = vshrl.u32 %v1035, 7
    %v1037 = vsub.s32 0, %v1036
    %v1038 = vrot.slane %v562, %v1037
    %v1039 = vlaneseq
    %v1040 = vshrl.u32 %v1039, 7
    %v1041 = vsub.s32 0, %v1040
    %v1042 = vrot.slane %v564, %v1041
    %v1043 = vlaneseq
    %v1044 = vshrl.u32 %v1043, 7
    %v1045 = vsub.s32 0, %v1044
    %v1046 = vrot.slane %v566, %v1045
    %v1047 = vlaneseq
    %v1048 = vshrl.u32 %v1047, 7
    %v1049 = vsub.s32 0, %v1048
    %v1050 = vrot.slane %v590, %v1049
    %v1051 = vlaneseq
    %v1052 = vshrl.u32 %v1051, 7
    %v1053 = vsub.s32 0, %v1052
    %v1054 = vrot.slane %v604, %v1053
    %v1055 = vlaneseq
    %v1056 = vshrl.u32 %v1055, 7
    %v1057 = vsub.s32 0, %v1056
    %v1058 = vrot.slane %v612, %v1057
    %v1059 = vlaneseq
    %v1060 = vshrl.u32 %v1059, 7
    %v1061 = vsub.s32 0, %v1060
    %v1062 = vrot.slane %v614, %v1061
    %v1063 = vlaneseq
    %v1064 = vshrl.u32 %v1063, 7
    %v1065 = vsub.s32 0, %v1064
    %v1066 = vrot.slane %v597, %v1065
    %v1067 = vlaneseq
    %v1068 = vshrl.u32 %v1067, 7
    %v1069 = vsub.s32 0, %v1068
    %v1070 = vrot.slane %v611, %v1069
    %v1071 = vlaneseq
    %v1072 = vshrl.u32 %v1071, 7
    %v1073 = vsub.s32 0, %v1072
    %v1074 = vrot.slane %v613, %v1073
    %v1075 = vlaneseq
    %v1076 = vshrl.u32 %v1075, 7
    %v1077 = vsub.s32 0, %v1076
    %v1078 = vrot.slane %v615, %v1077
    %v1079 = vlaneseq
    %v1080 = vshrl.u32 %v1079, 7
    %v1081 = vsub.s32 0, %v1080
    %v1082 = vrot.slane %v639, %v1081
    %v1083 = vlaneseq
    %v1084 = vshrl.u32 %v1083, 7
    %v1085 = vsub.s32 0, %v1084
    %v1086 = vrot.slane %v653, %v1085
    %v1087 = vlaneseq
    %v1088 = vshrl.u32 %v1087, 7
    %v1089 = vsub.s32 0, %v1088
    %v1090 = vrot.slane %v661, %v1089
    %v1091 = vlaneseq
    %v1092 = vshrl.u32 %v1091, 7
    %v1093 = vsub.s32 0, %v1092
    %v1094 = vrot.slane %v663, %v1093
    %v1095 = vlaneseq
    %v1096 = vshrl.u32 %v1095, 7
    %v1097 = vsub.s32 0, %v1096
    %v1098 = vrot.slane %v646, %v1097
    %v1099 = vlaneseq
    %v1100 = vshrl.u32 %v1099, 7
    %v1101 = vsub.s32 0, %v1100
    %v1102 = vrot.slane %v660, %v1101
    %v1103 = vlaneseq
    %v1104 = vshrl.u32 %v1103, 7
    %v1105 = vsub.s32 0, %v1104
    %v1106 = vrot.slane %v662, %v1105
    %v1107 = vlaneseq
    %v1108 = vshrl.u32 %v1107, 7
    %v1109 = vsub.s32 0, %v1108
    %v1110 = vrot.slane %v664, %v1109
    %v1111 = vlaneseq
    %v1112 = vshrl.u32 %v1111, 7
    %v1113 = vsub.s32 0, %v1112
    %v1114 = vrot.slane %v688, %v1113
    %v1115 = vlaneseq
    %v1116 = vshrl.u32 %v1115, 7
    %v1117 = vsub.s32 0, %v1116
    %v1118 = vrot.slane %v702, %v1117
    %v1119 = vlaneseq
    %v1120 = vshrl.u32 %v1119, 7
    %v1121 = vsub.s32 0, %v1120
    %v1122 = vrot.slane %v710, %v1121
    %v1123 = vlaneseq
    %v1124 = vshrl.u32 %v1123, 7
    %v1125 = vsub.s32 0, %v1124
    %v1126 = vrot.slane %v711, %v1125
    %v1127 = vlaneseq
    %v1128 = vshrl.u32 %v1127, 7
    %v1129 = vsub.s32 0, %v1128
    %v1130 = vrot.slane %v695, %v1129
    %v1131 = vlaneseq
    %v1132 = vshrl.u32 %v1131, 7
    %v1133 = vsub.s32 0, %v1132
    %v1134 = vrot.slane %v709, %v1133
    %1238 = vset.pattern.permute.xlu0 0
    %1239 = vperm.xlu0 %1238, %v726
    %v1240 = vpop.permute.xlu0 %1239
    %v1242 = vmul.f32 %v730, %v1240
    %v1243 = vmul.f32 %v734, %v1240
    %v1244 = vmul.f32 %v738, %v1240
    %v1245 = vmul.f32 %v742, %v1240
    %v1246 = vmul.f32 %v746, %v1240
    %v1247 = vmul.f32 %v750, %v1240
    %v1248 = vmul.f32 %v754, %v1240
    %v1249 = vmul.f32 %v758, %v1240
    %v1250 = vmul.f32 %v762, %v1240
    %v1251 = vmul.f32 %v766, %v1240
    %v1252 = vmul.f32 %v770, %v1240
    %v1253 = vmul.f32 %v774, %v1240
    %v1254 = vmul.f32 %v778, %v1240
    %v1255 = vmul.f32 %v782, %v1240
    %v1256 = vmul.f32 %v786, %v1240
    %v1257 = vmul.f32 %v790, %v1240
    %v1258 = vmul.f32 %v794, %v1240
    %v1259 = vmul.f32 %v798, %v1240
    %v1260 = vmul.f32 %v802, %v1240
    %v1261 = vmul.f32 %v806, %v1240
    %v1262 = vmul.f32 %v810, %v1240
    %v1263 = vmul.f32 %v814, %v1240
    %v1264 = vmul.f32 %v818, %v1240
    %v1265 = vmul.f32 %v822, %v1240
    %v1266 = vmul.f32 %v826, %v1240
    %v1267 = vmul.f32 %v830, %v1240
    %v1268 = vmul.f32 %v834, %v1240
    %v1269 = vmul.f32 %v838, %v1240
    %v1270 = vmul.f32 %v842, %v1240
    %v1271 = vmul.f32 %v846, %v1240
    %v1272 = vmul.f32 %v850, %v1240
    %v1273 = vmul.f32 %v854, %v1240
    %v1274 = vmul.f32 %v858, %v1240
    %v1275 = vmul.f32 %v862, %v1240
    %v1276 = vmul.f32 %v866, %v1240
    %v1277 = vmul.f32 %v870, %v1240
    %v1278 = vmul.f32 %v874, %v1240
    %v1279 = vmul.f32 %v878, %v1240
    %v1280 = vmul.f32 %v882, %v1240
    %v1281 = vmul.f32 %v886, %v1240
    %v1282 = vmul.f32 %v890, %v1240
    %v1283 = vmul.f32 %v894, %v1240
    %v1284 = vmul.f32 %v898, %v1240
    %v1285 = vmul.f32 %v902, %v1240
    %v1286 = vmul.f32 %v906, %v1240
    %v1287 = vmul.f32 %v910, %v1240
    %v1288 = vmul.f32 %v914, %v1240
    %v1289 = vmul.f32 %v918, %v1240
    %v1290 = vmul.f32 %v922, %v1240
    %v1291 = vmul.f32 %v926, %v1240
    %v1292 = vmul.f32 %v930, %v1240
    %v1293 = vmul.f32 %v934, %v1240
    %v1294 = vmul.f32 %v938, %v1240
    %v1295 = vmul.f32 %v942, %v1240
    %v1296 = vmul.f32 %v946, %v1240
    %v1297 = vmul.f32 %v950, %v1240
    %v1298 = vmul.f32 %v954, %v1240
    %v1299 = vmul.f32 %v958, %v1240
    %v1300 = vmul.f32 %v962, %v1240
    %v1301 = vmul.f32 %v966, %v1240
    %v1302 = vmul.f32 %v970, %v1240
    %v1303 = vmul.f32 %v974, %v1240
    %v1304 = vmul.f32 %v978, %v1240
    %v1305 = vmul.f32 %v982, %v1240
    %v1306 = vmul.f32 %v986, %v1240
    %v1307 = vmul.f32 %v990, %v1240
    %v1308 = vmul.f32 %v994, %v1240
    %v1309 = vmul.f32 %v998, %v1240
    %v1310 = vmul.f32 %v1002, %v1240
    %v1311 = vmul.f32 %v1006, %v1240
    %v1312 = vmul.f32 %v1010, %v1240
    %v1313 = vmul.f32 %v1014, %v1240
    %v1314 = vmul.f32 %v1018, %v1240
    %v1315 = vmul.f32 %v1022, %v1240
    %v1316 = vmul.f32 %v1026, %v1240
    %v1317 = vmul.f32 %v1030, %v1240
    %v1318 = vmul.f32 %v1034, %v1240
    %v1319 = vmul.f32 %v1038, %v1240
    %v1320 = vmul.f32 %v1042, %v1240
    %v1321 = vmul.f32 %v1046, %v1240
    %v1322 = vmul.f32 %v1050, %v1240
    %v1323 = vmul.f32 %v1054, %v1240
    %v1324 = vmul.f32 %v1058, %v1240
    %v1325 = vmul.f32 %v1062, %v1240
    %v1326 = vmul.f32 %v1066, %v1240
    %v1327 = vmul.f32 %v1070, %v1240
    %v1328 = vmul.f32 %v1074, %v1240
    %v1329 = vmul.f32 %v1078, %v1240
    %v1330 = vmul.f32 %v1082, %v1240
    %v1331 = vmul.f32 %v1086, %v1240
    %v1332 = vmul.f32 %v1090, %v1240
    %v1333 = vmul.f32 %v1094, %v1240
    %v1334 = vmul.f32 %v1098, %v1240
    %v1335 = vmul.f32 %v1102, %v1240
    %v1336 = vmul.f32 %v1106, %v1240
    %v1337 = vmul.f32 %v1110, %v1240
    %v1338 = vmul.f32 %v1114, %v1240
    %v1339 = vmul.f32 %v1118, %v1240
    %v1340 = vmul.f32 %v1122, %v1240
    %v1341 = vmul.f32 %v1126, %v1240
    %v1342 = vmul.f32 %v1130, %v1240
    %v1343 = vmul.f32 %v1134, %v1240
    %v1344 = vcombine.high %v695, %v695
    %s1345 = scalar_lea.vmem %s1, 8
    %v1346 = vld [vmem:[%s1345] sm:$0xff]
    %v1347 = vlaneseq
    %v1348 = vshrl.u32 %v1347, 7
    %v1349 = vsub.s32 0, %v1348
    %v1350 = vrot.slane %v1344, %v1349
    %1353 = vset.pattern.permute.xlu0 0
    %1354 = vperm.xlu0 %1353, %v1346
    %v1355 = vpop.permute.xlu0 %1354
    %v1357 = vmul.f32 %v734, %v1355
    %v1358 = vmul.f32 %v738, %v1355
    %v1359 = vmul.f32 %v742, %v1355
    %v1360 = vmul.f32 %v746, %v1355
    %v1361 = vmul.f32 %v750, %v1355
    %v1362 = vmul.f32 %v754, %v1355
    %v1363 = vmul.f32 %v758, %v1355
    %v1364 = vmul.f32 %v762, %v1355
    %v1365 = vmul.f32 %v766, %v1355
    %v1366 = vmul.f32 %v770, %v1355
    %v1367 = vmul.f32 %v774, %v1355
    %v1368 = vmul.f32 %v778, %v1355
    %v1369 = vmul.f32 %v782, %v1355
    %v1370 = vmul.f32 %v786, %v1355
    %v1371 = vmul.f32 %v790, %v1355
    %v1372 = vmul.f32 %v794, %v1355
    %v1373 = vmul.f32 %v798, %v1355
    %v1374 = vmul.f32 %v802, %v1355
    %v1375 = vmul.f32 %v806, %v1355
    %v1376 = vmul.f32 %v810, %v1355
    %v1377 = vmul.f32 %v814, %v1355
    %v1378 = vmul.f32 %v818, %v1355
    %v1379 = vmul.f32 %v822, %v1355
    %v1380 = vmul.f32 %v826, %v1355
    %v1381 = vmul.f32 %v830, %v1355
    %v1382 = vmul.f32 %v834, %v1355
    %v1383 = vmul.f32 %v838, %v1355
    %v1384 = vmul.f32 %v842, %v1355
    %v1385 = vmul.f32 %v846, %v1355
    %v1386 = vmul.f32 %v850, %v1355
    %v1387 = vmul.f32 %v854, %v1355
    %v1388 = vmul.f32 %v858, %v1355
    %v1389 = vmul.f32 %v862, %v1355
    %v1390 = vmul.f32 %v866, %v1355
    %v1391 = vmul.f32 %v870, %v1355
    %v1392 = vmul.f32 %v874, %v1355
    %v1393 = vmul.f32 %v878, %v1355
    %v1394 = vmul.f32 %v882, %v1355
    %v1395 = vmul.f32 %v886, %v1355
    %v1396 = vmul.f32 %v890, %v1355
    %v1397 = vmul.f32 %v894, %v1355
    %v1398 = vmul.f32 %v898, %v1355
    %v1399 = vmul.f32 %v902, %v1355
    %v1400 = vmul.f32 %v906, %v1355
    %v1401 = vmul.f32 %v910, %v1355
    %v1402 = vmul.f32 %v914, %v1355
    %v1403 = vmul.f32 %v918, %v1355
    %v1404 = vmul.f32 %v922, %v1355
    %v1405 = vmul.f32 %v926, %v1355
    %v1406 = vmul.f32 %v930, %v1355
    %v1407 = vmul.f32 %v934, %v1355
    %v1408 = vmul.f32 %v938, %v1355
    %v1409 = vmul.f32 %v942, %v1355
    %v1410 = vmul.f32 %v946, %v1355
    %v1411 = vmul.f32 %v950, %v1355
    %v1412 = vmul.f32 %v954, %v1355
    %v1413 = vmul.f32 %v958, %v1355
    %v1414 = vmul.f32 %v962, %v1355
    %v1415 = vmul.f32 %v966, %v1355
    %v1416 = vmul.f32 %v970, %v1355
    %v1417 = vmul.f32 %v974, %v1355
    %v1418 = vmul.f32 %v978, %v1355
    %v1419 = vmul.f32 %v982, %v1355
    %v1420 = vmul.f32 %v986, %v1355
    %v1421 = vmul.f32 %v990, %v1355
    %v1422 = vmul.f32 %v994, %v1355
    %v1423 = vmul.f32 %v998, %v1355
    %v1424 = vmul.f32 %v1002, %v1355
    %v1425 = vmul.f32 %v1006, %v1355
    %v1426 = vmul.f32 %v1010, %v1355
    %v1427 = vmul.f32 %v1014, %v1355
    %v1428 = vmul.f32 %v1018, %v1355
    %v1429 = vmul.f32 %v1022, %v1355
    %v1430 = vmul.f32 %v1026, %v1355
    %v1431 = vmul.f32 %v1030, %v1355
    %v1432 = vmul.f32 %v1034, %v1355
    %v1433 = vmul.f32 %v1038, %v1355
    %v1434 = vmul.f32 %v1042, %v1355
    %v1435 = vmul.f32 %v1046, %v1355
    %v1436 = vmul.f32 %v1050, %v1355
    %v1437 = vmul.f32 %v1054, %v1355
    %v1438 = vmul.f32 %v1058, %v1355
    %v1439 = vmul.f32 %v1062, %v1355
    %v1440 = vmul.f32 %v1066, %v1355
    %v1441 = vmul.f32 %v1070, %v1355
    %v1442 = vmul.f32 %v1074, %v1355
    %v1443 = vmul.f32 %v1078, %v1355
    %v1444 = vmul.f32 %v1082, %v1355
    %v1445 = vmul.f32 %v1086, %v1355
    %v1446 = vmul.f32 %v1090, %v1355
    %v1447 = vmul.f32 %v1094, %v1355
    %v1448 = vmul.f32 %v1098, %v1355
    %v1449 = vmul.f32 %v1102, %v1355
    %v1450 = vmul.f32 %v1106, %v1355
    %v1451 = vmul.f32 %v1110, %v1355
    %v1452 = vmul.f32 %v1114, %v1355
    %v1453 = vmul.f32 %v1118, %v1355
    %v1454 = vmul.f32 %v1122, %v1355
    %v1455 = vmul.f32 %v1126, %v1355
    %v1456 = vmul.f32 %v1130, %v1355
    %v1457 = vmul.f32 %v1134, %v1355
    %v1458 = vmul.f32 %v1350, %v1355
    %v1459 = vadd.f32 %v1242, %v1357
    %v1460 = vadd.f32 %v1243, %v1358
    %v1461 = vadd.f32 %v1244, %v1359
    %v1462 = vadd.f32 %v1245, %v1360
    %v1463 = vadd.f32 %v1246, %v1361
    %v1464 = vadd.f32 %v1247, %v1362
    %v1465 = vadd.f32 %v1248, %v1363
    %v1466 = vadd.f32 %v1249, %v1364
    %v1467 = vadd.f32 %v1250, %v1365
    %v1468 = vadd.f32 %v1251, %v1366
    %v1469 = vadd.f32 %v1252, %v1367
    %v1470 = vadd.f32 %v1253, %v1368
    %v1471 = vadd.f32 %v1254, %v1369
    %v1472 = vadd.f32 %v1255, %v1370
    %v1473 = vadd.f32 %v1256, %v1371
    %v1474 = vadd.f32 %v1257, %v1372
    %v1475 = vadd.f32 %v1258, %v1373
    %v1476 = vadd.f32 %v1259, %v1374
    %v1477 = vadd.f32 %v1260, %v1375
    %v1478 = vadd.f32 %v1261, %v1376
    %v1479 = vadd.f32 %v1262, %v1377
    %v1480 = vadd.f32 %v1263, %v1378
    %v1481 = vadd.f32 %v1264, %v1379
    %v1482 = vadd.f32 %v1265, %v1380
    %v1483 = vadd.f32 %v1266, %v1381
    %v1484 = vadd.f32 %v1267, %v1382
    %v1485 = vadd.f32 %v1268, %v1383
    %v1486 = vadd.f32 %v1269, %v1384
    %v1487 = vadd.f32 %v1270, %v1385
    %v1488 = vadd.f32 %v1271, %v1386
    %v1489 = vadd.f32 %v1272, %v1387
    %v1490 = vadd.f32 %v1273, %v1388
    %v1491 = vadd.f32 %v1274, %v1389
    %v1492 = vadd.f32 %v1275, %v1390
    %v1493 = vadd.f32 %v1276, %v1391
    %v1494 = vadd.f32 %v1277, %v1392
    %v1495 = vadd.f32 %v1278, %v1393
    %v1496 = vadd.f32 %v1279, %v1394
    %v1497 = vadd.f32 %v1280, %v1395
    %v1498 = vadd.f32 %v1281, %v1396
    %v1499 = vadd.f32 %v1282, %v1397
    %v1500 = vadd.f32 %v1283, %v1398
    %v1501 = vadd.f32 %v1284, %v1399
    %v1502 = vadd.f32 %v1285, %v1400
    %v1503 = vadd.f32 %v1286, %v1401
    %v1504 = vadd.f32 %v1287, %v1402
    %v1505 = vadd.f32 %v1288, %v1403
    %v1506 = vadd.f32 %v1289, %v1404
    %v1507 = vadd.f32 %v1290, %v1405
    %v1508 = vadd.f32 %v1291, %v1406
    %v1509 = vadd.f32 %v1292, %v1407
    %v1510 = vadd.f32 %v1293, %v1408
    %v1511 = vadd.f32 %v1294, %v1409
    %v1512 = vadd.f32 %v1295, %v1410
    %v1513 = vadd.f32 %v1296, %v1411
    %v1514 = vadd.f32 %v1297, %v1412
    %v1515 = vadd.f32 %v1298, %v1413
    %v1516 = vadd.f32 %v1299, %v1414
    %v1517 = vadd.f32 %v1300, %v1415
    %v1518 = vadd.f32 %v1301, %v1416
    %v1519 = vadd.f32 %v1302, %v1417
    %v1520 = vadd.f32 %v1303, %v1418
    %v1521 = vadd.f32 %v1304, %v1419
    %v1522 = vadd.f32 %v1305, %v1420
    %v1523 = vadd.f32 %v1306, %v1421
    %v1524 = vadd.f32 %v1307, %v1422
    %v1525 = vadd.f32 %v1308, %v1423
    %v1526 = vadd.f32 %v1309, %v1424
    %v1527 = vadd.f32 %v1310, %v1425
    %v1528 = vadd.f32 %v1311, %v1426
    %v1529 = vadd.f32 %v1312, %v1427
    %v1530 = vadd.f32 %v1313, %v1428
    %v1531 = vadd.f32 %v1314, %v1429
    %v1532 = vadd.f32 %v1315, %v1430
    %v1533 = vadd.f32 %v1316, %v1431
    %v1534 = vadd.f32 %v1317, %v1432
    %v1535 = vadd.f32 %v1318, %v1433
    %v1536 = vadd.f32 %v1319, %v1434
    %v1537 = vadd.f32 %v1320, %v1435
    %v1538 = vadd.f32 %v1321, %v1436
    %v1539 = vadd.f32 %v1322, %v1437
    %v1540 = vadd.f32 %v1323, %v1438
    %v1541 = vadd.f32 %v1324, %v1439
    %v1542 = vadd.f32 %v1325, %v1440
    %v1543 = vadd.f32 %v1326, %v1441
    %v1544 = vadd.f32 %v1327, %v1442
    %v1545 = vadd.f32 %v1328, %v1443
    %v1546 = vadd.f32 %v1329, %v1444
    %v1547 = vadd.f32 %v1330, %v1445
    %v1548 = vadd.f32 %v1331, %v1446
    %v1549 = vadd.f32 %v1332, %v1447
    %v1550 = vadd.f32 %v1333, %v1448
    %v1551 = vadd.f32 %v1334, %v1449
    %v1552 = vadd.f32 %v1335, %v1450
    %v1553 = vadd.f32 %v1336, %v1451
    %v1554 = vadd.f32 %v1337, %v1452
    %v1555 = vadd.f32 %v1338, %v1453
    %v1556 = vadd.f32 %v1339, %v1454
    %v1557 = vadd.f32 %v1340, %v1455
    %v1558 = vadd.f32 %v1341, %v1456
    %v1559 = vadd.f32 %v1342, %v1457
    %v1560 = vadd.f32 %v1343, %v1458
    %v1561 = vcombine.high %v709, %v709
    %s1562 = scalar_lea.vmem %s1, 16
    %v1563 = vld [vmem:[%s1562] sm:$0xff]
    %v1564 = vlaneseq
    %v1565 = vshrl.u32 %v1564, 7
    %v1566 = vsub.s32 0, %v1565
    %v1567 = vrot.slane %v1561, %v1566
    %1570 = vset.pattern.permute.xlu0 0
    %1571 = vperm.xlu0 %1570, %v1563
    %v1572 = vpop.permute.xlu0 %1571
    %v1574 = vmul.f32 %v738, %v1572
    %v1575 = vmul.f32 %v742, %v1572
    %v1576 = vmul.f32 %v746, %v1572
    %v1577 = vmul.f32 %v750, %v1572
    %v1578 = vmul.f32 %v754, %v1572
    %v1579 = vmul.f32 %v758, %v1572
    %v1580 = vmul.f32 %v762, %v1572
    %v1581 = vmul.f32 %v766, %v1572
    %v1582 = vmul.f32 %v770, %v1572
    %v1583 = vmul.f32 %v774, %v1572
    %v1584 = vmul.f32 %v778, %v1572
    %v1585 = vmul.f32 %v782, %v1572
    %v1586 = vmul.f32 %v786, %v1572
    %v1587 = vmul.f32 %v790, %v1572
    %v1588 = vmul.f32 %v794, %v1572
    %v1589 = vmul.f32 %v798, %v1572
    %v1590 = vmul.f32 %v802, %v1572
    %v1591 = vmul.f32 %v806, %v1572
    %v1592 = vmul.f32 %v810, %v1572
    %v1593 = vmul.f32 %v814, %v1572
    %v1594 = vmul.f32 %v818, %v1572
    %v1595 = vmul.f32 %v822, %v1572
    %v1596 = vmul.f32 %v826, %v1572
    %v1597 = vmul.f32 %v830, %v1572
    %v1598 = vmul.f32 %v834, %v1572
    %v1599 = vmul.f32 %v838, %v1572
    %v1600 = vmul.f32 %v842, %v1572
    %v1601 = vmul.f32 %v846, %v1572
    %v1602 = vmul.f32 %v850, %v1572
    %v1603 = vmul.f32 %v854, %v1572
    %v1604 = vmul.f32 %v858, %v1572
    %v1605 = vmul.f32 %v862, %v1572
    %v1606 = vmul.f32 %v866, %v1572
    %v1607 = vmul.f32 %v870, %v1572
    %v1608 = vmul.f32 %v874, %v1572
    %v1609 = vmul.f32 %v878, %v1572
    %v1610 = vmul.f32 %v882, %v1572
    %v1611 = vmul.f32 %v886, %v1572
    %v1612 = vmul.f32 %v890, %v1572
    %v1613 = vmul.f32 %v894, %v1572
    %v1614 = vmul.f32 %v898, %v1572
    %v1615 = vmul.f32 %v902, %v1572
    %v1616 = vmul.f32 %v906, %v1572
    %v1617 = vmul.f32 %v910, %v1572
    %v1618 = vmul.f32 %v914, %v1572
    %v1619 = vmul.f32 %v918, %v1572
    %v1620 = vmul.f32 %v922, %v1572
    %v1621 = vmul.f32 %v926, %v1572
    %v1622 = vmul.f32 %v930, %v1572
    %v1623 = vmul.f32 %v934, %v1572
    %v1624 = vmul.f32 %v938, %v1572
    %v1625 = vmul.f32 %v942, %v1572
    %v1626 = vmul.f32 %v946, %v1572
    %v1627 = vmul.f32 %v950, %v1572
    %v1628 = vmul.f32 %v954, %v1572
    %v1629 = vmul.f32 %v958, %v1572
    %v1630 = vmul.f32 %v962, %v1572
    %v1631 = vmul.f32 %v966, %v1572
    %v1632 = vmul.f32 %v970, %v1572
    %v1633 = vmul.f32 %v974, %v1572
    %v1634 = vmul.f32 %v978, %v1572
    %v1635 = vmul.f32 %v982, %v1572
    %v1636 = vmul.f32 %v986, %v1572
    %v1637 = vmul.f32 %v990, %v1572
    %v1638 = vmul.f32 %v994, %v1572
    %v1639 = vmul.f32 %v998, %v1572
    %v1640 = vmul.f32 %v1002, %v1572
    %v1641 = vmul.f32 %v1006, %v1572
    %v1642 = vmul.f32 %v1010, %v1572
    %v1643 = vmul.f32 %v1014, %v1572
    %v1644 = vmul.f32 %v1018, %v1572
    %v1645 = vmul.f32 %v1022, %v1572
    %v1646 = vmul.f32 %v1026, %v1572
    %v1647 = vmul.f32 %v1030, %v1572
    %v1648 = vmul.f32 %v1034, %v1572
    %v1649 = vmul.f32 %v1038, %v1572
    %v1650 = vmul.f32 %v1042, %v1572
    %v1651 = vmul.f32 %v1046, %v1572
    %v1652 = vmul.f32 %v1050, %v1572
    %v1653 = vmul.f32 %v1054, %v1572
    %v1654 = vmul.f32 %v1058, %v1572
    %v1655 = vmul.f32 %v1062, %v1572
    %v1656 = vmul.f32 %v1066, %v1572
    %v1657 = vmul.f32 %v1070, %v1572
    %v1658 = vmul.f32 %v1074, %v1572
    %v1659 = vmul.f32 %v1078, %v1572
    %v1660 = vmul.f32 %v1082, %v1572
    %v1661 = vmul.f32 %v1086, %v1572
    %v1662 = vmul.f32 %v1090, %v1572
    %v1663 = vmul.f32 %v1094, %v1572
    %v1664 = vmul.f32 %v1098, %v1572
    %v1665 = vmul.f32 %v1102, %v1572
    %v1666 = vmul.f32 %v1106, %v1572
    %v1667 = vmul.f32 %v1110, %v1572
    %v1668 = vmul.f32 %v1114, %v1572
    %v1669 = vmul.f32 %v1118, %v1572
    %v1670 = vmul.f32 %v1122, %v1572
    %v1671 = vmul.f32 %v1126, %v1572
    %v1672 = vmul.f32 %v1130, %v1572
    %v1673 = vmul.f32 %v1134, %v1572
    %v1674 = vmul.f32 %v1350, %v1572
    %v1675 = vmul.f32 %v1567, %v1572
    %v1676 = vadd.f32 %v1459, %v1574
    %v1677 = vadd.f32 %v1460, %v1575
    %v1678 = vadd.f32 %v1461, %v1576
    %v1679 = vadd.f32 %v1462, %v1577
    %v1680 = vadd.f32 %v1463, %v1578
    %v1681 = vadd.f32 %v1464, %v1579
    %v1682 = vadd.f32 %v1465, %v1580
    %v1683 = vadd.f32 %v1466, %v1581
    %v1684 = vadd.f32 %v1467, %v1582
    %v1685 = vadd.f32 %v1468, %v1583
    %v1686 = vadd.f32 %v1469, %v1584
    %v1687 = vadd.f32 %v1470, %v1585
    %v1688 = vadd.f32 %v1471, %v1586
    %v1689 = vadd.f32 %v1472, %v1587
    %v1690 = vadd.f32 %v1473, %v1588
    %v1691 = vadd.f32 %v1474, %v1589
    %v1692 = vadd.f32 %v1475, %v1590
    %v1693 = vadd.f32 %v1476, %v1591
    %v1694 = vadd.f32 %v1477, %v1592
    %v1695 = vadd.f32 %v1478, %v1593
    %v1696 = vadd.f32 %v1479, %v1594
    %v1697 = vadd.f32 %v1480, %v1595
    %v1698 = vadd.f32 %v1481, %v1596
    %v1699 = vadd.f32 %v1482, %v1597
    %v1700 = vadd.f32 %v1483, %v1598
    %v1701 = vadd.f32 %v1484, %v1599
    %v1702 = vadd.f32 %v1485, %v1600
    %v1703 = vadd.f32 %v1486, %v1601
    %v1704 = vadd.f32 %v1487, %v1602
    %v1705 = vadd.f32 %v1488, %v1603
    %v1706 = vadd.f32 %v1489, %v1604
    %v1707 = vadd.f32 %v1490, %v1605
    %v1708 = vadd.f32 %v1491, %v1606
    %v1709 = vadd.f32 %v1492, %v1607
    %v1710 = vadd.f32 %v1493, %v1608
    %v1711 = vadd.f32 %v1494, %v1609
    %v1712 = vadd.f32 %v1495, %v1610
    %v1713 = vadd.f32 %v1496, %v1611
    %v1714 = vadd.f32 %v1497, %v1612
    %v1715 = vadd.f32 %v1498, %v1613
    %v1716 = vadd.f32 %v1499, %v1614
    %v1717 = vadd.f32 %v1500, %v1615
    %v1718 = vadd.f32 %v1501, %v1616
    %v1719 = vadd.f32 %v1502, %v1617
    %v1720 = vadd.f32 %v1503, %v1618
    %v1721 = vadd.f32 %v1504, %v1619
    %v1722 = vadd.f32 %v1505, %v1620
    %v1723 = vadd.f32 %v1506, %v1621
    %v1724 = vadd.f32 %v1507, %v1622
    %v1725 = vadd.f32 %v1508, %v1623
    %v1726 = vadd.f32 %v1509, %v1624
    %v1727 = vadd.f32 %v1510, %v1625
    %v1728 = vadd.f32 %v1511, %v1626
    %v1729 = vadd.f32 %v1512, %v1627
    %v1730 = vadd.f32 %v1513, %v1628
    %v1731 = vadd.f32 %v1514, %v1629
    %v1732 = vadd.f32 %v1515, %v1630
    %v1733 = vadd.f32 %v1516, %v1631
    %v1734 = vadd.f32 %v1517, %v1632
    %v1735 = vadd.f32 %v1518, %v1633
    %v1736 = vadd.f32 %v1519, %v1634
    %v1737 = vadd.f32 %v1520, %v1635
    %v1738 = vadd.f32 %v1521, %v1636
    %v1739 = vadd.f32 %v1522, %v1637
    %v1740 = vadd.f32 %v1523, %v1638
    %v1741 = vadd.f32 %v1524, %v1639
    %v1742 = vadd.f32 %v1525, %v1640
    %v1743 = vadd.f32 %v1526, %v1641
    %v1744 = vadd.f32 %v1527, %v1642
    %v1745 = vadd.f32 %v1528, %v1643
    %v1746 = vadd.f32 %v1529, %v1644
    %v1747 = vadd.f32 %v1530, %v1645
    %v1748 = vadd.f32 %v1531, %v1646
    %v1749 = vadd.f32 %v1532, %v1647
    %v1750 = vadd.f32 %v1533, %v1648
    %v1751 = vadd.f32 %v1534, %v1649
    %v1752 = vadd.f32 %v1535, %v1650
    %v1753 = vadd.f32 %v1536, %v1651
    %v1754 = vadd.f32 %v1537, %v1652
    %v1755 = vadd.f32 %v1538, %v1653
    %v1756 = vadd.f32 %v1539, %v1654
    %v1757 = vadd.f32 %v1540, %v1655
    %v1758 = vadd.f32 %v1541, %v1656
    %v1759 = vadd.f32 %v1542, %v1657
    %v1760 = vadd.f32 %v1543, %v1658
    %v1761 = vadd.f32 %v1544, %v1659
    %v1762 = vadd.f32 %v1545, %v1660
    %v1763 = vadd.f32 %v1546, %v1661
    %v1764 = vadd.f32 %v1547, %v1662
    %v1765 = vadd.f32 %v1548, %v1663
    %v1766 = vadd.f32 %v1549, %v1664
    %v1767 = vadd.f32 %v1550, %v1665
    %v1768 = vadd.f32 %v1551, %v1666
    %v1769 = vadd.f32 %v1552, %v1667
    %v1770 = vadd.f32 %v1553, %v1668
    %v1771 = vadd.f32 %v1554, %v1669
    %v1772 = vadd.f32 %v1555, %v1670
    %v1773 = vadd.f32 %v1556, %v1671
    %v1774 = vadd.f32 %v1557, %v1672
    %v1775 = vadd.f32 %v1558, %v1673
    %v1776 = vadd.f32 %v1559, %v1674
    %v1777 = vadd.f32 %v1560, %v1675
    %s1778 = scalar_lea.vmem %s1, 24
    %v1779 = vld [vmem:[%s1778] sm:$0xff]
    %v1780 = vlaneseq
    %v1781 = vshrl.u32 %v1780, 7
    %v1782 = vsub.s32 0, %v1781
    %v1783 = vrot.slane %v725, %v1782
    %1786 = vset.pattern.permute.xlu0 0
    %1787 = vperm.xlu0 %1786, %v1779
    %v1788 = vpop.permute.xlu0 %1787
    %v1790 = vmul.f32 %v742, %v1788
    %v1791 = vmul.f32 %v746, %v1788
    %v1792 = vmul.f32 %v750, %v1788
    %v1793 = vmul.f32 %v754, %v1788
    %v1794 = vmul.f32 %v758, %v1788
    %v1795 = vmul.f32 %v762, %v1788
    %v1796 = vmul.f32 %v766, %v1788
    %v1797 = vmul.f32 %v770, %v1788
    %v1798 = vmul.f32 %v774, %v1788
    %v1799 = vmul.f32 %v778, %v1788
    %v1800 = vmul.f32 %v782, %v1788
    %v1801 = vmul.f32 %v786, %v1788
    %v1802 = vmul.f32 %v790, %v1788
    %v1803 = vmul.f32 %v794, %v1788
    %v1804 = vmul.f32 %v798, %v1788
    %v1805 = vmul.f32 %v802, %v1788
    %v1806 = vmul.f32 %v806, %v1788
    %v1807 = vmul.f32 %v810, %v1788
    %v1808 = vmul.f32 %v814, %v1788
    %v1809 = vmul.f32 %v818, %v1788
    %v1810 = vmul.f32 %v822, %v1788
    %v1811 = vmul.f32 %v826, %v1788
    %v1812 = vmul.f32 %v830, %v1788
    %v1813 = vmul.f32 %v834, %v1788
    %v1814 = vmul.f32 %v838, %v1788
    %v1815 = vmul.f32 %v842, %v1788
    %v1816 = vmul.f32 %v846, %v1788
    %v1817 = vmul.f32 %v850, %v1788
    %v1818 = vmul.f32 %v854, %v1788
    %v1819 = vmul.f32 %v858, %v1788
    %v1820 = vmul.f32 %v862, %v1788
    %v1821 = vmul.f32 %v866, %v1788
    %v1822 = vmul.f32 %v870, %v1788
    %v1823 = vmul.f32 %v874, %v1788
    %v1824 = vmul.f32 %v878, %v1788
    %v1825 = vmul.f32 %v882, %v1788
    %v1826 = vmul.f32 %v886, %v1788
    %v1827 = vmul.f32 %v890, %v1788
    %v1828 = vmul.f32 %v894, %v1788
    %v1829 = vmul.f32 %v898, %v1788
    %v1830 = vmul.f32 %v902, %v1788
    %v1831 = vmul.f32 %v906, %v1788
    %v1832 = vmul.f32 %v910, %v1788
    %v1833 = vmul.f32 %v914, %v1788
    %v1834 = vmul.f32 %v918, %v1788
    %v1835 = vmul.f32 %v922, %v1788
    %v1836 = vmul.f32 %v926, %v1788
    %v1837 = vmul.f32 %v930, %v1788
    %v1838 = vmul.f32 %v934, %v1788
    %v1839 = vmul.f32 %v938, %v1788
    %v1840 = vmul.f32 %v942, %v1788
    %v1841 = vmul.f32 %v946, %v1788
    %v1842 = vmul.f32 %v950, %v1788
    %v1843 = vmul.f32 %v954, %v1788
    %v1844 = vmul.f32 %v958, %v1788
    %v1845 = vmul.f32 %v962, %v1788
    %v1846 = vmul.f32 %v966, %v1788
    %v1847 = vmul.f32 %v970, %v1788
    %v1848 = vmul.f32 %v974, %v1788
    %v1849 = vmul.f32 %v978, %v1788
    %v1850 = vmul.f32 %v982, %v1788
    %v1851 = vmul.f32 %v986, %v1788
    %v1852 = vmul.f32 %v990, %v1788
    %v1853 = vmul.f32 %v994, %v1788
    %v1854 = vmul.f32 %v998, %v1788
    %v1855 = vmul.f32 %v1002, %v1788
    %v1856 = vmul.f32 %v1006, %v1788
    %v1857 = vmul.f32 %v1010, %v1788
    %v1858 = vmul.f32 %v1014, %v1788
    %v1859 = vmul.f32 %v1018, %v1788
    %v1860 = vmul.f32 %v1022, %v1788
    %v1861 = vmul.f32 %v1026, %v1788
    %v1862 = vmul.f32 %v1030, %v1788
    %v1863 = vmul.f32 %v1034, %v1788
    %v1864 = vmul.f32 %v1038, %v1788
    %v1865 = vmul.f32 %v1042, %v1788
    %v1866 = vmul.f32 %v1046, %v1788
    %v1867 = vmul.f32 %v1050, %v1788
    %v1868 = vmul.f32 %v1054, %v1788
    %v1869 = vmul.f32 %v1058, %v1788
    %v1870 = vmul.f32 %v1062, %v1788
    %v1871 = vmul.f32 %v1066, %v1788
    %v1872 = vmul.f32 %v1070, %v1788
    %v1873 = vmul.f32 %v1074, %v1788
    %v1874 = vmul.f32 %v1078, %v1788
    %v1875 = vmul.f32 %v1082, %v1788
    %v1876 = vmul.f32 %v1086, %v1788
    %v1877 = vmul.f32 %v1090, %v1788
    %v1878 = vmul.f32 %v1094, %v1788
    %v1879 = vmul.f32 %v1098, %v1788
    %v1880 = vmul.f32 %v1102, %v1788
    %v1881 = vmul.f32 %v1106, %v1788
    %v1882 = vmul.f32 %v1110, %v1788
    %v1883 = vmul.f32 %v1114, %v1788
    %v1884 = vmul.f32 %v1118, %v1788
    %v1885 = vmul.f32 %v1122, %v1788
    %v1886 = vmul.f32 %v1126, %v1788
    %v1887 = vmul.f32 %v1130, %v1788
    %v1888 = vmul.f32 %v1134, %v1788
    %v1889 = vmul.f32 %v1350, %v1788
    %v1890 = vmul.f32 %v1567, %v1788
    %v1891 = vmul.f32 %v1783, %v1788
    %v1892 = vadd.f32 %v1676, %v1790
    %v1893 = vadd.f32 %v1677, %v1791
    %v1894 = vadd.f32 %v1678, %v1792
    %v1895 = vadd.f32 %v1679, %v1793
    %v1896 = vadd.f32 %v1680, %v1794
    %v1897 = vadd.f32 %v1681, %v1795
    %v1898 = vadd.f32 %v1682, %v1796
    %v1899 = vadd.f32 %v1683, %v1797
    %v1900 = vadd.f32 %v1684, %v1798
    %v1901 = vadd.f32 %v1685, %v1799
    %v1902 = vadd.f32 %v1686, %v1800
    %v1903 = vadd.f32 %v1687, %v1801
    %v1904 = vadd.f32 %v1688, %v1802
    %v1905 = vadd.f32 %v1689, %v1803
    %v1906 = vadd.f32 %v1690, %v1804
    %v1907 = vadd.f32 %v1691, %v1805
    %v1908 = vadd.f32 %v1692, %v1806
    %v1909 = vadd.f32 %v1693, %v1807
    %v1910 = vadd.f32 %v1694, %v1808
    %v1911 = vadd.f32 %v1695, %v1809
    %v1912 = vadd.f32 %v1696, %v1810
    %v1913 = vadd.f32 %v1697, %v1811
    %v1914 = vadd.f32 %v1698, %v1812
    %v1915 = vadd.f32 %v1699, %v1813
    %v1916 = vadd.f32 %v1700, %v1814
    %v1917 = vadd.f32 %v1701, %v1815
    %v1918 = vadd.f32 %v1702, %v1816
    %v1919 = vadd.f32 %v1703, %v1817
    %v1920 = vadd.f32 %v1704, %v1818
    %v1921 = vadd.f32 %v1705, %v1819
    %v1922 = vadd.f32 %v1706, %v1820
    %v1923 = vadd.f32 %v1707, %v1821
    %v1924 = vadd.f32 %v1708, %v1822
    %v1925 = vadd.f32 %v1709, %v1823
    %v1926 = vadd.f32 %v1710, %v1824
    %v1927 = vadd.f32 %v1711, %v1825
    %v1928 = vadd.f32 %v1712, %v1826
    %v1929 = vadd.f32 %v1713, %v1827
    %v1930 = vadd.f32 %v1714, %v1828
    %v1931 = vadd.f32 %v1715, %v1829
    %v1932 = vadd.f32 %v1716, %v1830
    %v1933 = vadd.f32 %v1717, %v1831
    %v1934 = vadd.f32 %v1718, %v1832
    %v1935 = vadd.f32 %v1719, %v1833
    %v1936 = vadd.f32 %v1720, %v1834
    %v1937 = vadd.f32 %v1721, %v1835
    %v1938 = vadd.f32 %v1722, %v1836
    %v1939 = vadd.f32 %v1723, %v1837
    %v1940 = vadd.f32 %v1724, %v1838
    %v1941 = vadd.f32 %v1725, %v1839
    %v1942 = vadd.f32 %v1726, %v1840
    %v1943 = vadd.f32 %v1727, %v1841
    %v1944 = vadd.f32 %v1728, %v1842
    %v1945 = vadd.f32 %v1729, %v1843
    %v1946 = vadd.f32 %v1730, %v1844
    %v1947 = vadd.f32 %v1731, %v1845
    %v1948 = vadd.f32 %v1732, %v1846
    %v1949 = vadd.f32 %v1733, %v1847
    %v1950 = vadd.f32 %v1734, %v1848
    %v1951 = vadd.f32 %v1735, %v1849
    %v1952 = vadd.f32 %v1736, %v1850
    %v1953 = vadd.f32 %v1737, %v1851
    %v1954 = vadd.f32 %v1738, %v1852
    %v1955 = vadd.f32 %v1739, %v1853
    %v1956 = vadd.f32 %v1740, %v1854
    %v1957 = vadd.f32 %v1741, %v1855
    %v1958 = vadd.f32 %v1742, %v1856
    %v1959 = vadd.f32 %v1743, %v1857
    %v1960 = vadd.f32 %v1744, %v1858
    %v1961 = vadd.f32 %v1745, %v1859
    %v1962 = vadd.f32 %v1746, %v1860
    %v1963 = vadd.f32 %v1747, %v1861
    %v1964 = vadd.f32 %v1748, %v1862
    %v1965 = vadd.f32 %v1749, %v1863
    %v1966 = vadd.f32 %v1750, %v1864
    %v1967 = vadd.f32 %v1751, %v1865
    %v1968 = vadd.f32 %v1752, %v1866
    %v1969 = vadd.f32 %v1753, %v1867
    %v1970 = vadd.f32 %v1754, %v1868
    %v1971 = vadd.f32 %v1755, %v1869
    %v1972 = vadd.f32 %v1756, %v1870
    %v1973 = vadd.f32 %v1757, %v1871
    %v1974 = vadd.f32 %v1758, %v1872
    %v1975 = vadd.f32 %v1759, %v1873
    %v1976 = vadd.f32 %v1760, %v1874
    %v1977 = vadd.f32 %v1761, %v1875
    %v1978 = vadd.f32 %v1762, %v1876
    %v1979 = vadd.f32 %v1763, %v1877
    %v1980 = vadd.f32 %v1764, %v1878
    %v1981 = vadd.f32 %v1765, %v1879
    %v1982 = vadd.f32 %v1766, %v1880
    %v1983 = vadd.f32 %v1767, %v1881
    %v1984 = vadd.f32 %v1768, %v1882
    %v1985 = vadd.f32 %v1769, %v1883
    %v1986 = vadd.f32 %v1770, %v1884
    %v1987 = vadd.f32 %v1771, %v1885
    %v1988 = vadd.f32 %v1772, %v1886
    %v1989 = vadd.f32 %v1773, %v1887
    %v1990 = vadd.f32 %v1774, %v1888
    %v1991 = vadd.f32 %v1775, %v1889
    %v1992 = vadd.f32 %v1776, %v1890
    %v1993 = vadd.f32 %v1777, %v1891
    %v1994 = vcombine.high %v718, %v718
    %v1996 = vunpack.c.l.s4 1966171168
    %v1997 = vunpack.c.0.s8 %v1996
    %v1998 = vlaneseq
    %v1999 = vshrl.u32 %v1998, 7
    %v2000 = vsub.s32 %v1997, %v1999
    %v2001 = vrot.slane %v1994, %v2000
    %s2002 = scalar_lea.vmem %s1, 32
    %v2003 = vld [vmem:[%s2002] sm:$0xff]
    %v2004 = vlaneseq
    %v2005 = vshrl.u32 %v2004, 7
    %v2006 = vsub.s32 0, %v2005
    %v2007 = vrot.slane %v2001, %v2006
    %2010 = vset.pattern.permute.xlu0 0
    %2011 = vperm.xlu0 %2010, %v2003
    %v2012 = vpop.permute.xlu0 %2011
    %v2014 = vmul.f32 %v746, %v2012
    %v2015 = vmul.f32 %v750, %v2012
    %v2016 = vmul.f32 %v754, %v2012
    %v2017 = vmul.f32 %v758, %v2012
    %v2018 = vmul.f32 %v762, %v2012
    %v2019 = vmul.f32 %v766, %v2012
    %v2020 = vmul.f32 %v770, %v2012
    %v2021 = vmul.f32 %v774, %v2012
    %v2022 = vmul.f32 %v778, %v2012
    %v2023 = vmul.f32 %v782, %v2012
    %v2024 = vmul.f32 %v786, %v2012
    %v2025 = vmul.f32 %v790, %v2012
    %v2026 = vmul.f32 %v794, %v2012
    %v2027 = vmul.f32 %v798, %v2012
    %v2028 = vmul.f32 %v802, %v2012
    %v2029 = vmul.f32 %v806, %v2012
    %v2030 = vmul.f32 %v810, %v2012
    %v2031 = vmul.f32 %v814, %v2012
    %v2032 = vmul.f32 %v818, %v2012
    %v2033 = vmul.f32 %v822, %v2012
    %v2034 = vmul.f32 %v826, %v2012
    %v2035 = vmul.f32 %v830, %v2012
    %v2036 = vmul.f32 %v834, %v2012
    %v2037 = vmul.f32 %v838, %v2012
    %v2038 = vmul.f32 %v842, %v2012
    %v2039 = vmul.f32 %v846, %v2012
    %v2040 = vmul.f32 %v850, %v2012
    %v2041 = vmul.f32 %v854, %v2012
    %v2042 = vmul.f32 %v858, %v2012
    %v2043 = vmul.f32 %v862, %v2012
    %v2044 = vmul.f32 %v866, %v2012
    %v2045 = vmul.f32 %v870, %v2012
    %v2046 = vmul.f32 %v874, %v2012
    %v2047 = vmul.f32 %v878, %v2012
    %v2048 = vmul.f32 %v882, %v2012
    %v2049 = vmul.f32 %v886, %v2012
    %v2050 = vmul.f32 %v890, %v2012
    %v2051 = vmul.f32 %v894, %v2012
    %v2052 = vmul.f32 %v898, %v2012
    %v2053 = vmul.f32 %v902, %v2012
    %v2054 = vmul.f32 %v906, %v2012
    %v2055 = vmul.f32 %v910, %v2012
    %v2056 = vmul.f32 %v914, %v2012
    %v2057 = vmul.f32 %v918, %v2012
    %v2058 = vmul.f32 %v922, %v2012
    %v2059 = vmul.f32 %v926, %v2012
    %v2060 = vmul.f32 %v930, %v2012
    %v2061 = vmul.f32 %v934, %v2012
    %v2062 = vmul.f32 %v938, %v2012
    %v2063 = vmul.f32 %v942, %v2012
    %v2064 = vmul.f32 %v946, %v2012
    %v2065 = vmul.f32 %v950, %v2012
    %v2066 = vmul.f32 %v954, %v2012
    %v2067 = vmul.f32 %v958, %v2012
    %v2068 = vmul.f32 %v962, %v2012
    %v2069 = vmul.f32 %v966, %v2012
    %v2070 = vmul.f32 %v970, %v2012
    %v2071 = vmul.f32 %v974, %v2012
    %v2072 = vmul.f32 %v978, %v2012
    %v2073 = vmul.f32 %v982, %v2012
    %v2074 = vmul.f32 %v986, %v2012
    %v2075 = vmul.f32 %v990, %v2012
    %v2076 = vmul.f32 %v994, %v2012
    %v2077 = vmul.f32 %v998, %v2012
    %v2078 = vmul.f32 %v1002, %v2012
    %v2079 = vmul.f32 %v1006, %v2012
    %v2080 = vmul.f32 %v1010, %v2012
    %v2081 = vmul.f32 %v1014, %v2012
    %v2082 = vmul.f32 %v1018, %v2012
    %v2083 = vmul.f32 %v1022, %v2012
    %v2084 = vmul.f32 %v1026, %v2012
    %v2085 = vmul.f32 %v1030, %v2012
    %v2086 = vmul.f32 %v1034, %v2012
    %v2087 = vmul.f32 %v1038, %v2012
    %v2088 = vmul.f32 %v1042, %v2012
    %v2089 = vmul.f32 %v1046, %v2012
    %v2090 = vmul.f32 %v1050, %v2012
    %v2091 = vmul.f32 %v1054, %v2012
    %v2092 = vmul.f32 %v1058, %v2012
    %v2093 = vmul.f32 %v1062, %v2012
    %v2094 = vmul.f32 %v1066, %v2012
    %v2095 = vmul.f32 %v1070, %v2012
    %v2096 = vmul.f32 %v1074, %v2012
    %v2097 = vmul.f32 %v1078, %v2012
    %v2098 = vmul.f32 %v1082, %v2012
    %v2099 = vmul.f32 %v1086, %v2012
    %v2100 = vmul.f32 %v1090, %v2012
    %v2101 = vmul.f32 %v1094, %v2012
    %v2102 = vmul.f32 %v1098, %v2012
    %v2103 = vmul.f32 %v1102, %v2012
    %v2104 = vmul.f32 %v1106, %v2012
    %v2105 = vmul.f32 %v1110, %v2012
    %v2106 = vmul.f32 %v1114, %v2012
    %v2107 = vmul.f32 %v1118, %v2012
    %v2108 = vmul.f32 %v1122, %v2012
    %v2109 = vmul.f32 %v1126, %v2012
    %v2110 = vmul.f32 %v1130, %v2012
    %v2111 = vmul.f32 %v1134, %v2012
    %v2112 = vmul.f32 %v1350, %v2012
    %v2113 = vmul.f32 %v1567, %v2012
    %v2114 = vmul.f32 %v1783, %v2012
    %v2115 = vmul.f32 %v2007, %v2012
    %v2116 = vadd.f32 %v1892, %v2014
    %v2117 = vadd.f32 %v1893, %v2015
    %v2118 = vadd.f32 %v1894, %v2016
    %v2119 = vadd.f32 %v1895, %v2017
    %v2120 = vadd.f32 %v1896, %v2018
    %v2121 = vadd.f32 %v1897, %v2019
    %v2122 = vadd.f32 %v1898, %v2020
    %v2123 = vadd.f32 %v1899, %v2021
    %v2124 = vadd.f32 %v1900, %v2022
    %v2125 = vadd.f32 %v1901, %v2023
    %v2126 = vadd.f32 %v1902, %v2024
    %v2127 = vadd.f32 %v1903, %v2025
    %v2128 = vadd.f32 %v1904, %v2026
    %v2129 = vadd.f32 %v1905, %v2027
    %v2130 = vadd.f32 %v1906, %v2028
    %v2131 = vadd.f32 %v1907, %v2029
    %v2132 = vadd.f32 %v1908, %v2030
    %v2133 = vadd.f32 %v1909, %v2031
    %v2134 = vadd.f32 %v1910, %v2032
    %v2135 = vadd.f32 %v1911, %v2033
    %v2136 = vadd.f32 %v1912, %v2034
    %v2137 = vadd.f32 %v1913, %v2035
    %v2138 = vadd.f32 %v1914, %v2036
    %v2139 = vadd.f32 %v1915, %v2037
    %v2140 = vadd.f32 %v1916, %v2038
    %v2141 = vadd.f32 %v1917, %v2039
    %v2142 = vadd.f32 %v1918, %v2040
    %v2143 = vadd.f32 %v1919, %v2041
    %v2144 = vadd.f32 %v1920, %v2042
    %v2145 = vadd.f32 %v1921, %v2043
    %v2146 = vadd.f32 %v1922, %v2044
    %v2147 = vadd.f32 %v1923, %v2045
    %v2148 = vadd.f32 %v1924, %v2046
    %v2149 = vadd.f32 %v1925, %v2047
    %v2150 = vadd.f32 %v1926, %v2048
    %v2151 = vadd.f32 %v1927, %v2049
    %v2152 = vadd.f32 %v1928, %v2050
    %v2153 = vadd.f32 %v1929, %v2051
    %v2154 = vadd.f32 %v1930, %v2052
    %v2155 = vadd.f32 %v1931, %v2053
    %v2156 = vadd.f32 %v1932, %v2054
    %v2157 = vadd.f32 %v1933, %v2055
    %v2158 = vadd.f32 %v1934, %v2056
    %v2159 = vadd.f32 %v1935, %v2057
    %v2160 = vadd.f32 %v1936, %v2058
    %v2161 = vadd.f32 %v1937, %v2059
    %v2162 = vadd.f32 %v1938, %v2060
    %v2163 = vadd.f32 %v1939, %v2061
    %v2164 = vadd.f32 %v1940, %v2062
    %v2165 = vadd.f32 %v1941, %v2063
    %v2166 = vadd.f32 %v1942, %v2064
    %v2167 = vadd.f32 %v1943, %v2065
    %v2168 = vadd.f32 %v1944, %v2066
    %v2169 = vadd.f32 %v1945, %v2067
    %v2170 = vadd.f32 %v1946, %v2068
    %v2171 = vadd.f32 %v1947, %v2069
    %v2172 = vadd.f32 %v1948, %v2070
    %v2173 = vadd.f32 %v1949, %v2071
    %v2174 = vadd.f32 %v1950, %v2072
    %v2175 = vadd.f32 %v1951, %v2073
    %v2176 = vadd.f32 %v1952, %v2074
    %v2177 = vadd.f32 %v1953, %v2075
    %v2178 = vadd.f32 %v1954, %v2076
    %v2179 = vadd.f32 %v1955, %v2077
    %v2180 = vadd.f32 %v1956, %v2078
    %v2181 = vadd.f32 %v1957, %v2079
    %v2182 = vadd.f32 %v1958, %v2080
    %v2183 = vadd.f32 %v1959, %v2081
    %v2184 = vadd.f32 %v1960, %v2082
    %v2185 = vadd.f32 %v1961, %v2083
    %v2186 = vadd.f32 %v1962, %v2084
    %v2187 = vadd.f32 %v1963, %v2085
    %v2188 = vadd.f32 %v1964, %v2086
    %v2189 = vadd.f32 %v1965, %v2087
    %v2190 = vadd.f32 %v1966, %v2088
    %v2191 = vadd.f32 %v1967, %v2089
    %v2192 = vadd.f32 %v1968, %v2090
    %v2193 = vadd.f32 %v1969, %v2091
    %v2194 = vadd.f32 %v1970, %v2092
    %v2195 = vadd.f32 %v1971, %v2093
    %v2196 = vadd.f32 %v1972, %v2094
    %v2197 = vadd.f32 %v1973, %v2095
    %v2198 = vadd.f32 %v1974, %v2096
    %v2199 = vadd.f32 %v1975, %v2097
    %v2200 = vadd.f32 %v1976, %v2098
    %v2201 = vadd.f32 %v1977, %v2099
    %v2202 = vadd.f32 %v1978, %v2100
    %v2203 = vadd.f32 %v1979, %v2101
    %v2204 = vadd.f32 %v1980, %v2102
    %v2205 = vadd.f32 %v1981, %v2103
    %v2206 = vadd.f32 %v1982, %v2104
    %v2207 = vadd.f32 %v1983, %v2105
    %v2208 = vadd.f32 %v1984, %v2106
    %v2209 = vadd.f32 %v1985, %v2107
    %v2210 = vadd.f32 %v1986, %v2108
    %v2211 = vadd.f32 %v1987, %v2109
    %v2212 = vadd.f32 %v1988, %v2110
    %v2213 = vadd.f32 %v1989, %v2111
    %v2214 = vadd.f32 %v1990, %v2112
    %v2215 = vadd.f32 %v1991, %v2113
    %v2216 = vadd.f32 %v1992, %v2114
    %v2217 = vadd.f32 %v1993, %v2115
    %v2218 = vld [vmem:[%s2] sm:$0xff]
    %2220 = vset.pattern.permute.xlu0 0
    %2221 = vperm.xlu0 %2220, %v2218
    %v2222 = vpop.permute.xlu0 %2221
    %v2224 = vadd.f32 %v2116, %v2222
    %v2225 = vadd.f32 %v2117, %v2222
    %v2226 = vadd.f32 %v2118, %v2222
    %v2227 = vadd.f32 %v2119, %v2222
    %v2228 = vadd.f32 %v2120, %v2222
    %v2229 = vadd.f32 %v2121, %v2222
    %v2230 = vadd.f32 %v2122, %v2222
    %v2231 = vadd.f32 %v2123, %v2222
    %v2232 = vadd.f32 %v2124, %v2222
    %v2233 = vadd.f32 %v2125, %v2222
    %v2234 = vadd.f32 %v2126, %v2222
    %v2235 = vadd.f32 %v2127, %v2222
    %v2236 = vadd.f32 %v2128, %v2222
    %v2237 = vadd.f32 %v2129, %v2222
    %v2238 = vadd.f32 %v2130, %v2222
    %v2239 = vadd.f32 %v2131, %v2222
    %v2240 = vadd.f32 %v2132, %v2222
    %v2241 = vadd.f32 %v2133, %v2222
    %v2242 = vadd.f32 %v2134, %v2222
    %v2243 = vadd.f32 %v2135, %v2222
    %v2244 = vadd.f32 %v2136, %v2222
    %v2245 = vadd.f32 %v2137, %v2222
    %v2246 = vadd.f32 %v2138, %v2222
    %v2247 = vadd.f32 %v2139, %v2222
    %v2248 = vadd.f32 %v2140, %v2222
    %v2249 = vadd.f32 %v2141, %v2222
    %v2250 = vadd.f32 %v2142, %v2222
    %v2251 = vadd.f32 %v2143, %v2222
    %v2252 = vadd.f32 %v2144, %v2222
    %v2253 = vadd.f32 %v2145, %v2222
    %v2254 = vadd.f32 %v2146, %v2222
    %v2255 = vadd.f32 %v2147, %v2222
    %v2256 = vadd.f32 %v2148, %v2222
    %v2257 = vadd.f32 %v2149, %v2222
    %v2258 = vadd.f32 %v2150, %v2222
    %v2259 = vadd.f32 %v2151, %v2222
    %v2260 = vadd.f32 %v2152, %v2222
    %v2261 = vadd.f32 %v2153, %v2222
    %v2262 = vadd.f32 %v2154, %v2222
    %v2263 = vadd.f32 %v2155, %v2222
    %v2264 = vadd.f32 %v2156, %v2222
    %v2265 = vadd.f32 %v2157, %v2222
    %v2266 = vadd.f32 %v2158, %v2222
    %v2267 = vadd.f32 %v2159, %v2222
    %v2268 = vadd.f32 %v2160, %v2222
    %v2269 = vadd.f32 %v2161, %v2222
    %v2270 = vadd.f32 %v2162, %v2222
    %v2271 = vadd.f32 %v2163, %v2222
    %v2272 = vadd.f32 %v2164, %v2222
    %v2273 = vadd.f32 %v2165, %v2222
    %v2274 = vadd.f32 %v2166, %v2222
    %v2275 = vadd.f32 %v2167, %v2222
    %v2276 = vadd.f32 %v2168, %v2222
    %v2277 = vadd.f32 %v2169, %v2222
    %v2278 = vadd.f32 %v2170, %v2222
    %v2279 = vadd.f32 %v2171, %v2222
    %v2280 = vadd.f32 %v2172, %v2222
    %v2281 = vadd.f32 %v2173, %v2222
    %v2282 = vadd.f32 %v2174, %v2222
    %v2283 = vadd.f32 %v2175, %v2222
    %v2284 = vadd.f32 %v2176, %v2222
    %v2285 = vadd.f32 %v2177, %v2222
    %v2286 = vadd.f32 %v2178, %v2222
    %v2287 = vadd.f32 %v2179, %v2222
    %v2288 = vadd.f32 %v2180, %v2222
    %v2289 = vadd.f32 %v2181, %v2222
    %v2290 = vadd.f32 %v2182, %v2222
    %v2291 = vadd.f32 %v2183, %v2222
    %v2292 = vadd.f32 %v2184, %v2222
    %v2293 = vadd.f32 %v2185, %v2222
    %v2294 = vadd.f32 %v2186, %v2222
    %v2295 = vadd.f32 %v2187, %v2222
    %v2296 = vadd.f32 %v2188, %v2222
    %v2297 = vadd.f32 %v2189, %v2222
    %v2298 = vadd.f32 %v2190, %v2222
    %v2299 = vadd.f32 %v2191, %v2222
    %v2300 = vadd.f32 %v2192, %v2222
    %v2301 = vadd.f32 %v2193, %v2222
    %v2302 = vadd.f32 %v2194, %v2222
    %v2303 = vadd.f32 %v2195, %v2222
    %v2304 = vadd.f32 %v2196, %v2222
    %v2305 = vadd.f32 %v2197, %v2222
    %v2306 = vadd.f32 %v2198, %v2222
    %v2307 = vadd.f32 %v2199, %v2222
    %v2308 = vadd.f32 %v2200, %v2222
    %v2309 = vadd.f32 %v2201, %v2222
    %v2310 = vadd.f32 %v2202, %v2222
    %v2311 = vadd.f32 %v2203, %v2222
    %v2312 = vadd.f32 %v2204, %v2222
    %v2313 = vadd.f32 %v2205, %v2222
    %v2314 = vadd.f32 %v2206, %v2222
    %v2315 = vadd.f32 %v2207, %v2222
    %v2316 = vadd.f32 %v2208, %v2222
    %v2317 = vadd.f32 %v2209, %v2222
    %v2318 = vadd.f32 %v2210, %v2222
    %v2319 = vadd.f32 %v2211, %v2222
    %v2320 = vadd.f32 %v2212, %v2222
    %v2321 = vadd.f32 %v2213, %v2222
    %v2322 = vadd.f32 %v2214, %v2222
    %v2323 = vadd.f32 %v2215, %v2222
    %v2324 = vadd.f32 %v2216, %v2222
    %v2325 = vadd.f32 %v2217, %v2222
    %vm2326 = vcmp.gt.f32.partialorder %v2224, 0.0
    %vm2327 = vcmp.gt.f32.partialorder %v2225, 0.0
    %vm2328 = vcmp.gt.f32.partialorder %v2226, 0.0
    %vm2329 = vcmp.gt.f32.partialorder %v2227, 0.0
    %vm2330 = vcmp.gt.f32.partialorder %v2228, 0.0
    %vm2331 = vcmp.gt.f32.partialorder %v2229, 0.0
    %vm2332 = vcmp.gt.f32.partialorder %v2230, 0.0
    %vm2333 = vcmp.gt.f32.partialorder %v2231, 0.0
    %vm2334 = vcmp.gt.f32.partialorder %v2232, 0.0
    %vm2335 = vcmp.gt.f32.partialorder %v2233, 0.0
    %vm2336 = vcmp.gt.f32.partialorder %v2234, 0.0
    %vm2337 = vcmp.gt.f32.partialorder %v2235, 0.0
    %vm2338 = vcmp.gt.f32.partialorder %v2236, 0.0
    %vm2339 = vcmp.gt.f32.partialorder %v2237, 0.0
    %vm2340 = vcmp.gt.f32.partialorder %v2238, 0.0
    %vm2341 = vcmp.gt.f32.partialorder %v2239, 0.0
    %vm2342 = vcmp.gt.f32.partialorder %v2240, 0.0
    %vm2343 = vcmp.gt.f32.partialorder %v2241, 0.0
    %vm2344 = vcmp.gt.f32.partialorder %v2242, 0.0
    %vm2345 = vcmp.gt.f32.partialorder %v2243, 0.0
    %vm2346 = vcmp.gt.f32.partialorder %v2244, 0.0
    %vm2347 = vcmp.gt.f32.partialorder %v2245, 0.0
    %vm2348 = vcmp.gt.f32.partialorder %v2246, 0.0
    %vm2349 = vcmp.gt.f32.partialorder %v2247, 0.0
    %vm2350 = vcmp.gt.f32.partialorder %v2248, 0.0
    %vm2351 = vcmp.gt.f32.partialorder %v2249, 0.0
    %vm2352 = vcmp.gt.f32.partialorder %v2250, 0.0
    %vm2353 = vcmp.gt.f32.partialorder %v2251, 0.0
    %vm2354 = vcmp.gt.f32.partialorder %v2252, 0.0
    %vm2355 = vcmp.gt.f32.partialorder %v2253, 0.0
    %vm2356 = vcmp.gt.f32.partialorder %v2254, 0.0
    %vm2357 = vcmp.gt.f32.partialorder %v2255, 0.0
    %vm2358 = vcmp.gt.f32.partialorder %v2256, 0.0
    %vm2359 = vcmp.gt.f32.partialorder %v2257, 0.0
    %vm2360 = vcmp.gt.f32.partialorder %v2258, 0.0
    %vm2361 = vcmp.gt.f32.partialorder %v2259, 0.0
    %vm2362 = vcmp.gt.f32.partialorder %v2260, 0.0
    %vm2363 = vcmp.gt.f32.partialorder %v2261, 0.0
    %vm2364 = vcmp.gt.f32.partialorder %v2262, 0.0
    %vm2365 = vcmp.gt.f32.partialorder %v2263, 0.0
    %vm2366 = vcmp.gt.f32.partialorder %v2264, 0.0
    %vm2367 = vcmp.gt.f32.partialorder %v2265, 0.0
    %vm2368 = vcmp.gt.f32.partialorder %v2266, 0.0
    %vm2369 = vcmp.gt.f32.partialorder %v2267, 0.0
    %vm2370 = vcmp.gt.f32.partialorder %v2268, 0.0
    %vm2371 = vcmp.gt.f32.partialorder %v2269, 0.0
    %vm2372 = vcmp.gt.f32.partialorder %v2270, 0.0
    %vm2373 = vcmp.gt.f32.partialorder %v2271, 0.0
    %vm2374 = vcmp.gt.f32.partialorder %v2272, 0.0
    %vm2375 = vcmp.gt.f32.partialorder %v2273, 0.0
    %vm2376 = vcmp.gt.f32.partialorder %v2274, 0.0
    %vm2377 = vcmp.gt.f32.partialorder %v2275, 0.0
    %vm2378 = vcmp.gt.f32.partialorder %v2276, 0.0
    %vm2379 = vcmp.gt.f32.partialorder %v2277, 0.0
    %vm2380 = vcmp.gt.f32.partialorder %v2278, 0.0
    %vm2381 = vcmp.gt.f32.partialorder %v2279, 0.0
    %vm2382 = vcmp.gt.f32.partialorder %v2280, 0.0
    %vm2383 = vcmp.gt.f32.partialorder %v2281, 0.0
    %vm2384 = vcmp.gt.f32.partialorder %v2282, 0.0
    %vm2385 = vcmp.gt.f32.partialorder %v2283, 0.0
    %vm2386 = vcmp.gt.f32.partialorder %v2284, 0.0
    %vm2387 = vcmp.gt.f32.partialorder %v2285, 0.0
    %vm2388 = vcmp.gt.f32.partialorder %v2286, 0.0
    %vm2389 = vcmp.gt.f32.partialorder %v2287, 0.0
    %vm2390 = vcmp.gt.f32.partialorder %v2288, 0.0
    %vm2391 = vcmp.gt.f32.partialorder %v2289, 0.0
    %vm2392 = vcmp.gt.f32.partialorder %v2290, 0.0
    %vm2393 = vcmp.gt.f32.partialorder %v2291, 0.0
    %vm2394 = vcmp.gt.f32.partialorder %v2292, 0.0
    %vm2395 = vcmp.gt.f32.partialorder %v2293, 0.0
    %vm2396 = vcmp.gt.f32.partialorder %v2294, 0.0
    %vm2397 = vcmp.gt.f32.partialorder %v2295, 0.0
    %vm2398 = vcmp.gt.f32.partialorder %v2296, 0.0
    %vm2399 = vcmp.gt.f32.partialorder %v2297, 0.0
    %vm2400 = vcmp.gt.f32.partialorder %v2298, 0.0
    %vm2401 = vcmp.gt.f32.partialorder %v2299, 0.0
    %vm2402 = vcmp.gt.f32.partialorder %v2300, 0.0
    %vm2403 = vcmp.gt.f32.partialorder %v2301, 0.0
    %vm2404 = vcmp.gt.f32.partialorder %v2302, 0.0
    %vm2405 = vcmp.gt.f32.partialorder %v2303, 0.0
    %vm2406 = vcmp.gt.f32.partialorder %v2304, 0.0
    %vm2407 = vcmp.gt.f32.partialorder %v2305, 0.0
    %vm2408 = vcmp.gt.f32.partialorder %v2306, 0.0
    %vm2409 = vcmp.gt.f32.partialorder %v2307, 0.0
    %vm2410 = vcmp.gt.f32.partialorder %v2308, 0.0
    %vm2411 = vcmp.gt.f32.partialorder %v2309, 0.0
    %vm2412 = vcmp.gt.f32.partialorder %v2310, 0.0
    %vm2413 = vcmp.gt.f32.partialorder %v2311, 0.0
    %vm2414 = vcmp.gt.f32.partialorder %v2312, 0.0
    %vm2415 = vcmp.gt.f32.partialorder %v2313, 0.0
    %vm2416 = vcmp.gt.f32.partialorder %v2314, 0.0
    %vm2417 = vcmp.gt.f32.partialorder %v2315, 0.0
    %vm2418 = vcmp.gt.f32.partialorder %v2316, 0.0
    %vm2419 = vcmp.gt.f32.partialorder %v2317, 0.0
    %vm2420 = vcmp.gt.f32.partialorder %v2318, 0.0
    %vm2421 = vcmp.gt.f32.partialorder %v2319, 0.0
    %vm2422 = vcmp.gt.f32.partialorder %v2320, 0.0
    %vm2423 = vcmp.gt.f32.partialorder %v2321, 0.0
    %vm2424 = vcmp.gt.f32.partialorder %v2322, 0.0
    %vm2425 = vcmp.gt.f32.partialorder %v2323, 0.0
    %vm2426 = vcmp.gt.f32.partialorder %v2324, 0.0
    %vm2427 = vcmp.gt.f32.partialorder %v2325, 0.0
    %v2428 = vmul.f32 %v2224, 0.01
    %v2429 = vmul.f32 %v2225, 0.01
    %v2430 = vmul.f32 %v2226, 0.01
    %v2431 = vmul.f32 %v2227, 0.01
    %v2432 = vmul.f32 %v2228, 0.01
    %v2433 = vmul.f32 %v2229, 0.01
    %v2434 = vmul.f32 %v2230, 0.01
    %v2435 = vmul.f32 %v2231, 0.01
    %v2436 = vmul.f32 %v2232, 0.01
    %v2437 = vmul.f32 %v2233, 0.01
    %v2438 = vmul.f32 %v2234, 0.01
    %v2439 = vmul.f32 %v2235, 0.01
    %v2440 = vmul.f32 %v2236, 0.01
    %v2441 = vmul.f32 %v2237, 0.01
    %v2442 = vmul.f32 %v2238, 0.01
    %v2443 = vmul.f32 %v2239, 0.01
    %v2444 = vmul.f32 %v2240, 0.01
    %v2445 = vmul.f32 %v2241, 0.01
    %v2446 = vmul.f32 %v2242, 0.01
    %v2447 = vmul.f32 %v2243, 0.01
    %v2448 = vmul.f32 %v2244, 0.01
    %v2449 = vmul.f32 %v2245, 0.01
    %v2450 = vmul.f32 %v2246, 0.01
    %v2451 = vmul.f32 %v2247, 0.01
    %v2452 = vmul.f32 %v2248, 0.01
    %v2453 = vmul.f32 %v2249, 0.01
    %v2454 = vmul.f32 %v2250, 0.01
    %v2455 = vmul.f32 %v2251, 0.01
    %v2456 = vmul.f32 %v2252, 0.01
    %v2457 = vmul.f32 %v2253, 0.01
    %v2458 = vmul.f32 %v2254, 0.01
    %v2459 = vmul.f32 %v2255, 0.01
    %v2460 = vmul.f32 %v2256, 0.01
    %v2461 = vmul.f32 %v2257, 0.01
    %v2462 = vmul.f32 %v2258, 0.01
    %v2463 = vmul.f32 %v2259, 0.01
    %v2464 = vmul.f32 %v2260, 0.01
    %v2465 = vmul.f32 %v2261, 0.01
    %v2466 = vmul.f32 %v2262, 0.01
    %v2467 = vmul.f32 %v2263, 0.01
    %v2468 = vmul.f32 %v2264, 0.01
    %v2469 = vmul.f32 %v2265, 0.01
    %v2470 = vmul.f32 %v2266, 0.01
    %v2471 = vmul.f32 %v2267, 0.01
    %v2472 = vmul.f32 %v2268, 0.01
    %v2473 = vmul.f32 %v2269, 0.01
    %v2474 = vmul.f32 %v2270, 0.01
    %v2475 = vmul.f32 %v2271, 0.01
    %v2476 = vmul.f32 %v2272, 0.01
    %v2477 = vmul.f32 %v2273, 0.01
    %v2478 = vmul.f32 %v2274, 0.01
    %v2479 = vmul.f32 %v2275, 0.01
    %v2480 = vmul.f32 %v2276, 0.01
    %v2481 = vmul.f32 %v2277, 0.01
    %v2482 = vmul.f32 %v2278, 0.01
    %v2483 = vmul.f32 %v2279, 0.01
    %v2484 = vmul.f32 %v2280, 0.01
    %v2485 = vmul.f32 %v2281, 0.01
    %v2486 = vmul.f32 %v2282, 0.01
    %v2487 = vmul.f32 %v2283, 0.01
    %v2488 = vmul.f32 %v2284, 0.01
    %v2489 = vmul.f32 %v2285, 0.01
    %v2490 = vmul.f32 %v2286, 0.01
    %v2491 = vmul.f32 %v2287, 0.01
    %v2492 = vmul.f32 %v2288, 0.01
    %v2493 = vmul.f32 %v2289, 0.01
    %v2494 = vmul.f32 %v2290, 0.01
    %v2495 = vmul.f32 %v2291, 0.01
    %v2496 = vmul.f32 %v2292, 0.01
    %v2497 = vmul.f32 %v2293, 0.01
    %v2498 = vmul.f32 %v2294, 0.01
    %v2499 = vmul.f32 %v2295, 0.01
    %v2500 = vmul.f32 %v2296, 0.01
    %v2501 = vmul.f32 %v2297, 0.01
    %v2502 = vmul.f32 %v2298, 0.01
    %v2503 = vmul.f32 %v2299, 0.01
    %v2504 = vmul.f32 %v2300, 0.01
    %v2505 = vmul.f32 %v2301, 0.01
    %v2506 = vmul.f32 %v2302, 0.01
    %v2507 = vmul.f32 %v2303, 0.01
    %v2508 = vmul.f32 %v2304, 0.01
    %v2509 = vmul.f32 %v2305, 0.01
    %v2510 = vmul.f32 %v2306, 0.01
    %v2511 = vmul.f32 %v2307, 0.01
    %v2512 = vmul.f32 %v2308, 0.01
    %v2513 = vmul.f32 %v2309, 0.01
    %v2514 = vmul.f32 %v2310, 0.01
    %v2515 = vmul.f32 %v2311, 0.01
    %v2516 = vmul.f32 %v2312, 0.01
    %v2517 = vmul.f32 %v2313, 0.01
    %v2518 = vmul.f32 %v2314, 0.01
    %v2519 = vmul.f32 %v2315, 0.01
    %v2520 = vmul.f32 %v2316, 0.01
    %v2521 = vmul.f32 %v2317, 0.01
    %v2522 = vmul.f32 %v2318, 0.01
    %v2523 = vmul.f32 %v2319, 0.01
    %v2524 = vmul.f32 %v2320, 0.01
    %v2525 = vmul.f32 %v2321, 0.01
    %v2526 = vmul.f32 %v2322, 0.01
    %v2527 = vmul.f32 %v2323, 0.01
    %v2528 = vmul.f32 %v2324, 0.01
    %v2529 = vmul.f32 %v2325, 0.01
    %v2530 = vsel %vm2326, %v2224, %v2428
    %v2531 = vsel %vm2327, %v2225, %v2429
    %v2532 = vsel %vm2328, %v2226, %v2430
    %v2533 = vsel %vm2329, %v2227, %v2431
    %v2534 = vsel %vm2330, %v2228, %v2432
    %v2535 = vsel %vm2331, %v2229, %v2433
    %v2536 = vsel %vm2332, %v2230, %v2434
    %v2537 = vsel %vm2333, %v2231, %v2435
    %v2538 = vsel %vm2334, %v2232, %v2436
    %v2539 = vsel %vm2335, %v2233, %v2437
    %v2540 = vsel %vm2336, %v2234, %v2438
    %v2541 = vsel %vm2337, %v2235, %v2439
    %v2542 = vsel %vm2338, %v2236, %v2440
    %v2543 = vsel %vm2339, %v2237, %v2441
    %v2544 = vsel %vm2340, %v2238, %v2442
    %v2545 = vsel %vm2341, %v2239, %v2443
    %v2546 = vsel %vm2342, %v2240, %v2444
    %v2547 = vsel %vm2343, %v2241, %v2445
    %v2548 = vsel %vm2344, %v2242, %v2446
    %v2549 = vsel %vm2345, %v2243, %v2447
    %v2550 = vsel %vm2346, %v2244, %v2448
    %v2551 = vsel %vm2347, %v2245, %v2449
    %v2552 = vsel %vm2348, %v2246, %v2450
    %v2553 = vsel %vm2349, %v2247, %v2451
    %v2554 = vsel %vm2350, %v2248, %v2452
    %v2555 = vsel %vm2351, %v2249, %v2453
    %v2556 = vsel %vm2352, %v2250, %v2454
    %v2557 = vsel %vm2353, %v2251, %v2455
    %v2558 = vsel %vm2354, %v2252, %v2456
    %v2559 = vsel %vm2355, %v2253, %v2457
    %v2560 = vsel %vm2356, %v2254, %v2458
    %v2561 = vsel %vm2357, %v2255, %v2459
    %v2562 = vsel %vm2358, %v2256, %v2460
    %v2563 = vsel %vm2359, %v2257, %v2461
    %v2564 = vsel %vm2360, %v2258, %v2462
    %v2565 = vsel %vm2361, %v2259, %v2463
    %v2566 = vsel %vm2362, %v2260, %v2464
    %v2567 = vsel %vm2363, %v2261, %v2465
    %v2568 = vsel %vm2364, %v2262, %v2466
    %v2569 = vsel %vm2365, %v2263, %v2467
    %v2570 = vsel %vm2366, %v2264, %v2468
    %v2571 = vsel %vm2367, %v2265, %v2469
    %v2572 = vsel %vm2368, %v2266, %v2470
    %v2573 = vsel %vm2369, %v2267, %v2471
    %v2574 = vsel %vm2370, %v2268, %v2472
    %v2575 = vsel %vm2371, %v2269, %v2473
    %v2576 = vsel %vm2372, %v2270, %v2474
    %v2577 = vsel %vm2373, %v2271, %v2475
    %v2578 = vsel %vm2374, %v2272, %v2476
    %v2579 = vsel %vm2375, %v2273, %v2477
    %v2580 = vsel %vm2376, %v2274, %v2478
    %v2581 = vsel %vm2377, %v2275, %v2479
    %v2582 = vsel %vm2378, %v2276, %v2480
    %v2583 = vsel %vm2379, %v2277, %v2481
    %v2584 = vsel %vm2380, %v2278, %v2482
    %v2585 = vsel %vm2381, %v2279, %v2483
    %v2586 = vsel %vm2382, %v2280, %v2484
    %v2587 = vsel %vm2383, %v2281, %v2485
    %v2588 = vsel %vm2384, %v2282, %v2486
    %v2589 = vsel %vm2385, %v2283, %v2487
    %v2590 = vsel %vm2386, %v2284, %v2488
    %v2591 = vsel %vm2387, %v2285, %v2489
    %v2592 = vsel %vm2388, %v2286, %v2490
    %v2593 = vsel %vm2389, %v2287, %v2491
    %v2594 = vsel %vm2390, %v2288, %v2492
    %v2595 = vsel %vm2391, %v2289, %v2493
    %v2596 = vsel %vm2392, %v2290, %v2494
    %v2597 = vsel %vm2393, %v2291, %v2495
    %v2598 = vsel %vm2394, %v2292, %v2496
    %v2599 = vsel %vm2395, %v2293, %v2497
    %v2600 = vsel %vm2396, %v2294, %v2498
    %v2601 = vsel %vm2397, %v2295, %v2499
    %v2602 = vsel %vm2398, %v2296, %v2500
    %v2603 = vsel %vm2399, %v2297, %v2501
    %v2604 = vsel %vm2400, %v2298, %v2502
    %v2605 = vsel %vm2401, %v2299, %v2503
    %v2606 = vsel %vm2402, %v2300, %v2504
    %v2607 = vsel %vm2403, %v2301, %v2505
    %v2608 = vsel %vm2404, %v2302, %v2506
    %v2609 = vsel %vm2405, %v2303, %v2507
    %v2610 = vsel %vm2406, %v2304, %v2508
    %v2611 = vsel %vm2407, %v2305, %v2509
    %v2612 = vsel %vm2408, %v2306, %v2510
    %v2613 = vsel %vm2409, %v2307, %v2511
    %v2614 = vsel %vm2410, %v2308, %v2512
    %v2615 = vsel %vm2411, %v2309, %v2513
    %v2616 = vsel %vm2412, %v2310, %v2514
    %v2617 = vsel %vm2413, %v2311, %v2515
    %v2618 = vsel %vm2414, %v2312, %v2516
    %v2619 = vsel %vm2415, %v2313, %v2517
    %v2620 = vsel %vm2416, %v2314, %v2518
    %v2621 = vsel %vm2417, %v2315, %v2519
    %v2622 = vsel %vm2418, %v2316, %v2520
    %v2623 = vsel %vm2419, %v2317, %v2521
    %v2624 = vsel %vm2420, %v2318, %v2522
    %v2625 = vsel %vm2421, %v2319, %v2523
    %v2626 = vsel %vm2422, %v2320, %v2524
    %v2627 = vsel %vm2423, %v2321, %v2525
    %v2628 = vsel %vm2424, %v2322, %v2526
    %v2629 = vsel %vm2425, %v2323, %v2527
    %v2630 = vsel %vm2426, %v2324, %v2528
    %v2631 = vsel %vm2427, %v2325, %v2529
    %v2632 = vmax.f32 %v2530, %v2531
    %v2633 = vmax.f32 %v2632, %v2532
    %v2634 = vmax.f32 %v2533, %v2534
    %v2635 = vmax.f32 %v2634, %v2535
    %v2636 = vmax.f32 %v2536, %v2537
    %v2637 = vmax.f32 %v2636, %v2538
    %v2638 = vmax.f32 %v2539, %v2540
    %v2639 = vmax.f32 %v2638, %v2541
    %v2640 = vmax.f32 %v2542, %v2543
    %v2641 = vmax.f32 %v2640, %v2544
    %v2642 = vmax.f32 %v2545, %v2546
    %v2643 = vmax.f32 %v2642, %v2547
    %v2644 = vmax.f32 %v2548, %v2549
    %v2645 = vmax.f32 %v2644, %v2550
    %v2646 = vmax.f32 %v2551, %v2552
    %v2647 = vmax.f32 %v2646, %v2553
    %v2648 = vmax.f32 %v2554, %v2555
    %v2649 = vmax.f32 %v2648, %v2556
    %v2650 = vmax.f32 %v2557, %v2558
    %v2651 = vmax.f32 %v2650, %v2559
    %v2652 = vmax.f32 %v2560, %v2561
    %v2653 = vmax.f32 %v2652, %v2562
    %v2654 = vmax.f32 %v2563, %v2564
    %v2655 = vmax.f32 %v2654, %v2565
    %v2656 = vmax.f32 %v2566, %v2567
    %v2657 = vmax.f32 %v2656, %v2568
    %v2658 = vmax.f32 %v2569, %v2570
    %v2659 = vmax.f32 %v2658, %v2571
    %v2660 = vmax.f32 %v2572, %v2573
    %v2661 = vmax.f32 %v2660, %v2574
    %v2662 = vmax.f32 %v2575, %v2576
    %v2663 = vmax.f32 %v2662, %v2577
    %v2664 = vmax.f32 %v2578, %v2579
    %v2665 = vmax.f32 %v2664, %v2580
    %v2666 = vmax.f32 %v2581, %v2582
    %v2667 = vmax.f32 %v2666, %v2583
    %v2668 = vmax.f32 %v2584, %v2585
    %v2669 = vmax.f32 %v2668, %v2586
    %v2670 = vmax.f32 %v2587, %v2588
    %v2671 = vmax.f32 %v2670, %v2589
    %v2672 = vmax.f32 %v2590, %v2591
    %v2673 = vmax.f32 %v2672, %v2592
    %v2674 = vmax.f32 %v2593, %v2594
    %v2675 = vmax.f32 %v2674, %v2595
    %v2676 = vmax.f32 %v2596, %v2597
    %v2677 = vmax.f32 %v2676, %v2598
    %v2678 = vmax.f32 %v2599, %v2600
    %v2679 = vmax.f32 %v2678, %v2601
    %v2680 = vmax.f32 %v2602, %v2603
    %v2681 = vmax.f32 %v2680, %v2604
    %v2682 = vmax.f32 %v2605, %v2606
    %v2683 = vmax.f32 %v2682, %v2607
    %v2684 = vmax.f32 %v2608, %v2609
    %v2685 = vmax.f32 %v2684, %v2610
    %v2686 = vmax.f32 %v2611, %v2612
    %v2687 = vmax.f32 %v2686, %v2613
    %v2688 = vmax.f32 %v2614, %v2615
    %v2689 = vmax.f32 %v2688, %v2616
    %v2690 = vmax.f32 %v2617, %v2618
    %v2691 = vmax.f32 %v2690, %v2619
    %v2692 = vmax.f32 %v2620, %v2621
    %v2693 = vmax.f32 %v2692, %v2622
    %v2694 = vmax.f32 %v2623, %v2624
    %v2695 = vmax.f32 %v2694, %v2625
    %v2696 = vmax.f32 %v2626, %v2627
    %v2697 = vmax.f32 %v2696, %v2628
    %v2698 = vmax.f32 %v2629, %v2630
    %v2699 = vmax.f32 %v2698, %v2631
    %v2700 = vld [vmem:[%s3] sm:$0xff]
    %v2701 = vld [vmem:[%s3 + $0x8] sm:$0xff]
    %v2702 = vld [vmem:[%s4] sm:$0xff]
    %v2703 = vld [vmem:[%s4 + $0x8] sm:$0xff]
    %2705 = vset.pattern.permute.xlu0 0
    %2706 = vperm.xlu0 %2705, %v2702
    %v2707 = vpop.permute.xlu0 %2706
    %2710 = vset.pattern.permute.xlu0 0
    %2711 = vperm.xlu0 %2710, %v2703
    %v2712 = vpop.permute.xlu0 %2711
    %vm2714 = vcmask 326656
    %v2716 = vsel %vm2714, %v2700, 0
    %v2719 = vsel %vm2714, %v2701, 0
    %2721 = vmatprep.subr.mxu0 0.0
    %2722 = vmatpush1.msra.mxu0 0.0
    %2723 = vmatprep.subr.mxu0 0.0
    %2724 = vmatpush1.msra.mxu0 0.0
    %2725 = vmatprep.subr.mxu0 0.0
    %2726 = vmatpush1.msra.mxu0 0.0
    %2727 = vmatprep.subr.mxu0 0.0
    %2728 = vmatpush1.msra.mxu0 0.0
    %2729 = vmatprep.subr.mxu0 0.0
    %2730 = vmatpush1.msra.mxu0 0.0
    %2731 = vmatprep.subr.mxu0 0.0
    %2732 = vmatpush1.msra.mxu0 0.0
    %2733 = vmatprep.subr.mxu0 0.0
    %2734 = vmatpush1.msra.mxu0 0.0
    %2735 = vmatprep.subr.mxu0 0.0
    %2736 = vmatpush1.msra.mxu0 0.0
    %2737 = vmatprep.subr.mxu0 0.0
    %2738 = vmatpush1.msra.mxu0 0.0
    %2739 = vmatprep.subr.mxu0 0.0
    %2740 = vmatpush1.msra.mxu0 0.0
    %2741 = vmatprep.subr.mxu0 0.0
    %2742 = vmatpush1.msra.mxu0 0.0
    %2743 = vmatprep.subr.mxu0 0.0
    %2744 = vmatpush1.msra.mxu0 %v2641
    %2745 = vmatprep.subr.mxu0 0.0
    %2746 = vmatpush1.msra.mxu0 %v2639
    %2747 = vmatprep.subr.mxu0 0.0
    %2748 = vmatpush1.msra.mxu0 %v2637
    %2749 = vmatprep.subr.mxu0 0.0
    %2750 = vmatpush1.msra.mxu0 %v2635
    %2751 = vmatprep.subr.mxu0 0.0
    %2752 = vmatpush1.msra.mxu0 %v2633
    %2753 = vmatprep.subr.mxu0 0.0
    %2754 = vmatpush2.msra.mxu0 0.0
    %2755 = vmatprep.subr.mxu0 0.0
    %2756 = vmatpush2.msra.mxu0 0.0
    %2757 = vmatprep.subr.mxu0 0.0
    %2758 = vmatpush2.msra.mxu0 0.0
    %2759 = vmatprep.subr.mxu0 0.0
    %2760 = vmatpush2.msra.mxu0 0.0
    %2761 = vmatprep.subr.mxu0 0.0
    %2762 = vmatpush2.msra.mxu0 0.0
    %2763 = vmatprep.subr.mxu0 0.0
    %2764 = vmatpush2.msra.mxu0 0.0
    %2765 = vmatprep.subr.mxu0 0.0
    %2766 = vmatpush2.msra.mxu0 0.0
    %2767 = vmatprep.subr.mxu0 0.0
    %2768 = vmatpush2.msra.mxu0 0.0
    %2769 = vmatprep.subr.mxu0 0.0
    %2770 = vmatpush2.msra.mxu0 0.0
    %2771 = vmatprep.subr.mxu0 0.0
    %2772 = vmatpush2.msra.mxu0 0.0
    %2773 = vmatprep.subr.mxu0 0.0
    %2774 = vmatpush2.msra.mxu0 0.0
    %2775 = vmatprep.subr.mxu0 0.0
    %2776 = vmatpush2.msra.mxu0 0.0
    %2777 = vmatprep.subr.mxu0 0.0
    %2778 = vmatpush2.msra.mxu0 0.0
    %2779 = vmatprep.subr.mxu0 0.0
    %2780 = vmatpush2.msra.mxu0 0.0
    %2781 = vmatprep.subr.mxu0 0.0
    %2782 = vmatpush2.msra.mxu0 0.0
    %2783 = vmatprep.subr.mxu0 0.0
    %2784 = vmatpush2.msra.mxu0 0.0
    %2785 = vmatprep.mubr.f32.mxu0 0.0
    %2786 = vmatmul.mubr.f32.gmra.mxu0 %v2716
    %v2787 = vpop.f32.mrf.mxu0
    %v2788 = vadd.f32 %v2707, %v2787
    %v2789 = vpop.f32.mrf.mxu0
    %2790 = vmatprep.mubr.f32.mxu0 0.0
    %2791 = vmatmul.mubr.f32.gmra.mxu0 %v2719
    %v2792 = vpop.f32.mrf.mxu0
    %v2793 = vadd.f32 %v2712, %v2792
    %v2794 = vpop.f32.mrf.mxu0
    %2795 = vdwg.mxu0
    %2796 = vmatprep.subr.mxu0 0.0
    %2797 = vmatpush1.msra.mxu0 0.0
    %2798 = vmatprep.subr.mxu0 0.0
    %2799 = vmatpush1.msra.mxu0 0.0
    %2800 = vmatprep.subr.mxu0 0.0
    %2801 = vmatpush1.msra.mxu0 0.0
    %2802 = vmatprep.subr.mxu0 0.0
    %2803 = vmatpush1.msra.mxu0 0.0
    %2804 = vmatprep.subr.mxu0 0.0
    %2805 = vmatpush1.msra.mxu0 0.0
    %2806 = vmatprep.subr.mxu0 0.0
    %2807 = vmatpush1.msra.mxu0 0.0
    %2808 = vmatprep.subr.mxu0 0.0
    %2809 = vmatpush1.msra.mxu0 0.0
    %2810 = vmatprep.subr.mxu0 0.0
    %2811 = vmatpush1.msra.mxu0 0.0
    %2812 = vmatprep.subr.mxu0 0.0
    %2813 = vmatpush1.msra.mxu0 0.0
    %2814 = vmatprep.subr.mxu0 0.0
    %2815 = vmatpush1.msra.mxu0 0.0
    %2816 = vmatprep.subr.mxu0 0.0
    %2817 = vmatpush1.msra.mxu0 0.0
    %2818 = vmatprep.subr.mxu0 0.0
    %2819 = vmatpush1.msra.mxu0 %v2643
    %2820 = vmatprep.subr.mxu0 0.0
    %2821 = vmatpush1.msra.mxu0 %v2641
    %2822 = vmatprep.subr.mxu0 0.0
    %2823 = vmatpush1.msra.mxu0 %v2639
    %2824 = vmatprep.subr.mxu0 0.0
    %2825 = vmatpush1.msra.mxu0 %v2637
    %2826 = vmatprep.subr.mxu0 0.0
    %2827 = vmatpush1.msra.mxu0 %v2635
    %2828 = vmatprep.subr.mxu0 0.0
    %2829 = vmatpush2.msra.mxu0 0.0
    %2830 = vmatprep.subr.mxu0 0.0
    %2831 = vmatpush2.msra.mxu0 0.0
    %2832 = vmatprep.subr.mxu0 0.0
    %2833 = vmatpush2.msra.mxu0 0.0
    %2834 = vmatprep.subr.mxu0 0.0
    %2835 = vmatpush2.msra.mxu0 0.0
    %2836 = vmatprep.subr.mxu0 0.0
    %2837 = vmatpush2.msra.mxu0 0.0
    %2838 = vmatprep.subr.mxu0 0.0
    %2839 = vmatpush2.msra.mxu0 0.0
    %2840 = vmatprep.subr.mxu0 0.0
    %2841 = vmatpush2.msra.mxu0 0.0
    %2842 = vmatprep.subr.mxu0 0.0
    %2843 = vmatpush2.msra.mxu0 0.0
    %2844 = vmatprep.subr.mxu0 0.0
    %2845 = vmatpush2.msra.mxu0 0.0
    %2846 = vmatprep.subr.mxu0 0.0
    %2847 = vmatpush2.msra.mxu0 0.0
    %2848 = vmatprep.subr.mxu0 0.0
    %2849 = vmatpush2.msra.mxu0 0.0
    %2850 = vmatprep.subr.mxu0 0.0
    %2851 = vmatpush2.msra.mxu0 0.0
    %2852 = vmatprep.subr.mxu0 0.0
    %2853 = vmatpush2.msra.mxu0 0.0
    %2854 = vmatprep.subr.mxu0 0.0
    %2855 = vmatpush2.msra.mxu0 0.0
    %2856 = vmatprep.subr.mxu0 0.0
    %2857 = vmatpush2.msra.mxu0 0.0
    %2858 = vmatprep.subr.mxu0 0.0
    %2859 = vmatpush2.msra.mxu0 0.0
    %2860 = vmatprep.mubr.f32.mxu0 0.0
    %2861 = vmatmul.mubr.f32.gmra.mxu0 %v2716
    %v2862 = vpop.f32.mrf.mxu0
    %v2863 = vadd.f32 %v2707, %v2862
    %v2864 = vpop.f32.mrf.mxu0
    %2865 = vmatprep.mubr.f32.mxu0 0.0
    %2866 = vmatmul.mubr.f32.gmra.mxu0 %v2719
    %v2867 = vpop.f32.mrf.mxu0
    %v2868 = vadd.f32 %v2712, %v2867
    %v2869 = vpop.f32.mrf.mxu0
    %2870 = vdwg.mxu0
    %2871 = vmatprep.subr.mxu0 0.0
    %2872 = vmatpush1.msra.mxu0 0.0
    %2873 = vmatprep.subr.mxu0 0.0
    %2874 = vmatpush1.msra.mxu0 0.0
    %2875 = vmatprep.subr.mxu0 0.0
    %2876 = vmatpush1.msra.mxu0 0.0
    %2877 = vmatprep.subr.mxu0 0.0
    %2878 = vmatpush1.msra.mxu0 0.0
    %2879 = vmatprep.subr.mxu0 0.0
    %2880 = vmatpush1.msra.mxu0 0.0
    %2881 = vmatprep.subr.mxu0 0.0
    %2882 = vmatpush1.msra.mxu0 0.0
    %2883 = vmatprep.subr.mxu0 0.0
    %2884 = vmatpush1.msra.mxu0 0.0
    %2885 = vmatprep.subr.mxu0 0.0
    %2886 = vmatpush1.msra.mxu0 0.0
    %2887 = vmatprep.subr.mxu0 0.0
    %2888 = vmatpush1.msra.mxu0 0.0
    %2889 = vmatprep.subr.mxu0 0.0
    %2890 = vmatpush1.msra.mxu0 0.0
    %2891 = vmatprep.subr.mxu0 0.0
    %2892 = vmatpush1.msra.mxu0 0.0
    %2893 = vmatprep.subr.mxu0 0.0
    %2894 = vmatpush1.msra.mxu0 %v2645
    %2895 = vmatprep.subr.mxu0 0.0
    %2896 = vmatpush1.msra.mxu0 %v2643
    %2897 = vmatprep.subr.mxu0 0.0
    %2898 = vmatpush1.msra.mxu0 %v2641
    %2899 = vmatprep.subr.mxu0 0.0
    %2900 = vmatpush1.msra.mxu0 %v2639
    %2901 = vmatprep.subr.mxu0 0.0
    %2902 = vmatpush1.msra.mxu0 %v2637
    %2903 = vmatprep.subr.mxu0 0.0
    %2904 = vmatpush2.msra.mxu0 0.0
    %2905 = vmatprep.subr.mxu0 0.0
    %2906 = vmatpush2.msra.mxu0 0.0
    %2907 = vmatprep.subr.mxu0 0.0
    %2908 = vmatpush2.msra.mxu0 0.0
    %2909 = vmatprep.subr.mxu0 0.0
    %2910 = vmatpush2.msra.mxu0 0.0
    %2911 = vmatprep.subr.mxu0 0.0
    %2912 = vmatpush2.msra.mxu0 0.0
    %2913 = vmatprep.subr.mxu0 0.0
    %2914 = vmatpush2.msra.mxu0 0.0
    %2915 = vmatprep.subr.mxu0 0.0
    %2916 = vmatpush2.msra.mxu0 0.0
    %2917 = vmatprep.subr.mxu0 0.0
    %2918 = vmatpush2.msra.mxu0 0.0
    %2919 = vmatprep.subr.mxu0 0.0
    %2920 = vmatpush2.msra.mxu0 0.0
    %2921 = vmatprep.subr.mxu0 0.0
    %2922 = vmatpush2.msra.mxu0 0.0
    %2923 = vmatprep.subr.mxu0 0.0
    %2924 = vmatpush2.msra.mxu0 0.0
    %2925 = vmatprep.subr.mxu0 0.0
    %2926 = vmatpush2.msra.mxu0 0.0
    %2927 = vmatprep.subr.mxu0 0.0
    %2928 = vmatpush2.msra.mxu0 0.0
    %2929 = vmatprep.subr.mxu0 0.0
    %2930 = vmatpush2.msra.mxu0 0.0
    %2931 = vmatprep.subr.mxu0 0.0
    %2932 = vmatpush2.msra.mxu0 0.0
    %2933 = vmatprep.subr.mxu0 0.0
    %2934 = vmatpush2.msra.mxu0 0.0
    %2935 = vmatprep.mubr.f32.mxu0 0.0
    %2936 = vmatmul.mubr.f32.gmra.mxu0 %v2716
    %v2937 = vpop.f32.mrf.mxu0
    %v2938 = vadd.f32 %v2707, %v2937
    %v2939 = vpop.f32.mrf.mxu0
    %2940 = vmatprep.mubr.f32.mxu0 0.0
    %2941 = vmatmul.mubr.f32.gmra.mxu0 %v2719
    %v2942 = vpop.f32.mrf.mxu0
    %v2943 = vadd.f32 %v2712, %v2942
    %v2944 = vpop.f32.mrf.mxu0
    %2945 = vdwg.mxu0
    %2946 = vmatprep.subr.mxu0 0.0
    %2947 = vmatpush1.msra.mxu0 0.0
    %2948 = vmatprep.subr.mxu0 0.0
    %2949 = vmatpush1.msra.mxu0 0.0
    %2950 = vmatprep.subr.mxu0 0.0
    %2951 = vmatpush1.msra.mxu0 0.0
    %2952 = vmatprep.subr.mxu0 0.0
    %2953 = vmatpush1.msra.mxu0 0.0
    %2954 = vmatprep.subr.mxu0 0.0
    %2955 = vmatpush1.msra.mxu0 0.0
    %2956 = vmatprep.subr.mxu0 0.0
    %2957 = vmatpush1.msra.mxu0 0.0
    %2958 = vmatprep.subr.mxu0 0.0
    %2959 = vmatpush1.msra.mxu0 0.0
    %2960 = vmatprep.subr.mxu0 0.0
    %2961 = vmatpush1.msra.mxu0 0.0
    %2962 = vmatprep.subr.mxu0 0.0
    %2963 = vmatpush1.msra.mxu0 0.0
    %2964 = vmatprep.subr.mxu0 0.0
    %2965 = vmatpush1.msra.mxu0 0.0
    %2966 = vmatprep.subr.mxu0 0.0
    %2967 = vmatpush1.msra.mxu0 0.0
    %2968 = vmatprep.subr.mxu0 0.0
    %2969 = vmatpush1.msra.mxu0 %v2647
    %2970 = vmatprep.subr.mxu0 0.0
    %2971 = vmatpush1.msra.mxu0 %v2645
    %2972 = vmatprep.subr.mxu0 0.0
    %2973 = vmatpush1.msra.mxu0 %v2643
    %2974 = vmatprep.subr.mxu0 0.0
    %2975 = vmatpush1.msra.mxu0 %v2641
    %2976 = vmatprep.subr.mxu0 0.0
    %2977 = vmatpush1.msra.mxu0 %v2639
    %2978 = vmatprep.subr.mxu0 0.0
    %2979 = vmatpush2.msra.mxu0 0.0
    %2980 = vmatprep.subr.mxu0 0.0
    %2981 = vmatpush2.msra.mxu0 0.0
    %2982 = vmatprep.subr.mxu0 0.0
    %2983 = vmatpush2.msra.mxu0 0.0
    %2984 = vmatprep.subr.mxu0 0.0
    %2985 = vmatpush2.msra.mxu0 0.0
    %2986 = vmatprep.subr.mxu0 0.0
    %2987 = vmatpush2.msra.mxu0 0.0
    %2988 = vmatprep.subr.mxu0 0.0
    %2989 = vmatpush2.msra.mxu0 0.0
    %2990 = vmatprep.subr.mxu0 0.0
    %2991 = vmatpush2.msra.mxu0 0.0
    %2992 = vmatprep.subr.mxu0 0.0
    %2993 = vmatpush2.msra.mxu0 0.0
    %2994 = vmatprep.subr.mxu0 0.0
    %2995 = vmatpush2.msra.mxu0 0.0
    %2996 = vmatprep.subr.mxu0 0.0
    %2997 = vmatpush2.msra.mxu0 0.0
    %2998 = vmatprep.subr.mxu0 0.0
    %2999 = vmatpush2.msra.mxu0 0.0
    %3000 = vmatprep.subr.mxu0 0.0
    %3001 = vmatpush2.msra.mxu0 0.0
    %3002 = vmatprep.subr.mxu0 0.0
    %3003 = vmatpush2.msra.mxu0 0.0
    %3004 = vmatprep.subr.mxu0 0.0
    %3005 = vmatpush2.msra.mxu0 0.0
    %3006 = vmatprep.subr.mxu0 0.0
    %3007 = vmatpush2.msra.mxu0 0.0
    %3008 = vmatprep.subr.mxu0 0.0
    %3009 = vmatpush2.msra.mxu0 0.0
    %3010 = vmatprep.mubr.f32.mxu0 0.0
    %3011 = vmatmul.mubr.f32.gmra.mxu0 %v2716
    %v3012 = vpop.f32.mrf.mxu0
    %v3013 = vadd.f32 %v2707, %v3012
    %v3014 = vpop.f32.mrf.mxu0
    %3015 = vmatprep.mubr.f32.mxu0 0.0
    %3016 = vmatmul.mubr.f32.gmra.mxu0 %v2719
    %v3017 = vpop.f32.mrf.mxu0
    %v3018 = vadd.f32 %v2712, %v3017
    %v3019 = vpop.f32.mrf.mxu0
    %3020 = vdwg.mxu0
    %3021 = vmatprep.subr.mxu0 0.0
    %3022 = vmatpush1.msra.mxu0 0.0
    %3023 = vmatprep.subr.mxu0 0.0
    %3024 = vmatpush1.msra.mxu0 0.0
    %3025 = vmatprep.subr.mxu0 0.0
    %3026 = vmatpush1.msra.mxu0 0.0
    %3027 = vmatprep.subr.mxu0 0.0
    %3028 = vmatpush1.msra.mxu0 0.0
    %3029 = vmatprep.subr.mxu0 0.0
    %3030 = vmatpush1.msra.mxu0 0.0
    %3031 = vmatprep.subr.mxu0 0.0
    %3032 = vmatpush1.msra.mxu0 0.0
    %3033 = vmatprep.subr.mxu0 0.0
    %3034 = vmatpush1.msra.mxu0 0.0
    %3035 = vmatprep.subr.mxu0 0.0
    %3036 = vmatpush1.msra.mxu0 0.0
    %3037 = vmatprep.subr.mxu0 0.0
    %3038 = vmatpush1.msra.mxu0 0.0
    %3039 = vmatprep.subr.mxu0 0.0
    %3040 = vmatpush1.msra.mxu0 0.0
    %3041 = vmatprep.subr.mxu0 0.0
    %3042 = vmatpush1.msra.mxu0 0.0
    %3043 = vmatprep.subr.mxu0 0.0
    %3044 = vmatpush1.msra.mxu0 %v2649
    %3045 = vmatprep.subr.mxu0 0.0
    %3046 = vmatpush1.msra.mxu0 %v2647
    %3047 = vmatprep.subr.mxu0 0.0
    %3048 = vmatpush1.msra.mxu0 %v2645
    %3049 = vmatprep.subr.mxu0 0.0
    %3050 = vmatpush1.msra.mxu0 %v2643
    %3051 = vmatprep.subr.mxu0 0.0
    %3052 = vmatpush1.msra.mxu0 %v2641
    %3053 = vmatprep.subr.mxu0 0.0
    %3054 = vmatpush2.msra.mxu0 0.0
    %3055 = vmatprep.subr.mxu0 0.0
    %3056 = vmatpush2.msra.mxu0 0.0
    %3057 = vmatprep.subr.mxu0 0.0
    %3058 = vmatpush2.msra.mxu0 0.0
    %3059 = vmatprep.subr.mxu0 0.0
    %3060 = vmatpush2.msra.mxu0 0.0
    %3061 = vmatprep.subr.mxu0 0.0
    %3062 = vmatpush2.msra.mxu0 0.0
    %3063 = vmatprep.subr.mxu0 0.0
    %3064 = vmatpush2.msra.mxu0 0.0
    %3065 = vmatprep.subr.mxu0 0.0
    %3066 = vmatpush2.msra.mxu0 0.0
    %3067 = vmatprep.subr.mxu0 0.0
    %3068 = vmatpush2.msra.mxu0 0.0
    %3069 = vmatprep.subr.mxu0 0.0
    %3070 = vmatpush2.msra.mxu0 0.0
    %3071 = vmatprep.subr.mxu0 0.0
    %3072 = vmatpush2.msra.mxu0 0.0
    %3073 = vmatprep.subr.mxu0 0.0
    %3074 = vmatpush2.msra.mxu0 0.0
    %3075 = vmatprep.subr.mxu0 0.0
    %3076 = vmatpush2.msra.mxu0 0.0
    %3077 = vmatprep.subr.mxu0 0.0
    %3078 = vmatpush2.msra.mxu0 0.0
    %3079 = vmatprep.subr.mxu0 0.0
    %3080 = vmatpush2.msra.mxu0 0.0
    %3081 = vmatprep.subr.mxu0 0.0
    %3082 = vmatpush2.msra.mxu0 0.0
    %3083 = vmatprep.subr.mxu0 0.0
    %3084 = vmatpush2.msra.mxu0 0.0
    %3085 = vmatprep.mubr.f32.mxu0 0.0
    %3086 = vmatmul.mubr.f32.gmra.mxu0 %v2716
    %v3087 = vpop.f32.mrf.mxu0
    %v3088 = vadd.f32 %v2707, %v3087
    %v3089 = vpop.f32.mrf.mxu0
    %3090 = vmatprep.mubr.f32.mxu0 0.0
    %3091 = vmatmul.mubr.f32.gmra.mxu0 %v2719
    %v3092 = vpop.f32.mrf.mxu0
    %v3093 = vadd.f32 %v2712, %v3092
    %v3094 = vpop.f32.mrf.mxu0
    %3095 = vdwg.mxu0
    %3096 = vmatprep.subr.mxu0 0.0
    %3097 = vmatpush1.msra.mxu0 0.0
    %3098 = vmatprep.subr.mxu0 0.0
    %3099 = vmatpush1.msra.mxu0 0.0
    %3100 = vmatprep.subr.mxu0 0.0
    %3101 = vmatpush1.msra.mxu0 0.0
    %3102 = vmatprep.subr.mxu0 0.0
    %3103 = vmatpush1.msra.mxu0 0.0
    %3104 = vmatprep.subr.mxu0 0.0
    %3105 = vmatpush1.msra.mxu0 0.0
    %3106 = vmatprep.subr.mxu0 0.0
    %3107 = vmatpush1.msra.mxu0 0.0
    %3108 = vmatprep.subr.mxu0 0.0
    %3109 = vmatpush1.msra.mxu0 0.0
    %3110 = vmatprep.subr.mxu0 0.0
    %3111 = vmatpush1.msra.mxu0 0.0
    %3112 = vmatprep.subr.mxu0 0.0
    %3113 = vmatpush1.msra.mxu0 0.0
    %3114 = vmatprep.subr.mxu0 0.0
    %3115 = vmatpush1.msra.mxu0 0.0
    %3116 = vmatprep.subr.mxu0 0.0
    %3117 = vmatpush1.msra.mxu0 0.0
    %3118 = vmatprep.subr.mxu0 0.0
    %3119 = vmatpush1.msra.mxu0 %v2651
    %3120 = vmatprep.subr.mxu0 0.0
    %3121 = vmatpush1.msra.mxu0 %v2649
    %3122 = vmatprep.subr.mxu0 0.0
    %3123 = vmatpush1.msra.mxu0 %v2647
    %3124 = vmatprep.subr.mxu0 0.0
    %3125 = vmatpush1.msra.mxu0 %v2645
    %3126 = vmatprep.subr.mxu0 0.0
    %3127 = vmatpush1.msra.mxu0 %v2643
    %3128 = vmatprep.subr.mxu0 0.0
    %3129 = vmatpush2.msra.mxu0 0.0
    %3130 = vmatprep.subr.mxu0 0.0
    %3131 = vmatpush2.msra.mxu0 0.0
    %3132 = vmatprep.subr.mxu0 0.0
    %3133 = vmatpush2.msra.mxu0 0.0
    %3134 = vmatprep.subr.mxu0 0.0
    %3135 = vmatpush2.msra.mxu0 0.0
    %3136 = vmatprep.subr.mxu0 0.0
    %3137 = vmatpush2.msra.mxu0 0.0
    %3138 = vmatprep.subr.mxu0 0.0
    %3139 = vmatpush2.msra.mxu0 0.0
    %3140 = vmatprep.subr.mxu0 0.0
    %3141 = vmatpush2.msra.mxu0 0.0
    %3142 = vmatprep.subr.mxu0 0.0
    %3143 = vmatpush2.msra.mxu0 0.0
    %3144 = vmatprep.subr.mxu0 0.0
    %3145 = vmatpush2.msra.mxu0 0.0
    %3146 = vmatprep.subr.mxu0 0.0
    %3147 = vmatpush2.msra.mxu0 0.0
    %3148 = vmatprep.subr.mxu0 0.0
    %3149 = vmatpush2.msra.mxu0 0.0
    %3150 = vmatprep.subr.mxu0 0.0
    %3151 = vmatpush2.msra.mxu0 0.0
    %3152 = vmatprep.subr.mxu0 0.0
    %3153 = vmatpush2.msra.mxu0 0.0
    %3154 = vmatprep.subr.mxu0 0.0
    %3155 = vmatpush2.msra.mxu0 0.0
    %3156 = vmatprep.subr.mxu0 0.0
    %3157 = vmatpush2.msra.mxu0 0.0
    %3158 = vmatprep.subr.mxu0 0.0
    %3159 = vmatpush2.msra.mxu0 0.0
    %3160 = vmatprep.mubr.f32.mxu0 0.0
    %3161 = vmatmul.mubr.f32.gmra.mxu0 %v2716
    %v3162 = vpop.f32.mrf.mxu0
    %v3163 = vadd.f32 %v2707, %v3162
    %v3164 = vpop.f32.mrf.mxu0
    %3165 = vmatprep.mubr.f32.mxu0 0.0
    %3166 = vmatmul.mubr.f32.gmra.mxu0 %v2719
    %v3167 = vpop.f32.mrf.mxu0
    %v3168 = vadd.f32 %v2712, %v3167
    %v3169 = vpop.f32.mrf.mxu0
    %3170 = vdwg.mxu0
    %3171 = vmatprep.subr.mxu0 0.0
    %3172 = vmatpush1.msra.mxu0 0.0
    %3173 = vmatprep.subr.mxu0 0.0
    %3174 = vmatpush1.msra.mxu0 0.0
    %3175 = vmatprep.subr.mxu0 0.0
    %3176 = vmatpush1.msra.mxu0 0.0
    %3177 = vmatprep.subr.mxu0 0.0
    %3178 = vmatpush1.msra.mxu0 0.0
    %3179 = vmatprep.subr.mxu0 0.0
    %3180 = vmatpush1.msra.mxu0 0.0
    %3181 = vmatprep.subr.mxu0 0.0
    %3182 = vmatpush1.msra.mxu0 0.0
    %3183 = vmatprep.subr.mxu0 0.0
    %3184 = vmatpush1.msra.mxu0 0.0
    %3185 = vmatprep.subr.mxu0 0.0
    %3186 = vmatpush1.msra.mxu0 0.0
    %3187 = vmatprep.subr.mxu0 0.0
    %3188 = vmatpush1.msra.mxu0 0.0
    %3189 = vmatprep.subr.mxu0 0.0
    %3190 = vmatpush1.msra.mxu0 0.0
    %3191 = vmatprep.subr.mxu0 0.0
    %3192 = vmatpush1.msra.mxu0 0.0
    %3193 = vmatprep.subr.mxu0 0.0
    %3194 = vmatpush1.msra.mxu0 %v2653
    %3195 = vmatprep.subr.mxu0 0.0
    %3196 = vmatpush1.msra.mxu0 %v2651
    %3197 = vmatprep.subr.mxu0 0.0
    %3198 = vmatpush1.msra.mxu0 %v2649
    %3199 = vmatprep.subr.mxu0 0.0
    %3200 = vmatpush1.msra.mxu0 %v2647
    %3201 = vmatprep.subr.mxu0 0.0
    %3202 = vmatpush1.msra.mxu0 %v2645
    %3203 = vmatprep.subr.mxu0 0.0
    %3204 = vmatpush2.msra.mxu0 0.0
    %3205 = vmatprep.subr.mxu0 0.0
    %3206 = vmatpush2.msra.mxu0 0.0
    %3207 = vmatprep.subr.mxu0 0.0
    %3208 = vmatpush2.msra.mxu0 0.0
    %3209 = vmatprep.subr.mxu0 0.0
    %3210 = vmatpush2.msra.mxu0 0.0
    %3211 = vmatprep.subr.mxu0 0.0
    %3212 = vmatpush2.msra.mxu0 0.0
    %3213 = vmatprep.subr.mxu0 0.0
    %3214 = vmatpush2.msra.mxu0 0.0
    %3215 = vmatprep.subr.mxu0 0.0
    %3216 = vmatpush2.msra.mxu0 0.0
    %3217 = vmatprep.subr.mxu0 0.0
    %3218 = vmatpush2.msra.mxu0 0.0
    %3219 = vmatprep.subr.mxu0 0.0
    %3220 = vmatpush2.msra.mxu0 0.0
    %3221 = vmatprep.subr.mxu0 0.0
    %3222 = vmatpush2.msra.mxu0 0.0
    %3223 = vmatprep.subr.mxu0 0.0
    %3224 = vmatpush2.msra.mxu0 0.0
    %3225 = vmatprep.subr.mxu0 0.0
    %3226 = vmatpush2.msra.mxu0 0.0
    %3227 = vmatprep.subr.mxu0 0.0
    %3228 = vmatpush2.msra.mxu0 0.0
    %3229 = vmatprep.subr.mxu0 0.0
    %3230 = vmatpush2.msra.mxu0 0.0
    %3231 = vmatprep.subr.mxu0 0.0
    %3232 = vmatpush2.msra.mxu0 0.0
    %3233 = vmatprep.subr.mxu0 0.0
    %3234 = vmatpush2.msra.mxu0 0.0
    %3235 = vmatprep.mubr.f32.mxu0 0.0
    %3236 = vmatmul.mubr.f32.gmra.mxu0 %v2716
    %v3237 = vpop.f32.mrf.mxu0
    %v3238 = vadd.f32 %v2707, %v3237
    %v3239 = vpop.f32.mrf.mxu0
    %3240 = vmatprep.mubr.f32.mxu0 0.0
    %3241 = vmatmul.mubr.f32.gmra.mxu0 %v2719
    %v3242 = vpop.f32.mrf.mxu0
    %v3243 = vadd.f32 %v2712, %v3242
    %v3244 = vpop.f32.mrf.mxu0
    %3245 = vdwg.mxu0
    %3246 = vmatprep.subr.mxu0 0.0
    %3247 = vmatpush1.msra.mxu0 0.0
    %3248 = vmatprep.subr.mxu0 0.0
    %3249 = vmatpush1.msra.mxu0 0.0
    %3250 = vmatprep.subr.mxu0 0.0
    %3251 = vmatpush1.msra.mxu0 0.0
    %3252 = vmatprep.subr.mxu0 0.0
    %3253 = vmatpush1.msra.mxu0 0.0
    %3254 = vmatprep.subr.mxu0 0.0
    %3255 = vmatpush1.msra.mxu0 0.0
    %3256 = vmatprep.subr.mxu0 0.0
    %3257 = vmatpush1.msra.mxu0 0.0
    %3258 = vmatprep.subr.mxu0 0.0
    %3259 = vmatpush1.msra.mxu0 0.0
    %3260 = vmatprep.subr.mxu0 0.0
    %3261 = vmatpush1.msra.mxu0 0.0
    %3262 = vmatprep.subr.mxu0 0.0
    %3263 = vmatpush1.msra.mxu0 0.0
    %3264 = vmatprep.subr.mxu0 0.0
    %3265 = vmatpush1.msra.mxu0 0.0
    %3266 = vmatprep.subr.mxu0 0.0
    %3267 = vmatpush1.msra.mxu0 0.0
    %3268 = vmatprep.subr.mxu0 0.0
    %3269 = vmatpush1.msra.mxu0 %v2655
    %3270 = vmatprep.subr.mxu0 0.0
    %3271 = vmatpush1.msra.mxu0 %v2653
    %3272 = vmatprep.subr.mxu0 0.0
    %3273 = vmatpush1.msra.mxu0 %v2651
    %3274 = vmatprep.subr.mxu0 0.0
    %3275 = vmatpush1.msra.mxu0 %v2649
    %3276 = vmatprep.subr.mxu0 0.0
    %3277 = vmatpush1.msra.mxu0 %v2647
    %3278 = vmatprep.subr.mxu0 0.0
    %3279 = vmatpush2.msra.mxu0 0.0
    %3280 = vmatprep.subr.mxu0 0.0
    %3281 = vmatpush2.msra.mxu0 0.0
    %3282 = vmatprep.subr.mxu0 0.0
    %3283 = vmatpush2.msra.mxu0 0.0
    %3284 = vmatprep.subr.mxu0 0.0
    %3285 = vmatpush2.msra.mxu0 0.0
    %3286 = vmatprep.subr.mxu0 0.0
    %3287 = vmatpush2.msra.mxu0 0.0
    %3288 = vmatprep.subr.mxu0 0.0
    %3289 = vmatpush2.msra.mxu0 0.0
    %3290 = vmatprep.subr.mxu0 0.0
    %3291 = vmatpush2.msra.mxu0 0.0
    %3292 = vmatprep.subr.mxu0 0.0
    %3293 = vmatpush2.msra.mxu0 0.0
    %3294 = vmatprep.subr.mxu0 0.0
    %3295 = vmatpush2.msra.mxu0 0.0
    %3296 = vmatprep.subr.mxu0 0.0
    %3297 = vmatpush2.msra.mxu0 0.0
    %3298 = vmatprep.subr.mxu0 0.0
    %3299 = vmatpush2.msra.mxu0 0.0
    %3300 = vmatprep.subr.mxu0 0.0
    %3301 = vmatpush2.msra.mxu0 0.0
    %3302 = vmatprep.subr.mxu0 0.0
    %3303 = vmatpush2.msra.mxu0 0.0
    %3304 = vmatprep.subr.mxu0 0.0
    %3305 = vmatpush2.msra.mxu0 0.0
    %3306 = vmatprep.subr.mxu0 0.0
    %3307 = vmatpush2.msra.mxu0 0.0
    %3308 = vmatprep.subr.mxu0 0.0
    %3309 = vmatpush2.msra.mxu0 0.0
    %3310 = vmatprep.mubr.f32.mxu0 0.0
    %3311 = vmatmul.mubr.f32.gmra.mxu0 %v2716
    %v3312 = vpop.f32.mrf.mxu0
    %v3313 = vadd.f32 %v2707, %v3312
    %v3314 = vpop.f32.mrf.mxu0
    %3315 = vmatprep.mubr.f32.mxu0 0.0
    %3316 = vmatmul.mubr.f32.gmra.mxu0 %v2719
    %v3317 = vpop.f32.mrf.mxu0
    %v3318 = vadd.f32 %v2712, %v3317
    %v3319 = vpop.f32.mrf.mxu0
    %3320 = vdwg.mxu0
    %3321 = vmatprep.subr.mxu0 0.0
    %3322 = vmatpush1.msra.mxu0 0.0
    %3323 = vmatprep.subr.mxu0 0.0
    %3324 = vmatpush1.msra.mxu0 0.0
    %3325 = vmatprep.subr.mxu0 0.0
    %3326 = vmatpush1.msra.mxu0 0.0
    %3327 = vmatprep.subr.mxu0 0.0
    %3328 = vmatpush1.msra.mxu0 0.0
    %3329 = vmatprep.subr.mxu0 0.0
    %3330 = vmatpush1.msra.mxu0 0.0
    %3331 = vmatprep.subr.mxu0 0.0
    %3332 = vmatpush1.msra.mxu0 0.0
    %3333 = vmatprep.subr.mxu0 0.0
    %3334 = vmatpush1.msra.mxu0 0.0
    %3335 = vmatprep.subr.mxu0 0.0
    %3336 = vmatpush1.msra.mxu0 0.0
    %3337 = vmatprep.subr.mxu0 0.0
    %3338 = vmatpush1.msra.mxu0 0.0
    %3339 = vmatprep.subr.mxu0 0.0
    %3340 = vmatpush1.msra.mxu0 0.0
    %3341 = vmatprep.subr.mxu0 0.0
    %3342 = vmatpush1.msra.mxu0 0.0
    %3343 = vmatprep.subr.mxu0 0.0
    %3344 = vmatpush1.msra.mxu0 %v2657
    %3345 = vmatprep.subr.mxu0 0.0
    %3346 = vmatpush1.msra.mxu0 %v2655
    %3347 = vmatprep.subr.mxu0 0.0
    %3348 = vmatpush1.msra.mxu0 %v2653
    %3349 = vmatprep.subr.mxu0 0.0
    %3350 = vmatpush1.msra.mxu0 %v2651
    %3351 = vmatprep.subr.mxu0 0.0
    %3352 = vmatpush1.msra.mxu0 %v2649
    %3353 = vmatprep.subr.mxu0 0.0
    %3354 = vmatpush2.msra.mxu0 0.0
    %3355 = vmatprep.subr.mxu0 0.0
    %3356 = vmatpush2.msra.mxu0 0.0
    %3357 = vmatprep.subr.mxu0 0.0
    %3358 = vmatpush2.msra.mxu0 0.0
    %3359 = vmatprep.subr.mxu0 0.0
    %3360 = vmatpush2.msra.mxu0 0.0
    %3361 = vmatprep.subr.mxu0 0.0
    %3362 = vmatpush2.msra.mxu0 0.0
    %3363 = vmatprep.subr.mxu0 0.0
    %3364 = vmatpush2.msra.mxu0 0.0
    %3365 = vmatprep.subr.mxu0 0.0
    %3366 = vmatpush2.msra.mxu0 0.0
    %3367 = vmatprep.subr.mxu0 0.0
    %3368 = vmatpush2.msra.mxu0 0.0
    %3369 = vmatprep.subr.mxu0 0.0
    %3370 = vmatpush2.msra.mxu0 0.0
    %3371 = vmatprep.subr.mxu0 0.0
    %3372 = vmatpush2.msra.mxu0 0.0
    %3373 = vmatprep.subr.mxu0 0.0
    %3374 = vmatpush2.msra.mxu0 0.0
    %3375 = vmatprep.subr.mxu0 0.0
    %3376 = vmatpush2.msra.mxu0 0.0
    %3377 = vmatprep.subr.mxu0 0.0
    %3378 = vmatpush2.msra.mxu0 0.0
    %3379 = vmatprep.subr.mxu0 0.0
    %3380 = vmatpush2.msra.mxu0 0.0
    %3381 = vmatprep.subr.mxu0 0.0
    %3382 = vmatpush2.msra.mxu0 0.0
    %3383 = vmatprep.subr.mxu0 0.0
    %3384 = vmatpush2.msra.mxu0 0.0
    %3385 = vmatprep.mubr.f32.mxu0 0.0
    %3386 = vmatmul.mubr.f32.gmra.mxu0 %v2716
    %v3387 = vpop.f32.mrf.mxu0
    %v3388 = vadd.f32 %v2707, %v3387
    %v3389 = vpop.f32.mrf.mxu0
    %3390 = vmatprep.mubr.f32.mxu0 0.0
    %3391 = vmatmul.mubr.f32.gmra.mxu0 %v2719
    %v3392 = vpop.f32.mrf.mxu0
    %v3393 = vadd.f32 %v2712, %v3392
    %v3394 = vpop.f32.mrf.mxu0
    %3395 = vdwg.mxu0
    %3396 = vmatprep.subr.mxu0 0.0
    %3397 = vmatpush1.msra.mxu0 0.0
    %3398 = vmatprep.subr.mxu0 0.0
    %3399 = vmatpush1.msra.mxu0 0.0
    %3400 = vmatprep.subr.mxu0 0.0
    %3401 = vmatpush1.msra.mxu0 0.0
    %3402 = vmatprep.subr.mxu0 0.0
    %3403 = vmatpush1.msra.mxu0 0.0
    %3404 = vmatprep.subr.mxu0 0.0
    %3405 = vmatpush1.msra.mxu0 0.0
    %3406 = vmatprep.subr.mxu0 0.0
    %3407 = vmatpush1.msra.mxu0 0.0
    %3408 = vmatprep.subr.mxu0 0.0
    %3409 = vmatpush1.msra.mxu0 0.0
    %3410 = vmatprep.subr.mxu0 0.0
    %3411 = vmatpush1.msra.mxu0 0.0
    %3412 = vmatprep.subr.mxu0 0.0
    %3413 = vmatpush1.msra.mxu0 0.0
    %3414 = vmatprep.subr.mxu0 0.0
    %3415 = vmatpush1.msra.mxu0 0.0
    %3416 = vmatprep.subr.mxu0 0.0
    %3417 = vmatpush1.msra.mxu0 0.0
    %3418 = vmatprep.subr.mxu0 0.0
    %3419 = vmatpush1.msra.mxu0 %v2659
    %3420 = vmatprep.subr.mxu0 0.0
    %3421 = vmatpush1.msra.mxu0 %v2657
    %3422 = vmatprep.subr.mxu0 0.0
    %3423 = vmatpush1.msra.mxu0 %v2655
    %3424 = vmatprep.subr.mxu0 0.0
    %3425 = vmatpush1.msra.mxu0 %v2653
    %3426 = vmatprep.subr.mxu0 0.0
    %3427 = vmatpush1.msra.mxu0 %v2651
    %3428 = vmatprep.subr.mxu0 0.0
    %3429 = vmatpush2.msra.mxu0 0.0
    %3430 = vmatprep.subr.mxu0 0.0
    %3431 = vmatpush2.msra.mxu0 0.0
    %3432 = vmatprep.subr.mxu0 0.0
    %3433 = vmatpush2.msra.mxu0 0.0
    %3434 = vmatprep.subr.mxu0 0.0
    %3435 = vmatpush2.msra.mxu0 0.0
    %3436 = vmatprep.subr.mxu0 0.0
    %3437 = vmatpush2.msra.mxu0 0.0
    %3438 = vmatprep.subr.mxu0 0.0
    %3439 = vmatpush2.msra.mxu0 0.0
    %3440 = vmatprep.subr.mxu0 0.0
    %3441 = vmatpush2.msra.mxu0 0.0
    %3442 = vmatprep.subr.mxu0 0.0
    %3443 = vmatpush2.msra.mxu0 0.0
    %3444 = vmatprep.subr.mxu0 0.0
    %3445 = vmatpush2.msra.mxu0 0.0
    %3446 = vmatprep.subr.mxu0 0.0
    %3447 = vmatpush2.msra.mxu0 0.0
    %3448 = vmatprep.subr.mxu0 0.0
    %3449 = vmatpush2.msra.mxu0 0.0
    %3450 = vmatprep.subr.mxu0 0.0
    %3451 = vmatpush2.msra.mxu0 0.0
    %3452 = vmatprep.subr.mxu0 0.0
    %3453 = vmatpush2.msra.mxu0 0.0
    %3454 = vmatprep.subr.mxu0 0.0
    %3455 = vmatpush2.msra.mxu0 0.0
    %3456 = vmatprep.subr.mxu0 0.0
    %3457 = vmatpush2.msra.mxu0 0.0
    %3458 = vmatprep.subr.mxu0 0.0
    %3459 = vmatpush2.msra.mxu0 0.0
    %3460 = vmatprep.mubr.f32.mxu0 0.0
    %3461 = vmatmul.mubr.f32.gmra.mxu0 %v2716
    %v3462 = vpop.f32.mrf.mxu0
    %v3463 = vadd.f32 %v2707, %v3462
    %v3464 = vpop.f32.mrf.mxu0
    %3465 = vmatprep.mubr.f32.mxu0 0.0
    %3466 = vmatmul.mubr.f32.gmra.mxu0 %v2719
    %v3467 = vpop.f32.mrf.mxu0
    %v3468 = vadd.f32 %v2712, %v3467
    %v3469 = vpop.f32.mrf.mxu0
    %3470 = vdwg.mxu0
    %3471 = vmatprep.subr.mxu0 0.0
    %3472 = vmatpush1.msra.mxu0 0.0
    %3473 = vmatprep.subr.mxu0 0.0
    %3474 = vmatpush1.msra.mxu0 0.0
    %3475 = vmatprep.subr.mxu0 0.0
    %3476 = vmatpush1.msra.mxu0 0.0
    %3477 = vmatprep.subr.mxu0 0.0
    %3478 = vmatpush1.msra.mxu0 0.0
    %3479 = vmatprep.subr.mxu0 0.0
    %3480 = vmatpush1.msra.mxu0 0.0
    %3481 = vmatprep.subr.mxu0 0.0
    %3482 = vmatpush1.msra.mxu0 0.0
    %3483 = vmatprep.subr.mxu0 0.0
    %3484 = vmatpush1.msra.mxu0 0.0
    %3485 = vmatprep.subr.mxu0 0.0
    %3486 = vmatpush1.msra.mxu0 0.0
    %3487 = vmatprep.subr.mxu0 0.0
    %3488 = vmatpush1.msra.mxu0 0.0
    %3489 = vmatprep.subr.mxu0 0.0
    %3490 = vmatpush1.msra.mxu0 0.0
    %3491 = vmatprep.subr.mxu0 0.0
    %3492 = vmatpush1.msra.mxu0 0.0
    %3493 = vmatprep.subr.mxu0 0.0
    %3494 = vmatpush1.msra.mxu0 %v2661
    %3495 = vmatprep.subr.mxu0 0.0
    %3496 = vmatpush1.msra.mxu0 %v2659
    %3497 = vmatprep.subr.mxu0 0.0
    %3498 = vmatpush1.msra.mxu0 %v2657
    %3499 = vmatprep.subr.mxu0 0.0
    %3500 = vmatpush1.msra.mxu0 %v2655
    %3501 = vmatprep.subr.mxu0 0.0
    %3502 = vmatpush1.msra.mxu0 %v2653
    %3503 = vmatprep.subr.mxu0 0.0
    %3504 = vmatpush2.msra.mxu0 0.0
    %3505 = vmatprep.subr.mxu0 0.0
    %3506 = vmatpush2.msra.mxu0 0.0
    %3507 = vmatprep.subr.mxu0 0.0
    %3508 = vmatpush2.msra.mxu0 0.0
    %3509 = vmatprep.subr.mxu0 0.0
    %3510 = vmatpush2.msra.mxu0 0.0
    %3511 = vmatprep.subr.mxu0 0.0
    %3512 = vmatpush2.msra.mxu0 0.0
    %3513 = vmatprep.subr.mxu0 0.0
    %3514 = vmatpush2.msra.mxu0 0.0
    %3515 = vmatprep.subr.mxu0 0.0
    %3516 = vmatpush2.msra.mxu0 0.0
    %3517 = vmatprep.subr.mxu0 0.0
    %3518 = vmatpush2.msra.mxu0 0.0
    %3519 = vmatprep.subr.mxu0 0.0
    %3520 = vmatpush2.msra.mxu0 0.0
    %3521 = vmatprep.subr.mxu0 0.0
    %3522 = vmatpush2.msra.mxu0 0.0
    %3523 = vmatprep.subr.mxu0 0.0
    %3524 = vmatpush2.msra.mxu0 0.0
    %3525 = vmatprep.subr.mxu0 0.0
    %3526 = vmatpush2.msra.mxu0 0.0
    %3527 = vmatprep.subr.mxu0 0.0
    %3528 = vmatpush2.msra.mxu0 0.0
    %3529 = vmatprep.subr.mxu0 0.0
    %3530 = vmatpush2.msra.mxu0 0.0
    %3531 = vmatprep.subr.mxu0 0.0
    %3532 = vmatpush2.msra.mxu0 0.0
    %3533 = vmatprep.subr.mxu0 0.0
    %3534 = vmatpush2.msra.mxu0 0.0
    %3535 = vmatprep.mubr.f32.mxu0 0.0
    %3536 = vmatmul.mubr.f32.gmra.mxu0 %v2716
    %v3537 = vpop.f32.mrf.mxu0
    %v3538 = vadd.f32 %v2707, %v3537
    %v3539 = vpop.f32.mrf.mxu0
    %3540 = vmatprep.mubr.f32.mxu0 0.0
    %3541 = vmatmul.mubr.f32.gmra.mxu0 %v2719
    %v3542 = vpop.f32.mrf.mxu0
    %v3543 = vadd.f32 %v2712, %v3542
    %v3544 = vpop.f32.mrf.mxu0
    %3545 = vdwg.mxu0
    %3546 = vmatprep.subr.mxu0 0.0
    %3547 = vmatpush1.msra.mxu0 0.0
    %3548 = vmatprep.subr.mxu0 0.0
    %3549 = vmatpush1.msra.mxu0 0.0
    %3550 = vmatprep.subr.mxu0 0.0
    %3551 = vmatpush1.msra.mxu0 0.0
    %3552 = vmatprep.subr.mxu0 0.0
    %3553 = vmatpush1.msra.mxu0 0.0
    %3554 = vmatprep.subr.mxu0 0.0
    %3555 = vmatpush1.msra.mxu0 0.0
    %3556 = vmatprep.subr.mxu0 0.0
    %3557 = vmatpush1.msra.mxu0 0.0
    %3558 = vmatprep.subr.mxu0 0.0
    %3559 = vmatpush1.msra.mxu0 0.0
    %3560 = vmatprep.subr.mxu0 0.0
    %3561 = vmatpush1.msra.mxu0 0.0
    %3562 = vmatprep.subr.mxu0 0.0
    %3563 = vmatpush1.msra.mxu0 0.0
    %3564 = vmatprep.subr.mxu0 0.0
    %3565 = vmatpush1.msra.mxu0 0.0
    %3566 = vmatprep.subr.mxu0 0.0
    %3567 = vmatpush1.msra.mxu0 0.0
    %3568 = vmatprep.subr.mxu0 0.0
    %3569 = vmatpush1.msra.mxu0 %v2663
    %3570 = vmatprep.subr.mxu0 0.0
    %3571 = vmatpush1.msra.mxu0 %v2661
    %3572 = vmatprep.subr.mxu0 0.0
    %3573 = vmatpush1.msra.mxu0 %v2659
    %3574 = vmatprep.subr.mxu0 0.0
    %3575 = vmatpush1.msra.mxu0 %v2657
    %3576 = vmatprep.subr.mxu0 0.0
    %3577 = vmatpush1.msra.mxu0 %v2655
    %3578 = vmatprep.subr.mxu0 0.0
    %3579 = vmatpush2.msra.mxu0 0.0
    %3580 = vmatprep.subr.mxu0 0.0
    %3581 = vmatpush2.msra.mxu0 0.0
    %3582 = vmatprep.subr.mxu0 0.0
    %3583 = vmatpush2.msra.mxu0 0.0
    %3584 = vmatprep.subr.mxu0 0.0
    %3585 = vmatpush2.msra.mxu0 0.0
    %3586 = vmatprep.subr.mxu0 0.0
    %3587 = vmatpush2.msra.mxu0 0.0
    %3588 = vmatprep.subr.mxu0 0.0
    %3589 = vmatpush2.msra.mxu0 0.0
    %3590 = vmatprep.subr.mxu0 0.0
    %3591 = vmatpush2.msra.mxu0 0.0
    %3592 = vmatprep.subr.mxu0 0.0
    %3593 = vmatpush2.msra.mxu0 0.0
    %3594 = vmatprep.subr.mxu0 0.0
    %3595 = vmatpush2.msra.mxu0 0.0
    %3596 = vmatprep.subr.mxu0 0.0
    %3597 = vmatpush2.msra.mxu0 0.0
    %3598 = vmatprep.subr.mxu0 0.0
    %3599 = vmatpush2.msra.mxu0 0.0
    %3600 = vmatprep.subr.mxu0 0.0
    %3601 = vmatpush2.msra.mxu0 0.0
    %3602 = vmatprep.subr.mxu0 0.0
    %3603 = vmatpush2.msra.mxu0 0.0
    %3604 = vmatprep.subr.mxu0 0.0
    %3605 = vmatpush2.msra.mxu0 0.0
    %3606 = vmatprep.subr.mxu0 0.0
    %3607 = vmatpush2.msra.mxu0 0.0
    %3608 = vmatprep.subr.mxu0 0.0
    %3609 = vmatpush2.msra.mxu0 0.0
    %3610 = vmatprep.mubr.f32.mxu0 0.0
    %3611 = vmatmul.mubr.f32.gmra.mxu0 %v2716
    %v3612 = vpop.f32.mrf.mxu0
    %v3613 = vadd.f32 %v2707, %v3612
    %v3614 = vpop.f32.mrf.mxu0
    %3615 = vmatprep.mubr.f32.mxu0 0.0
    %3616 = vmatmul.mubr.f32.gmra.mxu0 %v2719
    %v3617 = vpop.f32.mrf.mxu0
    %v3618 = vadd.f32 %v2712, %v3617
    %v3619 = vpop.f32.mrf.mxu0
    %3620 = vdwg.mxu0
    %3621 = vmatprep.subr.mxu0 0.0
    %3622 = vmatpush1.msra.mxu0 0.0
    %3623 = vmatprep.subr.mxu0 0.0
    %3624 = vmatpush1.msra.mxu0 0.0
    %3625 = vmatprep.subr.mxu0 0.0
    %3626 = vmatpush1.msra.mxu0 0.0
    %3627 = vmatprep.subr.mxu0 0.0
    %3628 = vmatpush1.msra.mxu0 0.0
    %3629 = vmatprep.subr.mxu0 0.0
    %3630 = vmatpush1.msra.mxu0 0.0
    %3631 = vmatprep.subr.mxu0 0.0
    %3632 = vmatpush1.msra.mxu0 0.0
    %3633 = vmatprep.subr.mxu0 0.0
    %3634 = vmatpush1.msra.mxu0 0.0
    %3635 = vmatprep.subr.mxu0 0.0
    %3636 = vmatpush1.msra.mxu0 0.0
    %3637 = vmatprep.subr.mxu0 0.0
    %3638 = vmatpush1.msra.mxu0 0.0
    %3639 = vmatprep.subr.mxu0 0.0
    %3640 = vmatpush1.msra.mxu0 0.0
    %3641 = vmatprep.subr.mxu0 0.0
    %3642 = vmatpush1.msra.mxu0 0.0
    %3643 = vmatprep.subr.mxu0 0.0
    %3644 = vmatpush1.msra.mxu0 %v2665
    %3645 = vmatprep.subr.mxu0 0.0
    %3646 = vmatpush1.msra.mxu0 %v2663
    %3647 = vmatprep.subr.mxu0 0.0
    %3648 = vmatpush1.msra.mxu0 %v2661
    %3649 = vmatprep.subr.mxu0 0.0
    %3650 = vmatpush1.msra.mxu0 %v2659
    %3651 = vmatprep.subr.mxu0 0.0
    %3652 = vmatpush1.msra.mxu0 %v2657
    %3653 = vmatprep.subr.mxu0 0.0
    %3654 = vmatpush2.msra.mxu0 0.0
    %3655 = vmatprep.subr.mxu0 0.0
    %3656 = vmatpush2.msra.mxu0 0.0
    %3657 = vmatprep.subr.mxu0 0.0
    %3658 = vmatpush2.msra.mxu0 0.0
    %3659 = vmatprep.subr.mxu0 0.0
    %3660 = vmatpush2.msra.mxu0 0.0
    %3661 = vmatprep.subr.mxu0 0.0
    %3662 = vmatpush2.msra.mxu0 0.0
    %3663 = vmatprep.subr.mxu0 0.0
    %3664 = vmatpush2.msra.mxu0 0.0
    %3665 = vmatprep.subr.mxu0 0.0
    %3666 = vmatpush2.msra.mxu0 0.0
    %3667 = vmatprep.subr.mxu0 0.0
    %3668 = vmatpush2.msra.mxu0 0.0
    %3669 = vmatprep.subr.mxu0 0.0
    %3670 = vmatpush2.msra.mxu0 0.0
    %3671 = vmatprep.subr.mxu0 0.0
    %3672 = vmatpush2.msra.mxu0 0.0
    %3673 = vmatprep.subr.mxu0 0.0
    %3674 = vmatpush2.msra.mxu0 0.0
    %3675 = vmatprep.subr.mxu0 0.0
    %3676 = vmatpush2.msra.mxu0 0.0
    %3677 = vmatprep.subr.mxu0 0.0
    %3678 = vmatpush2.msra.mxu0 0.0
    %3679 = vmatprep.subr.mxu0 0.0
    %3680 = vmatpush2.msra.mxu0 0.0
    %3681 = vmatprep.subr.mxu0 0.0
    %3682 = vmatpush2.msra.mxu0 0.0
    %3683 = vmatprep.subr.mxu0 0.0
    %3684 = vmatpush2.msra.mxu0 0.0
    %3685 = vmatprep.mubr.f32.mxu0 0.0
    %3686 = vmatmul.mubr.f32.gmra.mxu0 %v2716
    %v3687 = vpop.f32.mrf.mxu0
    %v3688 = vadd.f32 %v2707, %v3687
    %v3689 = vpop.f32.mrf.mxu0
    %3690 = vmatprep.mubr.f32.mxu0 0.0
    %3691 = vmatmul.mubr.f32.gmra.mxu0 %v2719
    %v3692 = vpop.f32.mrf.mxu0
    %v3693 = vadd.f32 %v2712, %v3692
    %v3694 = vpop.f32.mrf.mxu0
    %3695 = vdwg.mxu0
    %3696 = vmatprep.subr.mxu0 0.0
    %3697 = vmatpush1.msra.mxu0 0.0
    %3698 = vmatprep.subr.mxu0 0.0
    %3699 = vmatpush1.msra.mxu0 0.0
    %3700 = vmatprep.subr.mxu0 0.0
    %3701 = vmatpush1.msra.mxu0 0.0
    %3702 = vmatprep.subr.mxu0 0.0
    %3703 = vmatpush1.msra.mxu0 0.0
    %3704 = vmatprep.subr.mxu0 0.0
    %3705 = vmatpush1.msra.mxu0 0.0
    %3706 = vmatprep.subr.mxu0 0.0
    %3707 = vmatpush1.msra.mxu0 0.0
    %3708 = vmatprep.subr.mxu0 0.0
    %3709 = vmatpush1.msra.mxu0 0.0
    %3710 = vmatprep.subr.mxu0 0.0
    %3711 = vmatpush1.msra.mxu0 0.0
    %3712 = vmatprep.subr.mxu0 0.0
    %3713 = vmatpush1.msra.mxu0 0.0
    %3714 = vmatprep.subr.mxu0 0.0
    %3715 = vmatpush1.msra.mxu0 0.0
    %3716 = vmatprep.subr.mxu0 0.0
    %3717 = vmatpush1.msra.mxu0 0.0
    %3718 = vmatprep.subr.mxu0 0.0
    %3719 = vmatpush1.msra.mxu0 %v2667
    %3720 = vmatprep.subr.mxu0 0.0
    %3721 = vmatpush1.msra.mxu0 %v2665
    %3722 = vmatprep.subr.mxu0 0.0
    %3723 = vmatpush1.msra.mxu0 %v2663
    %3724 = vmatprep.subr.mxu0 0.0
    %3725 = vmatpush1.msra.mxu0 %v2661
    %3726 = vmatprep.subr.mxu0 0.0
    %3727 = vmatpush1.msra.mxu0 %v2659
    %3728 = vmatprep.subr.mxu0 0.0
    %3729 = vmatpush2.msra.mxu0 0.0
    %3730 = vmatprep.subr.mxu0 0.0
    %3731 = vmatpush2.msra.mxu0 0.0
    %3732 = vmatprep.subr.mxu0 0.0
    %3733 = vmatpush2.msra.mxu0 0.0
    %3734 = vmatprep.subr.mxu0 0.0
    %3735 = vmatpush2.msra.mxu0 0.0
    %3736 = vmatprep.subr.mxu0 0.0
    %3737 = vmatpush2.msra.mxu0 0.0
    %3738 = vmatprep.subr.mxu0 0.0
    %3739 = vmatpush2.msra.mxu0 0.0
    %3740 = vmatprep.subr.mxu0 0.0
    %3741 = vmatpush2.msra.mxu0 0.0
    %3742 = vmatprep.subr.mxu0 0.0
    %3743 = vmatpush2.msra.mxu0 0.0
    %3744 = vmatprep.subr.mxu0 0.0
    %3745 = vmatpush2.msra.mxu0 0.0
    %3746 = vmatprep.subr.mxu0 0.0
    %3747 = vmatpush2.msra.mxu0 0.0
    %3748 = vmatprep.subr.mxu0 0.0
    %3749 = vmatpush2.msra.mxu0 0.0
    %3750 = vmatprep.subr.mxu0 0.0
    %3751 = vmatpush2.msra.mxu0 0.0
    %3752 = vmatprep.subr.mxu0 0.0
    %3753 = vmatpush2.msra.mxu0 0.0
    %3754 = vmatprep.subr.mxu0 0.0
    %3755 = vmatpush2.msra.mxu0 0.0
    %3756 = vmatprep.subr.mxu0 0.0
    %3757 = vmatpush2.msra.mxu0 0.0
    %3758 = vmatprep.subr.mxu0 0.0
    %3759 = vmatpush2.msra.mxu0 0.0
    %3760 = vmatprep.mubr.f32.mxu0 0.0
    %3761 = vmatmul.mubr.f32.gmra.mxu0 %v2716
    %v3762 = vpop.f32.mrf.mxu0
    %v3763 = vadd.f32 %v2707, %v3762
    %v3764 = vpop.f32.mrf.mxu0
    %3765 = vmatprep.mubr.f32.mxu0 0.0
    %3766 = vmatmul.mubr.f32.gmra.mxu0 %v2719
    %v3767 = vpop.f32.mrf.mxu0
    %v3768 = vadd.f32 %v2712, %v3767
    %v3769 = vpop.f32.mrf.mxu0
    %3770 = vdwg.mxu0
    %3771 = vmatprep.subr.mxu0 0.0
    %3772 = vmatpush1.msra.mxu0 0.0
    %3773 = vmatprep.subr.mxu0 0.0
    %3774 = vmatpush1.msra.mxu0 0.0
    %3775 = vmatprep.subr.mxu0 0.0
    %3776 = vmatpush1.msra.mxu0 0.0
    %3777 = vmatprep.subr.mxu0 0.0
    %3778 = vmatpush1.msra.mxu0 0.0
    %3779 = vmatprep.subr.mxu0 0.0
    %3780 = vmatpush1.msra.mxu0 0.0
    %3781 = vmatprep.subr.mxu0 0.0
    %3782 = vmatpush1.msra.mxu0 0.0
    %3783 = vmatprep.subr.mxu0 0.0
    %3784 = vmatpush1.msra.mxu0 0.0
    %3785 = vmatprep.subr.mxu0 0.0
    %3786 = vmatpush1.msra.mxu0 0.0
    %3787 = vmatprep.subr.mxu0 0.0
    %3788 = vmatpush1.msra.mxu0 0.0
    %3789 = vmatprep.subr.mxu0 0.0
    %3790 = vmatpush1.msra.mxu0 0.0
    %3791 = vmatprep.subr.mxu0 0.0
    %3792 = vmatpush1.msra.mxu0 0.0
    %3793 = vmatprep.subr.mxu0 0.0
    %3794 = vmatpush1.msra.mxu0 %v2669
    %3795 = vmatprep.subr.mxu0 0.0
    %3796 = vmatpush1.msra.mxu0 %v2667
    %3797 = vmatprep.subr.mxu0 0.0
    %3798 = vmatpush1.msra.mxu0 %v2665
    %3799 = vmatprep.subr.mxu0 0.0
    %3800 = vmatpush1.msra.mxu0 %v2663
    %3801 = vmatprep.subr.mxu0 0.0
    %3802 = vmatpush1.msra.mxu0 %v2661
    %3803 = vmatprep.subr.mxu0 0.0
    %3804 = vmatpush2.msra.mxu0 0.0
    %3805 = vmatprep.subr.mxu0 0.0
    %3806 = vmatpush2.msra.mxu0 0.0
    %3807 = vmatprep.subr.mxu0 0.0
    %3808 = vmatpush2.msra.mxu0 0.0
    %3809 = vmatprep.subr.mxu0 0.0
    %3810 = vmatpush2.msra.mxu0 0.0
    %3811 = vmatprep.subr.mxu0 0.0
    %3812 = vmatpush2.msra.mxu0 0.0
    %3813 = vmatprep.subr.mxu0 0.0
    %3814 = vmatpush2.msra.mxu0 0.0
    %3815 = vmatprep.subr.mxu0 0.0
    %3816 = vmatpush2.msra.mxu0 0.0
    %3817 = vmatprep.subr.mxu0 0.0
    %3818 = vmatpush2.msra.mxu0 0.0
    %3819 = vmatprep.subr.mxu0 0.0
    %3820 = vmatpush2.msra.mxu0 0.0
    %3821 = vmatprep.subr.mxu0 0.0
    %3822 = vmatpush2.msra.mxu0 0.0
    %3823 = vmatprep.subr.mxu0 0.0
    %3824 = vmatpush2.msra.mxu0 0.0
    %3825 = vmatprep.subr.mxu0 0.0
    %3826 = vmatpush2.msra.mxu0 0.0
    %3827 = vmatprep.subr.mxu0 0.0
    %3828 = vmatpush2.msra.mxu0 0.0
    %3829 = vmatprep.subr.mxu0 0.0
    %3830 = vmatpush2.msra.mxu0 0.0
    %3831 = vmatprep.subr.mxu0 0.0
    %3832 = vmatpush2.msra.mxu0 0.0
    %3833 = vmatprep.subr.mxu0 0.0
    %3834 = vmatpush2.msra.mxu0 0.0
    %3835 = vmatprep.mubr.f32.mxu0 0.0
    %3836 = vmatmul.mubr.f32.gmra.mxu0 %v2716
    %v3837 = vpop.f32.mrf.mxu0
    %v3838 = vadd.f32 %v2707, %v3837
    %v3839 = vpop.f32.mrf.mxu0
    %3840 = vmatprep.mubr.f32.mxu0 0.0
    %3841 = vmatmul.mubr.f32.gmra.mxu0 %v2719
    %v3842 = vpop.f32.mrf.mxu0
    %v3843 = vadd.f32 %v2712, %v3842
    %v3844 = vpop.f32.mrf.mxu0
    %3845 = vdwg.mxu0
    %3846 = vmatprep.subr.mxu0 0.0
    %3847 = vmatpush1.msra.mxu0 0.0
    %3848 = vmatprep.subr.mxu0 0.0
    %3849 = vmatpush1.msra.mxu0 0.0
    %3850 = vmatprep.subr.mxu0 0.0
    %3851 = vmatpush1.msra.mxu0 0.0
    %3852 = vmatprep.subr.mxu0 0.0
    %3853 = vmatpush1.msra.mxu0 0.0
    %3854 = vmatprep.subr.mxu0 0.0
    %3855 = vmatpush1.msra.mxu0 0.0
    %3856 = vmatprep.subr.mxu0 0.0
    %3857 = vmatpush1.msra.mxu0 0.0
    %3858 = vmatprep.subr.mxu0 0.0
    %3859 = vmatpush1.msra.mxu0 0.0
    %3860 = vmatprep.subr.mxu0 0.0
    %3861 = vmatpush1.msra.mxu0 0.0
    %3862 = vmatprep.subr.mxu0 0.0
    %3863 = vmatpush1.msra.mxu0 0.0
    %3864 = vmatprep.subr.mxu0 0.0
    %3865 = vmatpush1.msra.mxu0 0.0
    %3866 = vmatprep.subr.mxu0 0.0
    %3867 = vmatpush1.msra.mxu0 0.0
    %3868 = vmatprep.subr.mxu0 0.0
    %3869 = vmatpush1.msra.mxu0 %v2671
    %3870 = vmatprep.subr.mxu0 0.0
    %3871 = vmatpush1.msra.mxu0 %v2669
    %3872 = vmatprep.subr.mxu0 0.0
    %3873 = vmatpush1.msra.mxu0 %v2667
    %3874 = vmatprep.subr.mxu0 0.0
    %3875 = vmatpush1.msra.mxu0 %v2665
    %3876 = vmatprep.subr.mxu0 0.0
    %3877 = vmatpush1.msra.mxu0 %v2663
    %3878 = vmatprep.subr.mxu0 0.0
    %3879 = vmatpush2.msra.mxu0 0.0
    %3880 = vmatprep.subr.mxu0 0.0
    %3881 = vmatpush2.msra.mxu0 0.0
    %3882 = vmatprep.subr.mxu0 0.0
    %3883 = vmatpush2.msra.mxu0 0.0
    %3884 = vmatprep.subr.mxu0 0.0
    %3885 = vmatpush2.msra.mxu0 0.0
    %3886 = vmatprep.subr.mxu0 0.0
    %3887 = vmatpush2.msra.mxu0 0.0
    %3888 = vmatprep.subr.mxu0 0.0
    %3889 = vmatpush2.msra.mxu0 0.0
    %3890 = vmatprep.subr.mxu0 0.0
    %3891 = vmatpush2.msra.mxu0 0.0
    %3892 = vmatprep.subr.mxu0 0.0
    %3893 = vmatpush2.msra.mxu0 0.0
    %3894 = vmatprep.subr.mxu0 0.0
    %3895 = vmatpush2.msra.mxu0 0.0
    %3896 = vmatprep.subr.mxu0 0.0
    %3897 = vmatpush2.msra.mxu0 0.0
    %3898 = vmatprep.subr.mxu0 0.0
    %3899 = vmatpush2.msra.mxu0 0.0
    %3900 = vmatprep.subr.mxu0 0.0
    %3901 = vmatpush2.msra.mxu0 0.0
    %3902 = vmatprep.subr.mxu0 0.0
    %3903 = vmatpush2.msra.mxu0 0.0
    %3904 = vmatprep.subr.mxu0 0.0
    %3905 = vmatpush2.msra.mxu0 0.0
    %3906 = vmatprep.subr.mxu0 0.0
    %3907 = vmatpush2.msra.mxu0 0.0
    %3908 = vmatprep.subr.mxu0 0.0
    %3909 = vmatpush2.msra.mxu0 0.0
    %3910 = vmatprep.mubr.f32.mxu0 0.0
    %3911 = vmatmul.mubr.f32.gmra.mxu0 %v2716
    %v3912 = vpop.f32.mrf.mxu0
    %v3913 = vadd.f32 %v2707, %v3912
    %v3914 = vpop.f32.mrf.mxu0
    %3915 = vmatprep.mubr.f32.mxu0 0.0
    %3916 = vmatmul.mubr.f32.gmra.mxu0 %v2719
    %v3917 = vpop.f32.mrf.mxu0
    %v3918 = vadd.f32 %v2712, %v3917
    %v3919 = vpop.f32.mrf.mxu0
    %3920 = vdwg.mxu0
    %3921 = vmatprep.subr.mxu0 0.0
    %3922 = vmatpush1.msra.mxu0 0.0
    %3923 = vmatprep.subr.mxu0 0.0
    %3924 = vmatpush1.msra.mxu0 0.0
    %3925 = vmatprep.subr.mxu0 0.0
    %3926 = vmatpush1.msra.mxu0 0.0
    %3927 = vmatprep.subr.mxu0 0.0
    %3928 = vmatpush1.msra.mxu0 0.0
    %3929 = vmatprep.subr.mxu0 0.0
    %3930 = vmatpush1.msra.mxu0 0.0
    %3931 = vmatprep.subr.mxu0 0.0
    %3932 = vmatpush1.msra.mxu0 0.0
    %3933 = vmatprep.subr.mxu0 0.0
    %3934 = vmatpush1.msra.mxu0 0.0
    %3935 = vmatprep.subr.mxu0 0.0
    %3936 = vmatpush1.msra.mxu0 0.0
    %3937 = vmatprep.subr.mxu0 0.0
    %3938 = vmatpush1.msra.mxu0 0.0
    %3939 = vmatprep.subr.mxu0 0.0
    %3940 = vmatpush1.msra.mxu0 0.0
    %3941 = vmatprep.subr.mxu0 0.0
    %3942 = vmatpush1.msra.mxu0 0.0
    %3943 = vmatprep.subr.mxu0 0.0
    %3944 = vmatpush1.msra.mxu0 %v2673
    %3945 = vmatprep.subr.mxu0 0.0
    %3946 = vmatpush1.msra.mxu0 %v2671
    %3947 = vmatprep.subr.mxu0 0.0
    %3948 = vmatpush1.msra.mxu0 %v2669
    %3949 = vmatprep.subr.mxu0 0.0
    %3950 = vmatpush1.msra.mxu0 %v2667
    %3951 = vmatprep.subr.mxu0 0.0
    %3952 = vmatpush1.msra.mxu0 %v2665
    %3953 = vmatprep.subr.mxu0 0.0
    %3954 = vmatpush2.msra.mxu0 0.0
    %3955 = vmatprep.subr.mxu0 0.0
    %3956 = vmatpush2.msra.mxu0 0.0
    %3957 = vmatprep.subr.mxu0 0.0
    %3958 = vmatpush2.msra.mxu0 0.0
    %3959 = vmatprep.subr.mxu0 0.0
    %3960 = vmatpush2.msra.mxu0 0.0
    %3961 = vmatprep.subr.mxu0 0.0
    %3962 = vmatpush2.msra.mxu0 0.0
    %3963 = vmatprep.subr.mxu0 0.0
    %3964 = vmatpush2.msra.mxu0 0.0
    %3965 = vmatprep.subr.mxu0 0.0
    %3966 = vmatpush2.msra.mxu0 0.0
    %3967 = vmatprep.subr.mxu0 0.0
    %3968 = vmatpush2.msra.mxu0 0.0
    %3969 = vmatprep.subr.mxu0 0.0
    %3970 = vmatpush2.msra.mxu0 0.0
    %3971 = vmatprep.subr.mxu0 0.0
    %3972 = vmatpush2.msra.mxu0 0.0
    %3973 = vmatprep.subr.mxu0 0.0
    %3974 = vmatpush2.msra.mxu0 0.0
    %3975 = vmatprep.subr.mxu0 0.0
    %3976 = vmatpush2.msra.mxu0 0.0
    %3977 = vmatprep.subr.mxu0 0.0
    %3978 = vmatpush2.msra.mxu0 0.0
    %3979 = vmatprep.subr.mxu0 0.0
    %3980 = vmatpush2.msra.mxu0 0.0
    %3981 = vmatprep.subr.mxu0 0.0
    %3982 = vmatpush2.msra.mxu0 0.0
    %3983 = vmatprep.subr.mxu0 0.0
    %3984 = vmatpush2.msra.mxu0 0.0
    %3985 = vmatprep.mubr.f32.mxu0 0.0
    %3986 = vmatmul.mubr.f32.gmra.mxu0 %v2716
    %v3987 = vpop.f32.mrf.mxu0
    %v3988 = vadd.f32 %v2707, %v3987
    %v3989 = vpop.f32.mrf.mxu0
    %3990 = vmatprep.mubr.f32.mxu0 0.0
    %3991 = vmatmul.mubr.f32.gmra.mxu0 %v2719
    %v3992 = vpop.f32.mrf.mxu0
    %v3993 = vadd.f32 %v2712, %v3992
    %v3994 = vpop.f32.mrf.mxu0
    %3995 = vdwg.mxu0
    %3996 = vmatprep.subr.mxu0 0.0
    %3997 = vmatpush1.msra.mxu0 0.0
    %3998 = vmatprep.subr.mxu0 0.0
    %3999 = vmatpush1.msra.mxu0 0.0
    %4000 = vmatprep.subr.mxu0 0.0
    %4001 = vmatpush1.msra.mxu0 0.0
    %4002 = vmatprep.subr.mxu0 0.0
    %4003 = vmatpush1.msra.mxu0 0.0
    %4004 = vmatprep.subr.mxu0 0.0
    %4005 = vmatpush1.msra.mxu0 0.0
    %4006 = vmatprep.subr.mxu0 0.0
    %4007 = vmatpush1.msra.mxu0 0.0
    %4008 = vmatprep.subr.mxu0 0.0
    %4009 = vmatpush1.msra.mxu0 0.0
    %4010 = vmatprep.subr.mxu0 0.0
    %4011 = vmatpush1.msra.mxu0 0.0
    %4012 = vmatprep.subr.mxu0 0.0
    %4013 = vmatpush1.msra.mxu0 0.0
    %4014 = vmatprep.subr.mxu0 0.0
    %4015 = vmatpush1.msra.mxu0 0.0
    %4016 = vmatprep.subr.mxu0 0.0
    %4017 = vmatpush1.msra.mxu0 0.0
    %4018 = vmatprep.subr.mxu0 0.0
    %4019 = vmatpush1.msra.mxu0 %v2675
    %4020 = vmatprep.subr.mxu0 0.0
    %4021 = vmatpush1.msra.mxu0 %v2673
    %4022 = vmatprep.subr.mxu0 0.0
    %4023 = vmatpush1.msra.mxu0 %v2671
    %4024 = vmatprep.subr.mxu0 0.0
    %4025 = vmatpush1.msra.mxu0 %v2669
    %4026 = vmatprep.subr.mxu0 0.0
    %4027 = vmatpush1.msra.mxu0 %v2667
    %4028 = vmatprep.subr.mxu0 0.0
    %4029 = vmatpush2.msra.mxu0 0.0
    %4030 = vmatprep.subr.mxu0 0.0
    %4031 = vmatpush2.msra.mxu0 0.0
    %4032 = vmatprep.subr.mxu0 0.0
    %4033 = vmatpush2.msra.mxu0 0.0
    %4034 = vmatprep.subr.mxu0 0.0
    %4035 = vmatpush2.msra.mxu0 0.0
    %4036 = vmatprep.subr.mxu0 0.0
    %4037 = vmatpush2.msra.mxu0 0.0
    %4038 = vmatprep.subr.mxu0 0.0
    %4039 = vmatpush2.msra.mxu0 0.0
    %4040 = vmatprep.subr.mxu0 0.0
    %4041 = vmatpush2.msra.mxu0 0.0
    %4042 = vmatprep.subr.mxu0 0.0
    %4043 = vmatpush2.msra.mxu0 0.0
    %4044 = vmatprep.subr.mxu0 0.0
    %4045 = vmatpush2.msra.mxu0 0.0
    %4046 = vmatprep.subr.mxu0 0.0
    %4047 = vmatpush2.msra.mxu0 0.0
    %4048 = vmatprep.subr.mxu0 0.0
    %4049 = vmatpush2.msra.mxu0 0.0
    %4050 = vmatprep.subr.mxu0 0.0
    %4051 = vmatpush2.msra.mxu0 0.0
    %4052 = vmatprep.subr.mxu0 0.0
    %4053 = vmatpush2.msra.mxu0 0.0
    %4054 = vmatprep.subr.mxu0 0.0
    %4055 = vmatpush2.msra.mxu0 0.0
    %4056 = vmatprep.subr.mxu0 0.0
    %4057 = vmatpush2.msra.mxu0 0.0
    %4058 = vmatprep.subr.mxu0 0.0
    %4059 = vmatpush2.msra.mxu0 0.0
    %4060 = vmatprep.mubr.f32.mxu0 0.0
    %4061 = vmatmul.mubr.f32.gmra.mxu0 %v2716
    %v4062 = vpop.f32.mrf.mxu0
    %v4063 = vadd.f32 %v2707, %v4062
    %v4064 = vpop.f32.mrf.mxu0
    %4065 = vmatprep.mubr.f32.mxu0 0.0
    %4066 = vmatmul.mubr.f32.gmra.mxu0 %v2719
    %v4067 = vpop.f32.mrf.mxu0
    %v4068 = vadd.f32 %v2712, %v4067
    %v4069 = vpop.f32.mrf.mxu0
    %4070 = vdwg.mxu0
    %4071 = vmatprep.subr.mxu0 0.0
    %4072 = vmatpush1.msra.mxu0 0.0
    %4073 = vmatprep.subr.mxu0 0.0
    %4074 = vmatpush1.msra.mxu0 0.0
    %4075 = vmatprep.subr.mxu0 0.0
    %4076 = vmatpush1.msra.mxu0 0.0
    %4077 = vmatprep.subr.mxu0 0.0
    %4078 = vmatpush1.msra.mxu0 0.0
    %4079 = vmatprep.subr.mxu0 0.0
    %4080 = vmatpush1.msra.mxu0 0.0
    %4081 = vmatprep.subr.mxu0 0.0
    %4082 = vmatpush1.msra.mxu0 0.0
    %4083 = vmatprep.subr.mxu0 0.0
    %4084 = vmatpush1.msra.mxu0 0.0
    %4085 = vmatprep.subr.mxu0 0.0
    %4086 = vmatpush1.msra.mxu0 0.0
    %4087 = vmatprep.subr.mxu0 0.0
    %4088 = vmatpush1.msra.mxu0 0.0
    %4089 = vmatprep.subr.mxu0 0.0
    %4090 = vmatpush1.msra.mxu0 0.0
    %4091 = vmatprep.subr.mxu0 0.0
    %4092 = vmatpush1.msra.mxu0 0.0
    %4093 = vmatprep.subr.mxu0 0.0
    %4094 = vmatpush1.msra.mxu0 %v2677
    %4095 = vmatprep.subr.mxu0 0.0
    %4096 = vmatpush1.msra.mxu0 %v2675
    %4097 = vmatprep.subr.mxu0 0.0
    %4098 = vmatpush1.msra.mxu0 %v2673
    %4099 = vmatprep.subr.mxu0 0.0
    %4100 = vmatpush1.msra.mxu0 %v2671
    %4101 = vmatprep.subr.mxu0 0.0
    %4102 = vmatpush1.msra.mxu0 %v2669
    %4103 = vmatprep.subr.mxu0 0.0
    %4104 = vmatpush2.msra.mxu0 0.0
    %4105 = vmatprep.subr.mxu0 0.0
    %4106 = vmatpush2.msra.mxu0 0.0
    %4107 = vmatprep.subr.mxu0 0.0
    %4108 = vmatpush2.msra.mxu0 0.0
    %4109 = vmatprep.subr.mxu0 0.0
    %4110 = vmatpush2.msra.mxu0 0.0
    %4111 = vmatprep.subr.mxu0 0.0
    %4112 = vmatpush2.msra.mxu0 0.0
    %4113 = vmatprep.subr.mxu0 0.0
    %4114 = vmatpush2.msra.mxu0 0.0
    %4115 = vmatprep.subr.mxu0 0.0
    %4116 = vmatpush2.msra.mxu0 0.0
    %4117 = vmatprep.subr.mxu0 0.0
    %4118 = vmatpush2.msra.mxu0 0.0
    %4119 = vmatprep.subr.mxu0 0.0
    %4120 = vmatpush2.msra.mxu0 0.0
    %4121 = vmatprep.subr.mxu0 0.0
    %4122 = vmatpush2.msra.mxu0 0.0
    %4123 = vmatprep.subr.mxu0 0.0
    %4124 = vmatpush2.msra.mxu0 0.0
    %4125 = vmatprep.subr.mxu0 0.0
    %4126 = vmatpush2.msra.mxu0 0.0
    %4127 = vmatprep.subr.mxu0 0.0
    %4128 = vmatpush2.msra.mxu0 0.0
    %4129 = vmatprep.subr.mxu0 0.0
    %4130 = vmatpush2.msra.mxu0 0.0
    %4131 = vmatprep.subr.mxu0 0.0
    %4132 = vmatpush2.msra.mxu0 0.0
    %4133 = vmatprep.subr.mxu0 0.0
    %4134 = vmatpush2.msra.mxu0 0.0
    %4135 = vmatprep.mubr.f32.mxu0 0.0
    %4136 = vmatmul.mubr.f32.gmra.mxu0 %v2716
    %v4137 = vpop.f32.mrf.mxu0
    %v4138 = vadd.f32 %v2707, %v4137
    %v4139 = vpop.f32.mrf.mxu0
    %4140 = vmatprep.mubr.f32.mxu0 0.0
    %4141 = vmatmul.mubr.f32.gmra.mxu0 %v2719
    %v4142 = vpop.f32.mrf.mxu0
    %v4143 = vadd.f32 %v2712, %v4142
    %v4144 = vpop.f32.mrf.mxu0
    %4145 = vdwg.mxu0
    %4146 = vmatprep.subr.mxu0 0.0
    %4147 = vmatpush1.msra.mxu0 0.0
    %4148 = vmatprep.subr.mxu0 0.0
    %4149 = vmatpush1.msra.mxu0 0.0
    %4150 = vmatprep.subr.mxu0 0.0
    %4151 = vmatpush1.msra.mxu0 0.0
    %4152 = vmatprep.subr.mxu0 0.0
    %4153 = vmatpush1.msra.mxu0 0.0
    %4154 = vmatprep.subr.mxu0 0.0
    %4155 = vmatpush1.msra.mxu0 0.0
    %4156 = vmatprep.subr.mxu0 0.0
    %4157 = vmatpush1.msra.mxu0 0.0
    %4158 = vmatprep.subr.mxu0 0.0
    %4159 = vmatpush1.msra.mxu0 0.0
    %4160 = vmatprep.subr.mxu0 0.0
    %4161 = vmatpush1.msra.mxu0 0.0
    %4162 = vmatprep.subr.mxu0 0.0
    %4163 = vmatpush1.msra.mxu0 0.0
    %4164 = vmatprep.subr.mxu0 0.0
    %4165 = vmatpush1.msra.mxu0 0.0
    %4166 = vmatprep.subr.mxu0 0.0
    %4167 = vmatpush1.msra.mxu0 0.0
    %4168 = vmatprep.subr.mxu0 0.0
    %4169 = vmatpush1.msra.mxu0 %v2679
    %4170 = vmatprep.subr.mxu0 0.0
    %4171 = vmatpush1.msra.mxu0 %v2677
    %4172 = vmatprep.subr.mxu0 0.0
    %4173 = vmatpush1.msra.mxu0 %v2675
    %4174 = vmatprep.subr.mxu0 0.0
    %4175 = vmatpush1.msra.mxu0 %v2673
    %4176 = vmatprep.subr.mxu0 0.0
    %4177 = vmatpush1.msra.mxu0 %v2671
    %4178 = vmatprep.subr.mxu0 0.0
    %4179 = vmatpush2.msra.mxu0 0.0
    %4180 = vmatprep.subr.mxu0 0.0
    %4181 = vmatpush2.msra.mxu0 0.0
    %4182 = vmatprep.subr.mxu0 0.0
    %4183 = vmatpush2.msra.mxu0 0.0
    %4184 = vmatprep.subr.mxu0 0.0
    %4185 = vmatpush2.msra.mxu0 0.0
    %4186 = vmatprep.subr.mxu0 0.0
    %4187 = vmatpush2.msra.mxu0 0.0
    %4188 = vmatprep.subr.mxu0 0.0
    %4189 = vmatpush2.msra.mxu0 0.0
    %4190 = vmatprep.subr.mxu0 0.0
    %4191 = vmatpush2.msra.mxu0 0.0
    %4192 = vmatprep.subr.mxu0 0.0
    %4193 = vmatpush2.msra.mxu0 0.0
    %4194 = vmatprep.subr.mxu0 0.0
    %4195 = vmatpush2.msra.mxu0 0.0
    %4196 = vmatprep.subr.mxu0 0.0
    %4197 = vmatpush2.msra.mxu0 0.0
    %4198 = vmatprep.subr.mxu0 0.0
    %4199 = vmatpush2.msra.mxu0 0.0
    %4200 = vmatprep.subr.mxu0 0.0
    %4201 = vmatpush2.msra.mxu0 0.0
    %4202 = vmatprep.subr.mxu0 0.0
    %4203 = vmatpush2.msra.mxu0 0.0
    %4204 = vmatprep.subr.mxu0 0.0
    %4205 = vmatpush2.msra.mxu0 0.0
    %4206 = vmatprep.subr.mxu0 0.0
    %4207 = vmatpush2.msra.mxu0 0.0
    %4208 = vmatprep.subr.mxu0 0.0
    %4209 = vmatpush2.msra.mxu0 0.0
    %4210 = vmatprep.mubr.f32.mxu0 0.0
    %4211 = vmatmul.mubr.f32.gmra.mxu0 %v2716
    %v4212 = vpop.f32.mrf.mxu0
    %v4213 = vadd.f32 %v2707, %v4212
    %v4214 = vpop.f32.mrf.mxu0
    %4215 = vmatprep.mubr.f32.mxu0 0.0
    %4216 = vmatmul.mubr.f32.gmra.mxu0 %v2719
    %v4217 = vpop.f32.mrf.mxu0
    %v4218 = vadd.f32 %v2712, %v4217
    %v4219 = vpop.f32.mrf.mxu0
    %4220 = vdwg.mxu0
    %4221 = vmatprep.subr.mxu0 0.0
    %4222 = vmatpush1.msra.mxu0 0.0
    %4223 = vmatprep.subr.mxu0 0.0
    %4224 = vmatpush1.msra.mxu0 0.0
    %4225 = vmatprep.subr.mxu0 0.0
    %4226 = vmatpush1.msra.mxu0 0.0
    %4227 = vmatprep.subr.mxu0 0.0
    %4228 = vmatpush1.msra.mxu0 0.0
    %4229 = vmatprep.subr.mxu0 0.0
    %4230 = vmatpush1.msra.mxu0 0.0
    %4231 = vmatprep.subr.mxu0 0.0
    %4232 = vmatpush1.msra.mxu0 0.0
    %4233 = vmatprep.subr.mxu0 0.0
    %4234 = vmatpush1.msra.mxu0 0.0
    %4235 = vmatprep.subr.mxu0 0.0
    %4236 = vmatpush1.msra.mxu0 0.0
    %4237 = vmatprep.subr.mxu0 0.0
    %4238 = vmatpush1.msra.mxu0 0.0
    %4239 = vmatprep.subr.mxu0 0.0
    %4240 = vmatpush1.msra.mxu0 0.0
    %4241 = vmatprep.subr.mxu0 0.0
    %4242 = vmatpush1.msra.mxu0 0.0
    %4243 = vmatprep.subr.mxu0 0.0
    %4244 = vmatpush1.msra.mxu0 %v2681
    %4245 = vmatprep.subr.mxu0 0.0
    %4246 = vmatpush1.msra.mxu0 %v2679
    %4247 = vmatprep.subr.mxu0 0.0
    %4248 = vmatpush1.msra.mxu0 %v2677
    %4249 = vmatprep.subr.mxu0 0.0
    %4250 = vmatpush1.msra.mxu0 %v2675
    %4251 = vmatprep.subr.mxu0 0.0
    %4252 = vmatpush1.msra.mxu0 %v2673
    %4253 = vmatprep.subr.mxu0 0.0
    %4254 = vmatpush2.msra.mxu0 0.0
    %4255 = vmatprep.subr.mxu0 0.0
    %4256 = vmatpush2.msra.mxu0 0.0
    %4257 = vmatprep.subr.mxu0 0.0
    %4258 = vmatpush2.msra.mxu0 0.0
    %4259 = vmatprep.subr.mxu0 0.0
    %4260 = vmatpush2.msra.mxu0 0.0
    %4261 = vmatprep.subr.mxu0 0.0
    %4262 = vmatpush2.msra.mxu0 0.0
    %4263 = vmatprep.subr.mxu0 0.0
    %4264 = vmatpush2.msra.mxu0 0.0
    %4265 = vmatprep.subr.mxu0 0.0
    %4266 = vmatpush2.msra.mxu0 0.0
    %4267 = vmatprep.subr.mxu0 0.0
    %4268 = vmatpush2.msra.mxu0 0.0
    %4269 = vmatprep.subr.mxu0 0.0
    %4270 = vmatpush2.msra.mxu0 0.0
    %4271 = vmatprep.subr.mxu0 0.0
    %4272 = vmatpush2.msra.mxu0 0.0
    %4273 = vmatprep.subr.mxu0 0.0
    %4274 = vmatpush2.msra.mxu0 0.0
    %4275 = vmatprep.subr.mxu0 0.0
    %4276 = vmatpush2.msra.mxu0 0.0
    %4277 = vmatprep.subr.mxu0 0.0
    %4278 = vmatpush2.msra.mxu0 0.0
    %4279 = vmatprep.subr.mxu0 0.0
    %4280 = vmatpush2.msra.mxu0 0.0
    %4281 = vmatprep.subr.mxu0 0.0
    %4282 = vmatpush2.msra.mxu0 0.0
    %4283 = vmatprep.subr.mxu0 0.0
    %4284 = vmatpush2.msra.mxu0 0.0
    %4285 = vmatprep.mubr.f32.mxu0 0.0
    %4286 = vmatmul.mubr.f32.gmra.mxu0 %v2716
    %v4287 = vpop.f32.mrf.mxu0
    %v4288 = vadd.f32 %v2707, %v4287
    %v4289 = vpop.f32.mrf.mxu0
    %4290 = vmatprep.mubr.f32.mxu0 0.0
    %4291 = vmatmul.mubr.f32.gmra.mxu0 %v2719
    %v4292 = vpop.f32.mrf.mxu0
    %v4293 = vadd.f32 %v2712, %v4292
    %v4294 = vpop.f32.mrf.mxu0
    %4295 = vdwg.mxu0
    %4296 = vmatprep.subr.mxu0 0.0
    %4297 = vmatpush1.msra.mxu0 0.0
    %4298 = vmatprep.subr.mxu0 0.0
    %4299 = vmatpush1.msra.mxu0 0.0
    %4300 = vmatprep.subr.mxu0 0.0
    %4301 = vmatpush1.msra.mxu0 0.0
    %4302 = vmatprep.subr.mxu0 0.0
    %4303 = vmatpush1.msra.mxu0 0.0
    %4304 = vmatprep.subr.mxu0 0.0
    %4305 = vmatpush1.msra.mxu0 0.0
    %4306 = vmatprep.subr.mxu0 0.0
    %4307 = vmatpush1.msra.mxu0 0.0
    %4308 = vmatprep.subr.mxu0 0.0
    %4309 = vmatpush1.msra.mxu0 0.0
    %4310 = vmatprep.subr.mxu0 0.0
    %4311 = vmatpush1.msra.mxu0 0.0
    %4312 = vmatprep.subr.mxu0 0.0
    %4313 = vmatpush1.msra.mxu0 0.0
    %4314 = vmatprep.subr.mxu0 0.0
    %4315 = vmatpush1.msra.mxu0 0.0
    %4316 = vmatprep.subr.mxu0 0.0
    %4317 = vmatpush1.msra.mxu0 0.0
    %4318 = vmatprep.subr.mxu0 0.0
    %4319 = vmatpush1.msra.mxu0 %v2683
    %4320 = vmatprep.subr.mxu0 0.0
    %4321 = vmatpush1.msra.mxu0 %v2681
    %4322 = vmatprep.subr.mxu0 0.0
    %4323 = vmatpush1.msra.mxu0 %v2679
    %4324 = vmatprep.subr.mxu0 0.0
    %4325 = vmatpush1.msra.mxu0 %v2677
    %4326 = vmatprep.subr.mxu0 0.0
    %4327 = vmatpush1.msra.mxu0 %v2675
    %4328 = vmatprep.subr.mxu0 0.0
    %4329 = vmatpush2.msra.mxu0 0.0
    %4330 = vmatprep.subr.mxu0 0.0
    %4331 = vmatpush2.msra.mxu0 0.0
    %4332 = vmatprep.subr.mxu0 0.0
    %4333 = vmatpush2.msra.mxu0 0.0
    %4334 = vmatprep.subr.mxu0 0.0
    %4335 = vmatpush2.msra.mxu0 0.0
    %4336 = vmatprep.subr.mxu0 0.0
    %4337 = vmatpush2.msra.mxu0 0.0
    %4338 = vmatprep.subr.mxu0 0.0
    %4339 = vmatpush2.msra.mxu0 0.0
    %4340 = vmatprep.subr.mxu0 0.0
    %4341 = vmatpush2.msra.mxu0 0.0
    %4342 = vmatprep.subr.mxu0 0.0
    %4343 = vmatpush2.msra.mxu0 0.0
    %4344 = vmatprep.subr.mxu0 0.0
    %4345 = vmatpush2.msra.mxu0 0.0
    %4346 = vmatprep.subr.mxu0 0.0
    %4347 = vmatpush2.msra.mxu0 0.0
    %4348 = vmatprep.subr.mxu0 0.0
    %4349 = vmatpush2.msra.mxu0 0.0
    %4350 = vmatprep.subr.mxu0 0.0
    %4351 = vmatpush2.msra.mxu0 0.0
    %4352 = vmatprep.subr.mxu0 0.0
    %4353 = vmatpush2.msra.mxu0 0.0
    %4354 = vmatprep.subr.mxu0 0.0
    %4355 = vmatpush2.msra.mxu0 0.0
    %4356 = vmatprep.subr.mxu0 0.0
    %4357 = vmatpush2.msra.mxu0 0.0
    %4358 = vmatprep.subr.mxu0 0.0
    %4359 = vmatpush2.msra.mxu0 0.0
    %4360 = vmatprep.mubr.f32.mxu0 0.0
    %4361 = vmatmul.mubr.f32.gmra.mxu0 %v2716
    %v4362 = vpop.f32.mrf.mxu0
    %v4363 = vadd.f32 %v2707, %v4362
    %v4364 = vpop.f32.mrf.mxu0
    %4365 = vmatprep.mubr.f32.mxu0 0.0
    %4366 = vmatmul.mubr.f32.gmra.mxu0 %v2719
    %v4367 = vpop.f32.mrf.mxu0
    %v4368 = vadd.f32 %v2712, %v4367
    %v4369 = vpop.f32.mrf.mxu0
    %4370 = vdwg.mxu0
    %4371 = vmatprep.subr.mxu0 0.0
    %4372 = vmatpush1.msra.mxu0 0.0
    %4373 = vmatprep.subr.mxu0 0.0
    %4374 = vmatpush1.msra.mxu0 0.0
    %4375 = vmatprep.subr.mxu0 0.0
    %4376 = vmatpush1.msra.mxu0 0.0
    %4377 = vmatprep.subr.mxu0 0.0
    %4378 = vmatpush1.msra.mxu0 0.0
    %4379 = vmatprep.subr.mxu0 0.0
    %4380 = vmatpush1.msra.mxu0 0.0
    %4381 = vmatprep.subr.mxu0 0.0
    %4382 = vmatpush1.msra.mxu0 0.0
    %4383 = vmatprep.subr.mxu0 0.0
    %4384 = vmatpush1.msra.mxu0 0.0
    %4385 = vmatprep.subr.mxu0 0.0
    %4386 = vmatpush1.msra.mxu0 0.0
    %4387 = vmatprep.subr.mxu0 0.0
    %4388 = vmatpush1.msra.mxu0 0.0
    %4389 = vmatprep.subr.mxu0 0.0
    %4390 = vmatpush1.msra.mxu0 0.0
    %4391 = vmatprep.subr.mxu0 0.0
    %4392 = vmatpush1.msra.mxu0 0.0
    %4393 = vmatprep.subr.mxu0 0.0
    %4394 = vmatpush1.msra.mxu0 %v2685
    %4395 = vmatprep.subr.mxu0 0.0
    %4396 = vmatpush1.msra.mxu0 %v2683
    %4397 = vmatprep.subr.mxu0 0.0
    %4398 = vmatpush1.msra.mxu0 %v2681
    %4399 = vmatprep.subr.mxu0 0.0
    %4400 = vmatpush1.msra.mxu0 %v2679
    %4401 = vmatprep.subr.mxu0 0.0
    %4402 = vmatpush1.msra.mxu0 %v2677
    %4403 = vmatprep.subr.mxu0 0.0
    %4404 = vmatpush2.msra.mxu0 0.0
    %4405 = vmatprep.subr.mxu0 0.0
    %4406 = vmatpush2.msra.mxu0 0.0
    %4407 = vmatprep.subr.mxu0 0.0
    %4408 = vmatpush2.msra.mxu0 0.0
    %4409 = vmatprep.subr.mxu0 0.0
    %4410 = vmatpush2.msra.mxu0 0.0
    %4411 = vmatprep.subr.mxu0 0.0
    %4412 = vmatpush2.msra.mxu0 0.0
    %4413 = vmatprep.subr.mxu0 0.0
    %4414 = vmatpush2.msra.mxu0 0.0
    %4415 = vmatprep.subr.mxu0 0.0
    %4416 = vmatpush2.msra.mxu0 0.0
    %4417 = vmatprep.subr.mxu0 0.0
    %4418 = vmatpush2.msra.mxu0 0.0
    %4419 = vmatprep.subr.mxu0 0.0
    %4420 = vmatpush2.msra.mxu0 0.0
    %4421 = vmatprep.subr.mxu0 0.0
    %4422 = vmatpush2.msra.mxu0 0.0
    %4423 = vmatprep.subr.mxu0 0.0
    %4424 = vmatpush2.msra.mxu0 0.0
    %4425 = vmatprep.subr.mxu0 0.0
    %4426 = vmatpush2.msra.mxu0 0.0
    %4427 = vmatprep.subr.mxu0 0.0
    %4428 = vmatpush2.msra.mxu0 0.0
    %4429 = vmatprep.subr.mxu0 0.0
    %4430 = vmatpush2.msra.mxu0 0.0
    %4431 = vmatprep.subr.mxu0 0.0
    %4432 = vmatpush2.msra.mxu0 0.0
    %4433 = vmatprep.subr.mxu0 0.0
    %4434 = vmatpush2.msra.mxu0 0.0
    %4435 = vmatprep.mubr.f32.mxu0 0.0
    %4436 = vmatmul.mubr.f32.gmra.mxu0 %v2716
    %v4437 = vpop.f32.mrf.mxu0
    %v4438 = vadd.f32 %v2707, %v4437
    %v4439 = vpop.f32.mrf.mxu0
    %4440 = vmatprep.mubr.f32.mxu0 0.0
    %4441 = vmatmul.mubr.f32.gmra.mxu0 %v2719
    %v4442 = vpop.f32.mrf.mxu0
    %v4443 = vadd.f32 %v2712, %v4442
    %v4444 = vpop.f32.mrf.mxu0
    %4445 = vdwg.mxu0
    %4446 = vmatprep.subr.mxu0 0.0
    %4447 = vmatpush1.msra.mxu0 0.0
    %4448 = vmatprep.subr.mxu0 0.0
    %4449 = vmatpush1.msra.mxu0 0.0
    %4450 = vmatprep.subr.mxu0 0.0
    %4451 = vmatpush1.msra.mxu0 0.0
    %4452 = vmatprep.subr.mxu0 0.0
    %4453 = vmatpush1.msra.mxu0 0.0
    %4454 = vmatprep.subr.mxu0 0.0
    %4455 = vmatpush1.msra.mxu0 0.0
    %4456 = vmatprep.subr.mxu0 0.0
    %4457 = vmatpush1.msra.mxu0 0.0
    %4458 = vmatprep.subr.mxu0 0.0
    %4459 = vmatpush1.msra.mxu0 0.0
    %4460 = vmatprep.subr.mxu0 0.0
    %4461 = vmatpush1.msra.mxu0 0.0
    %4462 = vmatprep.subr.mxu0 0.0
    %4463 = vmatpush1.msra.mxu0 0.0
    %4464 = vmatprep.subr.mxu0 0.0
    %4465 = vmatpush1.msra.mxu0 0.0
    %4466 = vmatprep.subr.mxu0 0.0
    %4467 = vmatpush1.msra.mxu0 0.0
    %4468 = vmatprep.subr.mxu0 0.0
    %4469 = vmatpush1.msra.mxu0 %v2687
    %4470 = vmatprep.subr.mxu0 0.0
    %4471 = vmatpush1.msra.mxu0 %v2685
    %4472 = vmatprep.subr.mxu0 0.0
    %4473 = vmatpush1.msra.mxu0 %v2683
    %4474 = vmatprep.subr.mxu0 0.0
    %4475 = vmatpush1.msra.mxu0 %v2681
    %4476 = vmatprep.subr.mxu0 0.0
    %4477 = vmatpush1.msra.mxu0 %v2679
    %4478 = vmatprep.subr.mxu0 0.0
    %4479 = vmatpush2.msra.mxu0 0.0
    %4480 = vmatprep.subr.mxu0 0.0
    %4481 = vmatpush2.msra.mxu0 0.0
    %4482 = vmatprep.subr.mxu0 0.0
    %4483 = vmatpush2.msra.mxu0 0.0
    %4484 = vmatprep.subr.mxu0 0.0
    %4485 = vmatpush2.msra.mxu0 0.0
    %4486 = vmatprep.subr.mxu0 0.0
    %4487 = vmatpush2.msra.mxu0 0.0
    %4488 = vmatprep.subr.mxu0 0.0
    %4489 = vmatpush2.msra.mxu0 0.0
    %4490 = vmatprep.subr.mxu0 0.0
    %4491 = vmatpush2.msra.mxu0 0.0
    %4492 = vmatprep.subr.mxu0 0.0
    %4493 = vmatpush2.msra.mxu0 0.0
    %4494 = vmatprep.subr.mxu0 0.0
    %4495 = vmatpush2.msra.mxu0 0.0
    %4496 = vmatprep.subr.mxu0 0.0
    %4497 = vmatpush2.msra.mxu0 0.0
    %4498 = vmatprep.subr.mxu0 0.0
    %4499 = vmatpush2.msra.mxu0 0.0
    %4500 = vmatprep.subr.mxu0 0.0
    %4501 = vmatpush2.msra.mxu0 0.0
    %4502 = vmatprep.subr.mxu0 0.0
    %4503 = vmatpush2.msra.mxu0 0.0
    %4504 = vmatprep.subr.mxu0 0.0
    %4505 = vmatpush2.msra.mxu0 0.0
    %4506 = vmatprep.subr.mxu0 0.0
    %4507 = vmatpush2.msra.mxu0 0.0
    %4508 = vmatprep.subr.mxu0 0.0
    %4509 = vmatpush2.msra.mxu0 0.0
    %4510 = vmatprep.mubr.f32.mxu0 0.0
    %4511 = vmatmul.mubr.f32.gmra.mxu0 %v2716
    %v4512 = vpop.f32.mrf.mxu0
    %v4513 = vadd.f32 %v2707, %v4512
    %v4514 = vpop.f32.mrf.mxu0
    %4515 = vmatprep.mubr.f32.mxu0 0.0
    %4516 = vmatmul.mubr.f32.gmra.mxu0 %v2719
    %v4517 = vpop.f32.mrf.mxu0
    %v4518 = vadd.f32 %v2712, %v4517
    %v4519 = vpop.f32.mrf.mxu0
    %4520 = vdwg.mxu0
    %4521 = vmatprep.subr.mxu0 0.0
    %4522 = vmatpush1.msra.mxu0 0.0
    %4523 = vmatprep.subr.mxu0 0.0
    %4524 = vmatpush1.msra.mxu0 0.0
    %4525 = vmatprep.subr.mxu0 0.0
    %4526 = vmatpush1.msra.mxu0 0.0
    %4527 = vmatprep.subr.mxu0 0.0
    %4528 = vmatpush1.msra.mxu0 0.0
    %4529 = vmatprep.subr.mxu0 0.0
    %4530 = vmatpush1.msra.mxu0 0.0
    %4531 = vmatprep.subr.mxu0 0.0
    %4532 = vmatpush1.msra.mxu0 0.0
    %4533 = vmatprep.subr.mxu0 0.0
    %4534 = vmatpush1.msra.mxu0 0.0
    %4535 = vmatprep.subr.mxu0 0.0
    %4536 = vmatpush1.msra.mxu0 0.0
    %4537 = vmatprep.subr.mxu0 0.0
    %4538 = vmatpush1.msra.mxu0 0.0
    %4539 = vmatprep.subr.mxu0 0.0
    %4540 = vmatpush1.msra.mxu0 0.0
    %4541 = vmatprep.subr.mxu0 0.0
    %4542 = vmatpush1.msra.mxu0 0.0
    %4543 = vmatprep.subr.mxu0 0.0
    %4544 = vmatpush1.msra.mxu0 %v2689
    %4545 = vmatprep.subr.mxu0 0.0
    %4546 = vmatpush1.msra.mxu0 %v2687
    %4547 = vmatprep.subr.mxu0 0.0
    %4548 = vmatpush1.msra.mxu0 %v2685
    %4549 = vmatprep.subr.mxu0 0.0
    %4550 = vmatpush1.msra.mxu0 %v2683
    %4551 = vmatprep.subr.mxu0 0.0
    %4552 = vmatpush1.msra.mxu0 %v2681
    %4553 = vmatprep.subr.mxu0 0.0
    %4554 = vmatpush2.msra.mxu0 0.0
    %4555 = vmatprep.subr.mxu0 0.0
    %4556 = vmatpush2.msra.mxu0 0.0
    %4557 = vmatprep.subr.mxu0 0.0
    %4558 = vmatpush2.msra.mxu0 0.0
    %4559 = vmatprep.subr.mxu0 0.0
    %4560 = vmatpush2.msra.mxu0 0.0
    %4561 = vmatprep.subr.mxu0 0.0
    %4562 = vmatpush2.msra.mxu0 0.0
    %4563 = vmatprep.subr.mxu0 0.0
    %4564 = vmatpush2.msra.mxu0 0.0
    %4565 = vmatprep.subr.mxu0 0.0
    %4566 = vmatpush2.msra.mxu0 0.0
    %4567 = vmatprep.subr.mxu0 0.0
    %4568 = vmatpush2.msra.mxu0 0.0
    %4569 = vmatprep.subr.mxu0 0.0
    %4570 = vmatpush2.msra.mxu0 0.0
    %4571 = vmatprep.subr.mxu0 0.0
    %4572 = vmatpush2.msra.mxu0 0.0
    %4573 = vmatprep.subr.mxu0 0.0
    %4574 = vmatpush2.msra.mxu0 0.0
    %4575 = vmatprep.subr.mxu0 0.0
    %4576 = vmatpush2.msra.mxu0 0.0
    %4577 = vmatprep.subr.mxu0 0.0
    %4578 = vmatpush2.msra.mxu0 0.0
    %4579 = vmatprep.subr.mxu0 0.0
    %4580 = vmatpush2.msra.mxu0 0.0
    %4581 = vmatprep.subr.mxu0 0.0
    %4582 = vmatpush2.msra.mxu0 0.0
    %4583 = vmatprep.subr.mxu0 0.0
    %4584 = vmatpush2.msra.mxu0 0.0
    %4585 = vmatprep.mubr.f32.mxu0 0.0
    %4586 = vmatmul.mubr.f32.gmra.mxu0 %v2716
    %v4587 = vpop.f32.mrf.mxu0
    %v4588 = vadd.f32 %v2707, %v4587
    %v4589 = vpop.f32.mrf.mxu0
    %4590 = vmatprep.mubr.f32.mxu0 0.0
    %4591 = vmatmul.mubr.f32.gmra.mxu0 %v2719
    %v4592 = vpop.f32.mrf.mxu0
    %v4593 = vadd.f32 %v2712, %v4592
    %v4594 = vpop.f32.mrf.mxu0
    %4595 = vdwg.mxu0
    %4596 = vmatprep.subr.mxu0 0.0
    %4597 = vmatpush1.msra.mxu0 0.0
    %4598 = vmatprep.subr.mxu0 0.0
    %4599 = vmatpush1.msra.mxu0 0.0
    %4600 = vmatprep.subr.mxu0 0.0
    %4601 = vmatpush1.msra.mxu0 0.0
    %4602 = vmatprep.subr.mxu0 0.0
    %4603 = vmatpush1.msra.mxu0 0.0
    %4604 = vmatprep.subr.mxu0 0.0
    %4605 = vmatpush1.msra.mxu0 0.0
    %4606 = vmatprep.subr.mxu0 0.0
    %4607 = vmatpush1.msra.mxu0 0.0
    %4608 = vmatprep.subr.mxu0 0.0
    %4609 = vmatpush1.msra.mxu0 0.0
    %4610 = vmatprep.subr.mxu0 0.0
    %4611 = vmatpush1.msra.mxu0 0.0
    %4612 = vmatprep.subr.mxu0 0.0
    %4613 = vmatpush1.msra.mxu0 0.0
    %4614 = vmatprep.subr.mxu0 0.0
    %4615 = vmatpush1.msra.mxu0 0.0
    %4616 = vmatprep.subr.mxu0 0.0
    %4617 = vmatpush1.msra.mxu0 0.0
    %4618 = vmatprep.subr.mxu0 0.0
    %4619 = vmatpush1.msra.mxu0 %v2691
    %4620 = vmatprep.subr.mxu0 0.0
    %4621 = vmatpush1.msra.mxu0 %v2689
    %4622 = vmatprep.subr.mxu0 0.0
    %4623 = vmatpush1.msra.mxu0 %v2687
    %4624 = vmatprep.subr.mxu0 0.0
    %4625 = vmatpush1.msra.mxu0 %v2685
    %4626 = vmatprep.subr.mxu0 0.0
    %4627 = vmatpush1.msra.mxu0 %v2683
    %4628 = vmatprep.subr.mxu0 0.0
    %4629 = vmatpush2.msra.mxu0 0.0
    %4630 = vmatprep.subr.mxu0 0.0
    %4631 = vmatpush2.msra.mxu0 0.0
    %4632 = vmatprep.subr.mxu0 0.0
    %4633 = vmatpush2.msra.mxu0 0.0
    %4634 = vmatprep.subr.mxu0 0.0
    %4635 = vmatpush2.msra.mxu0 0.0
    %4636 = vmatprep.subr.mxu0 0.0
    %4637 = vmatpush2.msra.mxu0 0.0
    %4638 = vmatprep.subr.mxu0 0.0
    %4639 = vmatpush2.msra.mxu0 0.0
    %4640 = vmatprep.subr.mxu0 0.0
    %4641 = vmatpush2.msra.mxu0 0.0
    %4642 = vmatprep.subr.mxu0 0.0
    %4643 = vmatpush2.msra.mxu0 0.0
    %4644 = vmatprep.subr.mxu0 0.0
    %4645 = vmatpush2.msra.mxu0 0.0
    %4646 = vmatprep.subr.mxu0 0.0
    %4647 = vmatpush2.msra.mxu0 0.0
    %4648 = vmatprep.subr.mxu0 0.0
    %4649 = vmatpush2.msra.mxu0 0.0
    %4650 = vmatprep.subr.mxu0 0.0
    %4651 = vmatpush2.msra.mxu0 0.0
    %4652 = vmatprep.subr.mxu0 0.0
    %4653 = vmatpush2.msra.mxu0 0.0
    %4654 = vmatprep.subr.mxu0 0.0
    %4655 = vmatpush2.msra.mxu0 0.0
    %4656 = vmatprep.subr.mxu0 0.0
    %4657 = vmatpush2.msra.mxu0 0.0
    %4658 = vmatprep.subr.mxu0 0.0
    %4659 = vmatpush2.msra.mxu0 0.0
    %4660 = vmatprep.mubr.f32.mxu0 0.0
    %4661 = vmatmul.mubr.f32.gmra.mxu0 %v2716
    %v4662 = vpop.f32.mrf.mxu0
    %v4663 = vadd.f32 %v2707, %v4662
    %v4664 = vpop.f32.mrf.mxu0
    %4665 = vmatprep.mubr.f32.mxu0 0.0
    %4666 = vmatmul.mubr.f32.gmra.mxu0 %v2719
    %v4667 = vpop.f32.mrf.mxu0
    %v4668 = vadd.f32 %v2712, %v4667
    %v4669 = vpop.f32.mrf.mxu0
    %4670 = vdwg.mxu0
    %4671 = vmatprep.subr.mxu0 0.0
    %4672 = vmatpush1.msra.mxu0 0.0
    %4673 = vmatprep.subr.mxu0 0.0
    %4674 = vmatpush1.msra.mxu0 0.0
    %4675 = vmatprep.subr.mxu0 0.0
    %4676 = vmatpush1.msra.mxu0 0.0
    %4677 = vmatprep.subr.mxu0 0.0
    %4678 = vmatpush1.msra.mxu0 0.0
    %4679 = vmatprep.subr.mxu0 0.0
    %4680 = vmatpush1.msra.mxu0 0.0
    %4681 = vmatprep.subr.mxu0 0.0
    %4682 = vmatpush1.msra.mxu0 0.0
    %4683 = vmatprep.subr.mxu0 0.0
    %4684 = vmatpush1.msra.mxu0 0.0
    %4685 = vmatprep.subr.mxu0 0.0
    %4686 = vmatpush1.msra.mxu0 0.0
    %4687 = vmatprep.subr.mxu0 0.0
    %4688 = vmatpush1.msra.mxu0 0.0
    %4689 = vmatprep.subr.mxu0 0.0
    %4690 = vmatpush1.msra.mxu0 0.0
    %4691 = vmatprep.subr.mxu0 0.0
    %4692 = vmatpush1.msra.mxu0 0.0
    %4693 = vmatprep.subr.mxu0 0.0
    %4694 = vmatpush1.msra.mxu0 %v2693
    %4695 = vmatprep.subr.mxu0 0.0
    %4696 = vmatpush1.msra.mxu0 %v2691
    %4697 = vmatprep.subr.mxu0 0.0
    %4698 = vmatpush1.msra.mxu0 %v2689
    %4699 = vmatprep.subr.mxu0 0.0
    %4700 = vmatpush1.msra.mxu0 %v2687
    %4701 = vmatprep.subr.mxu0 0.0
    %4702 = vmatpush1.msra.mxu0 %v2685
    %4703 = vmatprep.subr.mxu0 0.0
    %4704 = vmatpush2.msra.mxu0 0.0
    %4705 = vmatprep.subr.mxu0 0.0
    %4706 = vmatpush2.msra.mxu0 0.0
    %4707 = vmatprep.subr.mxu0 0.0
    %4708 = vmatpush2.msra.mxu0 0.0
    %4709 = vmatprep.subr.mxu0 0.0
    %4710 = vmatpush2.msra.mxu0 0.0
    %4711 = vmatprep.subr.mxu0 0.0
    %4712 = vmatpush2.msra.mxu0 0.0
    %4713 = vmatprep.subr.mxu0 0.0
    %4714 = vmatpush2.msra.mxu0 0.0
    %4715 = vmatprep.subr.mxu0 0.0
    %4716 = vmatpush2.msra.mxu0 0.0
    %4717 = vmatprep.subr.mxu0 0.0
    %4718 = vmatpush2.msra.mxu0 0.0
    %4719 = vmatprep.subr.mxu0 0.0
    %4720 = vmatpush2.msra.mxu0 0.0
    %4721 = vmatprep.subr.mxu0 0.0
    %4722 = vmatpush2.msra.mxu0 0.0
    %4723 = vmatprep.subr.mxu0 0.0
    %4724 = vmatpush2.msra.mxu0 0.0
    %4725 = vmatprep.subr.mxu0 0.0
    %4726 = vmatpush2.msra.mxu0 0.0
    %4727 = vmatprep.subr.mxu0 0.0
    %4728 = vmatpush2.msra.mxu0 0.0
    %4729 = vmatprep.subr.mxu0 0.0
    %4730 = vmatpush2.msra.mxu0 0.0
    %4731 = vmatprep.subr.mxu0 0.0
    %4732 = vmatpush2.msra.mxu0 0.0
    %4733 = vmatprep.subr.mxu0 0.0
    %4734 = vmatpush2.msra.mxu0 0.0
    %4735 = vmatprep.mubr.f32.mxu0 0.0
    %4736 = vmatmul.mubr.f32.gmra.mxu0 %v2716
    %v4737 = vpop.f32.mrf.mxu0
    %v4738 = vadd.f32 %v2707, %v4737
    %v4739 = vpop.f32.mrf.mxu0
    %4740 = vmatprep.mubr.f32.mxu0 0.0
    %4741 = vmatmul.mubr.f32.gmra.mxu0 %v2719
    %v4742 = vpop.f32.mrf.mxu0
    %v4743 = vadd.f32 %v2712, %v4742
    %v4744 = vpop.f32.mrf.mxu0
    %4745 = vdwg.mxu0
    %4746 = vmatprep.subr.mxu0 0.0
    %4747 = vmatpush1.msra.mxu0 0.0
    %4748 = vmatprep.subr.mxu0 0.0
    %4749 = vmatpush1.msra.mxu0 0.0
    %4750 = vmatprep.subr.mxu0 0.0
    %4751 = vmatpush1.msra.mxu0 0.0
    %4752 = vmatprep.subr.mxu0 0.0
    %4753 = vmatpush1.msra.mxu0 0.0
    %4754 = vmatprep.subr.mxu0 0.0
    %4755 = vmatpush1.msra.mxu0 0.0
    %4756 = vmatprep.subr.mxu0 0.0
    %4757 = vmatpush1.msra.mxu0 0.0
    %4758 = vmatprep.subr.mxu0 0.0
    %4759 = vmatpush1.msra.mxu0 0.0
    %4760 = vmatprep.subr.mxu0 0.0
    %4761 = vmatpush1.msra.mxu0 0.0
    %4762 = vmatprep.subr.mxu0 0.0
    %4763 = vmatpush1.msra.mxu0 0.0
    %4764 = vmatprep.subr.mxu0 0.0
    %4765 = vmatpush1.msra.mxu0 0.0
    %4766 = vmatprep.subr.mxu0 0.0
    %4767 = vmatpush1.msra.mxu0 0.0
    %4768 = vmatprep.subr.mxu0 0.0
    %4769 = vmatpush1.msra.mxu0 %v2695
    %4770 = vmatprep.subr.mxu0 0.0
    %4771 = vmatpush1.msra.mxu0 %v2693
    %4772 = vmatprep.subr.mxu0 0.0
    %4773 = vmatpush1.msra.mxu0 %v2691
    %4774 = vmatprep.subr.mxu0 0.0
    %4775 = vmatpush1.msra.mxu0 %v2689
    %4776 = vmatprep.subr.mxu0 0.0
    %4777 = vmatpush1.msra.mxu0 %v2687
    %4778 = vmatprep.subr.mxu0 0.0
    %4779 = vmatpush2.msra.mxu0 0.0
    %4780 = vmatprep.subr.mxu0 0.0
    %4781 = vmatpush2.msra.mxu0 0.0
    %4782 = vmatprep.subr.mxu0 0.0
    %4783 = vmatpush2.msra.mxu0 0.0
    %4784 = vmatprep.subr.mxu0 0.0
    %4785 = vmatpush2.msra.mxu0 0.0
    %4786 = vmatprep.subr.mxu0 0.0
    %4787 = vmatpush2.msra.mxu0 0.0
    %4788 = vmatprep.subr.mxu0 0.0
    %4789 = vmatpush2.msra.mxu0 0.0
    %4790 = vmatprep.subr.mxu0 0.0
    %4791 = vmatpush2.msra.mxu0 0.0
    %4792 = vmatprep.subr.mxu0 0.0
    %4793 = vmatpush2.msra.mxu0 0.0
    %4794 = vmatprep.subr.mxu0 0.0
    %4795 = vmatpush2.msra.mxu0 0.0
    %4796 = vmatprep.subr.mxu0 0.0
    %4797 = vmatpush2.msra.mxu0 0.0
    %4798 = vmatprep.subr.mxu0 0.0
    %4799 = vmatpush2.msra.mxu0 0.0
    %4800 = vmatprep.subr.mxu0 0.0
    %4801 = vmatpush2.msra.mxu0 0.0
    %4802 = vmatprep.subr.mxu0 0.0
    %4803 = vmatpush2.msra.mxu0 0.0
    %4804 = vmatprep.subr.mxu0 0.0
    %4805 = vmatpush2.msra.mxu0 0.0
    %4806 = vmatprep.subr.mxu0 0.0
    %4807 = vmatpush2.msra.mxu0 0.0
    %4808 = vmatprep.subr.mxu0 0.0
    %4809 = vmatpush2.msra.mxu0 0.0
    %4810 = vmatprep.mubr.f32.mxu0 0.0
    %4811 = vmatmul.mubr.f32.gmra.mxu0 %v2716
    %v4812 = vpop.f32.mrf.mxu0
    %v4813 = vadd.f32 %v2707, %v4812
    %v4814 = vpop.f32.mrf.mxu0
    %4815 = vmatprep.mubr.f32.mxu0 0.0
    %4816 = vmatmul.mubr.f32.gmra.mxu0 %v2719
    %v4817 = vpop.f32.mrf.mxu0
    %v4818 = vadd.f32 %v2712, %v4817
    %v4819 = vpop.f32.mrf.mxu0
    %4820 = vdwg.mxu0
    %4821 = vmatprep.subr.mxu0 0.0
    %4822 = vmatpush1.msra.mxu0 0.0
    %4823 = vmatprep.subr.mxu0 0.0
    %4824 = vmatpush1.msra.mxu0 0.0
    %4825 = vmatprep.subr.mxu0 0.0
    %4826 = vmatpush1.msra.mxu0 0.0
    %4827 = vmatprep.subr.mxu0 0.0
    %4828 = vmatpush1.msra.mxu0 0.0
    %4829 = vmatprep.subr.mxu0 0.0
    %4830 = vmatpush1.msra.mxu0 0.0
    %4831 = vmatprep.subr.mxu0 0.0
    %4832 = vmatpush1.msra.mxu0 0.0
    %4833 = vmatprep.subr.mxu0 0.0
    %4834 = vmatpush1.msra.mxu0 0.0
    %4835 = vmatprep.subr.mxu0 0.0
    %4836 = vmatpush1.msra.mxu0 0.0
    %4837 = vmatprep.subr.mxu0 0.0
    %4838 = vmatpush1.msra.mxu0 0.0
    %4839 = vmatprep.subr.mxu0 0.0
    %4840 = vmatpush1.msra.mxu0 0.0
    %4841 = vmatprep.subr.mxu0 0.0
    %4842 = vmatpush1.msra.mxu0 0.0
    %4843 = vmatprep.subr.mxu0 0.0
    %4844 = vmatpush1.msra.mxu0 %v2697
    %4845 = vmatprep.subr.mxu0 0.0
    %4846 = vmatpush1.msra.mxu0 %v2695
    %4847 = vmatprep.subr.mxu0 0.0
    %4848 = vmatpush1.msra.mxu0 %v2693
    %4849 = vmatprep.subr.mxu0 0.0
    %4850 = vmatpush1.msra.mxu0 %v2691
    %4851 = vmatprep.subr.mxu0 0.0
    %4852 = vmatpush1.msra.mxu0 %v2689
    %4853 = vmatprep.subr.mxu0 0.0
    %4854 = vmatpush2.msra.mxu0 0.0
    %4855 = vmatprep.subr.mxu0 0.0
    %4856 = vmatpush2.msra.mxu0 0.0
    %4857 = vmatprep.subr.mxu0 0.0
    %4858 = vmatpush2.msra.mxu0 0.0
    %4859 = vmatprep.subr.mxu0 0.0
    %4860 = vmatpush2.msra.mxu0 0.0
    %4861 = vmatprep.subr.mxu0 0.0
    %4862 = vmatpush2.msra.mxu0 0.0
    %4863 = vmatprep.subr.mxu0 0.0
    %4864 = vmatpush2.msra.mxu0 0.0
    %4865 = vmatprep.subr.mxu0 0.0
    %4866 = vmatpush2.msra.mxu0 0.0
    %4867 = vmatprep.subr.mxu0 0.0
    %4868 = vmatpush2.msra.mxu0 0.0
    %4869 = vmatprep.subr.mxu0 0.0
    %4870 = vmatpush2.msra.mxu0 0.0
    %4871 = vmatprep.subr.mxu0 0.0
    %4872 = vmatpush2.msra.mxu0 0.0
    %4873 = vmatprep.subr.mxu0 0.0
    %4874 = vmatpush2.msra.mxu0 0.0
    %4875 = vmatprep.subr.mxu0 0.0
    %4876 = vmatpush2.msra.mxu0 0.0
    %4877 = vmatprep.subr.mxu0 0.0
    %4878 = vmatpush2.msra.mxu0 0.0
    %4879 = vmatprep.subr.mxu0 0.0
    %4880 = vmatpush2.msra.mxu0 0.0
    %4881 = vmatprep.subr.mxu0 0.0
    %4882 = vmatpush2.msra.mxu0 0.0
    %4883 = vmatprep.subr.mxu0 0.0
    %4884 = vmatpush2.msra.mxu0 0.0
    %4885 = vmatprep.mubr.f32.mxu0 0.0
    %4886 = vmatmul.mubr.f32.gmra.mxu0 %v2716
    %v4887 = vpop.f32.mrf.mxu0
    %v4888 = vadd.f32 %v2707, %v4887
    %v4889 = vpop.f32.mrf.mxu0
    %4890 = vmatprep.mubr.f32.mxu0 0.0
    %4891 = vmatmul.mubr.f32.gmra.mxu0 %v2719
    %v4892 = vpop.f32.mrf.mxu0
    %v4893 = vadd.f32 %v2712, %v4892
    %v4894 = vpop.f32.mrf.mxu0
    %4895 = vdwg.mxu0
    %4896 = vmatprep.subr.mxu0 0.0
    %4897 = vmatpush1.msra.mxu0 0.0
    %4898 = vmatprep.subr.mxu0 0.0
    %4899 = vmatpush1.msra.mxu0 0.0
    %4900 = vmatprep.subr.mxu0 0.0
    %4901 = vmatpush1.msra.mxu0 0.0
    %4902 = vmatprep.subr.mxu0 0.0
    %4903 = vmatpush1.msra.mxu0 0.0
    %4904 = vmatprep.subr.mxu0 0.0
    %4905 = vmatpush1.msra.mxu0 0.0
    %4906 = vmatprep.subr.mxu0 0.0
    %4907 = vmatpush1.msra.mxu0 0.0
    %4908 = vmatprep.subr.mxu0 0.0
    %4909 = vmatpush1.msra.mxu0 0.0
    %4910 = vmatprep.subr.mxu0 0.0
    %4911 = vmatpush1.msra.mxu0 0.0
    %4912 = vmatprep.subr.mxu0 0.0
    %4913 = vmatpush1.msra.mxu0 0.0
    %4914 = vmatprep.subr.mxu0 0.0
    %4915 = vmatpush1.msra.mxu0 0.0
    %4916 = vmatprep.subr.mxu0 0.0
    %4917 = vmatpush1.msra.mxu0 0.0
    %4918 = vmatprep.subr.mxu0 0.0
    %4919 = vmatpush1.msra.mxu0 %v2699
    %4920 = vmatprep.subr.mxu0 0.0
    %4921 = vmatpush1.msra.mxu0 %v2697
    %4922 = vmatprep.subr.mxu0 0.0
    %4923 = vmatpush1.msra.mxu0 %v2695
    %4924 = vmatprep.subr.mxu0 0.0
    %4925 = vmatpush1.msra.mxu0 %v2693
    %4926 = vmatprep.subr.mxu0 0.0
    %4927 = vmatpush1.msra.mxu0 %v2691
    %4928 = vmatprep.subr.mxu0 0.0
    %4929 = vmatpush2.msra.mxu0 0.0
    %4930 = vmatprep.subr.mxu0 0.0
    %4931 = vmatpush2.msra.mxu0 0.0
    %4932 = vmatprep.subr.mxu0 0.0
    %4933 = vmatpush2.msra.mxu0 0.0
    %4934 = vmatprep.subr.mxu0 0.0
    %4935 = vmatpush2.msra.mxu0 0.0
    %4936 = vmatprep.subr.mxu0 0.0
    %4937 = vmatpush2.msra.mxu0 0.0
    %4938 = vmatprep.subr.mxu0 0.0
    %4939 = vmatpush2.msra.mxu0 0.0
    %4940 = vmatprep.subr.mxu0 0.0
    %4941 = vmatpush2.msra.mxu0 0.0
    %4942 = vmatprep.subr.mxu0 0.0
    %4943 = vmatpush2.msra.mxu0 0.0
    %4944 = vmatprep.subr.mxu0 0.0
    %4945 = vmatpush2.msra.mxu0 0.0
    %4946 = vmatprep.subr.mxu0 0.0
    %4947 = vmatpush2.msra.mxu0 0.0
    %4948 = vmatprep.subr.mxu0 0.0
    %4949 = vmatpush2.msra.mxu0 0.0
    %4950 = vmatprep.subr.mxu0 0.0
    %4951 = vmatpush2.msra.mxu0 0.0
    %4952 = vmatprep.subr.mxu0 0.0
    %4953 = vmatpush2.msra.mxu0 0.0
    %4954 = vmatprep.subr.mxu0 0.0
    %4955 = vmatpush2.msra.mxu0 0.0
    %4956 = vmatprep.subr.mxu0 0.0
    %4957 = vmatpush2.msra.mxu0 0.0
    %4958 = vmatprep.subr.mxu0 0.0
    %4959 = vmatpush2.msra.mxu0 0.0
    %4960 = vmatprep.mubr.f32.mxu0 0.0
    %4961 = vmatmul.mubr.f32.gmra.mxu0 %v2716
    %v4962 = vpop.f32.mrf.mxu0
    %v4963 = vadd.f32 %v2707, %v4962
    %v4964 = vpop.f32.mrf.mxu0
    %4965 = vmatprep.mubr.f32.mxu0 0.0
    %4966 = vmatmul.mubr.f32.gmra.mxu0 %v2719
    %v4967 = vpop.f32.mrf.mxu0
    %v4968 = vadd.f32 %v2712, %v4967
    %v4969 = vpop.f32.mrf.mxu0
    %4970 = vdwg.mxu0
    %vm4971 = vcmp.gt.f32.partialorder %v2788, 0.0
    %vm4972 = vcmp.gt.f32.partialorder %v2793, 0.0
    %vm4973 = vcmp.gt.f32.partialorder %v2863, 0.0
    %vm4974 = vcmp.gt.f32.partialorder %v2868, 0.0
    %vm4975 = vcmp.gt.f32.partialorder %v2938, 0.0
    %vm4976 = vcmp.gt.f32.partialorder %v2943, 0.0
    %vm4977 = vcmp.gt.f32.partialorder %v3013, 0.0
    %vm4978 = vcmp.gt.f32.partialorder %v3018, 0.0
    %vm4979 = vcmp.gt.f32.partialorder %v3088, 0.0
    %vm4980 = vcmp.gt.f32.partialorder %v3093, 0.0
    %vm4981 = vcmp.gt.f32.partialorder %v3163, 0.0
    %vm4982 = vcmp.gt.f32.partialorder %v3168, 0.0
    %vm4983 = vcmp.gt.f32.partialorder %v3238, 0.0
    %vm4984 = vcmp.gt.f32.partialorder %v3243, 0.0
    %vm4985 = vcmp.gt.f32.partialorder %v3313, 0.0
    %vm4986 = vcmp.gt.f32.partialorder %v3318, 0.0
    %vm4987 = vcmp.gt.f32.partialorder %v3388, 0.0
    %vm4988 = vcmp.gt.f32.partialorder %v3393, 0.0
    %vm4989 = vcmp.gt.f32.partialorder %v3463, 0.0
    %vm4990 = vcmp.gt.f32.partialorder %v3468, 0.0
    %vm4991 = vcmp.gt.f32.partialorder %v3538, 0.0
    %vm4992 = vcmp.gt.f32.partialorder %v3543, 0.0
    %vm4993 = vcmp.gt.f32.partialorder %v3613, 0.0
    %vm4994 = vcmp.gt.f32.partialorder %v3618, 0.0
    %vm4995 = vcmp.gt.f32.partialorder %v3688, 0.0
    %vm4996 = vcmp.gt.f32.partialorder %v3693, 0.0
    %vm4997 = vcmp.gt.f32.partialorder %v3763, 0.0
    %vm4998 = vcmp.gt.f32.partialorder %v3768, 0.0
    %vm4999 = vcmp.gt.f32.partialorder %v3838, 0.0
    %vm5000 = vcmp.gt.f32.partialorder %v3843, 0.0
    %vm5001 = vcmp.gt.f32.partialorder %v3913, 0.0
    %vm5002 = vcmp.gt.f32.partialorder %v3918, 0.0
    %vm5003 = vcmp.gt.f32.partialorder %v3988, 0.0
    %vm5004 = vcmp.gt.f32.partialorder %v3993, 0.0
    %vm5005 = vcmp.gt.f32.partialorder %v4063, 0.0
    %vm5006 = vcmp.gt.f32.partialorder %v4068, 0.0
    %vm5007 = vcmp.gt.f32.partialorder %v4138, 0.0
    %vm5008 = vcmp.gt.f32.partialorder %v4143, 0.0
    %vm5009 = vcmp.gt.f32.partialorder %v4213, 0.0
    %vm5010 = vcmp.gt.f32.partialorder %v4218, 0.0
    %vm5011 = vcmp.gt.f32.partialorder %v4288, 0.0
    %vm5012 = vcmp.gt.f32.partialorder %v4293, 0.0
    %vm5013 = vcmp.gt.f32.partialorder %v4363, 0.0
    %vm5014 = vcmp.gt.f32.partialorder %v4368, 0.0
    %vm5015 = vcmp.gt.f32.partialorder %v4438, 0.0
    %vm5016 = vcmp.gt.f32.partialorder %v4443, 0.0
    %vm5017 = vcmp.gt.f32.partialorder %v4513, 0.0
    %vm5018 = vcmp.gt.f32.partialorder %v4518, 0.0
    %vm5019 = vcmp.gt.f32.partialorder %v4588, 0.0
    %vm5020 = vcmp.gt.f32.partialorder %v4593, 0.0
    %vm5021 = vcmp.gt.f32.partialorder %v4663, 0.0
    %vm5022 = vcmp.gt.f32.partialorder %v4668, 0.0
    %vm5023 = vcmp.gt.f32.partialorder %v4738, 0.0
    %vm5024 = vcmp.gt.f32.partialorder %v4743, 0.0
    %vm5025 = vcmp.gt.f32.partialorder %v4813, 0.0
    %vm5026 = vcmp.gt.f32.partialorder %v4818, 0.0
    %vm5027 = vcmp.gt.f32.partialorder %v4888, 0.0
    %vm5028 = vcmp.gt.f32.partialorder %v4893, 0.0
    %vm5029 = vcmp.gt.f32.partialorder %v4963, 0.0
    %vm5030 = vcmp.gt.f32.partialorder %v4968, 0.0
    %v5031 = vmul.f32 %v2788, 0.01
    %v5032 = vmul.f32 %v2793, 0.01
    %v5033 = vmul.f32 %v2863, 0.01
    %v5034 = vmul.f32 %v2868, 0.01
    %v5035 = vmul.f32 %v2938, 0.01
    %v5036 = vmul.f32 %v2943, 0.01
    %v5037 = vmul.f32 %v3013, 0.01
    %v5038 = vmul.f32 %v3018, 0.01
    %v5039 = vmul.f32 %v3088, 0.01
    %v5040 = vmul.f32 %v3093, 0.01
    %v5041 = vmul.f32 %v3163, 0.01
    %v5042 = vmul.f32 %v3168, 0.01
    %v5043 = vmul.f32 %v3238, 0.01
    %v5044 = vmul.f32 %v3243, 0.01
    %v5045 = vmul.f32 %v3313, 0.01
    %v5046 = vmul.f32 %v3318, 0.01
    %v5047 = vmul.f32 %v3388, 0.01
    %v5048 = vmul.f32 %v3393, 0.01
    %v5049 = vmul.f32 %v3463, 0.01
    %v5050 = vmul.f32 %v3468, 0.01
    %v5051 = vmul.f32 %v3538, 0.01
    %v5052 = vmul.f32 %v3543, 0.01
    %v5053 = vmul.f32 %v3613, 0.01
    %v5054 = vmul.f32 %v3618, 0.01
    %v5055 = vmul.f32 %v3688, 0.01
    %v5056 = vmul.f32 %v3693, 0.01
    %v5057 = vmul.f32 %v3763, 0.01
    %v5058 = vmul.f32 %v3768, 0.01
    %v5059 = vmul.f32 %v3838, 0.01
    %v5060 = vmul.f32 %v3843, 0.01
    %v5061 = vmul.f32 %v3913, 0.01
    %v5062 = vmul.f32 %v3918, 0.01
    %v5063 = vmul.f32 %v3988, 0.01
    %v5064 = vmul.f32 %v3993, 0.01
    %v5065 = vmul.f32 %v4063, 0.01
    %v5066 = vmul.f32 %v4068, 0.01
    %v5067 = vmul.f32 %v4138, 0.01
    %v5068 = vmul.f32 %v4143, 0.01
    %v5069 = vmul.f32 %v4213, 0.01
    %v5070 = vmul.f32 %v4218, 0.01
    %v5071 = vmul.f32 %v4288, 0.01
    %v5072 = vmul.f32 %v4293, 0.01
    %v5073 = vmul.f32 %v4363, 0.01
    %v5074 = vmul.f32 %v4368, 0.01
    %v5075 = vmul.f32 %v4438, 0.01
    %v5076 = vmul.f32 %v4443, 0.01
    %v5077 = vmul.f32 %v4513, 0.01
    %v5078 = vmul.f32 %v4518, 0.01
    %v5079 = vmul.f32 %v4588, 0.01
    %v5080 = vmul.f32 %v4593, 0.01
    %v5081 = vmul.f32 %v4663, 0.01
    %v5082 = vmul.f32 %v4668, 0.01
    %v5083 = vmul.f32 %v4738, 0.01
    %v5084 = vmul.f32 %v4743, 0.01
    %v5085 = vmul.f32 %v4813, 0.01
    %v5086 = vmul.f32 %v4818, 0.01
    %v5087 = vmul.f32 %v4888, 0.01
    %v5088 = vmul.f32 %v4893, 0.01
    %v5089 = vmul.f32 %v4963, 0.01
    %v5090 = vmul.f32 %v4968, 0.01
    %v5091 = vsel %vm4971, %v2788, %v5031
    %v5092 = vsel %vm4972, %v2793, %v5032
    %v5093 = vsel %vm4973, %v2863, %v5033
    %v5094 = vsel %vm4974, %v2868, %v5034
    %v5095 = vsel %vm4975, %v2938, %v5035
    %v5096 = vsel %vm4976, %v2943, %v5036
    %v5097 = vsel %vm4977, %v3013, %v5037
    %v5098 = vsel %vm4978, %v3018, %v5038
    %v5099 = vsel %vm4979, %v3088, %v5039
    %v5100 = vsel %vm4980, %v3093, %v5040
    %v5101 = vsel %vm4981, %v3163, %v5041
    %v5102 = vsel %vm4982, %v3168, %v5042
    %v5103 = vsel %vm4983, %v3238, %v5043
    %v5104 = vsel %vm4984, %v3243, %v5044
    %v5105 = vsel %vm4985, %v3313, %v5045
    %v5106 = vsel %vm4986, %v3318, %v5046
    %v5107 = vsel %vm4987, %v3388, %v5047
    %v5108 = vsel %vm4988, %v3393, %v5048
    %v5109 = vsel %vm4989, %v3463, %v5049
    %v5110 = vsel %vm4990, %v3468, %v5050
    %v5111 = vsel %vm4991, %v3538, %v5051
    %v5112 = vsel %vm4992, %v3543, %v5052
    %v5113 = vsel %vm4993, %v3613, %v5053
    %v5114 = vsel %vm4994, %v3618, %v5054
    %v5115 = vsel %vm4995, %v3688, %v5055
    %v5116 = vsel %vm4996, %v3693, %v5056
    %v5117 = vsel %vm4997, %v3763, %v5057
    %v5118 = vsel %vm4998, %v3768, %v5058
    %v5119 = vsel %vm4999, %v3838, %v5059
    %v5120 = vsel %vm5000, %v3843, %v5060
    %v5121 = vsel %vm5001, %v3913, %v5061
    %v5122 = vsel %vm5002, %v3918, %v5062
    %v5123 = vsel %vm5003, %v3988, %v5063
    %v5124 = vsel %vm5004, %v3993, %v5064
    %v5125 = vsel %vm5005, %v4063, %v5065
    %v5126 = vsel %vm5006, %v4068, %v5066
    %v5127 = vsel %vm5007, %v4138, %v5067
    %v5128 = vsel %vm5008, %v4143, %v5068
    %v5129 = vsel %vm5009, %v4213, %v5069
    %v5130 = vsel %vm5010, %v4218, %v5070
    %v5131 = vsel %vm5011, %v4288, %v5071
    %v5132 = vsel %vm5012, %v4293, %v5072
    %v5133 = vsel %vm5013, %v4363, %v5073
    %v5134 = vsel %vm5014, %v4368, %v5074
    %v5135 = vsel %vm5015, %v4438, %v5075
    %v5136 = vsel %vm5016, %v4443, %v5076
    %v5137 = vsel %vm5017, %v4513, %v5077
    %v5138 = vsel %vm5018, %v4518, %v5078
    %v5139 = vsel %vm5019, %v4588, %v5079
    %v5140 = vsel %vm5020, %v4593, %v5080
    %v5141 = vsel %vm5021, %v4663, %v5081
    %v5142 = vsel %vm5022, %v4668, %v5082
    %v5143 = vsel %vm5023, %v4738, %v5083
    %v5144 = vsel %vm5024, %v4743, %v5084
    %v5145 = vsel %vm5025, %v4813, %v5085
    %v5146 = vsel %vm5026, %v4818, %v5086
    %v5147 = vsel %vm5027, %v4888, %v5087
    %v5148 = vsel %vm5028, %v4893, %v5088
    %v5149 = vsel %vm5029, %v4963, %v5089
    %v5150 = vsel %vm5030, %v4968, %v5090
    %v5151 = vmax.f32 %v5091, %v5093
    %v5152 = vmax.f32 %v5092, %v5094
    %v5153 = vmax.f32 %v5151, %v5095
    %v5154 = vmax.f32 %v5152, %v5096
    %v5155 = vmax.f32 %v5097, %v5099
    %v5156 = vmax.f32 %v5098, %v5100
    %v5157 = vmax.f32 %v5155, %v5101
    %v5158 = vmax.f32 %v5156, %v5102
    %v5159 = vmax.f32 %v5103, %v5105
    %v5160 = vmax.f32 %v5104, %v5106
    %v5161 = vmax.f32 %v5159, %v5107
    %v5162 = vmax.f32 %v5160, %v5108
    %v5163 = vmax.f32 %v5109, %v5111
    %v5164 = vmax.f32 %v5110, %v5112
    %v5165 = vmax.f32 %v5163, %v5113
    %v5166 = vmax.f32 %v5164, %v5114
    %v5167 = vmax.f32 %v5115, %v5117
    %v5168 = vmax.f32 %v5116, %v5118
    %v5169 = vmax.f32 %v5167, %v5119
    %v5170 = vmax.f32 %v5168, %v5120
    %v5171 = vmax.f32 %v5121, %v5123
    %v5172 = vmax.f32 %v5122, %v5124
    %v5173 = vmax.f32 %v5171, %v5125
    %v5174 = vmax.f32 %v5172, %v5126
    %v5175 = vmax.f32 %v5127, %v5129
    %v5176 = vmax.f32 %v5128, %v5130
    %v5177 = vmax.f32 %v5175, %v5131
    %v5178 = vmax.f32 %v5176, %v5132
    %v5179 = vmax.f32 %v5133, %v5135
    %v5180 = vmax.f32 %v5134, %v5136
    %v5181 = vmax.f32 %v5179, %v5137
    %v5182 = vmax.f32 %v5180, %v5138
    %v5183 = vmax.f32 %v5139, %v5141
    %v5184 = vmax.f32 %v5140, %v5142
    %v5185 = vmax.f32 %v5183, %v5143
    %v5186 = vmax.f32 %v5184, %v5144
    %v5187 = vmax.f32 %v5145, %v5147
    %v5188 = vmax.f32 %v5146, %v5148
    %v5189 = vmax.f32 %v5187, %v5149
    %v5190 = vmax.f32 %v5188, %v5150
    %v5191 = vld [vmem:[%s5] sm:$0xff]
    %v5192 = vld [vmem:[%s5 + $0x8] sm:$0xff]
    %v5193 = vld [vmem:[%s5 + $0x10] sm:$0xff]
    %v5194 = vld [vmem:[%s5 + $0x18] sm:$0xff]
    %v5195 = vld [vmem:[%s6] sm:$0xff]
    %v5196 = vld [vmem:[%s6 + $0x8] sm:$0xff]
    %v5197 = vld [vmem:[%s6 + $0x10] sm:$0xff]
    %v5198 = vld [vmem:[%s6 + $0x18] sm:$0xff]
    %5200 = vset.pattern.permute.xlu0 0
    %5201 = vperm.xlu0 %5200, %v5195
    %v5202 = vpop.permute.xlu0 %5201
    %5205 = vset.pattern.permute.xlu0 0
    %5206 = vperm.xlu0 %5205, %v5196
    %v5207 = vpop.permute.xlu0 %5206
    %5210 = vset.pattern.permute.xlu0 0
    %5211 = vperm.xlu0 %5210, %v5197
    %v5212 = vpop.permute.xlu0 %5211
    %5215 = vset.pattern.permute.xlu0 0
    %5216 = vperm.xlu0 %5215, %v5198
    %v5217 = vpop.permute.xlu0 %5216
    %vm5219 = vcmask 654336
    %v5221 = vsel %vm5219, %v5191, 0
    %v5224 = vsel %vm5219, %v5192, 0
    %v5227 = vsel %vm5219, %v5193, 0
    %v5230 = vsel %vm5219, %v5194, 0
    %5232 = vmatprep.subr.mxu0 0.0
    %5233 = vmatpush1.msra.mxu0 0.0
    %5234 = vmatprep.subr.mxu0 0.0
    %5235 = vmatpush1.msra.mxu0 0.0
    %5236 = vmatprep.subr.mxu0 0.0
    %5237 = vmatpush1.msra.mxu0 0.0
    %5238 = vmatprep.subr.mxu0 0.0
    %5239 = vmatpush1.msra.mxu0 0.0
    %5240 = vmatprep.subr.mxu0 0.0
    %5241 = vmatpush1.msra.mxu0 0.0
    %5242 = vmatprep.subr.mxu0 0.0
    %5243 = vmatpush1.msra.mxu0 0.0
    %5244 = vmatprep.subr.mxu0 0.0
    %5245 = vmatpush1.msra.mxu0 %v5170
    %5246 = vmatprep.subr.mxu0 0.0
    %5247 = vmatpush1.msra.mxu0 %v5169
    %5248 = vmatprep.subr.mxu0 0.0
    %5249 = vmatpush1.msra.mxu0 %v5166
    %5250 = vmatprep.subr.mxu0 0.0
    %5251 = vmatpush1.msra.mxu0 %v5165
    %5252 = vmatprep.subr.mxu0 0.0
    %5253 = vmatpush1.msra.mxu0 %v5162
    %5254 = vmatprep.subr.mxu0 0.0
    %5255 = vmatpush1.msra.mxu0 %v5161
    %5256 = vmatprep.subr.mxu0 0.0
    %5257 = vmatpush1.msra.mxu0 %v5158
    %5258 = vmatprep.subr.mxu0 0.0
    %5259 = vmatpush1.msra.mxu0 %v5157
    %5260 = vmatprep.subr.mxu0 0.0
    %5261 = vmatpush1.msra.mxu0 %v5154
    %5262 = vmatprep.subr.mxu0 0.0
    %5263 = vmatpush1.msra.mxu0 %v5153
    %5264 = vmatprep.subr.mxu0 0.0
    %5265 = vmatpush2.msra.mxu0 0.0
    %5266 = vmatprep.subr.mxu0 0.0
    %5267 = vmatpush2.msra.mxu0 0.0
    %5268 = vmatprep.subr.mxu0 0.0
    %5269 = vmatpush2.msra.mxu0 0.0
    %5270 = vmatprep.subr.mxu0 0.0
    %5271 = vmatpush2.msra.mxu0 0.0
    %5272 = vmatprep.subr.mxu0 0.0
    %5273 = vmatpush2.msra.mxu0 0.0
    %5274 = vmatprep.subr.mxu0 0.0
    %5275 = vmatpush2.msra.mxu0 0.0
    %5276 = vmatprep.subr.mxu0 0.0
    %5277 = vmatpush2.msra.mxu0 0.0
    %5278 = vmatprep.subr.mxu0 0.0
    %5279 = vmatpush2.msra.mxu0 0.0
    %5280 = vmatprep.subr.mxu0 0.0
    %5281 = vmatpush2.msra.mxu0 0.0
    %5282 = vmatprep.subr.mxu0 0.0
    %5283 = vmatpush2.msra.mxu0 0.0
    %5284 = vmatprep.subr.mxu0 0.0
    %5285 = vmatpush2.msra.mxu0 0.0
    %5286 = vmatprep.subr.mxu0 0.0
    %5287 = vmatpush2.msra.mxu0 0.0
    %5288 = vmatprep.subr.mxu0 0.0
    %5289 = vmatpush2.msra.mxu0 0.0
    %5290 = vmatprep.subr.mxu0 0.0
    %5291 = vmatpush2.msra.mxu0 0.0
    %5292 = vmatprep.subr.mxu0 0.0
    %5293 = vmatpush2.msra.mxu0 0.0
    %5294 = vmatprep.subr.mxu0 0.0
    %5295 = vmatpush2.msra.mxu0 0.0
    %5296 = vmatprep.mubr.f32.mxu0 0.0
    %5297 = vmatmul.mubr.f32.gmra.mxu0 %v5221
    %v5298 = vpop.f32.mrf.mxu0
    %v5299 = vadd.f32 %v5202, %v5298
    %v5300 = vpop.f32.mrf.mxu0
    %5301 = vmatprep.mubr.f32.mxu0 0.0
    %5302 = vmatmul.mubr.f32.gmra.mxu0 %v5224
    %v5303 = vpop.f32.mrf.mxu0
    %v5304 = vadd.f32 %v5207, %v5303
    %v5305 = vpop.f32.mrf.mxu0
    %5306 = vmatprep.mubr.f32.mxu0 0.0
    %5307 = vmatmul.mubr.f32.gmra.mxu0 %v5227
    %v5308 = vpop.f32.mrf.mxu0
    %v5309 = vadd.f32 %v5212, %v5308
    %v5310 = vpop.f32.mrf.mxu0
    %5311 = vmatprep.mubr.f32.mxu0 0.0
    %5312 = vmatmul.mubr.f32.gmra.mxu0 %v5230
    %v5313 = vpop.f32.mrf.mxu0
    %v5314 = vadd.f32 %v5217, %v5313
    %v5315 = vpop.f32.mrf.mxu0
    %5316 = vdwg.mxu0
    %5317 = vmatprep.subr.mxu0 0.0
    %5318 = vmatpush1.msra.mxu0 0.0
    %5319 = vmatprep.subr.mxu0 0.0
    %5320 = vmatpush1.msra.mxu0 0.0
    %5321 = vmatprep.subr.mxu0 0.0
    %5322 = vmatpush1.msra.mxu0 0.0
    %5323 = vmatprep.subr.mxu0 0.0
    %5324 = vmatpush1.msra.mxu0 0.0
    %5325 = vmatprep.subr.mxu0 0.0
    %5326 = vmatpush1.msra.mxu0 0.0
    %5327 = vmatprep.subr.mxu0 0.0
    %5328 = vmatpush1.msra.mxu0 0.0
    %5329 = vmatprep.subr.mxu0 0.0
    %5330 = vmatpush1.msra.mxu0 %v5174
    %5331 = vmatprep.subr.mxu0 0.0
    %5332 = vmatpush1.msra.mxu0 %v5173
    %5333 = vmatprep.subr.mxu0 0.0
    %5334 = vmatpush1.msra.mxu0 %v5170
    %5335 = vmatprep.subr.mxu0 0.0
    %5336 = vmatpush1.msra.mxu0 %v5169
    %5337 = vmatprep.subr.mxu0 0.0
    %5338 = vmatpush1.msra.mxu0 %v5166
    %5339 = vmatprep.subr.mxu0 0.0
    %5340 = vmatpush1.msra.mxu0 %v5165
    %5341 = vmatprep.subr.mxu0 0.0
    %5342 = vmatpush1.msra.mxu0 %v5162
    %5343 = vmatprep.subr.mxu0 0.0
    %5344 = vmatpush1.msra.mxu0 %v5161
    %5345 = vmatprep.subr.mxu0 0.0
    %5346 = vmatpush1.msra.mxu0 %v5158
    %5347 = vmatprep.subr.mxu0 0.0
    %5348 = vmatpush1.msra.mxu0 %v5157
    %5349 = vmatprep.subr.mxu0 0.0
    %5350 = vmatpush2.msra.mxu0 0.0
    %5351 = vmatprep.subr.mxu0 0.0
    %5352 = vmatpush2.msra.mxu0 0.0
    %5353 = vmatprep.subr.mxu0 0.0
    %5354 = vmatpush2.msra.mxu0 0.0
    %5355 = vmatprep.subr.mxu0 0.0
    %5356 = vmatpush2.msra.mxu0 0.0
    %5357 = vmatprep.subr.mxu0 0.0
    %5358 = vmatpush2.msra.mxu0 0.0
    %5359 = vmatprep.subr.mxu0 0.0
    %5360 = vmatpush2.msra.mxu0 0.0
    %5361 = vmatprep.subr.mxu0 0.0
    %5362 = vmatpush2.msra.mxu0 0.0
    %5363 = vmatprep.subr.mxu0 0.0
    %5364 = vmatpush2.msra.mxu0 0.0
    %5365 = vmatprep.subr.mxu0 0.0
    %5366 = vmatpush2.msra.mxu0 0.0
    %5367 = vmatprep.subr.mxu0 0.0
    %5368 = vmatpush2.msra.mxu0 0.0
    %5369 = vmatprep.subr.mxu0 0.0
    %5370 = vmatpush2.msra.mxu0 0.0
    %5371 = vmatprep.subr.mxu0 0.0
    %5372 = vmatpush2.msra.mxu0 0.0
    %5373 = vmatprep.subr.mxu0 0.0
    %5374 = vmatpush2.msra.mxu0 0.0
    %5375 = vmatprep.subr.mxu0 0.0
    %5376 = vmatpush2.msra.mxu0 0.0
    %5377 = vmatprep.subr.mxu0 0.0
    %5378 = vmatpush2.msra.mxu0 0.0
    %5379 = vmatprep.subr.mxu0 0.0
    %5380 = vmatpush2.msra.mxu0 0.0
    %5381 = vmatprep.mubr.f32.mxu0 0.0
    %5382 = vmatmul.mubr.f32.gmra.mxu0 %v5221
    %v5383 = vpop.f32.mrf.mxu0
    %v5384 = vadd.f32 %v5202, %v5383
    %v5385 = vpop.f32.mrf.mxu0
    %5386 = vmatprep.mubr.f32.mxu0 0.0
    %5387 = vmatmul.mubr.f32.gmra.mxu0 %v5224
    %v5388 = vpop.f32.mrf.mxu0
    %v5389 = vadd.f32 %v5207, %v5388
    %v5390 = vpop.f32.mrf.mxu0
    %5391 = vmatprep.mubr.f32.mxu0 0.0
    %5392 = vmatmul.mubr.f32.gmra.mxu0 %v5227
    %v5393 = vpop.f32.mrf.mxu0
    %v5394 = vadd.f32 %v5212, %v5393
    %v5395 = vpop.f32.mrf.mxu0
    %5396 = vmatprep.mubr.f32.mxu0 0.0
    %5397 = vmatmul.mubr.f32.gmra.mxu0 %v5230
    %v5398 = vpop.f32.mrf.mxu0
    %v5399 = vadd.f32 %v5217, %v5398
    %v5400 = vpop.f32.mrf.mxu0
    %5401 = vdwg.mxu0
    %5402 = vmatprep.subr.mxu0 0.0
    %5403 = vmatpush1.msra.mxu0 0.0
    %5404 = vmatprep.subr.mxu0 0.0
    %5405 = vmatpush1.msra.mxu0 0.0
    %5406 = vmatprep.subr.mxu0 0.0
    %5407 = vmatpush1.msra.mxu0 0.0
    %5408 = vmatprep.subr.mxu0 0.0
    %5409 = vmatpush1.msra.mxu0 0.0
    %5410 = vmatprep.subr.mxu0 0.0
    %5411 = vmatpush1.msra.mxu0 0.0
    %5412 = vmatprep.subr.mxu0 0.0
    %5413 = vmatpush1.msra.mxu0 0.0
    %5414 = vmatprep.subr.mxu0 0.0
    %5415 = vmatpush1.msra.mxu0 %v5178
    %5416 = vmatprep.subr.mxu0 0.0
    %5417 = vmatpush1.msra.mxu0 %v5177
    %5418 = vmatprep.subr.mxu0 0.0
    %5419 = vmatpush1.msra.mxu0 %v5174
    %5420 = vmatprep.subr.mxu0 0.0
    %5421 = vmatpush1.msra.mxu0 %v5173
    %5422 = vmatprep.subr.mxu0 0.0
    %5423 = vmatpush1.msra.mxu0 %v5170
    %5424 = vmatprep.subr.mxu0 0.0
    %5425 = vmatpush1.msra.mxu0 %v5169
    %5426 = vmatprep.subr.mxu0 0.0
    %5427 = vmatpush1.msra.mxu0 %v5166
    %5428 = vmatprep.subr.mxu0 0.0
    %5429 = vmatpush1.msra.mxu0 %v5165
    %5430 = vmatprep.subr.mxu0 0.0
    %5431 = vmatpush1.msra.mxu0 %v5162
    %5432 = vmatprep.subr.mxu0 0.0
    %5433 = vmatpush1.msra.mxu0 %v5161
    %5434 = vmatprep.subr.mxu0 0.0
    %5435 = vmatpush2.msra.mxu0 0.0
    %5436 = vmatprep.subr.mxu0 0.0
    %5437 = vmatpush2.msra.mxu0 0.0
    %5438 = vmatprep.subr.mxu0 0.0
    %5439 = vmatpush2.msra.mxu0 0.0
    %5440 = vmatprep.subr.mxu0 0.0
    %5441 = vmatpush2.msra.mxu0 0.0
    %5442 = vmatprep.subr.mxu0 0.0
    %5443 = vmatpush2.msra.mxu0 0.0
    %5444 = vmatprep.subr.mxu0 0.0
    %5445 = vmatpush2.msra.mxu0 0.0
    %5446 = vmatprep.subr.mxu0 0.0
    %5447 = vmatpush2.msra.mxu0 0.0
    %5448 = vmatprep.subr.mxu0 0.0
    %5449 = vmatpush2.msra.mxu0 0.0
    %5450 = vmatprep.subr.mxu0 0.0
    %5451 = vmatpush2.msra.mxu0 0.0
    %5452 = vmatprep.subr.mxu0 0.0
    %5453 = vmatpush2.msra.mxu0 0.0
    %5454 = vmatprep.subr.mxu0 0.0
    %5455 = vmatpush2.msra.mxu0 0.0
    %5456 = vmatprep.subr.mxu0 0.0
    %5457 = vmatpush2.msra.mxu0 0.0
    %5458 = vmatprep.subr.mxu0 0.0
    %5459 = vmatpush2.msra.mxu0 0.0
    %5460 = vmatprep.subr.mxu0 0.0
    %5461 = vmatpush2.msra.mxu0 0.0
    %5462 = vmatprep.subr.mxu0 0.0
    %5463 = vmatpush2.msra.mxu0 0.0
    %5464 = vmatprep.subr.mxu0 0.0
    %5465 = vmatpush2.msra.mxu0 0.0
    %5466 = vmatprep.mubr.f32.mxu0 0.0
    %5467 = vmatmul.mubr.f32.gmra.mxu0 %v5221
    %v5468 = vpop.f32.mrf.mxu0
    %v5469 = vadd.f32 %v5202, %v5468
    %v5470 = vpop.f32.mrf.mxu0
    %5471 = vmatprep.mubr.f32.mxu0 0.0
    %5472 = vmatmul.mubr.f32.gmra.mxu0 %v5224
    %v5473 = vpop.f32.mrf.mxu0
    %v5474 = vadd.f32 %v5207, %v5473
    %v5475 = vpop.f32.mrf.mxu0
    %5476 = vmatprep.mubr.f32.mxu0 0.0
    %5477 = vmatmul.mubr.f32.gmra.mxu0 %v5227
    %v5478 = vpop.f32.mrf.mxu0
    %v5479 = vadd.f32 %v5212, %v5478
    %v5480 = vpop.f32.mrf.mxu0
    %5481 = vmatprep.mubr.f32.mxu0 0.0
    %5482 = vmatmul.mubr.f32.gmra.mxu0 %v5230
    %v5483 = vpop.f32.mrf.mxu0
    %v5484 = vadd.f32 %v5217, %v5483
    %v5485 = vpop.f32.mrf.mxu0
    %5486 = vdwg.mxu0
    %5487 = vmatprep.subr.mxu0 0.0
    %5488 = vmatpush1.msra.mxu0 0.0
    %5489 = vmatprep.subr.mxu0 0.0
    %5490 = vmatpush1.msra.mxu0 0.0
    %5491 = vmatprep.subr.mxu0 0.0
    %5492 = vmatpush1.msra.mxu0 0.0
    %5493 = vmatprep.subr.mxu0 0.0
    %5494 = vmatpush1.msra.mxu0 0.0
    %5495 = vmatprep.subr.mxu0 0.0
    %5496 = vmatpush1.msra.mxu0 0.0
    %5497 = vmatprep.subr.mxu0 0.0
    %5498 = vmatpush1.msra.mxu0 0.0
    %5499 = vmatprep.subr.mxu0 0.0
    %5500 = vmatpush1.msra.mxu0 %v5182
    %5501 = vmatprep.subr.mxu0 0.0
    %5502 = vmatpush1.msra.mxu0 %v5181
    %5503 = vmatprep.subr.mxu0 0.0
    %5504 = vmatpush1.msra.mxu0 %v5178
    %5505 = vmatprep.subr.mxu0 0.0
    %5506 = vmatpush1.msra.mxu0 %v5177
    %5507 = vmatprep.subr.mxu0 0.0
    %5508 = vmatpush1.msra.mxu0 %v5174
    %5509 = vmatprep.subr.mxu0 0.0
    %5510 = vmatpush1.msra.mxu0 %v5173
    %5511 = vmatprep.subr.mxu0 0.0
    %5512 = vmatpush1.msra.mxu0 %v5170
    %5513 = vmatprep.subr.mxu0 0.0
    %5514 = vmatpush1.msra.mxu0 %v5169
    %5515 = vmatprep.subr.mxu0 0.0
    %5516 = vmatpush1.msra.mxu0 %v5166
    %5517 = vmatprep.subr.mxu0 0.0
    %5518 = vmatpush1.msra.mxu0 %v5165
    %5519 = vmatprep.subr.mxu0 0.0
    %5520 = vmatpush2.msra.mxu0 0.0
    %5521 = vmatprep.subr.mxu0 0.0
    %5522 = vmatpush2.msra.mxu0 0.0
    %5523 = vmatprep.subr.mxu0 0.0
    %5524 = vmatpush2.msra.mxu0 0.0
    %5525 = vmatprep.subr.mxu0 0.0
    %5526 = vmatpush2.msra.mxu0 0.0
    %5527 = vmatprep.subr.mxu0 0.0
    %5528 = vmatpush2.msra.mxu0 0.0
    %5529 = vmatprep.subr.mxu0 0.0
    %5530 = vmatpush2.msra.mxu0 0.0
    %5531 = vmatprep.subr.mxu0 0.0
    %5532 = vmatpush2.msra.mxu0 0.0
    %5533 = vmatprep.subr.mxu0 0.0
    %5534 = vmatpush2.msra.mxu0 0.0
    %5535 = vmatprep.subr.mxu0 0.0
    %5536 = vmatpush2.msra.mxu0 0.0
    %5537 = vmatprep.subr.mxu0 0.0
    %5538 = vmatpush2.msra.mxu0 0.0
    %5539 = vmatprep.subr.mxu0 0.0
    %5540 = vmatpush2.msra.mxu0 0.0
    %5541 = vmatprep.subr.mxu0 0.0
    %5542 = vmatpush2.msra.mxu0 0.0
    %5543 = vmatprep.subr.mxu0 0.0
    %5544 = vmatpush2.msra.mxu0 0.0
    %5545 = vmatprep.subr.mxu0 0.0
    %5546 = vmatpush2.msra.mxu0 0.0
    %5547 = vmatprep.subr.mxu0 0.0
    %5548 = vmatpush2.msra.mxu0 0.0
    %5549 = vmatprep.subr.mxu0 0.0
    %5550 = vmatpush2.msra.mxu0 0.0
    %5551 = vmatprep.mubr.f32.mxu0 0.0
    %5552 = vmatmul.mubr.f32.gmra.mxu0 %v5221
    %v5553 = vpop.f32.mrf.mxu0
    %v5554 = vadd.f32 %v5202, %v5553
    %v5555 = vpop.f32.mrf.mxu0
    %5556 = vmatprep.mubr.f32.mxu0 0.0
    %5557 = vmatmul.mubr.f32.gmra.mxu0 %v5224
    %v5558 = vpop.f32.mrf.mxu0
    %v5559 = vadd.f32 %v5207, %v5558
    %v5560 = vpop.f32.mrf.mxu0
    %5561 = vmatprep.mubr.f32.mxu0 0.0
    %5562 = vmatmul.mubr.f32.gmra.mxu0 %v5227
    %v5563 = vpop.f32.mrf.mxu0
    %v5564 = vadd.f32 %v5212, %v5563
    %v5565 = vpop.f32.mrf.mxu0
    %5566 = vmatprep.mubr.f32.mxu0 0.0
    %5567 = vmatmul.mubr.f32.gmra.mxu0 %v5230
    %v5568 = vpop.f32.mrf.mxu0
    %v5569 = vadd.f32 %v5217, %v5568
    %v5570 = vpop.f32.mrf.mxu0
    %5571 = vdwg.mxu0
    %5572 = vmatprep.subr.mxu0 0.0
    %5573 = vmatpush1.msra.mxu0 0.0
    %5574 = vmatprep.subr.mxu0 0.0
    %5575 = vmatpush1.msra.mxu0 0.0
    %5576 = vmatprep.subr.mxu0 0.0
    %5577 = vmatpush1.msra.mxu0 0.0
    %5578 = vmatprep.subr.mxu0 0.0
    %5579 = vmatpush1.msra.mxu0 0.0
    %5580 = vmatprep.subr.mxu0 0.0
    %5581 = vmatpush1.msra.mxu0 0.0
    %5582 = vmatprep.subr.mxu0 0.0
    %5583 = vmatpush1.msra.mxu0 0.0
    %5584 = vmatprep.subr.mxu0 0.0
    %5585 = vmatpush1.msra.mxu0 %v5186
    %5586 = vmatprep.subr.mxu0 0.0
    %5587 = vmatpush1.msra.mxu0 %v5185
    %5588 = vmatprep.subr.mxu0 0.0
    %5589 = vmatpush1.msra.mxu0 %v5182
    %5590 = vmatprep.subr.mxu0 0.0
    %5591 = vmatpush1.msra.mxu0 %v5181
    %5592 = vmatprep.subr.mxu0 0.0
    %5593 = vmatpush1.msra.mxu0 %v5178
    %5594 = vmatprep.subr.mxu0 0.0
    %5595 = vmatpush1.msra.mxu0 %v5177
    %5596 = vmatprep.subr.mxu0 0.0
    %5597 = vmatpush1.msra.mxu0 %v5174
    %5598 = vmatprep.subr.mxu0 0.0
    %5599 = vmatpush1.msra.mxu0 %v5173
    %5600 = vmatprep.subr.mxu0 0.0
    %5601 = vmatpush1.msra.mxu0 %v5170
    %5602 = vmatprep.subr.mxu0 0.0
    %5603 = vmatpush1.msra.mxu0 %v5169
    %5604 = vmatprep.subr.mxu0 0.0
    %5605 = vmatpush2.msra.mxu0 0.0
    %5606 = vmatprep.subr.mxu0 0.0
    %5607 = vmatpush2.msra.mxu0 0.0
    %5608 = vmatprep.subr.mxu0 0.0
    %5609 = vmatpush2.msra.mxu0 0.0
    %5610 = vmatprep.subr.mxu0 0.0
    %5611 = vmatpush2.msra.mxu0 0.0
    %5612 = vmatprep.subr.mxu0 0.0
    %5613 = vmatpush2.msra.mxu0 0.0
    %5614 = vmatprep.subr.mxu0 0.0
    %5615 = vmatpush2.msra.mxu0 0.0
    %5616 = vmatprep.subr.mxu0 0.0
    %5617 = vmatpush2.msra.mxu0 0.0
    %5618 = vmatprep.subr.mxu0 0.0
    %5619 = vmatpush2.msra.mxu0 0.0
    %5620 = vmatprep.subr.mxu0 0.0
    %5621 = vmatpush2.msra.mxu0 0.0
    %5622 = vmatprep.subr.mxu0 0.0
    %5623 = vmatpush2.msra.mxu0 0.0
    %5624 = vmatprep.subr.mxu0 0.0
    %5625 = vmatpush2.msra.mxu0 0.0
    %5626 = vmatprep.subr.mxu0 0.0
    %5627 = vmatpush2.msra.mxu0 0.0
    %5628 = vmatprep.subr.mxu0 0.0
    %5629 = vmatpush2.msra.mxu0 0.0
    %5630 = vmatprep.subr.mxu0 0.0
    %5631 = vmatpush2.msra.mxu0 0.0
    %5632 = vmatprep.subr.mxu0 0.0
    %5633 = vmatpush2.msra.mxu0 0.0
    %5634 = vmatprep.subr.mxu0 0.0
    %5635 = vmatpush2.msra.mxu0 0.0
    %5636 = vmatprep.mubr.f32.mxu0 0.0
    %5637 = vmatmul.mubr.f32.gmra.mxu0 %v5221
    %v5638 = vpop.f32.mrf.mxu0
    %v5639 = vadd.f32 %v5202, %v5638
    %v5640 = vpop.f32.mrf.mxu0
    %5641 = vmatprep.mubr.f32.mxu0 0.0
    %5642 = vmatmul.mubr.f32.gmra.mxu0 %v5224
    %v5643 = vpop.f32.mrf.mxu0
    %v5644 = vadd.f32 %v5207, %v5643
    %v5645 = vpop.f32.mrf.mxu0
    %5646 = vmatprep.mubr.f32.mxu0 0.0
    %5647 = vmatmul.mubr.f32.gmra.mxu0 %v5227
    %v5648 = vpop.f32.mrf.mxu0
    %v5649 = vadd.f32 %v5212, %v5648
    %v5650 = vpop.f32.mrf.mxu0
    %5651 = vmatprep.mubr.f32.mxu0 0.0
    %5652 = vmatmul.mubr.f32.gmra.mxu0 %v5230
    %v5653 = vpop.f32.mrf.mxu0
    %v5654 = vadd.f32 %v5217, %v5653
    %v5655 = vpop.f32.mrf.mxu0
    %5656 = vdwg.mxu0
    %5657 = vmatprep.subr.mxu0 0.0
    %5658 = vmatpush1.msra.mxu0 0.0
    %5659 = vmatprep.subr.mxu0 0.0
    %5660 = vmatpush1.msra.mxu0 0.0
    %5661 = vmatprep.subr.mxu0 0.0
    %5662 = vmatpush1.msra.mxu0 0.0
    %5663 = vmatprep.subr.mxu0 0.0
    %5664 = vmatpush1.msra.mxu0 0.0
    %5665 = vmatprep.subr.mxu0 0.0
    %5666 = vmatpush1.msra.mxu0 0.0
    %5667 = vmatprep.subr.mxu0 0.0
    %5668 = vmatpush1.msra.mxu0 0.0
    %5669 = vmatprep.subr.mxu0 0.0
    %5670 = vmatpush1.msra.mxu0 %v5190
    %5671 = vmatprep.subr.mxu0 0.0
    %5672 = vmatpush1.msra.mxu0 %v5189
    %5673 = vmatprep.subr.mxu0 0.0
    %5674 = vmatpush1.msra.mxu0 %v5186
    %5675 = vmatprep.subr.mxu0 0.0
    %5676 = vmatpush1.msra.mxu0 %v5185
    %5677 = vmatprep.subr.mxu0 0.0
    %5678 = vmatpush1.msra.mxu0 %v5182
    %5679 = vmatprep.subr.mxu0 0.0
    %5680 = vmatpush1.msra.mxu0 %v5181
    %5681 = vmatprep.subr.mxu0 0.0
    %5682 = vmatpush1.msra.mxu0 %v5178
    %5683 = vmatprep.subr.mxu0 0.0
    %5684 = vmatpush1.msra.mxu0 %v5177
    %5685 = vmatprep.subr.mxu0 0.0
    %5686 = vmatpush1.msra.mxu0 %v5174
    %5687 = vmatprep.subr.mxu0 0.0
    %5688 = vmatpush1.msra.mxu0 %v5173
    %5689 = vmatprep.subr.mxu0 0.0
    %5690 = vmatpush2.msra.mxu0 0.0
    %5691 = vmatprep.subr.mxu0 0.0
    %5692 = vmatpush2.msra.mxu0 0.0
    %5693 = vmatprep.subr.mxu0 0.0
    %5694 = vmatpush2.msra.mxu0 0.0
    %5695 = vmatprep.subr.mxu0 0.0
    %5696 = vmatpush2.msra.mxu0 0.0
    %5697 = vmatprep.subr.mxu0 0.0
    %5698 = vmatpush2.msra.mxu0 0.0
    %5699 = vmatprep.subr.mxu0 0.0
    %5700 = vmatpush2.msra.mxu0 0.0
    %5701 = vmatprep.subr.mxu0 0.0
    %5702 = vmatpush2.msra.mxu0 0.0
    %5703 = vmatprep.subr.mxu0 0.0
    %5704 = vmatpush2.msra.mxu0 0.0
    %5705 = vmatprep.subr.mxu0 0.0
    %5706 = vmatpush2.msra.mxu0 0.0
    %5707 = vmatprep.subr.mxu0 0.0
    %5708 = vmatpush2.msra.mxu0 0.0
    %5709 = vmatprep.subr.mxu0 0.0
    %5710 = vmatpush2.msra.mxu0 0.0
    %5711 = vmatprep.subr.mxu0 0.0
    %5712 = vmatpush2.msra.mxu0 0.0
    %5713 = vmatprep.subr.mxu0 0.0
    %5714 = vmatpush2.msra.mxu0 0.0
    %5715 = vmatprep.subr.mxu0 0.0
    %5716 = vmatpush2.msra.mxu0 0.0
    %5717 = vmatprep.subr.mxu0 0.0
    %5718 = vmatpush2.msra.mxu0 0.0
    %5719 = vmatprep.subr.mxu0 0.0
    %5720 = vmatpush2.msra.mxu0 0.0
    %5721 = vmatprep.mubr.f32.mxu0 0.0
    %5722 = vmatmul.mubr.f32.gmra.mxu0 %v5221
    %v5723 = vpop.f32.mrf.mxu0
    %v5724 = vadd.f32 %v5202, %v5723
    %v5725 = vpop.f32.mrf.mxu0
    %5726 = vmatprep.mubr.f32.mxu0 0.0
    %5727 = vmatmul.mubr.f32.gmra.mxu0 %v5224
    %v5728 = vpop.f32.mrf.mxu0
    %v5729 = vadd.f32 %v5207, %v5728
    %v5730 = vpop.f32.mrf.mxu0
    %5731 = vmatprep.mubr.f32.mxu0 0.0
    %5732 = vmatmul.mubr.f32.gmra.mxu0 %v5227
    %v5733 = vpop.f32.mrf.mxu0
    %v5734 = vadd.f32 %v5212, %v5733
    %v5735 = vpop.f32.mrf.mxu0
    %5736 = vmatprep.mubr.f32.mxu0 0.0
    %5737 = vmatmul.mubr.f32.gmra.mxu0 %v5230
    %v5738 = vpop.f32.mrf.mxu0
    %v5739 = vadd.f32 %v5217, %v5738
    %v5740 = vpop.f32.mrf.mxu0
    %5741 = vdwg.mxu0
    %vm5742 = vcmp.gt.f32.partialorder %v5299, 0.0
    %vm5743 = vcmp.gt.f32.partialorder %v5304, 0.0
    %vm5744 = vcmp.gt.f32.partialorder %v5309, 0.0
    %vm5745 = vcmp.gt.f32.partialorder %v5314, 0.0
    %vm5746 = vcmp.gt.f32.partialorder %v5384, 0.0
    %vm5747 = vcmp.gt.f32.partialorder %v5389, 0.0
    %vm5748 = vcmp.gt.f32.partialorder %v5394, 0.0
    %vm5749 = vcmp.gt.f32.partialorder %v5399, 0.0
    %vm5750 = vcmp.gt.f32.partialorder %v5469, 0.0
    %vm5751 = vcmp.gt.f32.partialorder %v5474, 0.0
    %vm5752 = vcmp.gt.f32.partialorder %v5479, 0.0
    %vm5753 = vcmp.gt.f32.partialorder %v5484, 0.0
    %vm5754 = vcmp.gt.f32.partialorder %v5554, 0.0
    %vm5755 = vcmp.gt.f32.partialorder %v5559, 0.0
    %vm5756 = vcmp.gt.f32.partialorder %v5564, 0.0
    %vm5757 = vcmp.gt.f32.partialorder %v5569, 0.0
    %vm5758 = vcmp.gt.f32.partialorder %v5639, 0.0
    %vm5759 = vcmp.gt.f32.partialorder %v5644, 0.0
    %vm5760 = vcmp.gt.f32.partialorder %v5649, 0.0
    %vm5761 = vcmp.gt.f32.partialorder %v5654, 0.0
    %vm5762 = vcmp.gt.f32.partialorder %v5724, 0.0
    %vm5763 = vcmp.gt.f32.partialorder %v5729, 0.0
    %vm5764 = vcmp.gt.f32.partialorder %v5734, 0.0
    %vm5765 = vcmp.gt.f32.partialorder %v5739, 0.0
    %v5766 = vmul.f32 %v5299, 0.01
    %v5767 = vmul.f32 %v5304, 0.01
    %v5768 = vmul.f32 %v5309, 0.01
    %v5769 = vmul.f32 %v5314, 0.01
    %v5770 = vmul.f32 %v5384, 0.01
    %v5771 = vmul.f32 %v5389, 0.01
    %v5772 = vmul.f32 %v5394, 0.01
    %v5773 = vmul.f32 %v5399, 0.01
    %v5774 = vmul.f32 %v5469, 0.01
    %v5775 = vmul.f32 %v5474, 0.01
    %v5776 = vmul.f32 %v5479, 0.01
    %v5777 = vmul.f32 %v5484, 0.01
    %v5778 = vmul.f32 %v5554, 0.01
    %v5779 = vmul.f32 %v5559, 0.01
    %v5780 = vmul.f32 %v5564, 0.01
    %v5781 = vmul.f32 %v5569, 0.01
    %v5782 = vmul.f32 %v5639, 0.01
    %v5783 = vmul.f32 %v5644, 0.01
    %v5784 = vmul.f32 %v5649, 0.01
    %v5785 = vmul.f32 %v5654, 0.01
    %v5786 = vmul.f32 %v5724, 0.01
    %v5787 = vmul.f32 %v5729, 0.01
    %v5788 = vmul.f32 %v5734, 0.01
    %v5789 = vmul.f32 %v5739, 0.01
    %v5790 = vsel %vm5742, %v5299, %v5766
    %v5791 = vsel %vm5743, %v5304, %v5767
    %v5792 = vsel %vm5744, %v5309, %v5768
    %v5793 = vsel %vm5745, %v5314, %v5769
    %v5794 = vsel %vm5746, %v5384, %v5770
    %v5795 = vsel %vm5747, %v5389, %v5771
    %v5796 = vsel %vm5748, %v5394, %v5772
    %v5797 = vsel %vm5749, %v5399, %v5773
    %v5798 = vsel %vm5750, %v5469, %v5774
    %v5799 = vsel %vm5751, %v5474, %v5775
    %v5800 = vsel %vm5752, %v5479, %v5776
    %v5801 = vsel %vm5753, %v5484, %v5777
    %v5802 = vsel %vm5754, %v5554, %v5778
    %v5803 = vsel %vm5755, %v5559, %v5779
    %v5804 = vsel %vm5756, %v5564, %v5780
    %v5805 = vsel %vm5757, %v5569, %v5781
    %v5806 = vsel %vm5758, %v5639, %v5782
    %v5807 = vsel %vm5759, %v5644, %v5783
    %v5808 = vsel %vm5760, %v5649, %v5784
    %v5809 = vsel %vm5761, %v5654, %v5785
    %v5810 = vsel %vm5762, %v5724, %v5786
    %v5811 = vsel %vm5763, %v5729, %v5787
    %v5812 = vsel %vm5764, %v5734, %v5788
    %v5813 = vsel %vm5765, %v5739, %v5789
    %v5814 = vmax.f32 %v5790, %v5794
    %v5815 = vmax.f32 %v5791, %v5795
    %v5816 = vmax.f32 %v5792, %v5796
    %v5817 = vmax.f32 %v5793, %v5797
    %v5818 = vmax.f32 %v5814, %v5798
    %v5819 = vmax.f32 %v5815, %v5799
    %v5820 = vmax.f32 %v5816, %v5800
    %v5821 = vmax.f32 %v5817, %v5801
    %v5822 = vmax.f32 %v5802, %v5806
    %v5823 = vmax.f32 %v5803, %v5807
    %v5824 = vmax.f32 %v5804, %v5808
    %v5825 = vmax.f32 %v5805, %v5809
    %v5826 = vmax.f32 %v5822, %v5810
    %v5827 = vmax.f32 %v5823, %v5811
    %v5828 = vmax.f32 %v5824, %v5812
    %v5829 = vmax.f32 %v5825, %v5813
    %v5830 = vld [vmem:[%s7] sm:$0x1]
    %v5831 = vld [vmem:[#allocation2] sm:$0x1]
    %5833 = vset.pattern.permute.xlu0 0
    %5834 = vperm.xlu0 %5833, %v5831
    %v5835 = vpop.permute.xlu0 %5834
    %v5837 = vlaneseq
    %v5838 = vshrl.u32 %v5837, 7
    %v5839 = vsub.s32 0, %v5838
    %v5840 = vrot.slane %v5835, %v5839
    %vm5841 = vcmask 523264
    %v5843 = vsel %vm5841, %v5830, 0
    %5845 = vmatprep.subr.mxu0 0.0
    %5846 = vmatpush1.msra.mxu0 0.0
    %5847 = vmatprep.subr.mxu0 0.0
    %5848 = vmatpush1.msra.mxu0 0.0
    %5849 = vmatprep.subr.mxu0 0.0
    %5850 = vmatpush1.msra.mxu0 0.0
    %5851 = vmatprep.subr.mxu0 0.0
    %5852 = vmatpush1.msra.mxu0 0.0
    %5853 = vmatprep.subr.mxu0 0.0
    %5854 = vmatpush1.msra.mxu0 0.0
    %5855 = vmatprep.subr.mxu0 0.0
    %5856 = vmatpush1.msra.mxu0 0.0
    %5857 = vmatprep.subr.mxu0 0.0
    %5858 = vmatpush1.msra.mxu0 0.0
    %5859 = vmatprep.subr.mxu0 0.0
    %5860 = vmatpush1.msra.mxu0 0.0
    %5861 = vmatprep.subr.mxu0 0.0
    %5862 = vmatpush1.msra.mxu0 %v5829
    %5863 = vmatprep.subr.mxu0 0.0
    %5864 = vmatpush1.msra.mxu0 %v5828
    %5865 = vmatprep.subr.mxu0 0.0
    %5866 = vmatpush1.msra.mxu0 %v5827
    %5867 = vmatprep.subr.mxu0 0.0
    %5868 = vmatpush1.msra.mxu0 %v5826
    %5869 = vmatprep.subr.mxu0 0.0
    %5870 = vmatpush1.msra.mxu0 %v5821
    %5871 = vmatprep.subr.mxu0 0.0
    %5872 = vmatpush1.msra.mxu0 %v5820
    %5873 = vmatprep.subr.mxu0 0.0
    %5874 = vmatpush1.msra.mxu0 %v5819
    %5875 = vmatprep.subr.mxu0 0.0
    %5876 = vmatpush1.msra.mxu0 %v5818
    %5877 = vmatprep.subr.mxu0 0.0
    %5878 = vmatpush2.msra.mxu0 0.0
    %5879 = vmatprep.subr.mxu0 0.0
    %5880 = vmatpush2.msra.mxu0 0.0
    %5881 = vmatprep.subr.mxu0 0.0
    %5882 = vmatpush2.msra.mxu0 0.0
    %5883 = vmatprep.subr.mxu0 0.0
    %5884 = vmatpush2.msra.mxu0 0.0
    %5885 = vmatprep.subr.mxu0 0.0
    %5886 = vmatpush2.msra.mxu0 0.0
    %5887 = vmatprep.subr.mxu0 0.0
    %5888 = vmatpush2.msra.mxu0 0.0
    %5889 = vmatprep.subr.mxu0 0.0
    %5890 = vmatpush2.msra.mxu0 0.0
    %5891 = vmatprep.subr.mxu0 0.0
    %5892 = vmatpush2.msra.mxu0 0.0
    %5893 = vmatprep.subr.mxu0 0.0
    %5894 = vmatpush2.msra.mxu0 0.0
    %5895 = vmatprep.subr.mxu0 0.0
    %5896 = vmatpush2.msra.mxu0 0.0
    %5897 = vmatprep.subr.mxu0 0.0
    %5898 = vmatpush2.msra.mxu0 0.0
    %5899 = vmatprep.subr.mxu0 0.0
    %5900 = vmatpush2.msra.mxu0 0.0
    %5901 = vmatprep.subr.mxu0 0.0
    %5902 = vmatpush2.msra.mxu0 0.0
    %5903 = vmatprep.subr.mxu0 0.0
    %5904 = vmatpush2.msra.mxu0 0.0
    %5905 = vmatprep.subr.mxu0 0.0
    %5906 = vmatpush2.msra.mxu0 0.0
    %5907 = vmatprep.subr.mxu0 0.0
    %5908 = vmatpush2.msra.mxu0 0.0
    %5909 = vmatprep.mubr.f32.mxu0 0.0
    %5910 = vmatmul.mubr.f32.gmra.mxu0 %v5843
    %v5911 = vpop.f32.mrf.mxu0
    %v5912 = vadd.f32 %v5840, %v5911
    %v5913 = vpop.f32.mrf.mxu0
    %5914 = vdwg.mxu0
    %5915 = vst [vmem:[#allocation6] sm:$0x1] %v5912
    // Predicated region
    $region42: #{tpu_custom_call.1} parent=1 // pred_check
      _
    $region43: #{tpu_custom_call.1} parent=1 // pred_check_branch
      %5917 = sbr.rel (0) target = $region45
    $region44: #{tpu_custom_call.1} parent=1 // pred_region
      %s5919 = ssub.s32 16, 16
      %5920 = vsyncadd [#allocation5], %s5919
      %s5922 = sshll.u32 [#allocation6], 4
      %s5923 = int_to_ptr.vmem [resolvable:$true] %s5922
      %5925 = dma.vmem_to_hbm [thread:$0]  %s5923, 16, %s9, [#allocation5]
    $region45: #{tpu_custom_call.1} parent=1 // pred_fallthru
      _
    // Predicated region
    $region46: #{tpu_custom_call.1} parent=1 // pred_check
      _
    $region47: #{tpu_custom_call.1} parent=1 // pred_check_branch
      %5927 = sbr.rel (0) target = $region49
    $region48: #{tpu_custom_call.1} parent=1 // pred_region
      %5928 = dma.done [#allocation5], 16
    $region49: #{tpu_custom_call.1} parent=1 // pred_fallthru
      _
    %5929 = vsyncpa [#allocation4], 1
    %5930 = vsyncpa [#allocation5], 1

</llo_original>
